<compile_context>
chip_gen: v7x
topology: tpu7x:2x2x1
jax: 0.10.0
libtpu: 0.0.40
codegen_flags: <defaults>
</compile_context>

<pallas_src>
import jax
import jax.numpy as jnp
from jax import lax
from jax.experimental import pallas as pl
from jax.experimental.pallas import tpu as pltpu

# ----------------------------- model hyper-params ---------------------------
NUM_CHANNELS = 3            # Conv2d(num_channels, 12, 5)
NUM_CLASSES = 10
CONV_OUT = 12
KSIZE = 5
IN_HW = 32                  # 32x32 -> conv 28x28 -> pool 14x14 -> 12*14*14 = 2352
CONV_HW = IN_HW - KSIZE + 1           # 28
POOL_HW = CONV_HW // 2                # 14
FLAT = CONV_OUT * POOL_HW * POOL_HW   # 2352
HIDDEN = 120

TB = 8                                 # samples per grid step (sublane multiple)
XT_LANES = 128                         # NUM_CHANNELS * IN_HW (=96) padded to 128
NCOL = CONV_OUT * IN_HW                # 384: conv-output column layout o*32 + w


# ------------------------------- fused kernel -------------------------------
def _fused_cnn_kernel(xt_ref, wconv_ref, bconv_ref, w1_ref, b1_ref,
                      w2_ref, b2_ref, out_ref):
    # xt_ref   : (32, TB, 128)      input tile, [image_row, n, c*32 + w]
    # wconv_ref: (5, 128, 768)      Toeplitz conv blocks (cols: [w-offset 0 | 1])
    # w1_ref   : (14, 384, 128)     fc1 with pool-selection/flatten folded in
    xt = xt_ref[...]                                          # (32, TB, 128)

    # ---- conv + bias + ReLU: 5 shifted matmuls, f32 accumulation ----
    acc = jnp.zeros((CONV_HW * TB, 2 * NCOL), jnp.float32)
    for kh in range(KSIZE):
        u = xt[kh:kh + CONV_HW].reshape(CONV_HW * TB, XT_LANES)   # rows = h*TB+n
        acc = acc + jnp.dot(u, wconv_ref[kh],
                            preferred_element_type=jnp.float32)
    conv = jnp.maximum(acc + bconv_ref[...], 0.0)             # (224, 768)

    # ---- 2x2 max-pool ----
    # rows: h = 2*ph + hh  ->  sublane-halved max
    c4 = conv.reshape(POOL_HW, 2 * TB, 2 * NCOL)              # (14, 16, 768)
    pool_h = jnp.maximum(c4[:, :TB, :], c4[:, TB:, :])        # (14, 8, 768)
    # cols: max with the pre-shifted (w+1) copy living in lanes [384:768)
    pool = jnp.maximum(pool_h[:, :, :NCOL], pool_h[:, :, NCOL:])  # (14, 8, 384)

    # ---- Dropout(p=0.15) is identity at inference ----
    # TODO(synk): training-mode stochastic dropout (pltpu.prng_*) not implemented.

    # ---- fc1 (flatten + pooled-lane selection folded into w1) + ReLU ----
    h = jnp.zeros((TB, 128), jnp.float32)
    for p in range(POOL_HW):
        h = h + jnp.dot(pool[p], w1_ref[p],
                        preferred_element_type=jnp.float32)
    h = jnp.maximum(h + b1_ref[...], 0.0)                     # (8, 128)

    # ---- fc2 (lane-dense, padded to 128 classes) ----
    out_ref[...] = jnp.dot(h, w2_ref[...],
                           preferred_element_type=jnp.float32) + b2_ref[...]


# -------------------------- weight re-packing (wrapper) ----------------------
def _pack_params(params):
    w_conv, b_conv, w1, b1, w2, b2 = params
    f32 = jnp.float32
    lane = jnp.arange(IN_HW)

    # Toeplitz conv blocks: BigW[d][kh][c*32+wt, o*32+w] = Wconv[o,c,kh,wt-w-d]
    # for 0 <= wt-w-d < 5 and w+d < 28, else 0.  d in {0,1} gives the two
    # horizontal positions of each 2x2 pool window.
    blocks, biases = [], []
    for d in (0, 1):
        s = jnp.stack([jnp.eye(IN_HW, IN_HW, k=-(kw + d), dtype=f32)
                       for kw in range(KSIZE)], axis=0)           # (5, wt, w)
        s = s * (lane[None, None, :] < (CONV_HW - d)).astype(f32)
        blk = jnp.einsum('ochq,qtw->hctow', w_conv.astype(f32), s)  # (5,C,32,O,32)
        blk = blk.reshape(KSIZE, NUM_CHANNELS * IN_HW, CONV_OUT * IN_HW)
        blk = jnp.pad(blk, ((0, 0), (0, XT_LANES - NUM_CHANNELS * IN_HW), (0, 0)))
        blocks.append(blk)                                        # (5, 128, 384)
        biases.append((b_conv.astype(f32)[:, None]
                       * (lane < (CONV_HW - d)).astype(f32)).reshape(-1))
    wconv_big = jnp.concatenate(blocks, axis=-1)                  # (5, 128, 768)
    bconv_big = jnp.concatenate(biases).reshape(1, 2 * NCOL)      # (1, 768)

    # fc1: fold torch flatten order (o*196 + ph*14 + pw) + pooled-lane selection
    # (lane o*32 + 2*pw of each ph-slab) + hidden padding into the weight.
    w1_4d = w1.astype(f32).reshape(CONV_OUT, POOL_HW, POOL_HW, HIDDEN)
    w1r = jnp.zeros((POOL_HW, CONV_OUT, IN_HW, 128), f32)
    w1r = w1r.at[:, :, 0:2 * POOL_HW:2, :HIDDEN].set(
        jnp.transpose(w1_4d, (1, 0, 2, 3)))
    w1r = w1r.reshape(POOL_HW, NCOL, 128)                         # (14, 384, 128)
    b1row = jnp.zeros((1, 128), f32).at[0, :HIDDEN].set(b1.astype(f32))

    w2p = jnp.zeros((128, 128), f32).at[:HIDDEN, :NUM_CLASSES].set(w2.astype(f32))
    b2row = jnp.zeros((1, 128), f32).at[0, :NUM_CLASSES].set(b2.astype(f32))
    return wconv_big, bconv_big, w1r, b1row, w2p, b2row


# ------------------------------- forward wrapper ----------------------------
@jax.jit
def model_forward(x, params):
    """x: (N, C, 32, 32) float32 (NCHW, like PyTorch)."""
    n = x.shape[0]
    n_pad = ((n + TB - 1) // TB) * TB
    n_tiles = n_pad // TB

    wconv_big, bconv_big, w1r, b1row, w2p, b2row = _pack_params(params)

    # (N, C, H, W) -> (H, N, C*W), zero-padded to a TB batch multiple / 128 lanes.
    xt = jnp.transpose(x.astype(jnp.float32), (2, 0, 1, 3)).reshape(
        IN_HW, n, NUM_CHANNELS * IN_HW)
    xt = jnp.pad(xt, ((0, 0), (0, n_pad - n),
                      (0, XT_LANES - NUM_CHANNELS * IN_HW)))

    flops = n_tiles * (2 * KSIZE * (CONV_HW * TB) * XT_LANES * (2 * NCOL)
                       + 2 * POOL_HW * TB * NCOL * 128
                       + 2 * TB * 128 * 128)
    bytes_accessed = 4 * (xt.size + wconv_big.size + bconv_big.size + w1r.size
                          + b1row.size + w2p.size + b2row.size + n_pad * 128)

    out = pl.pallas_call(
        _fused_cnn_kernel,
        out_shape=jax.ShapeDtypeStruct((n_pad, 128), jnp.float32),
        grid=(n_tiles,),
        in_specs=[
            pl.BlockSpec((IN_HW, TB, XT_LANES), lambda i: (0, i, 0)),
            pl.BlockSpec((KSIZE, XT_LANES, 2 * NCOL), lambda i: (0, 0, 0)),
            pl.BlockSpec((1, 2 * NCOL), lambda i: (0, 0)),
            pl.BlockSpec((POOL_HW, NCOL, 128), lambda i: (0, 0, 0)),
            pl.BlockSpec((1, 128), lambda i: (0, 0)),
            pl.BlockSpec((128, 128), lambda i: (0, 0)),
            pl.BlockSpec((1, 128), lambda i: (0, 0)),
        ],
        out_specs=pl.BlockSpec((TB, 128), lambda i: (i, 0)),
        compiler_params=pltpu.CompilerParams(
            dimension_semantics=("parallel",),
            vmem_limit_bytes=32 * 1024 * 1024),
        cost_estimate=pl.CostEstimate(flops=flops, transcendentals=0,
                                      bytes_accessed=bytes_accessed),
    )(xt, wconv_big, bconv_big, w1r, b1row, w2p, b2row)

    return out[:n, :NUM_CLASSES]


# ------------------------------ pure-JAX reference --------------------------
def reference_forward(x, params):
    w_conv, b_conv, w1, b1, w2, b2 = params
    y = lax.conv_general_dilated(
        x, w_conv, window_strides=(1, 1), padding="VALID",
        dimension_numbers=("NCHW", "OIHW", "NCHW"))
    y = jnp.maximum(y + b_conv.reshape(1, CONV_OUT, 1, 1), 0.0)
    y = lax.reduce_window(y, -jnp.inf, lax.max,
                          (1, 1, 2, 2), (1, 1, 2, 2), "VALID")
    y = y.reshape(x.shape[0], -1)
    h = jnp.maximum(y @ w1 + b1, 0.0)
    return h @ w2 + b2


# ----------------------------------- init ------------------------------------
def init_params(key):
    kc, kcb, k1, k1b, k2, k2b = jax.random.split(key, 6)
    fan_conv = NUM_CHANNELS * KSIZE * KSIZE
    bc = 1.0 / jnp.sqrt(fan_conv)
    w_conv = jax.random.uniform(kc, (CONV_OUT, NUM_CHANNELS, KSIZE, KSIZE),
                                jnp.float32, -bc, bc)
    b_conv = jax.random.uniform(kcb, (CONV_OUT,), jnp.float32, -bc, bc)
    b1s = 1.0 / jnp.sqrt(FLAT)
    w1 = jax.random.uniform(k1, (FLAT, HIDDEN), jnp.float32, -b1s, b1s)
    b1 = jax.random.uniform(k1b, (HIDDEN,), jnp.float32, -b1s, b1s)
    b2s = 1.0 / jnp.sqrt(HIDDEN)
    w2 = jax.random.uniform(k2, (HIDDEN, NUM_CLASSES), jnp.float32, -b2s, b2s)
    b2 = jax.random.uniform(k2b, (NUM_CLASSES,), jnp.float32, -b2s, b2s)
    return (w_conv, b_conv, w1, b1, w2, b2)


# ----------------------------------- main ------------------------------------
if __name__ == "__main__":
    key = jax.random.PRNGKey(0)
    kx, kp = jax.random.split(key)
    batch = 2
    x = jax.random.normal(kx, (batch, NUM_CHANNELS, IN_HW, IN_HW), jnp.float32)
    params = init_params(kp)

    out = jax.block_until_ready(model_forward(x, params))
    assert out.shape == (batch, NUM_CLASSES), out.shape

    ref = jax.block_until_ready(reference_forward(x, params))
    assert jnp.allclose(out, ref, rtol=5e-3, atol=5e-3), (
        float(jnp.max(jnp.abs(out - ref))))

    print("KERNEL_OK")
</pallas_src>

<mosaic_0001>
module attributes {stable_mosaic.version = 11 : i64} {
  func.func @_fused_cnn_kernel(%arg0: i32, %arg1: memref<32x8x128xf32, #tpu.memory_space<vmem>>, %arg2: memref<5x128x768xf32, #tpu.memory_space<vmem>>, %arg3: memref<1x768xf32, #tpu.memory_space<vmem>>, %arg4: memref<14x384x128xf32, #tpu.memory_space<vmem>>, %arg5: memref<1x128xf32, #tpu.memory_space<vmem>>, %arg6: memref<128x128xf32, #tpu.memory_space<vmem>>, %arg7: memref<1x128xf32, #tpu.memory_space<vmem>>, %arg8: memref<8x128xf32, #tpu.memory_space<vmem>>) attributes {dimension_semantics = [#tpu.dimension_semantics<parallel>], iteration_bounds = array<i64: 1>, scalar_prefetch = 0 : i64, scratch_operands = 0 : i64, tpu.core_type = #tpu.core_type<tc>, window_params = [{transform_indices = @transform_0, window_bounds = array<i64: 32, 8, 128>}, {pipeline_mode = #tpu.pipeline_mode<synchronous>, transform_indices = @transform_1, window_bounds = array<i64: 5, 128, 768>}, {pipeline_mode = #tpu.pipeline_mode<synchronous>, transform_indices = @transform_2, window_bounds = array<i64: 1, 768>}, {pipeline_mode = #tpu.pipeline_mode<synchronous>, transform_indices = @transform_3, window_bounds = array<i64: 14, 384, 128>}, {pipeline_mode = #tpu.pipeline_mode<synchronous>, transform_indices = @transform_4, window_bounds = array<i64: 1, 128>}, {pipeline_mode = #tpu.pipeline_mode<synchronous>, transform_indices = @transform_5, window_bounds = array<i64: 128, 128>}, {pipeline_mode = #tpu.pipeline_mode<synchronous>, transform_indices = @transform_6, window_bounds = array<i64: 1, 128>}, {transform_indices = @transform_7, window_bounds = array<i64: 8, 128>}]} {
    %c0 = arith.constant 0 : index
    %c0_0 = arith.constant 0 : index
    %c0_1 = arith.constant 0 : index
    %0 = vector.load %arg1[%c0, %c0_0, %c0_1] : memref<32x8x128xf32, #tpu.memory_space<vmem>>, vector<32x8x128xf32>
    %cst = arith.constant 0.000000e+00 : f32
    %1 = vector.broadcast %cst : f32 to vector<224x768xf32>
    %2 = vector.extract_strided_slice %0 {offsets = [0, 0, 0], sizes = [28, 8, 128], strides = [1, 1, 1]} : vector<32x8x128xf32> to vector<28x8x128xf32>
    %3 = vector.shape_cast %2 : vector<28x8x128xf32> to vector<224x128xf32>
    %c0_2 = arith.constant 0 : index
    %c0_3 = arith.constant 0 : index
    %c0_4 = arith.constant 0 : index
    %4 = vector.load %arg2[%c0_2, %c0_3, %c0_4] : memref<5x128x768xf32, #tpu.memory_space<vmem>>, vector<1x128x768xf32>
    %5 = vector.shape_cast %4 : vector<1x128x768xf32> to vector<128x768xf32>
    %cst_5 = arith.constant dense<0.000000e+00> : vector<224x768xf32>
    %6 = tpu.matmul %3, %5, %cst_5 {dimension_numbers = #tpu.dot_dimension_numbers<[1], [0], [0], [1], [0, 0, 1, 1], [], []>} : vector<224x128xf32>, vector<128x768xf32>, vector<224x768xf32> -> vector<224x768xf32>
    %7 = arith.addf %1, %6 : vector<224x768xf32>
    %8 = vector.extract_strided_slice %0 {offsets = [1, 0, 0], sizes = [28, 8, 128], strides = [1, 1, 1]} : vector<32x8x128xf32> to vector<28x8x128xf32>
    %9 = vector.shape_cast %8 : vector<28x8x128xf32> to vector<224x128xf32>
    %c1 = arith.constant 1 : index
    %c0_6 = arith.constant 0 : index
    %c0_7 = arith.constant 0 : index
    %10 = vector.load %arg2[%c1, %c0_6, %c0_7] : memref<5x128x768xf32, #tpu.memory_space<vmem>>, vector<1x128x768xf32>
    %11 = vector.shape_cast %10 : vector<1x128x768xf32> to vector<128x768xf32>
    %cst_8 = arith.constant dense<0.000000e+00> : vector<224x768xf32>
    %12 = tpu.matmul %9, %11, %cst_8 {dimension_numbers = #tpu.dot_dimension_numbers<[1], [0], [0], [1], [0, 0, 1, 1], [], []>} : vector<224x128xf32>, vector<128x768xf32>, vector<224x768xf32> -> vector<224x768xf32>
    %13 = arith.addf %7, %12 : vector<224x768xf32>
    %14 = vector.extract_strided_slice %0 {offsets = [2, 0, 0], sizes = [28, 8, 128], strides = [1, 1, 1]} : vector<32x8x128xf32> to vector<28x8x128xf32>
    %15 = vector.shape_cast %14 : vector<28x8x128xf32> to vector<224x128xf32>
    %c2 = arith.constant 2 : index
    %c0_9 = arith.constant 0 : index
    %c0_10 = arith.constant 0 : index
    %16 = vector.load %arg2[%c2, %c0_9, %c0_10] : memref<5x128x768xf32, #tpu.memory_space<vmem>>, vector<1x128x768xf32>
    %17 = vector.shape_cast %16 : vector<1x128x768xf32> to vector<128x768xf32>
    %cst_11 = arith.constant dense<0.000000e+00> : vector<224x768xf32>
    %18 = tpu.matmul %15, %17, %cst_11 {dimension_numbers = #tpu.dot_dimension_numbers<[1], [0], [0], [1], [0, 0, 1, 1], [], []>} : vector<224x128xf32>, vector<128x768xf32>, vector<224x768xf32> -> vector<224x768xf32>
    %19 = arith.addf %13, %18 : vector<224x768xf32>
    %20 = vector.extract_strided_slice %0 {offsets = [3, 0, 0], sizes = [28, 8, 128], strides = [1, 1, 1]} : vector<32x8x128xf32> to vector<28x8x128xf32>
    %21 = vector.shape_cast %20 : vector<28x8x128xf32> to vector<224x128xf32>
    %c3 = arith.constant 3 : index
    %c0_12 = arith.constant 0 : index
    %c0_13 = arith.constant 0 : index
    %22 = vector.load %arg2[%c3, %c0_12, %c0_13] : memref<5x128x768xf32, #tpu.memory_space<vmem>>, vector<1x128x768xf32>
    %23 = vector.shape_cast %22 : vector<1x128x768xf32> to vector<128x768xf32>
    %cst_14 = arith.constant dense<0.000000e+00> : vector<224x768xf32>
    %24 = tpu.matmul %21, %23, %cst_14 {dimension_numbers = #tpu.dot_dimension_numbers<[1], [0], [0], [1], [0, 0, 1, 1], [], []>} : vector<224x128xf32>, vector<128x768xf32>, vector<224x768xf32> -> vector<224x768xf32>
    %25 = arith.addf %19, %24 : vector<224x768xf32>
    %26 = vector.extract_strided_slice %0 {offsets = [4, 0, 0], sizes = [28, 8, 128], strides = [1, 1, 1]} : vector<32x8x128xf32> to vector<28x8x128xf32>
    %27 = vector.shape_cast %26 : vector<28x8x128xf32> to vector<224x128xf32>
    %c4 = arith.constant 4 : index
    %c0_15 = arith.constant 0 : index
    %c0_16 = arith.constant 0 : index
    %28 = vector.load %arg2[%c4, %c0_15, %c0_16] : memref<5x128x768xf32, #tpu.memory_space<vmem>>, vector<1x128x768xf32>
    %29 = vector.shape_cast %28 : vector<1x128x768xf32> to vector<128x768xf32>
    %cst_17 = arith.constant dense<0.000000e+00> : vector<224x768xf32>
    %30 = tpu.matmul %27, %29, %cst_17 {dimension_numbers = #tpu.dot_dimension_numbers<[1], [0], [0], [1], [0, 0, 1, 1], [], []>} : vector<224x128xf32>, vector<128x768xf32>, vector<224x768xf32> -> vector<224x768xf32>
    %31 = arith.addf %25, %30 : vector<224x768xf32>
    %c0_18 = arith.constant 0 : index
    %c0_19 = arith.constant 0 : index
    %32 = vector.load %arg3[%c0_18, %c0_19] : memref<1x768xf32, #tpu.memory_space<vmem>>, vector<1x768xf32>
    %33 = vector.broadcast %32 : vector<1x768xf32> to vector<224x768xf32>
    %34 = arith.addf %31, %33 : vector<224x768xf32>
    %cst_20 = arith.constant 0.000000e+00 : f32
    %35 = vector.broadcast %cst_20 : f32 to vector<224x768xf32>
    %36 = arith.maximumf %34, %35 : vector<224x768xf32>
    %37 = vector.shape_cast %36 : vector<224x768xf32> to vector<14x16x768xf32>
    %38 = vector.extract_strided_slice %37 {offsets = [0, 0, 0], sizes = [14, 8, 768], strides = [1, 1, 1]} : vector<14x16x768xf32> to vector<14x8x768xf32>
    %39 = vector.extract_strided_slice %37 {offsets = [0, 8, 0], sizes = [14, 8, 768], strides = [1, 1, 1]} : vector<14x16x768xf32> to vector<14x8x768xf32>
    %40 = arith.maximumf %38, %39 : vector<14x8x768xf32>
    %41 = vector.extract_strided_slice %40 {offsets = [0, 0, 0], sizes = [14, 8, 384], strides = [1, 1, 1]} : vector<14x8x768xf32> to vector<14x8x384xf32>
    %42 = vector.extract_strided_slice %40 {offsets = [0, 0, 384], sizes = [14, 8, 384], strides = [1, 1, 1]} : vector<14x8x768xf32> to vector<14x8x384xf32>
    %43 = arith.maximumf %41, %42 : vector<14x8x384xf32>
    %cst_21 = arith.constant 0.000000e+00 : f32
    %44 = vector.broadcast %cst_21 : f32 to vector<8x128xf32>
    %45 = vector.extract_strided_slice %43 {offsets = [0, 0, 0], sizes = [1, 8, 384], strides = [1, 1, 1]} : vector<14x8x384xf32> to vector<1x8x384xf32>
    %46 = vector.shape_cast %45 : vector<1x8x384xf32> to vector<8x384xf32>
    %c0_22 = arith.constant 0 : index
    %c0_23 = arith.constant 0 : index
    %c0_24 = arith.constant 0 : index
    %47 = vector.load %arg4[%c0_22, %c0_23, %c0_24] : memref<14x384x128xf32, #tpu.memory_space<vmem>>, vector<1x384x128xf32>
    %48 = vector.shape_cast %47 : vector<1x384x128xf32> to vector<384x128xf32>
    %cst_25 = arith.constant dense<0.000000e+00> : vector<8x128xf32>
    %49 = tpu.matmul %46, %48, %cst_25 {dimension_numbers = #tpu.dot_dimension_numbers<[1], [0], [0], [1], [0, 0, 1, 1], [], []>} : vector<8x384xf32>, vector<384x128xf32>, vector<8x128xf32> -> vector<8x128xf32>
    %50 = arith.addf %44, %49 : vector<8x128xf32>
    %51 = vector.extract_strided_slice %43 {offsets = [1, 0, 0], sizes = [1, 8, 384], strides = [1, 1, 1]} : vector<14x8x384xf32> to vector<1x8x384xf32>
    %52 = vector.shape_cast %51 : vector<1x8x384xf32> to vector<8x384xf32>
    %c1_26 = arith.constant 1 : index
    %c0_27 = arith.constant 0 : index
    %c0_28 = arith.constant 0 : index
    %53 = vector.load %arg4[%c1_26, %c0_27, %c0_28] : memref<14x384x128xf32, #tpu.memory_space<vmem>>, vector<1x384x128xf32>
    %54 = vector.shape_cast %53 : vector<1x384x128xf32> to vector<384x128xf32>
    %cst_29 = arith.constant dense<0.000000e+00> : vector<8x128xf32>
    %55 = tpu.matmul %52, %54, %cst_29 {dimension_numbers = #tpu.dot_dimension_numbers<[1], [0], [0], [1], [0, 0, 1, 1], [], []>} : vector<8x384xf32>, vector<384x128xf32>, vector<8x128xf32> -> vector<8x128xf32>
    %56 = arith.addf %50, %55 : vector<8x128xf32>
    %57 = vector.extract_strided_slice %43 {offsets = [2, 0, 0], sizes = [1, 8, 384], strides = [1, 1, 1]} : vector<14x8x384xf32> to vector<1x8x384xf32>
    %58 = vector.shape_cast %57 : vector<1x8x384xf32> to vector<8x384xf32>
    %c2_30 = arith.constant 2 : index
    %c0_31 = arith.constant 0 : index
    %c0_32 = arith.constant 0 : index
    %59 = vector.load %arg4[%c2_30, %c0_31, %c0_32] : memref<14x384x128xf32, #tpu.memory_space<vmem>>, vector<1x384x128xf32>
    %60 = vector.shape_cast %59 : vector<1x384x128xf32> to vector<384x128xf32>
    %cst_33 = arith.constant dense<0.000000e+00> : vector<8x128xf32>
    %61 = tpu.matmul %58, %60, %cst_33 {dimension_numbers = #tpu.dot_dimension_numbers<[1], [0], [0], [1], [0, 0, 1, 1], [], []>} : vector<8x384xf32>, vector<384x128xf32>, vector<8x128xf32> -> vector<8x128xf32>
    %62 = arith.addf %56, %61 : vector<8x128xf32>
    %63 = vector.extract_strided_slice %43 {offsets = [3, 0, 0], sizes = [1, 8, 384], strides = [1, 1, 1]} : vector<14x8x384xf32> to vector<1x8x384xf32>
    %64 = vector.shape_cast %63 : vector<1x8x384xf32> to vector<8x384xf32>
    %c3_34 = arith.constant 3 : index
    %c0_35 = arith.constant 0 : index
    %c0_36 = arith.constant 0 : index
    %65 = vector.load %arg4[%c3_34, %c0_35, %c0_36] : memref<14x384x128xf32, #tpu.memory_space<vmem>>, vector<1x384x128xf32>
    %66 = vector.shape_cast %65 : vector<1x384x128xf32> to vector<384x128xf32>
    %cst_37 = arith.constant dense<0.000000e+00> : vector<8x128xf32>
    %67 = tpu.matmul %64, %66, %cst_37 {dimension_numbers = #tpu.dot_dimension_numbers<[1], [0], [0], [1], [0, 0, 1, 1], [], []>} : vector<8x384xf32>, vector<384x128xf32>, vector<8x128xf32> -> vector<8x128xf32>
    %68 = arith.addf %62, %67 : vector<8x128xf32>
    %69 = vector.extract_strided_slice %43 {offsets = [4, 0, 0], sizes = [1, 8, 384], strides = [1, 1, 1]} : vector<14x8x384xf32> to vector<1x8x384xf32>
    %70 = vector.shape_cast %69 : vector<1x8x384xf32> to vector<8x384xf32>
    %c4_38 = arith.constant 4 : index
    %c0_39 = arith.constant 0 : index
    %c0_40 = arith.constant 0 : index
    %71 = vector.load %arg4[%c4_38, %c0_39, %c0_40] : memref<14x384x128xf32, #tpu.memory_space<vmem>>, vector<1x384x128xf32>
    %72 = vector.shape_cast %71 : vector<1x384x128xf32> to vector<384x128xf32>
    %cst_41 = arith.constant dense<0.000000e+00> : vector<8x128xf32>
    %73 = tpu.matmul %70, %72, %cst_41 {dimension_numbers = #tpu.dot_dimension_numbers<[1], [0], [0], [1], [0, 0, 1, 1], [], []>} : vector<8x384xf32>, vector<384x128xf32>, vector<8x128xf32> -> vector<8x128xf32>
    %74 = arith.addf %68, %73 : vector<8x128xf32>
    %75 = vector.extract_strided_slice %43 {offsets = [5, 0, 0], sizes = [1, 8, 384], strides = [1, 1, 1]} : vector<14x8x384xf32> to vector<1x8x384xf32>
    %76 = vector.shape_cast %75 : vector<1x8x384xf32> to vector<8x384xf32>
    %c5 = arith.constant 5 : index
    %c0_42 = arith.constant 0 : index
    %c0_43 = arith.constant 0 : index
    %77 = vector.load %arg4[%c5, %c0_42, %c0_43] : memref<14x384x128xf32, #tpu.memory_space<vmem>>, vector<1x384x128xf32>
    %78 = vector.shape_cast %77 : vector<1x384x128xf32> to vector<384x128xf32>
    %cst_44 = arith.constant dense<0.000000e+00> : vector<8x128xf32>
    %79 = tpu.matmul %76, %78, %cst_44 {dimension_numbers = #tpu.dot_dimension_numbers<[1], [0], [0], [1], [0, 0, 1, 1], [], []>} : vector<8x384xf32>, vector<384x128xf32>, vector<8x128xf32> -> vector<8x128xf32>
    %80 = arith.addf %74, %79 : vector<8x128xf32>
    %81 = vector.extract_strided_slice %43 {offsets = [6, 0, 0], sizes = [1, 8, 384], strides = [1, 1, 1]} : vector<14x8x384xf32> to vector<1x8x384xf32>
    %82 = vector.shape_cast %81 : vector<1x8x384xf32> to vector<8x384xf32>
    %c6 = arith.constant 6 : index
    %c0_45 = arith.constant 0 : index
    %c0_46 = arith.constant 0 : index
    %83 = vector.load %arg4[%c6, %c0_45, %c0_46] : memref<14x384x128xf32, #tpu.memory_space<vmem>>, vector<1x384x128xf32>
    %84 = vector.shape_cast %83 : vector<1x384x128xf32> to vector<384x128xf32>
    %cst_47 = arith.constant dense<0.000000e+00> : vector<8x128xf32>
    %85 = tpu.matmul %82, %84, %cst_47 {dimension_numbers = #tpu.dot_dimension_numbers<[1], [0], [0], [1], [0, 0, 1, 1], [], []>} : vector<8x384xf32>, vector<384x128xf32>, vector<8x128xf32> -> vector<8x128xf32>
    %86 = arith.addf %80, %85 : vector<8x128xf32>
    %87 = vector.extract_strided_slice %43 {offsets = [7, 0, 0], sizes = [1, 8, 384], strides = [1, 1, 1]} : vector<14x8x384xf32> to vector<1x8x384xf32>
    %88 = vector.shape_cast %87 : vector<1x8x384xf32> to vector<8x384xf32>
    %c7 = arith.constant 7 : index
    %c0_48 = arith.constant 0 : index
    %c0_49 = arith.constant 0 : index
    %89 = vector.load %arg4[%c7, %c0_48, %c0_49] : memref<14x384x128xf32, #tpu.memory_space<vmem>>, vector<1x384x128xf32>
    %90 = vector.shape_cast %89 : vector<1x384x128xf32> to vector<384x128xf32>
    %cst_50 = arith.constant dense<0.000000e+00> : vector<8x128xf32>
    %91 = tpu.matmul %88, %90, %cst_50 {dimension_numbers = #tpu.dot_dimension_numbers<[1], [0], [0], [1], [0, 0, 1, 1], [], []>} : vector<8x384xf32>, vector<384x128xf32>, vector<8x128xf32> -> vector<8x128xf32>
    %92 = arith.addf %86, %91 : vector<8x128xf32>
    %93 = vector.extract_strided_slice %43 {offsets = [8, 0, 0], sizes = [1, 8, 384], strides = [1, 1, 1]} : vector<14x8x384xf32> to vector<1x8x384xf32>
    %94 = vector.shape_cast %93 : vector<1x8x384xf32> to vector<8x384xf32>
    %c8 = arith.constant 8 : index
    %c0_51 = arith.constant 0 : index
    %c0_52 = arith.constant 0 : index
    %95 = vector.load %arg4[%c8, %c0_51, %c0_52] : memref<14x384x128xf32, #tpu.memory_space<vmem>>, vector<1x384x128xf32>
    %96 = vector.shape_cast %95 : vector<1x384x128xf32> to vector<384x128xf32>
    %cst_53 = arith.constant dense<0.000000e+00> : vector<8x128xf32>
    %97 = tpu.matmul %94, %96, %cst_53 {dimension_numbers = #tpu.dot_dimension_numbers<[1], [0], [0], [1], [0, 0, 1, 1], [], []>} : vector<8x384xf32>, vector<384x128xf32>, vector<8x128xf32> -> vector<8x128xf32>
    %98 = arith.addf %92, %97 : vector<8x128xf32>
    %99 = vector.extract_strided_slice %43 {offsets = [9, 0, 0], sizes = [1, 8, 384], strides = [1, 1, 1]} : vector<14x8x384xf32> to vector<1x8x384xf32>
    %100 = vector.shape_cast %99 : vector<1x8x384xf32> to vector<8x384xf32>
    %c9 = arith.constant 9 : index
    %c0_54 = arith.constant 0 : index
    %c0_55 = arith.constant 0 : index
    %101 = vector.load %arg4[%c9, %c0_54, %c0_55] : memref<14x384x128xf32, #tpu.memory_space<vmem>>, vector<1x384x128xf32>
    %102 = vector.shape_cast %101 : vector<1x384x128xf32> to vector<384x128xf32>
    %cst_56 = arith.constant dense<0.000000e+00> : vector<8x128xf32>
    %103 = tpu.matmul %100, %102, %cst_56 {dimension_numbers = #tpu.dot_dimension_numbers<[1], [0], [0], [1], [0, 0, 1, 1], [], []>} : vector<8x384xf32>, vector<384x128xf32>, vector<8x128xf32> -> vector<8x128xf32>
    %104 = arith.addf %98, %103 : vector<8x128xf32>
    %105 = vector.extract_strided_slice %43 {offsets = [10, 0, 0], sizes = [1, 8, 384], strides = [1, 1, 1]} : vector<14x8x384xf32> to vector<1x8x384xf32>
    %106 = vector.shape_cast %105 : vector<1x8x384xf32> to vector<8x384xf32>
    %c10 = arith.constant 10 : index
    %c0_57 = arith.constant 0 : index
    %c0_58 = arith.constant 0 : index
    %107 = vector.load %arg4[%c10, %c0_57, %c0_58] : memref<14x384x128xf32, #tpu.memory_space<vmem>>, vector<1x384x128xf32>
    %108 = vector.shape_cast %107 : vector<1x384x128xf32> to vector<384x128xf32>
    %cst_59 = arith.constant dense<0.000000e+00> : vector<8x128xf32>
    %109 = tpu.matmul %106, %108, %cst_59 {dimension_numbers = #tpu.dot_dimension_numbers<[1], [0], [0], [1], [0, 0, 1, 1], [], []>} : vector<8x384xf32>, vector<384x128xf32>, vector<8x128xf32> -> vector<8x128xf32>
    %110 = arith.addf %104, %109 : vector<8x128xf32>
    %111 = vector.extract_strided_slice %43 {offsets = [11, 0, 0], sizes = [1, 8, 384], strides = [1, 1, 1]} : vector<14x8x384xf32> to vector<1x8x384xf32>
    %112 = vector.shape_cast %111 : vector<1x8x384xf32> to vector<8x384xf32>
    %c11 = arith.constant 11 : index
    %c0_60 = arith.constant 0 : index
    %c0_61 = arith.constant 0 : index
    %113 = vector.load %arg4[%c11, %c0_60, %c0_61] : memref<14x384x128xf32, #tpu.memory_space<vmem>>, vector<1x384x128xf32>
    %114 = vector.shape_cast %113 : vector<1x384x128xf32> to vector<384x128xf32>
    %cst_62 = arith.constant dense<0.000000e+00> : vector<8x128xf32>
    %115 = tpu.matmul %112, %114, %cst_62 {dimension_numbers = #tpu.dot_dimension_numbers<[1], [0], [0], [1], [0, 0, 1, 1], [], []>} : vector<8x384xf32>, vector<384x128xf32>, vector<8x128xf32> -> vector<8x128xf32>
    %116 = arith.addf %110, %115 : vector<8x128xf32>
    %117 = vector.extract_strided_slice %43 {offsets = [12, 0, 0], sizes = [1, 8, 384], strides = [1, 1, 1]} : vector<14x8x384xf32> to vector<1x8x384xf32>
    %118 = vector.shape_cast %117 : vector<1x8x384xf32> to vector<8x384xf32>
    %c12 = arith.constant 12 : index
    %c0_63 = arith.constant 0 : index
    %c0_64 = arith.constant 0 : index
    %119 = vector.load %arg4[%c12, %c0_63, %c0_64] : memref<14x384x128xf32, #tpu.memory_space<vmem>>, vector<1x384x128xf32>
    %120 = vector.shape_cast %119 : vector<1x384x128xf32> to vector<384x128xf32>
    %cst_65 = arith.constant dense<0.000000e+00> : vector<8x128xf32>
    %121 = tpu.matmul %118, %120, %cst_65 {dimension_numbers = #tpu.dot_dimension_numbers<[1], [0], [0], [1], [0, 0, 1, 1], [], []>} : vector<8x384xf32>, vector<384x128xf32>, vector<8x128xf32> -> vector<8x128xf32>
    %122 = arith.addf %116, %121 : vector<8x128xf32>
    %123 = vector.extract_strided_slice %43 {offsets = [13, 0, 0], sizes = [1, 8, 384], strides = [1, 1, 1]} : vector<14x8x384xf32> to vector<1x8x384xf32>
    %124 = vector.shape_cast %123 : vector<1x8x384xf32> to vector<8x384xf32>
    %c13 = arith.constant 13 : index
    %c0_66 = arith.constant 0 : index
    %c0_67 = arith.constant 0 : index
    %125 = vector.load %arg4[%c13, %c0_66, %c0_67] : memref<14x384x128xf32, #tpu.memory_space<vmem>>, vector<1x384x128xf32>
    %126 = vector.shape_cast %125 : vector<1x384x128xf32> to vector<384x128xf32>
    %cst_68 = arith.constant dense<0.000000e+00> : vector<8x128xf32>
    %127 = tpu.matmul %124, %126, %cst_68 {dimension_numbers = #tpu.dot_dimension_numbers<[1], [0], [0], [1], [0, 0, 1, 1], [], []>} : vector<8x384xf32>, vector<384x128xf32>, vector<8x128xf32> -> vector<8x128xf32>
    %128 = arith.addf %122, %127 : vector<8x128xf32>
    %c0_69 = arith.constant 0 : index
    %c0_70 = arith.constant 0 : index
    %129 = vector.load %arg5[%c0_69, %c0_70] : memref<1x128xf32, #tpu.memory_space<vmem>>, vector<1x128xf32>
    %130 = vector.broadcast %129 : vector<1x128xf32> to vector<8x128xf32>
    %131 = arith.addf %128, %130 : vector<8x128xf32>
    %cst_71 = arith.constant 0.000000e+00 : f32
    %132 = vector.broadcast %cst_71 : f32 to vector<8x128xf32>
    %133 = arith.maximumf %131, %132 : vector<8x128xf32>
    %c0_72 = arith.constant 0 : index
    %c0_73 = arith.constant 0 : index
    %134 = vector.load %arg6[%c0_72, %c0_73] : memref<128x128xf32, #tpu.memory_space<vmem>>, vector<128x128xf32>
    %cst_74 = arith.constant dense<0.000000e+00> : vector<8x128xf32>
    %135 = tpu.matmul %133, %134, %cst_74 {dimension_numbers = #tpu.dot_dimension_numbers<[1], [0], [0], [1], [0, 0, 1, 1], [], []>} : vector<8x128xf32>, vector<128x128xf32>, vector<8x128xf32> -> vector<8x128xf32>
    %c0_75 = arith.constant 0 : index
    %c0_76 = arith.constant 0 : index
    %136 = vector.load %arg7[%c0_75, %c0_76] : memref<1x128xf32, #tpu.memory_space<vmem>>, vector<1x128xf32>
    %137 = vector.broadcast %136 : vector<1x128xf32> to vector<8x128xf32>
    %138 = arith.addf %135, %137 : vector<8x128xf32>
    %c0_77 = arith.constant 0 : index
    %c0_78 = arith.constant 0 : index
    %139 = vector.load %arg8[%c0_77, %c0_78] : memref<8x128xf32, #tpu.memory_space<vmem>>, vector<8x128xf32>
    tpu.vector_store %arg8[%c0_77, %c0_78], %138 {strides = array<i32>} : memref<8x128xf32, #tpu.memory_space<vmem>>, vector<8x128xf32>,
    return
  }
  func.func @transform_0(%arg0: i32) -> (i32, i32, i32) {
    %c0_i32 = arith.constant 0 : i32
    %c0_i32_0 = arith.constant 0 : i32
    %c0_i32_1 = arith.constant 0 : i32
    return %c0_i32, %arg0, %c0_i32_0 : i32, i32, i32
  }
  func.func @transform_1(%arg0: i32) -> (i32, i32, i32) {
    %c0_i32 = arith.constant 0 : i32
    %c0_i32_0 = arith.constant 0 : i32
    %c0_i32_1 = arith.constant 0 : i32
    %c0_i32_2 = arith.constant 0 : i32
    return %c0_i32, %c0_i32_0, %c0_i32_1 : i32, i32, i32
  }
  func.func @transform_2(%arg0: i32) -> (i32, i32) {
    %c0_i32 = arith.constant 0 : i32
    %c0_i32_0 = arith.constant 0 : i32
    %c0_i32_1 = arith.constant 0 : i32
    return %c0_i32, %c0_i32_0 : i32, i32
  }
  func.func @transform_3(%arg0: i32) -> (i32, i32, i32) {
    %c0_i32 = arith.constant 0 : i32
    %c0_i32_0 = arith.constant 0 : i32
    %c0_i32_1 = arith.constant 0 : i32
    %c0_i32_2 = arith.constant 0 : i32
    return %c0_i32, %c0_i32_0, %c0_i32_1 : i32, i32, i32
  }
  func.func @transform_4(%arg0: i32) -> (i32, i32) {
    %c0_i32 = arith.constant 0 : i32
    %c0_i32_0 = arith.constant 0 : i32
    %c0_i32_1 = arith.constant 0 : i32
    return %c0_i32, %c0_i32_0 : i32, i32
  }
  func.func @transform_5(%arg0: i32) -> (i32, i32) {
    %c0_i32 = arith.constant 0 : i32
    %c0_i32_0 = arith.constant 0 : i32
    %c0_i32_1 = arith.constant 0 : i32
    return %c0_i32, %c0_i32_0 : i32, i32
  }
  func.func @transform_6(%arg0: i32) -> (i32, i32) {
    %c0_i32 = arith.constant 0 : i32
    %c0_i32_0 = arith.constant 0 : i32
    %c0_i32_1 = arith.constant 0 : i32
    return %c0_i32, %c0_i32_0 : i32, i32
  }
  func.func @transform_7(%arg0: i32) -> (i32, i32) {
    %c0_i32 = arith.constant 0 : i32
    %c0_i32_0 = arith.constant 0 : i32
    return %arg0, %c0_i32 : i32, i32
  }
}

</mosaic_0001>

<llo_original>
// kernel: model_forward.1
$region0: #{model_forward.1}
  #allocation0 [shape = 'u32[]', space=smem, size = 0x4, offset = 0x4, fixed_abs, tag = 'smem constant byte address 0x4 - core index']
  #allocation1 [shape = 'u32[144,128]{1,0:T(1,128)}', space=vmem, size = 0x12000, scoped, tag = 'internal scratch']
  %s0 = inlined_call_operand.vmem [shape: f32[32,8,128], index: 0, kind: input, shape index: {}]
  %s1 = inlined_call_operand.vmem [shape: f32[5,128,768], index: 1, kind: input, shape index: {}]
  %s2 = inlined_call_operand.vmem [shape: f32[1,768], index: 2, kind: input, shape index: {}]
  %s3 = inlined_call_operand.vmem [shape: f32[14,384,128], index: 3, kind: input, shape index: {}]
  %s4 = inlined_call_operand.vmem [shape: f32[1,128], index: 4, kind: input, shape index: {}]
  %s5 = inlined_call_operand.vmem [shape: f32[128,128], index: 5, kind: input, shape index: {}]
  %s6 = inlined_call_operand.vmem [shape: f32[1,128], index: 6, kind: input, shape index: {}]
  %s7 = inlined_call_operand.vmem [shape: f32[8,128], index: 7, kind: output, shape index: {}]
  %s8 = sld [smem:[#allocation0]]
  $region38: #{model_forward.1} parent=0
    _
  %s10 = ssub.s32 1, %s8
  %s11 = scalar_select 0, %s10, %s8
  // Predicated region
  $region2: #{model_forward.1} parent=0 // pred_check
    _
  $region3: #{model_forward.1} parent=0 // pred_check_branch
    %13 = sbr.rel (0) target = $region5
  $region4: #{model_forward.1} parent=0 // pred_region
    _
  $region5: #{model_forward.1} parent=0 // pred_fallthru
    _
  // Predicated region
  $region6: #{model_forward.1} parent=0 // pred_check
    _
  $region7: #{model_forward.1} parent=0 // pred_check_branch
    %15 = sbr.rel (0) target = $region9
  $region8: #{model_forward.1} parent=0 // pred_region
    _
  $region9: #{model_forward.1} parent=0 // pred_fallthru
    _
  // Predicated region
  $region10: #{model_forward.1} parent=0 // pred_check
    _
  $region11: #{model_forward.1} parent=0 // pred_check_branch
    %17 = sbr.rel (0) target = $region13
  $region12: #{model_forward.1} parent=0 // pred_region
    _
  $region13: #{model_forward.1} parent=0 // pred_fallthru
    _
  // Predicated region
  $region14: #{model_forward.1} parent=0 // pred_check
    _
  $region15: #{model_forward.1} parent=0 // pred_check_branch
    %19 = sbr.rel (0) target = $region17
  $region16: #{model_forward.1} parent=0 // pred_region
    _
  $region17: #{model_forward.1} parent=0 // pred_fallthru
    _
  // Predicated region
  $region18: #{model_forward.1} parent=0 // pred_check
    _
  $region19: #{model_forward.1} parent=0 // pred_check_branch
    %21 = sbr.rel (0) target = $region21
  $region20: #{model_forward.1} parent=0 // pred_region
    _
  $region21: #{model_forward.1} parent=0 // pred_fallthru
    _
  // Predicated region
  $region22: #{model_forward.1} parent=0 // pred_check
    _
  $region23: #{model_forward.1} parent=0 // pred_check_branch
    %23 = sbr.rel (0) target = $region25
  $region24: #{model_forward.1} parent=0 // pred_region
    _
  $region25: #{model_forward.1} parent=0 // pred_fallthru
    _
  // Predicated region
  $region26: #{model_forward.1} parent=0 // pred_check
    _
  $region27: #{model_forward.1} parent=0 // pred_check_branch
    %25 = sbr.rel (0) target = $region29
  $region28: #{model_forward.1} parent=0 // pred_region
    _
  $region29: #{model_forward.1} parent=0 // pred_fallthru
    _
  %v26 = vld [vmem:[%s0] sm:$0xff]
  %v27 = vld [vmem:[%s0 + $0x8] sm:$0xff]
  %v28 = vld [vmem:[%s0 + $0x10] sm:$0xff]
  %v29 = vld [vmem:[%s0 + $0x18] sm:$0xff]
  %v30 = vld [vmem:[%s0 + $0x20] sm:$0xff]
  %v31 = vld [vmem:[%s0 + $0x28] sm:$0xff]
  %v32 = vld [vmem:[%s0 + $0x30] sm:$0xff]
  %v33 = vld [vmem:[%s0 + $0x38] sm:$0xff]
  %v34 = vld [vmem:[%s0 + $0x40] sm:$0xff]
  %v35 = vld [vmem:[%s0 + $0x48] sm:$0xff]
  %v36 = vld [vmem:[%s0 + $0x50] sm:$0xff]
  %v37 = vld [vmem:[%s0 + $0x58] sm:$0xff]
  %v38 = vld [vmem:[%s0 + $0x60] sm:$0xff]
  %v39 = vld [vmem:[%s0 + $0x68] sm:$0xff]
  %v40 = vld [vmem:[%s0 + $0x70] sm:$0xff]
  %v41 = vld [vmem:[%s0 + $0x78] sm:$0xff]
  %v42 = vld [vmem:[%s0 + $0x80] sm:$0xff]
  %v43 = vld [vmem:[%s0 + $0x88] sm:$0xff]
  %v44 = vld [vmem:[%s0 + $0x90] sm:$0xff]
  %v45 = vld [vmem:[%s0 + $0x98] sm:$0xff]
  %v46 = vld [vmem:[%s0 + $0xa0] sm:$0xff]
  %v47 = vld [vmem:[%s0 + $0xa8] sm:$0xff]
  %v48 = vld [vmem:[%s0 + $0xb0] sm:$0xff]
  %v49 = vld [vmem:[%s0 + $0xb8] sm:$0xff]
  %v50 = vld [vmem:[%s0 + $0xc0] sm:$0xff]
  %v51 = vld [vmem:[%s0 + $0xc8] sm:$0xff]
  %v52 = vld [vmem:[%s0 + $0xd0] sm:$0xff]
  %v53 = vld [vmem:[%s0 + $0xd8] sm:$0xff]
  %v54 = vld [vmem:[%s0 + $0xe0] sm:$0xff]
  %v55 = vld [vmem:[%s0 + $0xe8] sm:$0xff]
  %v56 = vld [vmem:[%s0 + $0xf0] sm:$0xff]
  %v57 = vld [vmem:[%s0 + $0xf8] sm:$0xff]
  %v58 = vld [vmem:[%s1] sm:$0xff]
  %v59 = vld [vmem:[%s1 + $0x8] sm:$0xff]
  %v60 = vld [vmem:[%s1 + $0x10] sm:$0xff]
  %v61 = vld [vmem:[%s1 + $0x18] sm:$0xff]
  %v62 = vld [vmem:[%s1 + $0x20] sm:$0xff]
  %v63 = vld [vmem:[%s1 + $0x28] sm:$0xff]
  %v64 = vld [vmem:[%s1 + $0x30] sm:$0xff]
  %v65 = vld [vmem:[%s1 + $0x38] sm:$0xff]
  %v66 = vld [vmem:[%s1 + $0x40] sm:$0xff]
  %v67 = vld [vmem:[%s1 + $0x48] sm:$0xff]
  %v68 = vld [vmem:[%s1 + $0x50] sm:$0xff]
  %v69 = vld [vmem:[%s1 + $0x58] sm:$0xff]
  %v70 = vld [vmem:[%s1 + $0x60] sm:$0xff]
  %v71 = vld [vmem:[%s1 + $0x68] sm:$0xff]
  %v72 = vld [vmem:[%s1 + $0x70] sm:$0xff]
  %v73 = vld [vmem:[%s1 + $0x78] sm:$0xff]
  %v74 = vld [vmem:[%s1 + $0x80] sm:$0xff]
  %v75 = vld [vmem:[%s1 + $0x88] sm:$0xff]
  %v76 = vld [vmem:[%s1 + $0x90] sm:$0xff]
  %v77 = vld [vmem:[%s1 + $0x98] sm:$0xff]
  %v78 = vld [vmem:[%s1 + $0xa0] sm:$0xff]
  %v79 = vld [vmem:[%s1 + $0xa8] sm:$0xff]
  %v80 = vld [vmem:[%s1 + $0xb0] sm:$0xff]
  %v81 = vld [vmem:[%s1 + $0xb8] sm:$0xff]
  %v82 = vld [vmem:[%s1 + $0xc0] sm:$0xff]
  %v83 = vld [vmem:[%s1 + $0xc8] sm:$0xff]
  %v84 = vld [vmem:[%s1 + $0xd0] sm:$0xff]
  %v85 = vld [vmem:[%s1 + $0xd8] sm:$0xff]
  %v86 = vld [vmem:[%s1 + $0xe0] sm:$0xff]
  %v87 = vld [vmem:[%s1 + $0xe8] sm:$0xff]
  %v88 = vld [vmem:[%s1 + $0xf0] sm:$0xff]
  %v89 = vld [vmem:[%s1 + $0xf8] sm:$0xff]
  %v90 = vld [vmem:[%s1 + $0x100] sm:$0xff]
  %v91 = vld [vmem:[%s1 + $0x108] sm:$0xff]
  %v92 = vld [vmem:[%s1 + $0x110] sm:$0xff]
  %v93 = vld [vmem:[%s1 + $0x118] sm:$0xff]
  %v94 = vld [vmem:[%s1 + $0x120] sm:$0xff]
  %v95 = vld [vmem:[%s1 + $0x128] sm:$0xff]
  %v96 = vld [vmem:[%s1 + $0x130] sm:$0xff]
  %v97 = vld [vmem:[%s1 + $0x138] sm:$0xff]
  %v98 = vld [vmem:[%s1 + $0x140] sm:$0xff]
  %v99 = vld [vmem:[%s1 + $0x148] sm:$0xff]
  %v100 = vld [vmem:[%s1 + $0x150] sm:$0xff]
  %v101 = vld [vmem:[%s1 + $0x158] sm:$0xff]
  %v102 = vld [vmem:[%s1 + $0x160] sm:$0xff]
  %v103 = vld [vmem:[%s1 + $0x168] sm:$0xff]
  %v104 = vld [vmem:[%s1 + $0x170] sm:$0xff]
  %v105 = vld [vmem:[%s1 + $0x178] sm:$0xff]
  %v106 = vld [vmem:[%s1 + $0x180] sm:$0xff]
  %v107 = vld [vmem:[%s1 + $0x188] sm:$0xff]
  %v108 = vld [vmem:[%s1 + $0x190] sm:$0xff]
  %v109 = vld [vmem:[%s1 + $0x198] sm:$0xff]
  %v110 = vld [vmem:[%s1 + $0x1a0] sm:$0xff]
  %v111 = vld [vmem:[%s1 + $0x1a8] sm:$0xff]
  %v112 = vld [vmem:[%s1 + $0x1b0] sm:$0xff]
  %v113 = vld [vmem:[%s1 + $0x1b8] sm:$0xff]
  %v114 = vld [vmem:[%s1 + $0x1c0] sm:$0xff]
  %v115 = vld [vmem:[%s1 + $0x1c8] sm:$0xff]
  %v116 = vld [vmem:[%s1 + $0x1d0] sm:$0xff]
  %v117 = vld [vmem:[%s1 + $0x1d8] sm:$0xff]
  %v118 = vld [vmem:[%s1 + $0x1e0] sm:$0xff]
  %v119 = vld [vmem:[%s1 + $0x1e8] sm:$0xff]
  %v120 = vld [vmem:[%s1 + $0x1f0] sm:$0xff]
  %v121 = vld [vmem:[%s1 + $0x1f8] sm:$0xff]
  %v122 = vld [vmem:[%s1 + $0x200] sm:$0xff]
  %v123 = vld [vmem:[%s1 + $0x208] sm:$0xff]
  %v124 = vld [vmem:[%s1 + $0x210] sm:$0xff]
  %v125 = vld [vmem:[%s1 + $0x218] sm:$0xff]
  %v126 = vld [vmem:[%s1 + $0x220] sm:$0xff]
  %v127 = vld [vmem:[%s1 + $0x228] sm:$0xff]
  %v128 = vld [vmem:[%s1 + $0x230] sm:$0xff]
  %v129 = vld [vmem:[%s1 + $0x238] sm:$0xff]
  %v130 = vld [vmem:[%s1 + $0x240] sm:$0xff]
  %v131 = vld [vmem:[%s1 + $0x248] sm:$0xff]
  %v132 = vld [vmem:[%s1 + $0x250] sm:$0xff]
  %v133 = vld [vmem:[%s1 + $0x258] sm:$0xff]
  %v134 = vld [vmem:[%s1 + $0x260] sm:$0xff]
  %v135 = vld [vmem:[%s1 + $0x268] sm:$0xff]
  %v136 = vld [vmem:[%s1 + $0x270] sm:$0xff]
  %v137 = vld [vmem:[%s1 + $0x278] sm:$0xff]
  %v138 = vld [vmem:[%s1 + $0x280] sm:$0xff]
  %v139 = vld [vmem:[%s1 + $0x288] sm:$0xff]
  %v140 = vld [vmem:[%s1 + $0x290] sm:$0xff]
  %v141 = vld [vmem:[%s1 + $0x298] sm:$0xff]
  %v142 = vld [vmem:[%s1 + $0x2a0] sm:$0xff]
  %v143 = vld [vmem:[%s1 + $0x2a8] sm:$0xff]
  %v144 = vld [vmem:[%s1 + $0x2b0] sm:$0xff]
  %v145 = vld [vmem:[%s1 + $0x2b8] sm:$0xff]
  %v146 = vld [vmem:[%s1 + $0x2c0] sm:$0xff]
  %v147 = vld [vmem:[%s1 + $0x2c8] sm:$0xff]
  %v148 = vld [vmem:[%s1 + $0x2d0] sm:$0xff]
  %v149 = vld [vmem:[%s1 + $0x2d8] sm:$0xff]
  %v150 = vld [vmem:[%s1 + $0x2e0] sm:$0xff]
  %v151 = vld [vmem:[%s1 + $0x2e8] sm:$0xff]
  %v152 = vld [vmem:[%s1 + $0x2f0] sm:$0xff]
  %v153 = vld [vmem:[%s1 + $0x2f8] sm:$0xff]
  %s154 = scalar_lea.vmem %s1, 768
  %v155 = vld [vmem:[%s154] sm:$0xff]
  %v156 = vld [vmem:[%s154 + $0x8] sm:$0xff]
  %v157 = vld [vmem:[%s154 + $0x10] sm:$0xff]
  %v158 = vld [vmem:[%s154 + $0x18] sm:$0xff]
  %v159 = vld [vmem:[%s154 + $0x20] sm:$0xff]
  %v160 = vld [vmem:[%s154 + $0x28] sm:$0xff]
  %v161 = vld [vmem:[%s154 + $0x30] sm:$0xff]
  %v162 = vld [vmem:[%s154 + $0x38] sm:$0xff]
  %v163 = vld [vmem:[%s154 + $0x40] sm:$0xff]
  %v164 = vld [vmem:[%s154 + $0x48] sm:$0xff]
  %v165 = vld [vmem:[%s154 + $0x50] sm:$0xff]
  %v166 = vld [vmem:[%s154 + $0x58] sm:$0xff]
  %v167 = vld [vmem:[%s154 + $0x60] sm:$0xff]
  %v168 = vld [vmem:[%s154 + $0x68] sm:$0xff]
  %v169 = vld [vmem:[%s154 + $0x70] sm:$0xff]
  %v170 = vld [vmem:[%s154 + $0x78] sm:$0xff]
  %v171 = vld [vmem:[%s154 + $0x80] sm:$0xff]
  %v172 = vld [vmem:[%s154 + $0x88] sm:$0xff]
  %v173 = vld [vmem:[%s154 + $0x90] sm:$0xff]
  %v174 = vld [vmem:[%s154 + $0x98] sm:$0xff]
  %v175 = vld [vmem:[%s154 + $0xa0] sm:$0xff]
  %v176 = vld [vmem:[%s154 + $0xa8] sm:$0xff]
  %v177 = vld [vmem:[%s154 + $0xb0] sm:$0xff]
  %v178 = vld [vmem:[%s154 + $0xb8] sm:$0xff]
  %v179 = vld [vmem:[%s154 + $0xc0] sm:$0xff]
  %v180 = vld [vmem:[%s154 + $0xc8] sm:$0xff]
  %v181 = vld [vmem:[%s154 + $0xd0] sm:$0xff]
  %v182 = vld [vmem:[%s154 + $0xd8] sm:$0xff]
  %v183 = vld [vmem:[%s154 + $0xe0] sm:$0xff]
  %v184 = vld [vmem:[%s154 + $0xe8] sm:$0xff]
  %v185 = vld [vmem:[%s154 + $0xf0] sm:$0xff]
  %v186 = vld [vmem:[%s154 + $0xf8] sm:$0xff]
  %v187 = vld [vmem:[%s154 + $0x100] sm:$0xff]
  %v188 = vld [vmem:[%s154 + $0x108] sm:$0xff]
  %v189 = vld [vmem:[%s154 + $0x110] sm:$0xff]
  %v190 = vld [vmem:[%s154 + $0x118] sm:$0xff]
  %v191 = vld [vmem:[%s154 + $0x120] sm:$0xff]
  %v192 = vld [vmem:[%s154 + $0x128] sm:$0xff]
  %v193 = vld [vmem:[%s154 + $0x130] sm:$0xff]
  %v194 = vld [vmem:[%s154 + $0x138] sm:$0xff]
  %v195 = vld [vmem:[%s154 + $0x140] sm:$0xff]
  %v196 = vld [vmem:[%s154 + $0x148] sm:$0xff]
  %v197 = vld [vmem:[%s154 + $0x150] sm:$0xff]
  %v198 = vld [vmem:[%s154 + $0x158] sm:$0xff]
  %v199 = vld [vmem:[%s154 + $0x160] sm:$0xff]
  %v200 = vld [vmem:[%s154 + $0x168] sm:$0xff]
  %v201 = vld [vmem:[%s154 + $0x170] sm:$0xff]
  %v202 = vld [vmem:[%s154 + $0x178] sm:$0xff]
  %v203 = vld [vmem:[%s154 + $0x180] sm:$0xff]
  %v204 = vld [vmem:[%s154 + $0x188] sm:$0xff]
  %v205 = vld [vmem:[%s154 + $0x190] sm:$0xff]
  %v206 = vld [vmem:[%s154 + $0x198] sm:$0xff]
  %v207 = vld [vmem:[%s154 + $0x1a0] sm:$0xff]
  %v208 = vld [vmem:[%s154 + $0x1a8] sm:$0xff]
  %v209 = vld [vmem:[%s154 + $0x1b0] sm:$0xff]
  %v210 = vld [vmem:[%s154 + $0x1b8] sm:$0xff]
  %v211 = vld [vmem:[%s154 + $0x1c0] sm:$0xff]
  %v212 = vld [vmem:[%s154 + $0x1c8] sm:$0xff]
  %v213 = vld [vmem:[%s154 + $0x1d0] sm:$0xff]
  %v214 = vld [vmem:[%s154 + $0x1d8] sm:$0xff]
  %v215 = vld [vmem:[%s154 + $0x1e0] sm:$0xff]
  %v216 = vld [vmem:[%s154 + $0x1e8] sm:$0xff]
  %v217 = vld [vmem:[%s154 + $0x1f0] sm:$0xff]
  %v218 = vld [vmem:[%s154 + $0x1f8] sm:$0xff]
  %v219 = vld [vmem:[%s154 + $0x200] sm:$0xff]
  %v220 = vld [vmem:[%s154 + $0x208] sm:$0xff]
  %v221 = vld [vmem:[%s154 + $0x210] sm:$0xff]
  %v222 = vld [vmem:[%s154 + $0x218] sm:$0xff]
  %v223 = vld [vmem:[%s154 + $0x220] sm:$0xff]
  %v224 = vld [vmem:[%s154 + $0x228] sm:$0xff]
  %v225 = vld [vmem:[%s154 + $0x230] sm:$0xff]
  %v226 = vld [vmem:[%s154 + $0x238] sm:$0xff]
  %v227 = vld [vmem:[%s154 + $0x240] sm:$0xff]
  %v228 = vld [vmem:[%s154 + $0x248] sm:$0xff]
  %v229 = vld [vmem:[%s154 + $0x250] sm:$0xff]
  %v230 = vld [vmem:[%s154 + $0x258] sm:$0xff]
  %v231 = vld [vmem:[%s154 + $0x260] sm:$0xff]
  %v232 = vld [vmem:[%s154 + $0x268] sm:$0xff]
  %v233 = vld [vmem:[%s154 + $0x270] sm:$0xff]
  %v234 = vld [vmem:[%s154 + $0x278] sm:$0xff]
  %v235 = vld [vmem:[%s154 + $0x280] sm:$0xff]
  %v236 = vld [vmem:[%s154 + $0x288] sm:$0xff]
  %v237 = vld [vmem:[%s154 + $0x290] sm:$0xff]
  %v238 = vld [vmem:[%s154 + $0x298] sm:$0xff]
  %v239 = vld [vmem:[%s154 + $0x2a0] sm:$0xff]
  %v240 = vld [vmem:[%s154 + $0x2a8] sm:$0xff]
  %v241 = vld [vmem:[%s154 + $0x2b0] sm:$0xff]
  %v242 = vld [vmem:[%s154 + $0x2b8] sm:$0xff]
  %v243 = vld [vmem:[%s154 + $0x2c0] sm:$0xff]
  %v244 = vld [vmem:[%s154 + $0x2c8] sm:$0xff]
  %v245 = vld [vmem:[%s154 + $0x2d0] sm:$0xff]
  %v246 = vld [vmem:[%s154 + $0x2d8] sm:$0xff]
  %v247 = vld [vmem:[%s154 + $0x2e0] sm:$0xff]
  %v248 = vld [vmem:[%s154 + $0x2e8] sm:$0xff]
  %v249 = vld [vmem:[%s154 + $0x2f0] sm:$0xff]
  %v250 = vld [vmem:[%s154 + $0x2f8] sm:$0xff]
  %251 = vmatprep.subr.mxu0 %v156
  %252 = vmatpush1.msra.mxu0 %v155
  %253 = vmatprep.subr.mxu0 %v162
  %254 = vmatpush1.msra.mxu0 %v161
  %255 = vmatprep.subr.mxu0 %v168
  %256 = vmatpush1.msra.mxu0 %v167
  %257 = vmatprep.subr.mxu0 %v174
  %258 = vmatpush1.msra.mxu0 %v173
  %259 = vmatprep.subr.mxu0 %v180
  %260 = vmatpush1.msra.mxu0 %v179
  %261 = vmatprep.subr.mxu0 %v186
  %262 = vmatpush1.msra.mxu0 %v185
  %263 = vmatprep.subr.mxu0 %v192
  %264 = vmatpush1.msra.mxu0 %v191
  %265 = vmatprep.subr.mxu0 %v198
  %266 = vmatpush1.msra.mxu0 %v197
  %267 = vmatprep.subr.mxu0 %v204
  %268 = vmatpush1.msra.mxu0 %v203
  %269 = vmatprep.subr.mxu0 %v210
  %270 = vmatpush1.msra.mxu0 %v209
  %271 = vmatprep.subr.mxu0 %v216
  %272 = vmatpush1.msra.mxu0 %v215
  %273 = vmatprep.subr.mxu0 %v222
  %274 = vmatpush1.msra.mxu0 %v221
  %275 = vmatprep.subr.mxu0 %v228
  %276 = vmatpush1.msra.mxu0 %v227
  %277 = vmatprep.subr.mxu0 %v234
  %278 = vmatpush1.msra.mxu0 %v233
  %279 = vmatprep.subr.mxu0 %v240
  %280 = vmatpush1.msra.mxu0 %v239
  %281 = vmatprep.subr.mxu0 %v246
  %282 = vmatpush1.msra.mxu0 %v245
  %283 = vmatprep.subr.mxu0 0.0
  %284 = vmatpush1.msra.mxu0 0.0
  %285 = vmatprep.subr.mxu0 0.0
  %286 = vmatpush1.msra.mxu0 0.0
  %287 = vmatprep.subr.mxu0 0.0
  %288 = vmatpush1.msra.mxu0 0.0
  %289 = vmatprep.subr.mxu0 0.0
  %290 = vmatpush1.msra.mxu0 0.0
  %291 = vmatprep.subr.mxu0 0.0
  %292 = vmatpush1.msra.mxu0 0.0
  %293 = vmatprep.subr.mxu0 0.0
  %294 = vmatpush1.msra.mxu0 0.0
  %295 = vmatprep.subr.mxu0 0.0
  %296 = vmatpush1.msra.mxu0 0.0
  %297 = vmatprep.subr.mxu0 0.0
  %298 = vmatpush1.msra.mxu0 0.0
  %299 = vmatprep.subr.mxu0 0.0
  %300 = vmatpush1.msra.mxu0 0.0
  %301 = vmatprep.subr.mxu0 0.0
  %302 = vmatpush1.msra.mxu0 0.0
  %303 = vmatprep.subr.mxu0 0.0
  %304 = vmatpush1.msra.mxu0 0.0
  %305 = vmatprep.subr.mxu0 0.0
  %306 = vmatpush1.msra.mxu0 0.0
  %307 = vmatprep.subr.mxu0 0.0
  %308 = vmatpush1.msra.mxu0 0.0
  %309 = vmatprep.subr.mxu0 0.0
  %310 = vmatpush1.msra.mxu0 0.0
  %311 = vmatprep.subr.mxu0 0.0
  %312 = vmatpush1.msra.mxu0 0.0
  %313 = vmatprep.subr.mxu0 0.0
  %314 = vmatpush1.msra.mxu0 0.0
  %315 = vmatprep.mubr.f32.mxu0 0.0
  %316 = vmatmul.mubr.f32.gmra.mrb[0].mxu0 %v27
  %v317 = vpop.f32.mrb[0].mxu0
  %v318 = vadd.f32 0.0, %v317
  %v319 = vpop.f32.mrb[0].mxu0
  %v320 = vadd.f32 0.0, %v319
  %321 = vmatprep.mubr.f32.mxu0 0.0
  %322 = vmatmul.mubr.f32.gmra.mrb[0].mxu0 %v28
  %v323 = vpop.f32.mrb[0].mxu0
  %v324 = vadd.f32 0.0, %v323
  %v325 = vpop.f32.mrb[0].mxu0
  %v326 = vadd.f32 0.0, %v325
  %327 = vmatprep.mubr.f32.mxu0 0.0
  %328 = vmatmul.mubr.f32.gmra.mrb[0].mxu0 %v29
  %v329 = vpop.f32.mrb[0].mxu0
  %v330 = vadd.f32 0.0, %v329
  %v331 = vpop.f32.mrb[0].mxu0
  %v332 = vadd.f32 0.0, %v331
  %333 = vmatprep.mubr.f32.mxu0 0.0
  %334 = vmatmul.mubr.f32.gmra.mrb[0].mxu0 %v30
  %v335 = vpop.f32.mrb[0].mxu0
  %v336 = vadd.f32 0.0, %v335
  %v337 = vpop.f32.mrb[0].mxu0
  %v338 = vadd.f32 0.0, %v337
  %339 = vmatprep.mubr.f32.mxu0 0.0
  %340 = vmatmul.mubr.f32.gmra.mrb[0].mxu0 %v31
  %v341 = vpop.f32.mrb[0].mxu0
  %v342 = vadd.f32 0.0, %v341
  %v343 = vpop.f32.mrb[0].mxu0
  %v344 = vadd.f32 0.0, %v343
  %345 = vmatprep.mubr.f32.mxu0 0.0
  %346 = vmatmul.mubr.f32.gmra.mrb[0].mxu0 %v32
  %v347 = vpop.f32.mrb[0].mxu0
  %v348 = vadd.f32 0.0, %v347
  %v349 = vpop.f32.mrb[0].mxu0
  %v350 = vadd.f32 0.0, %v349
  %351 = vmatprep.mubr.f32.mxu0 0.0
  %352 = vmatmul.mubr.f32.gmra.mrb[0].mxu0 %v33
  %v353 = vpop.f32.mrb[0].mxu0
  %v354 = vadd.f32 0.0, %v353
  %v355 = vpop.f32.mrb[0].mxu0
  %v356 = vadd.f32 0.0, %v355
  %357 = vmatprep.mubr.f32.mxu0 0.0
  %358 = vmatmul.mubr.f32.gmra.mrb[0].mxu0 %v34
  %v359 = vpop.f32.mrb[0].mxu0
  %v360 = vadd.f32 0.0, %v359
  %v361 = vpop.f32.mrb[0].mxu0
  %v362 = vadd.f32 0.0, %v361
  %363 = vmatprep.mubr.f32.mxu0 0.0
  %364 = vmatmul.mubr.f32.gmra.mrb[0].mxu0 %v35
  %v365 = vpop.f32.mrb[0].mxu0
  %v366 = vadd.f32 0.0, %v365
  %v367 = vpop.f32.mrb[0].mxu0
  %v368 = vadd.f32 0.0, %v367
  %369 = vmatprep.mubr.f32.mxu0 0.0
  %370 = vmatmul.mubr.f32.gmra.mrb[0].mxu0 %v36
  %v371 = vpop.f32.mrb[0].mxu0
  %v372 = vadd.f32 0.0, %v371
  %v373 = vpop.f32.mrb[0].mxu0
  %v374 = vadd.f32 0.0, %v373
  %375 = vmatprep.mubr.f32.mxu0 0.0
  %376 = vmatmul.mubr.f32.gmra.mrb[0].mxu0 %v37
  %v377 = vpop.f32.mrb[0].mxu0
  %v378 = vadd.f32 0.0, %v377
  %v379 = vpop.f32.mrb[0].mxu0
  %v380 = vadd.f32 0.0, %v379
  %381 = vmatprep.mubr.f32.mxu0 0.0
  %382 = vmatmul.mubr.f32.gmra.mrb[0].mxu0 %v38
  %v383 = vpop.f32.mrb[0].mxu0
  %v384 = vadd.f32 0.0, %v383
  %v385 = vpop.f32.mrb[0].mxu0
  %v386 = vadd.f32 0.0, %v385
  %387 = vmatprep.mubr.f32.mxu0 0.0
  %388 = vmatmul.mubr.f32.gmra.mrb[0].mxu0 %v39
  %v389 = vpop.f32.mrb[0].mxu0
  %v390 = vadd.f32 0.0, %v389
  %v391 = vpop.f32.mrb[0].mxu0
  %v392 = vadd.f32 0.0, %v391
  %393 = vmatprep.mubr.f32.mxu0 0.0
  %394 = vmatmul.mubr.f32.gmra.mrb[0].mxu0 %v40
  %v395 = vpop.f32.mrb[0].mxu0
  %v396 = vadd.f32 0.0, %v395
  %v397 = vpop.f32.mrb[0].mxu0
  %v398 = vadd.f32 0.0, %v397
  %399 = vmatprep.mubr.f32.mxu0 0.0
  %400 = vmatmul.mubr.f32.gmra.mrb[0].mxu0 %v41
  %v401 = vpop.f32.mrb[0].mxu0
  %v402 = vadd.f32 0.0, %v401
  %v403 = vpop.f32.mrb[0].mxu0
  %v404 = vadd.f32 0.0, %v403
  %405 = vmatprep.mubr.f32.mxu0 0.0
  %406 = vmatmul.mubr.f32.gmra.mrb[0].mxu0 %v42
  %v407 = vpop.f32.mrb[0].mxu0
  %v408 = vadd.f32 0.0, %v407
  %v409 = vpop.f32.mrb[0].mxu0
  %v410 = vadd.f32 0.0, %v409
  %411 = vmatprep.mubr.f32.mxu0 0.0
  %412 = vmatmul.mubr.f32.gmra.mrb[0].mxu0 %v43
  %v413 = vpop.f32.mrb[0].mxu0
  %v414 = vadd.f32 0.0, %v413
  %v415 = vpop.f32.mrb[0].mxu0
  %v416 = vadd.f32 0.0, %v415
  %417 = vmatprep.mubr.f32.mxu0 0.0
  %418 = vmatmul.mubr.f32.gmra.mrb[0].mxu0 %v44
  %v419 = vpop.f32.mrb[0].mxu0
  %v420 = vadd.f32 0.0, %v419
  %v421 = vpop.f32.mrb[0].mxu0
  %v422 = vadd.f32 0.0, %v421
  %423 = vmatprep.mubr.f32.mxu0 0.0
  %424 = vmatmul.mubr.f32.gmra.mrb[0].mxu0 %v45
  %v425 = vpop.f32.mrb[0].mxu0
  %v426 = vadd.f32 0.0, %v425
  %v427 = vpop.f32.mrb[0].mxu0
  %v428 = vadd.f32 0.0, %v427
  %429 = vmatprep.mubr.f32.mxu0 0.0
  %430 = vmatmul.mubr.f32.gmra.mrb[0].mxu0 %v46
  %v431 = vpop.f32.mrb[0].mxu0
  %v432 = vadd.f32 0.0, %v431
  %v433 = vpop.f32.mrb[0].mxu0
  %v434 = vadd.f32 0.0, %v433
  %435 = vmatprep.mubr.f32.mxu0 0.0
  %436 = vmatmul.mubr.f32.gmra.mrb[0].mxu0 %v47
  %v437 = vpop.f32.mrb[0].mxu0
  %v438 = vadd.f32 0.0, %v437
  %v439 = vpop.f32.mrb[0].mxu0
  %v440 = vadd.f32 0.0, %v439
  %441 = vmatprep.mubr.f32.mxu0 0.0
  %442 = vmatmul.mubr.f32.gmra.mrb[0].mxu0 %v48
  %v443 = vpop.f32.mrb[0].mxu0
  %v444 = vadd.f32 0.0, %v443
  %v445 = vpop.f32.mrb[0].mxu0
  %v446 = vadd.f32 0.0, %v445
  %447 = vmatprep.mubr.f32.mxu0 0.0
  %448 = vmatmul.mubr.f32.gmra.mrb[0].mxu0 %v49
  %v449 = vpop.f32.mrb[0].mxu0
  %v450 = vadd.f32 0.0, %v449
  %v451 = vpop.f32.mrb[0].mxu0
  %v452 = vadd.f32 0.0, %v451
  %453 = vmatprep.mubr.f32.mxu0 0.0
  %454 = vmatmul.mubr.f32.gmra.mrb[0].mxu0 %v50
  %v455 = vpop.f32.mrb[0].mxu0
  %v456 = vadd.f32 0.0, %v455
  %v457 = vpop.f32.mrb[0].mxu0
  %v458 = vadd.f32 0.0, %v457
  %459 = vmatprep.mubr.f32.mxu0 0.0
  %460 = vmatmul.mubr.f32.gmra.mrb[0].mxu0 %v51
  %v461 = vpop.f32.mrb[0].mxu0
  %v462 = vadd.f32 0.0, %v461
  %v463 = vpop.f32.mrb[0].mxu0
  %v464 = vadd.f32 0.0, %v463
  %465 = vmatprep.mubr.f32.mxu0 0.0
  %466 = vmatmul.mubr.f32.gmra.mrb[0].mxu0 %v52
  %v467 = vpop.f32.mrb[0].mxu0
  %v468 = vadd.f32 0.0, %v467
  %v469 = vpop.f32.mrb[0].mxu0
  %v470 = vadd.f32 0.0, %v469
  %471 = vmatprep.mubr.f32.mxu0 0.0
  %472 = vmatmul.mubr.f32.gmra.mrb[0].mxu0 %v53
  %v473 = vpop.f32.mrb[0].mxu0
  %v474 = vadd.f32 0.0, %v473
  %v475 = vpop.f32.mrb[0].mxu0
  %v476 = vadd.f32 0.0, %v475
  %477 = vmatprep.mubr.f32.mxu0 0.0
  %478 = vmatmul.mubr.f32.gmra.mrb[0].mxu0 %v54
  %v479 = vpop.f32.mrb[0].mxu0
  %v480 = vadd.f32 0.0, %v479
  %v481 = vpop.f32.mrb[0].mxu0
  %v482 = vadd.f32 0.0, %v481
  %483 = vdwg.mxu0
  %484 = vmatprep.subr.mxu0 %v158
  %485 = vmatpush1.msra.mxu0 %v157
  %486 = vmatprep.subr.mxu0 %v164
  %487 = vmatpush1.msra.mxu0 %v163
  %488 = vmatprep.subr.mxu0 %v170
  %489 = vmatpush1.msra.mxu0 %v169
  %490 = vmatprep.subr.mxu0 %v176
  %491 = vmatpush1.msra.mxu0 %v175
  %492 = vmatprep.subr.mxu0 %v182
  %493 = vmatpush1.msra.mxu0 %v181
  %494 = vmatprep.subr.mxu0 %v188
  %495 = vmatpush1.msra.mxu0 %v187
  %496 = vmatprep.subr.mxu0 %v194
  %497 = vmatpush1.msra.mxu0 %v193
  %498 = vmatprep.subr.mxu0 %v200
  %499 = vmatpush1.msra.mxu0 %v199
  %500 = vmatprep.subr.mxu0 %v206
  %501 = vmatpush1.msra.mxu0 %v205
  %502 = vmatprep.subr.mxu0 %v212
  %503 = vmatpush1.msra.mxu0 %v211
  %504 = vmatprep.subr.mxu0 %v218
  %505 = vmatpush1.msra.mxu0 %v217
  %506 = vmatprep.subr.mxu0 %v224
  %507 = vmatpush1.msra.mxu0 %v223
  %508 = vmatprep.subr.mxu0 %v230
  %509 = vmatpush1.msra.mxu0 %v229
  %510 = vmatprep.subr.mxu0 %v236
  %511 = vmatpush1.msra.mxu0 %v235
  %512 = vmatprep.subr.mxu0 %v242
  %513 = vmatpush1.msra.mxu0 %v241
  %514 = vmatprep.subr.mxu0 %v248
  %515 = vmatpush1.msra.mxu0 %v247
  %516 = vmatprep.subr.mxu0 0.0
  %517 = vmatpush1.msra.mxu0 0.0
  %518 = vmatprep.subr.mxu0 0.0
  %519 = vmatpush1.msra.mxu0 0.0
  %520 = vmatprep.subr.mxu0 0.0
  %521 = vmatpush1.msra.mxu0 0.0
  %522 = vmatprep.subr.mxu0 0.0
  %523 = vmatpush1.msra.mxu0 0.0
  %524 = vmatprep.subr.mxu0 0.0
  %525 = vmatpush1.msra.mxu0 0.0
  %526 = vmatprep.subr.mxu0 0.0
  %527 = vmatpush1.msra.mxu0 0.0
  %528 = vmatprep.subr.mxu0 0.0
  %529 = vmatpush1.msra.mxu0 0.0
  %530 = vmatprep.subr.mxu0 0.0
  %531 = vmatpush1.msra.mxu0 0.0
  %532 = vmatprep.subr.mxu0 0.0
  %533 = vmatpush1.msra.mxu0 0.0
  %534 = vmatprep.subr.mxu0 0.0
  %535 = vmatpush1.msra.mxu0 0.0
  %536 = vmatprep.subr.mxu0 0.0
  %537 = vmatpush1.msra.mxu0 0.0
  %538 = vmatprep.subr.mxu0 0.0
  %539 = vmatpush1.msra.mxu0 0.0
  %540 = vmatprep.subr.mxu0 0.0
  %541 = vmatpush1.msra.mxu0 0.0
  %542 = vmatprep.subr.mxu0 0.0
  %543 = vmatpush1.msra.mxu0 0.0
  %544 = vmatprep.subr.mxu0 0.0
  %545 = vmatpush1.msra.mxu0 0.0
  %546 = vmatprep.subr.mxu0 0.0
  %547 = vmatpush1.msra.mxu0 0.0
  %548 = vmatprep.mubr.f32.mxu0 0.0
  %549 = vmatmul.mubr.f32.gmra.mrb[0].mxu0 %v27
  %v550 = vpop.f32.mrb[0].mxu0
  %v551 = vadd.f32 0.0, %v550
  %v552 = vpop.f32.mrb[0].mxu0
  %v553 = vadd.f32 0.0, %v552
  %554 = vmatprep.mubr.f32.mxu0 0.0
  %555 = vmatmul.mubr.f32.gmra.mrb[0].mxu0 %v28
  %v556 = vpop.f32.mrb[0].mxu0
  %v557 = vadd.f32 0.0, %v556
  %v558 = vpop.f32.mrb[0].mxu0
  %v559 = vadd.f32 0.0, %v558
  %560 = vmatprep.mubr.f32.mxu0 0.0
  %561 = vmatmul.mubr.f32.gmra.mrb[0].mxu0 %v29
  %v562 = vpop.f32.mrb[0].mxu0
  %v563 = vadd.f32 0.0, %v562
  %v564 = vpop.f32.mrb[0].mxu0
  %v565 = vadd.f32 0.0, %v564
  %566 = vmatprep.mubr.f32.mxu0 0.0
  %567 = vmatmul.mubr.f32.gmra.mrb[0].mxu0 %v30
  %v568 = vpop.f32.mrb[0].mxu0
  %v569 = vadd.f32 0.0, %v568
  %v570 = vpop.f32.mrb[0].mxu0
  %v571 = vadd.f32 0.0, %v570
  %572 = vmatprep.mubr.f32.mxu0 0.0
  %573 = vmatmul.mubr.f32.gmra.mrb[0].mxu0 %v31
  %v574 = vpop.f32.mrb[0].mxu0
  %v575 = vadd.f32 0.0, %v574
  %v576 = vpop.f32.mrb[0].mxu0
  %v577 = vadd.f32 0.0, %v576
  %578 = vmatprep.mubr.f32.mxu0 0.0
  %579 = vmatmul.mubr.f32.gmra.mrb[0].mxu0 %v32
  %v580 = vpop.f32.mrb[0].mxu0
  %v581 = vadd.f32 0.0, %v580
  %v582 = vpop.f32.mrb[0].mxu0
  %v583 = vadd.f32 0.0, %v582
  %584 = vmatprep.mubr.f32.mxu0 0.0
  %585 = vmatmul.mubr.f32.gmra.mrb[0].mxu0 %v33
  %v586 = vpop.f32.mrb[0].mxu0
  %v587 = vadd.f32 0.0, %v586
  %v588 = vpop.f32.mrb[0].mxu0
  %v589 = vadd.f32 0.0, %v588
  %590 = vmatprep.mubr.f32.mxu0 0.0
  %591 = vmatmul.mubr.f32.gmra.mrb[0].mxu0 %v34
  %v592 = vpop.f32.mrb[0].mxu0
  %v593 = vadd.f32 0.0, %v592
  %v594 = vpop.f32.mrb[0].mxu0
  %v595 = vadd.f32 0.0, %v594
  %596 = vmatprep.mubr.f32.mxu0 0.0
  %597 = vmatmul.mubr.f32.gmra.mrb[0].mxu0 %v35
  %v598 = vpop.f32.mrb[0].mxu0
  %v599 = vadd.f32 0.0, %v598
  %v600 = vpop.f32.mrb[0].mxu0
  %v601 = vadd.f32 0.0, %v600
  %602 = vmatprep.mubr.f32.mxu0 0.0
  %603 = vmatmul.mubr.f32.gmra.mrb[0].mxu0 %v36
  %v604 = vpop.f32.mrb[0].mxu0
  %v605 = vadd.f32 0.0, %v604
  %v606 = vpop.f32.mrb[0].mxu0
  %v607 = vadd.f32 0.0, %v606
  %608 = vmatprep.mubr.f32.mxu0 0.0
  %609 = vmatmul.mubr.f32.gmra.mrb[0].mxu0 %v37
  %v610 = vpop.f32.mrb[0].mxu0
  %v611 = vadd.f32 0.0, %v610
  %v612 = vpop.f32.mrb[0].mxu0
  %v613 = vadd.f32 0.0, %v612
  %614 = vmatprep.mubr.f32.mxu0 0.0
  %615 = vmatmul.mubr.f32.gmra.mrb[0].mxu0 %v38
  %v616 = vpop.f32.mrb[0].mxu0
  %v617 = vadd.f32 0.0, %v616
  %v618 = vpop.f32.mrb[0].mxu0
  %v619 = vadd.f32 0.0, %v618
  %620 = vmatprep.mubr.f32.mxu0 0.0
  %621 = vmatmul.mubr.f32.gmra.mrb[0].mxu0 %v39
  %v622 = vpop.f32.mrb[0].mxu0
  %v623 = vadd.f32 0.0, %v622
  %v624 = vpop.f32.mrb[0].mxu0
  %v625 = vadd.f32 0.0, %v624
  %626 = vmatprep.mubr.f32.mxu0 0.0
  %627 = vmatmul.mubr.f32.gmra.mrb[0].mxu0 %v40
  %v628 = vpop.f32.mrb[0].mxu0
  %v629 = vadd.f32 0.0, %v628
  %v630 = vpop.f32.mrb[0].mxu0
  %v631 = vadd.f32 0.0, %v630
  %632 = vmatprep.mubr.f32.mxu0 0.0
  %633 = vmatmul.mubr.f32.gmra.mrb[0].mxu0 %v41
  %v634 = vpop.f32.mrb[0].mxu0
  %v635 = vadd.f32 0.0, %v634
  %v636 = vpop.f32.mrb[0].mxu0
  %v637 = vadd.f32 0.0, %v636
  %638 = vmatprep.mubr.f32.mxu0 0.0
  %639 = vmatmul.mubr.f32.gmra.mrb[0].mxu0 %v42
  %v640 = vpop.f32.mrb[0].mxu0
  %v641 = vadd.f32 0.0, %v640
  %v642 = vpop.f32.mrb[0].mxu0
  %v643 = vadd.f32 0.0, %v642
  %644 = vmatprep.mubr.f32.mxu0 0.0
  %645 = vmatmul.mubr.f32.gmra.mrb[0].mxu0 %v43
  %v646 = vpop.f32.mrb[0].mxu0
  %v647 = vadd.f32 0.0, %v646
  %v648 = vpop.f32.mrb[0].mxu0
  %v649 = vadd.f32 0.0, %v648
  %650 = vmatprep.mubr.f32.mxu0 0.0
  %651 = vmatmul.mubr.f32.gmra.mrb[0].mxu0 %v44
  %v652 = vpop.f32.mrb[0].mxu0
  %v653 = vadd.f32 0.0, %v652
  %v654 = vpop.f32.mrb[0].mxu0
  %v655 = vadd.f32 0.0, %v654
  %656 = vmatprep.mubr.f32.mxu0 0.0
  %657 = vmatmul.mubr.f32.gmra.mrb[0].mxu0 %v45
  %v658 = vpop.f32.mrb[0].mxu0
  %v659 = vadd.f32 0.0, %v658
  %v660 = vpop.f32.mrb[0].mxu0
  %v661 = vadd.f32 0.0, %v660
  %662 = vmatprep.mubr.f32.mxu0 0.0
  %663 = vmatmul.mubr.f32.gmra.mrb[0].mxu0 %v46
  %v664 = vpop.f32.mrb[0].mxu0
  %v665 = vadd.f32 0.0, %v664
  %v666 = vpop.f32.mrb[0].mxu0
  %v667 = vadd.f32 0.0, %v666
  %668 = vmatprep.mubr.f32.mxu0 0.0
  %669 = vmatmul.mubr.f32.gmra.mrb[0].mxu0 %v47
  %v670 = vpop.f32.mrb[0].mxu0
  %v671 = vadd.f32 0.0, %v670
  %v672 = vpop.f32.mrb[0].mxu0
  %v673 = vadd.f32 0.0, %v672
  %674 = vmatprep.mubr.f32.mxu0 0.0
  %675 = vmatmul.mubr.f32.gmra.mrb[0].mxu0 %v48
  %v676 = vpop.f32.mrb[0].mxu0
  %v677 = vadd.f32 0.0, %v676
  %v678 = vpop.f32.mrb[0].mxu0
  %v679 = vadd.f32 0.0, %v678
  %680 = vmatprep.mubr.f32.mxu0 0.0
  %681 = vmatmul.mubr.f32.gmra.mrb[0].mxu0 %v49
  %v682 = vpop.f32.mrb[0].mxu0
  %v683 = vadd.f32 0.0, %v682
  %v684 = vpop.f32.mrb[0].mxu0
  %v685 = vadd.f32 0.0, %v684
  %686 = vmatprep.mubr.f32.mxu0 0.0
  %687 = vmatmul.mubr.f32.gmra.mrb[0].mxu0 %v50
  %v688 = vpop.f32.mrb[0].mxu0
  %v689 = vadd.f32 0.0, %v688
  %v690 = vpop.f32.mrb[0].mxu0
  %v691 = vadd.f32 0.0, %v690
  %692 = vmatprep.mubr.f32.mxu0 0.0
  %693 = vmatmul.mubr.f32.gmra.mrb[0].mxu0 %v51
  %v694 = vpop.f32.mrb[0].mxu0
  %v695 = vadd.f32 0.0, %v694
  %v696 = vpop.f32.mrb[0].mxu0
  %v697 = vadd.f32 0.0, %v696
  %698 = vmatprep.mubr.f32.mxu0 0.0
  %699 = vmatmul.mubr.f32.gmra.mrb[0].mxu0 %v52
  %v700 = vpop.f32.mrb[0].mxu0
  %v701 = vadd.f32 0.0, %v700
  %v702 = vpop.f32.mrb[0].mxu0
  %v703 = vadd.f32 0.0, %v702
  %704 = vmatprep.mubr.f32.mxu0 0.0
  %705 = vmatmul.mubr.f32.gmra.mrb[0].mxu0 %v53
  %v706 = vpop.f32.mrb[0].mxu0
  %v707 = vadd.f32 0.0, %v706
  %v708 = vpop.f32.mrb[0].mxu0
  %v709 = vadd.f32 0.0, %v708
  %710 = vmatprep.mubr.f32.mxu0 0.0
  %711 = vmatmul.mubr.f32.gmra.mrb[0].mxu0 %v54
  %v712 = vpop.f32.mrb[0].mxu0
  %v713 = vadd.f32 0.0, %v712
  %v714 = vpop.f32.mrb[0].mxu0
  %v715 = vadd.f32 0.0, %v714
  %716 = vdwg.mxu0
  %717 = vmatprep.subr.mxu0 %v160
  %718 = vmatpush1.msra.mxu0 %v159
  %719 = vmatprep.subr.mxu0 %v166
  %720 = vmatpush1.msra.mxu0 %v165
  %721 = vmatprep.subr.mxu0 %v172
  %722 = vmatpush1.msra.mxu0 %v171
  %723 = vmatprep.subr.mxu0 %v178
  %724 = vmatpush1.msra.mxu0 %v177
  %725 = vmatprep.subr.mxu0 %v184
  %726 = vmatpush1.msra.mxu0 %v183
  %727 = vmatprep.subr.mxu0 %v190
  %728 = vmatpush1.msra.mxu0 %v189
  %729 = vmatprep.subr.mxu0 %v196
  %730 = vmatpush1.msra.mxu0 %v195
  %731 = vmatprep.subr.mxu0 %v202
  %732 = vmatpush1.msra.mxu0 %v201
  %733 = vmatprep.subr.mxu0 %v208
  %734 = vmatpush1.msra.mxu0 %v207
  %735 = vmatprep.subr.mxu0 %v214
  %736 = vmatpush1.msra.mxu0 %v213
  %737 = vmatprep.subr.mxu0 %v220
  %738 = vmatpush1.msra.mxu0 %v219
  %739 = vmatprep.subr.mxu0 %v226
  %740 = vmatpush1.msra.mxu0 %v225
  %741 = vmatprep.subr.mxu0 %v232
  %742 = vmatpush1.msra.mxu0 %v231
  %743 = vmatprep.subr.mxu0 %v238
  %744 = vmatpush1.msra.mxu0 %v237
  %745 = vmatprep.subr.mxu0 %v244
  %746 = vmatpush1.msra.mxu0 %v243
  %747 = vmatprep.subr.mxu0 %v250
  %748 = vmatpush1.msra.mxu0 %v249
  %749 = vmatprep.subr.mxu0 0.0
  %750 = vmatpush1.msra.mxu0 0.0
  %751 = vmatprep.subr.mxu0 0.0
  %752 = vmatpush1.msra.mxu0 0.0
  %753 = vmatprep.subr.mxu0 0.0
  %754 = vmatpush1.msra.mxu0 0.0
  %755 = vmatprep.subr.mxu0 0.0
  %756 = vmatpush1.msra.mxu0 0.0
  %757 = vmatprep.subr.mxu0 0.0
  %758 = vmatpush1.msra.mxu0 0.0
  %759 = vmatprep.subr.mxu0 0.0
  %760 = vmatpush1.msra.mxu0 0.0
  %761 = vmatprep.subr.mxu0 0.0
  %762 = vmatpush1.msra.mxu0 0.0
  %763 = vmatprep.subr.mxu0 0.0
  %764 = vmatpush1.msra.mxu0 0.0
  %765 = vmatprep.subr.mxu0 0.0
  %766 = vmatpush1.msra.mxu0 0.0
  %767 = vmatprep.subr.mxu0 0.0
  %768 = vmatpush1.msra.mxu0 0.0
  %769 = vmatprep.subr.mxu0 0.0
  %770 = vmatpush1.msra.mxu0 0.0
  %771 = vmatprep.subr.mxu0 0.0
  %772 = vmatpush1.msra.mxu0 0.0
  %773 = vmatprep.subr.mxu0 0.0
  %774 = vmatpush1.msra.mxu0 0.0
  %775 = vmatprep.subr.mxu0 0.0
  %776 = vmatpush1.msra.mxu0 0.0
  %777 = vmatprep.subr.mxu0 0.0
  %778 = vmatpush1.msra.mxu0 0.0
  %779 = vmatprep.subr.mxu0 0.0
  %780 = vmatpush1.msra.mxu0 0.0
  %781 = vmatprep.mubr.f32.mxu0 0.0
  %782 = vmatmul.mubr.f32.gmra.mrb[0].mxu0 %v27
  %v783 = vpop.f32.mrb[0].mxu0
  %v784 = vadd.f32 0.0, %v783
  %v785 = vpop.f32.mrb[0].mxu0
  %v786 = vadd.f32 0.0, %v785
  %787 = vmatprep.mubr.f32.mxu0 0.0
  %788 = vmatmul.mubr.f32.gmra.mrb[0].mxu0 %v28
  %v789 = vpop.f32.mrb[0].mxu0
  %v790 = vadd.f32 0.0, %v789
  %v791 = vpop.f32.mrb[0].mxu0
  %v792 = vadd.f32 0.0, %v791
  %793 = vmatprep.mubr.f32.mxu0 0.0
  %794 = vmatmul.mubr.f32.gmra.mrb[0].mxu0 %v29
  %v795 = vpop.f32.mrb[0].mxu0
  %v796 = vadd.f32 0.0, %v795
  %v797 = vpop.f32.mrb[0].mxu0
  %v798 = vadd.f32 0.0, %v797
  %799 = vmatprep.mubr.f32.mxu0 0.0
  %800 = vmatmul.mubr.f32.gmra.mrb[0].mxu0 %v30
  %v801 = vpop.f32.mrb[0].mxu0
  %v802 = vadd.f32 0.0, %v801
  %v803 = vpop.f32.mrb[0].mxu0
  %v804 = vadd.f32 0.0, %v803
  %805 = vmatprep.mubr.f32.mxu0 0.0
  %806 = vmatmul.mubr.f32.gmra.mrb[0].mxu0 %v31
  %v807 = vpop.f32.mrb[0].mxu0
  %v808 = vadd.f32 0.0, %v807
  %v809 = vpop.f32.mrb[0].mxu0
  %v810 = vadd.f32 0.0, %v809
  %811 = vmatprep.mubr.f32.mxu0 0.0
  %812 = vmatmul.mubr.f32.gmra.mrb[0].mxu0 %v32
  %v813 = vpop.f32.mrb[0].mxu0
  %v814 = vadd.f32 0.0, %v813
  %v815 = vpop.f32.mrb[0].mxu0
  %v816 = vadd.f32 0.0, %v815
  %817 = vmatprep.mubr.f32.mxu0 0.0
  %818 = vmatmul.mubr.f32.gmra.mrb[0].mxu0 %v33
  %v819 = vpop.f32.mrb[0].mxu0
  %v820 = vadd.f32 0.0, %v819
  %v821 = vpop.f32.mrb[0].mxu0
  %v822 = vadd.f32 0.0, %v821
  %823 = vmatprep.mubr.f32.mxu0 0.0
  %824 = vmatmul.mubr.f32.gmra.mrb[0].mxu0 %v34
  %v825 = vpop.f32.mrb[0].mxu0
  %v826 = vadd.f32 0.0, %v825
  %v827 = vpop.f32.mrb[0].mxu0
  %v828 = vadd.f32 0.0, %v827
  %829 = vmatprep.mubr.f32.mxu0 0.0
  %830 = vmatmul.mubr.f32.gmra.mrb[0].mxu0 %v35
  %v831 = vpop.f32.mrb[0].mxu0
  %v832 = vadd.f32 0.0, %v831
  %v833 = vpop.f32.mrb[0].mxu0
  %v834 = vadd.f32 0.0, %v833
  %835 = vmatprep.mubr.f32.mxu0 0.0
  %836 = vmatmul.mubr.f32.gmra.mrb[0].mxu0 %v36
  %v837 = vpop.f32.mrb[0].mxu0
  %v838 = vadd.f32 0.0, %v837
  %v839 = vpop.f32.mrb[0].mxu0
  %v840 = vadd.f32 0.0, %v839
  %841 = vmatprep.mubr.f32.mxu0 0.0
  %842 = vmatmul.mubr.f32.gmra.mrb[0].mxu0 %v37
  %v843 = vpop.f32.mrb[0].mxu0
  %v844 = vadd.f32 0.0, %v843
  %v845 = vpop.f32.mrb[0].mxu0
  %v846 = vadd.f32 0.0, %v845
  %847 = vmatprep.mubr.f32.mxu0 0.0
  %848 = vmatmul.mubr.f32.gmra.mrb[0].mxu0 %v38
  %v849 = vpop.f32.mrb[0].mxu0
  %v850 = vadd.f32 0.0, %v849
  %v851 = vpop.f32.mrb[0].mxu0
  %v852 = vadd.f32 0.0, %v851
  %853 = vmatprep.mubr.f32.mxu0 0.0
  %854 = vmatmul.mubr.f32.gmra.mrb[0].mxu0 %v39
  %v855 = vpop.f32.mrb[0].mxu0
  %v856 = vadd.f32 0.0, %v855
  %v857 = vpop.f32.mrb[0].mxu0
  %v858 = vadd.f32 0.0, %v857
  %859 = vmatprep.mubr.f32.mxu0 0.0
  %860 = vmatmul.mubr.f32.gmra.mrb[0].mxu0 %v40
  %v861 = vpop.f32.mrb[0].mxu0
  %v862 = vadd.f32 0.0, %v861
  %v863 = vpop.f32.mrb[0].mxu0
  %v864 = vadd.f32 0.0, %v863
  %865 = vmatprep.mubr.f32.mxu0 0.0
  %866 = vmatmul.mubr.f32.gmra.mrb[0].mxu0 %v41
  %v867 = vpop.f32.mrb[0].mxu0
  %v868 = vadd.f32 0.0, %v867
  %v869 = vpop.f32.mrb[0].mxu0
  %v870 = vadd.f32 0.0, %v869
  %871 = vmatprep.mubr.f32.mxu0 0.0
  %872 = vmatmul.mubr.f32.gmra.mrb[0].mxu0 %v42
  %v873 = vpop.f32.mrb[0].mxu0
  %v874 = vadd.f32 0.0, %v873
  %v875 = vpop.f32.mrb[0].mxu0
  %v876 = vadd.f32 0.0, %v875
  %877 = vmatprep.mubr.f32.mxu0 0.0
  %878 = vmatmul.mubr.f32.gmra.mrb[0].mxu0 %v43
  %v879 = vpop.f32.mrb[0].mxu0
  %v880 = vadd.f32 0.0, %v879
  %v881 = vpop.f32.mrb[0].mxu0
  %v882 = vadd.f32 0.0, %v881
  %883 = vmatprep.mubr.f32.mxu0 0.0
  %884 = vmatmul.mubr.f32.gmra.mrb[0].mxu0 %v44
  %v885 = vpop.f32.mrb[0].mxu0
  %v886 = vadd.f32 0.0, %v885
  %v887 = vpop.f32.mrb[0].mxu0
  %v888 = vadd.f32 0.0, %v887
  %889 = vmatprep.mubr.f32.mxu0 0.0
  %890 = vmatmul.mubr.f32.gmra.mrb[0].mxu0 %v45
  %v891 = vpop.f32.mrb[0].mxu0
  %v892 = vadd.f32 0.0, %v891
  %v893 = vpop.f32.mrb[0].mxu0
  %v894 = vadd.f32 0.0, %v893
  %895 = vmatprep.mubr.f32.mxu0 0.0
  %896 = vmatmul.mubr.f32.gmra.mrb[0].mxu0 %v46
  %v897 = vpop.f32.mrb[0].mxu0
  %v898 = vadd.f32 0.0, %v897
  %v899 = vpop.f32.mrb[0].mxu0
  %v900 = vadd.f32 0.0, %v899
  %901 = vmatprep.mubr.f32.mxu0 0.0
  %902 = vmatmul.mubr.f32.gmra.mrb[0].mxu0 %v47
  %v903 = vpop.f32.mrb[0].mxu0
  %v904 = vadd.f32 0.0, %v903
  %v905 = vpop.f32.mrb[0].mxu0
  %v906 = vadd.f32 0.0, %v905
  %907 = vmatprep.mubr.f32.mxu0 0.0
  %908 = vmatmul.mubr.f32.gmra.mrb[0].mxu0 %v48
  %v909 = vpop.f32.mrb[0].mxu0
  %v910 = vadd.f32 0.0, %v909
  %v911 = vpop.f32.mrb[0].mxu0
  %v912 = vadd.f32 0.0, %v911
  %913 = vmatprep.mubr.f32.mxu0 0.0
  %914 = vmatmul.mubr.f32.gmra.mrb[0].mxu0 %v49
  %v915 = vpop.f32.mrb[0].mxu0
  %v916 = vadd.f32 0.0, %v915
  %v917 = vpop.f32.mrb[0].mxu0
  %v918 = vadd.f32 0.0, %v917
  %919 = vmatprep.mubr.f32.mxu0 0.0
  %920 = vmatmul.mubr.f32.gmra.mrb[0].mxu0 %v50
  %v921 = vpop.f32.mrb[0].mxu0
  %v922 = vadd.f32 0.0, %v921
  %v923 = vpop.f32.mrb[0].mxu0
  %v924 = vadd.f32 0.0, %v923
  %925 = vmatprep.mubr.f32.mxu0 0.0
  %926 = vmatmul.mubr.f32.gmra.mrb[0].mxu0 %v51
  %v927 = vpop.f32.mrb[0].mxu0
  %v928 = vadd.f32 0.0, %v927
  %v929 = vpop.f32.mrb[0].mxu0
  %v930 = vadd.f32 0.0, %v929
  %931 = vmatprep.mubr.f32.mxu0 0.0
  %932 = vmatmul.mubr.f32.gmra.mrb[0].mxu0 %v52
  %v933 = vpop.f32.mrb[0].mxu0
  %v934 = vadd.f32 0.0, %v933
  %v935 = vpop.f32.mrb[0].mxu0
  %v936 = vadd.f32 0.0, %v935
  %937 = vmatprep.mubr.f32.mxu0 0.0
  %938 = vmatmul.mubr.f32.gmra.mrb[0].mxu0 %v53
  %v939 = vpop.f32.mrb[0].mxu0
  %v940 = vadd.f32 0.0, %v939
  %v941 = vpop.f32.mrb[0].mxu0
  %v942 = vadd.f32 0.0, %v941
  %943 = vmatprep.mubr.f32.mxu0 0.0
  %944 = vmatmul.mubr.f32.gmra.mrb[0].mxu0 %v54
  %v945 = vpop.f32.mrb[0].mxu0
  %v946 = vadd.f32 0.0, %v945
  %v947 = vpop.f32.mrb[0].mxu0
  %v948 = vadd.f32 0.0, %v947
  %949 = vdwg.mxu0
  %950 = vmatprep.subr.mxu0 %v59
  %951 = vmatpush1.msra.mxu0 %v58
  %952 = vmatprep.subr.mxu0 %v65
  %953 = vmatpush1.msra.mxu0 %v64
  %954 = vmatprep.subr.mxu0 %v71
  %955 = vmatpush1.msra.mxu0 %v70
  %956 = vmatprep.subr.mxu0 %v77
  %957 = vmatpush1.msra.mxu0 %v76
  %958 = vmatprep.subr.mxu0 %v83
  %959 = vmatpush1.msra.mxu0 %v82
  %960 = vmatprep.subr.mxu0 %v89
  %961 = vmatpush1.msra.mxu0 %v88
  %962 = vmatprep.subr.mxu0 %v95
  %963 = vmatpush1.msra.mxu0 %v94
  %964 = vmatprep.subr.mxu0 %v101
  %965 = vmatpush1.msra.mxu0 %v100
  %966 = vmatprep.subr.mxu0 %v107
  %967 = vmatpush1.msra.mxu0 %v106
  %968 = vmatprep.subr.mxu0 %v113
  %969 = vmatpush1.msra.mxu0 %v112
  %970 = vmatprep.subr.mxu0 %v119
  %971 = vmatpush1.msra.mxu0 %v118
  %972 = vmatprep.subr.mxu0 %v125
  %973 = vmatpush1.msra.mxu0 %v124
  %974 = vmatprep.subr.mxu0 %v131
  %975 = vmatpush1.msra.mxu0 %v130
  %976 = vmatprep.subr.mxu0 %v137
  %977 = vmatpush1.msra.mxu0 %v136
  %978 = vmatprep.subr.mxu0 %v143
  %979 = vmatpush1.msra.mxu0 %v142
  %980 = vmatprep.subr.mxu0 %v149
  %981 = vmatpush1.msra.mxu0 %v148
  %982 = vmatprep.subr.mxu0 0.0
  %983 = vmatpush1.msra.mxu0 0.0
  %984 = vmatprep.subr.mxu0 0.0
  %985 = vmatpush1.msra.mxu0 0.0
  %986 = vmatprep.subr.mxu0 0.0
  %987 = vmatpush1.msra.mxu0 0.0
  %988 = vmatprep.subr.mxu0 0.0
  %989 = vmatpush1.msra.mxu0 0.0
  %990 = vmatprep.subr.mxu0 0.0
  %991 = vmatpush1.msra.mxu0 0.0
  %992 = vmatprep.subr.mxu0 0.0
  %993 = vmatpush1.msra.mxu0 0.0
  %994 = vmatprep.subr.mxu0 0.0
  %995 = vmatpush1.msra.mxu0 0.0
  %996 = vmatprep.subr.mxu0 0.0
  %997 = vmatpush1.msra.mxu0 0.0
  %998 = vmatprep.subr.mxu0 0.0
  %999 = vmatpush1.msra.mxu0 0.0
  %1000 = vmatprep.subr.mxu0 0.0
  %1001 = vmatpush1.msra.mxu0 0.0
  %1002 = vmatprep.subr.mxu0 0.0
  %1003 = vmatpush1.msra.mxu0 0.0
  %1004 = vmatprep.subr.mxu0 0.0
  %1005 = vmatpush1.msra.mxu0 0.0
  %1006 = vmatprep.subr.mxu0 0.0
  %1007 = vmatpush1.msra.mxu0 0.0
  %1008 = vmatprep.subr.mxu0 0.0
  %1009 = vmatpush1.msra.mxu0 0.0
  %1010 = vmatprep.subr.mxu0 0.0
  %1011 = vmatpush1.msra.mxu0 0.0
  %1012 = vmatprep.subr.mxu0 0.0
  %1013 = vmatpush1.msra.mxu0 0.0
  %1014 = vmatprep.mubr.f32.mxu0 0.0
  %1015 = vmatmul.mubr.f32.gmra.mrb[0].mxu0 %v26
  %v1016 = vpop.f32.mrb[0].mxu0
  %v1017 = vadd.f32 %v318, %v1016
  %v1018 = vpop.f32.mrb[0].mxu0
  %v1019 = vadd.f32 %v320, %v1018
  %1020 = vmatprep.mubr.f32.mxu0 0.0
  %1021 = vmatmul.mubr.f32.gmra.mrb[0].mxu0 %v27
  %v1022 = vpop.f32.mrb[0].mxu0
  %v1023 = vadd.f32 %v324, %v1022
  %v1024 = vpop.f32.mrb[0].mxu0
  %v1025 = vadd.f32 %v326, %v1024
  %1026 = vmatprep.mubr.f32.mxu0 0.0
  %1027 = vmatmul.mubr.f32.gmra.mrb[0].mxu0 %v28
  %v1028 = vpop.f32.mrb[0].mxu0
  %v1029 = vadd.f32 %v330, %v1028
  %v1030 = vpop.f32.mrb[0].mxu0
  %v1031 = vadd.f32 %v332, %v1030
  %1032 = vmatprep.mubr.f32.mxu0 0.0
  %1033 = vmatmul.mubr.f32.gmra.mrb[0].mxu0 %v29
  %v1034 = vpop.f32.mrb[0].mxu0
  %v1035 = vadd.f32 %v336, %v1034
  %v1036 = vpop.f32.mrb[0].mxu0
  %v1037 = vadd.f32 %v338, %v1036
  %1038 = vmatprep.mubr.f32.mxu0 0.0
  %1039 = vmatmul.mubr.f32.gmra.mrb[0].mxu0 %v30
  %v1040 = vpop.f32.mrb[0].mxu0
  %v1041 = vadd.f32 %v342, %v1040
  %v1042 = vpop.f32.mrb[0].mxu0
  %v1043 = vadd.f32 %v344, %v1042
  %1044 = vmatprep.mubr.f32.mxu0 0.0
  %1045 = vmatmul.mubr.f32.gmra.mrb[0].mxu0 %v31
  %v1046 = vpop.f32.mrb[0].mxu0
  %v1047 = vadd.f32 %v348, %v1046
  %v1048 = vpop.f32.mrb[0].mxu0
  %v1049 = vadd.f32 %v350, %v1048
  %1050 = vmatprep.mubr.f32.mxu0 0.0
  %1051 = vmatmul.mubr.f32.gmra.mrb[0].mxu0 %v32
  %v1052 = vpop.f32.mrb[0].mxu0
  %v1053 = vadd.f32 %v354, %v1052
  %v1054 = vpop.f32.mrb[0].mxu0
  %v1055 = vadd.f32 %v356, %v1054
  %1056 = vmatprep.mubr.f32.mxu0 0.0
  %1057 = vmatmul.mubr.f32.gmra.mrb[0].mxu0 %v33
  %v1058 = vpop.f32.mrb[0].mxu0
  %v1059 = vadd.f32 %v360, %v1058
  %v1060 = vpop.f32.mrb[0].mxu0
  %v1061 = vadd.f32 %v362, %v1060
  %1062 = vmatprep.mubr.f32.mxu0 0.0
  %1063 = vmatmul.mubr.f32.gmra.mrb[0].mxu0 %v34
  %v1064 = vpop.f32.mrb[0].mxu0
  %v1065 = vadd.f32 %v366, %v1064
  %v1066 = vpop.f32.mrb[0].mxu0
  %v1067 = vadd.f32 %v368, %v1066
  %1068 = vmatprep.mubr.f32.mxu0 0.0
  %1069 = vmatmul.mubr.f32.gmra.mrb[0].mxu0 %v35
  %v1070 = vpop.f32.mrb[0].mxu0
  %v1071 = vadd.f32 %v372, %v1070
  %v1072 = vpop.f32.mrb[0].mxu0
  %v1073 = vadd.f32 %v374, %v1072
  %1074 = vmatprep.mubr.f32.mxu0 0.0
  %1075 = vmatmul.mubr.f32.gmra.mrb[0].mxu0 %v36
  %v1076 = vpop.f32.mrb[0].mxu0
  %v1077 = vadd.f32 %v378, %v1076
  %v1078 = vpop.f32.mrb[0].mxu0
  %v1079 = vadd.f32 %v380, %v1078
  %1080 = vmatprep.mubr.f32.mxu0 0.0
  %1081 = vmatmul.mubr.f32.gmra.mrb[0].mxu0 %v37
  %v1082 = vpop.f32.mrb[0].mxu0
  %v1083 = vadd.f32 %v384, %v1082
  %v1084 = vpop.f32.mrb[0].mxu0
  %v1085 = vadd.f32 %v386, %v1084
  %1086 = vmatprep.mubr.f32.mxu0 0.0
  %1087 = vmatmul.mubr.f32.gmra.mrb[0].mxu0 %v38
  %v1088 = vpop.f32.mrb[0].mxu0
  %v1089 = vadd.f32 %v390, %v1088
  %v1090 = vpop.f32.mrb[0].mxu0
  %v1091 = vadd.f32 %v392, %v1090
  %1092 = vmatprep.mubr.f32.mxu0 0.0
  %1093 = vmatmul.mubr.f32.gmra.mrb[0].mxu0 %v39
  %v1094 = vpop.f32.mrb[0].mxu0
  %v1095 = vadd.f32 %v396, %v1094
  %v1096 = vpop.f32.mrb[0].mxu0
  %v1097 = vadd.f32 %v398, %v1096
  %1098 = vmatprep.mubr.f32.mxu0 0.0
  %1099 = vmatmul.mubr.f32.gmra.mrb[0].mxu0 %v40
  %v1100 = vpop.f32.mrb[0].mxu0
  %v1101 = vadd.f32 %v402, %v1100
  %v1102 = vpop.f32.mrb[0].mxu0
  %v1103 = vadd.f32 %v404, %v1102
  %1104 = vmatprep.mubr.f32.mxu0 0.0
  %1105 = vmatmul.mubr.f32.gmra.mrb[0].mxu0 %v41
  %v1106 = vpop.f32.mrb[0].mxu0
  %v1107 = vadd.f32 %v408, %v1106
  %v1108 = vpop.f32.mrb[0].mxu0
  %v1109 = vadd.f32 %v410, %v1108
  %1110 = vmatprep.mubr.f32.mxu0 0.0
  %1111 = vmatmul.mubr.f32.gmra.mrb[0].mxu0 %v42
  %v1112 = vpop.f32.mrb[0].mxu0
  %v1113 = vadd.f32 %v414, %v1112
  %v1114 = vpop.f32.mrb[0].mxu0
  %v1115 = vadd.f32 %v416, %v1114
  %1116 = vmatprep.mubr.f32.mxu0 0.0
  %1117 = vmatmul.mubr.f32.gmra.mrb[0].mxu0 %v43
  %v1118 = vpop.f32.mrb[0].mxu0
  %v1119 = vadd.f32 %v420, %v1118
  %v1120 = vpop.f32.mrb[0].mxu0
  %v1121 = vadd.f32 %v422, %v1120
  %1122 = vmatprep.mubr.f32.mxu0 0.0
  %1123 = vmatmul.mubr.f32.gmra.mrb[0].mxu0 %v44
  %v1124 = vpop.f32.mrb[0].mxu0
  %v1125 = vadd.f32 %v426, %v1124
  %v1126 = vpop.f32.mrb[0].mxu0
  %v1127 = vadd.f32 %v428, %v1126
  %1128 = vmatprep.mubr.f32.mxu0 0.0
  %1129 = vmatmul.mubr.f32.gmra.mrb[0].mxu0 %v45
  %v1130 = vpop.f32.mrb[0].mxu0
  %v1131 = vadd.f32 %v432, %v1130
  %v1132 = vpop.f32.mrb[0].mxu0
  %v1133 = vadd.f32 %v434, %v1132
  %1134 = vmatprep.mubr.f32.mxu0 0.0
  %1135 = vmatmul.mubr.f32.gmra.mrb[0].mxu0 %v46
  %v1136 = vpop.f32.mrb[0].mxu0
  %v1137 = vadd.f32 %v438, %v1136
  %v1138 = vpop.f32.mrb[0].mxu0
  %v1139 = vadd.f32 %v440, %v1138
  %1140 = vmatprep.mubr.f32.mxu0 0.0
  %1141 = vmatmul.mubr.f32.gmra.mrb[0].mxu0 %v47
  %v1142 = vpop.f32.mrb[0].mxu0
  %v1143 = vadd.f32 %v444, %v1142
  %v1144 = vpop.f32.mrb[0].mxu0
  %v1145 = vadd.f32 %v446, %v1144
  %1146 = vmatprep.mubr.f32.mxu0 0.0
  %1147 = vmatmul.mubr.f32.gmra.mrb[0].mxu0 %v48
  %v1148 = vpop.f32.mrb[0].mxu0
  %v1149 = vadd.f32 %v450, %v1148
  %v1150 = vpop.f32.mrb[0].mxu0
  %v1151 = vadd.f32 %v452, %v1150
  %1152 = vmatprep.mubr.f32.mxu0 0.0
  %1153 = vmatmul.mubr.f32.gmra.mrb[0].mxu0 %v49
  %v1154 = vpop.f32.mrb[0].mxu0
  %v1155 = vadd.f32 %v456, %v1154
  %v1156 = vpop.f32.mrb[0].mxu0
  %v1157 = vadd.f32 %v458, %v1156
  %1158 = vmatprep.mubr.f32.mxu0 0.0
  %1159 = vmatmul.mubr.f32.gmra.mrb[0].mxu0 %v50
  %v1160 = vpop.f32.mrb[0].mxu0
  %v1161 = vadd.f32 %v462, %v1160
  %v1162 = vpop.f32.mrb[0].mxu0
  %v1163 = vadd.f32 %v464, %v1162
  %1164 = vmatprep.mubr.f32.mxu0 0.0
  %1165 = vmatmul.mubr.f32.gmra.mrb[0].mxu0 %v51
  %v1166 = vpop.f32.mrb[0].mxu0
  %v1167 = vadd.f32 %v468, %v1166
  %v1168 = vpop.f32.mrb[0].mxu0
  %v1169 = vadd.f32 %v470, %v1168
  %1170 = vmatprep.mubr.f32.mxu0 0.0
  %1171 = vmatmul.mubr.f32.gmra.mrb[0].mxu0 %v52
  %v1172 = vpop.f32.mrb[0].mxu0
  %v1173 = vadd.f32 %v474, %v1172
  %v1174 = vpop.f32.mrb[0].mxu0
  %v1175 = vadd.f32 %v476, %v1174
  %1176 = vmatprep.mubr.f32.mxu0 0.0
  %1177 = vmatmul.mubr.f32.gmra.mrb[0].mxu0 %v53
  %v1178 = vpop.f32.mrb[0].mxu0
  %v1179 = vadd.f32 %v480, %v1178
  %v1180 = vpop.f32.mrb[0].mxu0
  %v1181 = vadd.f32 %v482, %v1180
  %1182 = vdwg.mxu0
  %1183 = vmatprep.subr.mxu0 %v61
  %1184 = vmatpush1.msra.mxu0 %v60
  %1185 = vmatprep.subr.mxu0 %v67
  %1186 = vmatpush1.msra.mxu0 %v66
  %1187 = vmatprep.subr.mxu0 %v73
  %1188 = vmatpush1.msra.mxu0 %v72
  %1189 = vmatprep.subr.mxu0 %v79
  %1190 = vmatpush1.msra.mxu0 %v78
  %1191 = vmatprep.subr.mxu0 %v85
  %1192 = vmatpush1.msra.mxu0 %v84
  %1193 = vmatprep.subr.mxu0 %v91
  %1194 = vmatpush1.msra.mxu0 %v90
  %1195 = vmatprep.subr.mxu0 %v97
  %1196 = vmatpush1.msra.mxu0 %v96
  %1197 = vmatprep.subr.mxu0 %v103
  %1198 = vmatpush1.msra.mxu0 %v102
  %1199 = vmatprep.subr.mxu0 %v109
  %1200 = vmatpush1.msra.mxu0 %v108
  %1201 = vmatprep.subr.mxu0 %v115
  %1202 = vmatpush1.msra.mxu0 %v114
  %1203 = vmatprep.subr.mxu0 %v121
  %1204 = vmatpush1.msra.mxu0 %v120
  %1205 = vmatprep.subr.mxu0 %v127
  %1206 = vmatpush1.msra.mxu0 %v126
  %1207 = vmatprep.subr.mxu0 %v133
  %1208 = vmatpush1.msra.mxu0 %v132
  %1209 = vmatprep.subr.mxu0 %v139
  %1210 = vmatpush1.msra.mxu0 %v138
  %1211 = vmatprep.subr.mxu0 %v145
  %1212 = vmatpush1.msra.mxu0 %v144
  %1213 = vmatprep.subr.mxu0 %v151
  %1214 = vmatpush1.msra.mxu0 %v150
  %1215 = vmatprep.subr.mxu0 0.0
  %1216 = vmatpush1.msra.mxu0 0.0
  %1217 = vmatprep.subr.mxu0 0.0
  %1218 = vmatpush1.msra.mxu0 0.0
  %1219 = vmatprep.subr.mxu0 0.0
  %1220 = vmatpush1.msra.mxu0 0.0
  %1221 = vmatprep.subr.mxu0 0.0
  %1222 = vmatpush1.msra.mxu0 0.0
  %1223 = vmatprep.subr.mxu0 0.0
  %1224 = vmatpush1.msra.mxu0 0.0
  %1225 = vmatprep.subr.mxu0 0.0
  %1226 = vmatpush1.msra.mxu0 0.0
  %1227 = vmatprep.subr.mxu0 0.0
  %1228 = vmatpush1.msra.mxu0 0.0
  %1229 = vmatprep.subr.mxu0 0.0
  %1230 = vmatpush1.msra.mxu0 0.0
  %1231 = vmatprep.subr.mxu0 0.0
  %1232 = vmatpush1.msra.mxu0 0.0
  %1233 = vmatprep.subr.mxu0 0.0
  %1234 = vmatpush1.msra.mxu0 0.0
  %1235 = vmatprep.subr.mxu0 0.0
  %1236 = vmatpush1.msra.mxu0 0.0
  %1237 = vmatprep.subr.mxu0 0.0
  %1238 = vmatpush1.msra.mxu0 0.0
  %1239 = vmatprep.subr.mxu0 0.0
  %1240 = vmatpush1.msra.mxu0 0.0
  %1241 = vmatprep.subr.mxu0 0.0
  %1242 = vmatpush1.msra.mxu0 0.0
  %1243 = vmatprep.subr.mxu0 0.0
  %1244 = vmatpush1.msra.mxu0 0.0
  %1245 = vmatprep.subr.mxu0 0.0
  %1246 = vmatpush1.msra.mxu0 0.0
  %1247 = vmatprep.mubr.f32.mxu0 0.0
  %1248 = vmatmul.mubr.f32.gmra.mrb[0].mxu0 %v26
  %v1249 = vpop.f32.mrb[0].mxu0
  %v1250 = vadd.f32 %v551, %v1249
  %v1251 = vpop.f32.mrb[0].mxu0
  %v1252 = vadd.f32 %v553, %v1251
  %1253 = vmatprep.mubr.f32.mxu0 0.0
  %1254 = vmatmul.mubr.f32.gmra.mrb[0].mxu0 %v27
  %v1255 = vpop.f32.mrb[0].mxu0
  %v1256 = vadd.f32 %v557, %v1255
  %v1257 = vpop.f32.mrb[0].mxu0
  %v1258 = vadd.f32 %v559, %v1257
  %1259 = vmatprep.mubr.f32.mxu0 0.0
  %1260 = vmatmul.mubr.f32.gmra.mrb[0].mxu0 %v28
  %v1261 = vpop.f32.mrb[0].mxu0
  %v1262 = vadd.f32 %v563, %v1261
  %v1263 = vpop.f32.mrb[0].mxu0
  %v1264 = vadd.f32 %v565, %v1263
  %1265 = vmatprep.mubr.f32.mxu0 0.0
  %1266 = vmatmul.mubr.f32.gmra.mrb[0].mxu0 %v29
  %v1267 = vpop.f32.mrb[0].mxu0
  %v1268 = vadd.f32 %v569, %v1267
  %v1269 = vpop.f32.mrb[0].mxu0
  %v1270 = vadd.f32 %v571, %v1269
  %1271 = vmatprep.mubr.f32.mxu0 0.0
  %1272 = vmatmul.mubr.f32.gmra.mrb[0].mxu0 %v30
  %v1273 = vpop.f32.mrb[0].mxu0
  %v1274 = vadd.f32 %v575, %v1273
  %v1275 = vpop.f32.mrb[0].mxu0
  %v1276 = vadd.f32 %v577, %v1275
  %1277 = vmatprep.mubr.f32.mxu0 0.0
  %1278 = vmatmul.mubr.f32.gmra.mrb[0].mxu0 %v31
  %v1279 = vpop.f32.mrb[0].mxu0
  %v1280 = vadd.f32 %v581, %v1279
  %v1281 = vpop.f32.mrb[0].mxu0
  %v1282 = vadd.f32 %v583, %v1281
  %1283 = vmatprep.mubr.f32.mxu0 0.0
  %1284 = vmatmul.mubr.f32.gmra.mrb[0].mxu0 %v32
  %v1285 = vpop.f32.mrb[0].mxu0
  %v1286 = vadd.f32 %v587, %v1285
  %v1287 = vpop.f32.mrb[0].mxu0
  %v1288 = vadd.f32 %v589, %v1287
  %1289 = vmatprep.mubr.f32.mxu0 0.0
  %1290 = vmatmul.mubr.f32.gmra.mrb[0].mxu0 %v33
  %v1291 = vpop.f32.mrb[0].mxu0
  %v1292 = vadd.f32 %v593, %v1291
  %v1293 = vpop.f32.mrb[0].mxu0
  %v1294 = vadd.f32 %v595, %v1293
  %1295 = vmatprep.mubr.f32.mxu0 0.0
  %1296 = vmatmul.mubr.f32.gmra.mrb[0].mxu0 %v34
  %v1297 = vpop.f32.mrb[0].mxu0
  %v1298 = vadd.f32 %v599, %v1297
  %v1299 = vpop.f32.mrb[0].mxu0
  %v1300 = vadd.f32 %v601, %v1299
  %1301 = vmatprep.mubr.f32.mxu0 0.0
  %1302 = vmatmul.mubr.f32.gmra.mrb[0].mxu0 %v35
  %v1303 = vpop.f32.mrb[0].mxu0
  %v1304 = vadd.f32 %v605, %v1303
  %v1305 = vpop.f32.mrb[0].mxu0
  %v1306 = vadd.f32 %v607, %v1305
  %1307 = vmatprep.mubr.f32.mxu0 0.0
  %1308 = vmatmul.mubr.f32.gmra.mrb[0].mxu0 %v36
  %v1309 = vpop.f32.mrb[0].mxu0
  %v1310 = vadd.f32 %v611, %v1309
  %v1311 = vpop.f32.mrb[0].mxu0
  %v1312 = vadd.f32 %v613, %v1311
  %1313 = vmatprep.mubr.f32.mxu0 0.0
  %1314 = vmatmul.mubr.f32.gmra.mrb[0].mxu0 %v37
  %v1315 = vpop.f32.mrb[0].mxu0
  %v1316 = vadd.f32 %v617, %v1315
  %v1317 = vpop.f32.mrb[0].mxu0
  %v1318 = vadd.f32 %v619, %v1317
  %1319 = vmatprep.mubr.f32.mxu0 0.0
  %1320 = vmatmul.mubr.f32.gmra.mrb[0].mxu0 %v38
  %v1321 = vpop.f32.mrb[0].mxu0
  %v1322 = vadd.f32 %v623, %v1321
  %v1323 = vpop.f32.mrb[0].mxu0
  %v1324 = vadd.f32 %v625, %v1323
  %1325 = vmatprep.mubr.f32.mxu0 0.0
  %1326 = vmatmul.mubr.f32.gmra.mrb[0].mxu0 %v39
  %v1327 = vpop.f32.mrb[0].mxu0
  %v1328 = vadd.f32 %v629, %v1327
  %v1329 = vpop.f32.mrb[0].mxu0
  %v1330 = vadd.f32 %v631, %v1329
  %1331 = vmatprep.mubr.f32.mxu0 0.0
  %1332 = vmatmul.mubr.f32.gmra.mrb[0].mxu0 %v40
  %v1333 = vpop.f32.mrb[0].mxu0
  %v1334 = vadd.f32 %v635, %v1333
  %v1335 = vpop.f32.mrb[0].mxu0
  %v1336 = vadd.f32 %v637, %v1335
  %1337 = vmatprep.mubr.f32.mxu0 0.0
  %1338 = vmatmul.mubr.f32.gmra.mrb[0].mxu0 %v41
  %v1339 = vpop.f32.mrb[0].mxu0
  %v1340 = vadd.f32 %v641, %v1339
  %v1341 = vpop.f32.mrb[0].mxu0
  %v1342 = vadd.f32 %v643, %v1341
  %1343 = vmatprep.mubr.f32.mxu0 0.0
  %1344 = vmatmul.mubr.f32.gmra.mrb[0].mxu0 %v42
  %v1345 = vpop.f32.mrb[0].mxu0
  %v1346 = vadd.f32 %v647, %v1345
  %v1347 = vpop.f32.mrb[0].mxu0
  %v1348 = vadd.f32 %v649, %v1347
  %1349 = vmatprep.mubr.f32.mxu0 0.0
  %1350 = vmatmul.mubr.f32.gmra.mrb[0].mxu0 %v43
  %v1351 = vpop.f32.mrb[0].mxu0
  %v1352 = vadd.f32 %v653, %v1351
  %v1353 = vpop.f32.mrb[0].mxu0
  %v1354 = vadd.f32 %v655, %v1353
  %1355 = vmatprep.mubr.f32.mxu0 0.0
  %1356 = vmatmul.mubr.f32.gmra.mrb[0].mxu0 %v44
  %v1357 = vpop.f32.mrb[0].mxu0
  %v1358 = vadd.f32 %v659, %v1357
  %v1359 = vpop.f32.mrb[0].mxu0
  %v1360 = vadd.f32 %v661, %v1359
  %1361 = vmatprep.mubr.f32.mxu0 0.0
  %1362 = vmatmul.mubr.f32.gmra.mrb[0].mxu0 %v45
  %v1363 = vpop.f32.mrb[0].mxu0
  %v1364 = vadd.f32 %v665, %v1363
  %v1365 = vpop.f32.mrb[0].mxu0
  %v1366 = vadd.f32 %v667, %v1365
  %1367 = vmatprep.mubr.f32.mxu0 0.0
  %1368 = vmatmul.mubr.f32.gmra.mrb[0].mxu0 %v46
  %v1369 = vpop.f32.mrb[0].mxu0
  %v1370 = vadd.f32 %v671, %v1369
  %v1371 = vpop.f32.mrb[0].mxu0
  %v1372 = vadd.f32 %v673, %v1371
  %1373 = vmatprep.mubr.f32.mxu0 0.0
  %1374 = vmatmul.mubr.f32.gmra.mrb[0].mxu0 %v47
  %v1375 = vpop.f32.mrb[0].mxu0
  %v1376 = vadd.f32 %v677, %v1375
  %v1377 = vpop.f32.mrb[0].mxu0
  %v1378 = vadd.f32 %v679, %v1377
  %1379 = vmatprep.mubr.f32.mxu0 0.0
  %1380 = vmatmul.mubr.f32.gmra.mrb[0].mxu0 %v48
  %v1381 = vpop.f32.mrb[0].mxu0
  %v1382 = vadd.f32 %v683, %v1381
  %v1383 = vpop.f32.mrb[0].mxu0
  %v1384 = vadd.f32 %v685, %v1383
  %1385 = vmatprep.mubr.f32.mxu0 0.0
  %1386 = vmatmul.mubr.f32.gmra.mrb[0].mxu0 %v49
  %v1387 = vpop.f32.mrb[0].mxu0
  %v1388 = vadd.f32 %v689, %v1387
  %v1389 = vpop.f32.mrb[0].mxu0
  %v1390 = vadd.f32 %v691, %v1389
  %1391 = vmatprep.mubr.f32.mxu0 0.0
  %1392 = vmatmul.mubr.f32.gmra.mrb[0].mxu0 %v50
  %v1393 = vpop.f32.mrb[0].mxu0
  %v1394 = vadd.f32 %v695, %v1393
  %v1395 = vpop.f32.mrb[0].mxu0
  %v1396 = vadd.f32 %v697, %v1395
  %1397 = vmatprep.mubr.f32.mxu0 0.0
  %1398 = vmatmul.mubr.f32.gmra.mrb[0].mxu0 %v51
  %v1399 = vpop.f32.mrb[0].mxu0
  %v1400 = vadd.f32 %v701, %v1399
  %v1401 = vpop.f32.mrb[0].mxu0
  %v1402 = vadd.f32 %v703, %v1401
  %1403 = vmatprep.mubr.f32.mxu0 0.0
  %1404 = vmatmul.mubr.f32.gmra.mrb[0].mxu0 %v52
  %v1405 = vpop.f32.mrb[0].mxu0
  %v1406 = vadd.f32 %v707, %v1405
  %v1407 = vpop.f32.mrb[0].mxu0
  %v1408 = vadd.f32 %v709, %v1407
  %1409 = vmatprep.mubr.f32.mxu0 0.0
  %1410 = vmatmul.mubr.f32.gmra.mrb[0].mxu0 %v53
  %v1411 = vpop.f32.mrb[0].mxu0
  %v1412 = vadd.f32 %v713, %v1411
  %v1413 = vpop.f32.mrb[0].mxu0
  %v1414 = vadd.f32 %v715, %v1413
  %1415 = vdwg.mxu0
  %1416 = vmatprep.subr.mxu0 %v63
  %1417 = vmatpush1.msra.mxu0 %v62
  %1418 = vmatprep.subr.mxu0 %v69
  %1419 = vmatpush1.msra.mxu0 %v68
  %1420 = vmatprep.subr.mxu0 %v75
  %1421 = vmatpush1.msra.mxu0 %v74
  %1422 = vmatprep.subr.mxu0 %v81
  %1423 = vmatpush1.msra.mxu0 %v80
  %1424 = vmatprep.subr.mxu0 %v87
  %1425 = vmatpush1.msra.mxu0 %v86
  %1426 = vmatprep.subr.mxu0 %v93
  %1427 = vmatpush1.msra.mxu0 %v92
  %1428 = vmatprep.subr.mxu0 %v99
  %1429 = vmatpush1.msra.mxu0 %v98
  %1430 = vmatprep.subr.mxu0 %v105
  %1431 = vmatpush1.msra.mxu0 %v104
  %1432 = vmatprep.subr.mxu0 %v111
  %1433 = vmatpush1.msra.mxu0 %v110
  %1434 = vmatprep.subr.mxu0 %v117
  %1435 = vmatpush1.msra.mxu0 %v116
  %1436 = vmatprep.subr.mxu0 %v123
  %1437 = vmatpush1.msra.mxu0 %v122
  %1438 = vmatprep.subr.mxu0 %v129
  %1439 = vmatpush1.msra.mxu0 %v128
  %1440 = vmatprep.subr.mxu0 %v135
  %1441 = vmatpush1.msra.mxu0 %v134
  %1442 = vmatprep.subr.mxu0 %v141
  %1443 = vmatpush1.msra.mxu0 %v140
  %1444 = vmatprep.subr.mxu0 %v147
  %1445 = vmatpush1.msra.mxu0 %v146
  %1446 = vmatprep.subr.mxu0 %v153
  %1447 = vmatpush1.msra.mxu0 %v152
  %1448 = vmatprep.subr.mxu0 0.0
  %1449 = vmatpush1.msra.mxu0 0.0
  %1450 = vmatprep.subr.mxu0 0.0
  %1451 = vmatpush1.msra.mxu0 0.0
  %1452 = vmatprep.subr.mxu0 0.0
  %1453 = vmatpush1.msra.mxu0 0.0
  %1454 = vmatprep.subr.mxu0 0.0
  %1455 = vmatpush1.msra.mxu0 0.0
  %1456 = vmatprep.subr.mxu0 0.0
  %1457 = vmatpush1.msra.mxu0 0.0
  %1458 = vmatprep.subr.mxu0 0.0
  %1459 = vmatpush1.msra.mxu0 0.0
  %1460 = vmatprep.subr.mxu0 0.0
  %1461 = vmatpush1.msra.mxu0 0.0
  %1462 = vmatprep.subr.mxu0 0.0
  %1463 = vmatpush1.msra.mxu0 0.0
  %1464 = vmatprep.subr.mxu0 0.0
  %1465 = vmatpush1.msra.mxu0 0.0
  %1466 = vmatprep.subr.mxu0 0.0
  %1467 = vmatpush1.msra.mxu0 0.0
  %1468 = vmatprep.subr.mxu0 0.0
  %1469 = vmatpush1.msra.mxu0 0.0
  %1470 = vmatprep.subr.mxu0 0.0
  %1471 = vmatpush1.msra.mxu0 0.0
  %1472 = vmatprep.subr.mxu0 0.0
  %1473 = vmatpush1.msra.mxu0 0.0
  %1474 = vmatprep.subr.mxu0 0.0
  %1475 = vmatpush1.msra.mxu0 0.0
  %1476 = vmatprep.subr.mxu0 0.0
  %1477 = vmatpush1.msra.mxu0 0.0
  %1478 = vmatprep.subr.mxu0 0.0
  %1479 = vmatpush1.msra.mxu0 0.0
  %1480 = vmatprep.mubr.f32.mxu0 0.0
  %1481 = vmatmul.mubr.f32.gmra.mrb[0].mxu0 %v26
  %v1482 = vpop.f32.mrb[0].mxu0
  %v1483 = vadd.f32 %v784, %v1482
  %v1484 = vpop.f32.mrb[0].mxu0
  %v1485 = vadd.f32 %v786, %v1484
  %1486 = vmatprep.mubr.f32.mxu0 0.0
  %1487 = vmatmul.mubr.f32.gmra.mrb[0].mxu0 %v27
  %v1488 = vpop.f32.mrb[0].mxu0
  %v1489 = vadd.f32 %v790, %v1488
  %v1490 = vpop.f32.mrb[0].mxu0
  %v1491 = vadd.f32 %v792, %v1490
  %1492 = vmatprep.mubr.f32.mxu0 0.0
  %1493 = vmatmul.mubr.f32.gmra.mrb[0].mxu0 %v28
  %v1494 = vpop.f32.mrb[0].mxu0
  %v1495 = vadd.f32 %v796, %v1494
  %v1496 = vpop.f32.mrb[0].mxu0
  %v1497 = vadd.f32 %v798, %v1496
  %1498 = vmatprep.mubr.f32.mxu0 0.0
  %1499 = vmatmul.mubr.f32.gmra.mrb[0].mxu0 %v29
  %v1500 = vpop.f32.mrb[0].mxu0
  %v1501 = vadd.f32 %v802, %v1500
  %v1502 = vpop.f32.mrb[0].mxu0
  %v1503 = vadd.f32 %v804, %v1502
  %1504 = vmatprep.mubr.f32.mxu0 0.0
  %1505 = vmatmul.mubr.f32.gmra.mrb[0].mxu0 %v30
  %v1506 = vpop.f32.mrb[0].mxu0
  %v1507 = vadd.f32 %v808, %v1506
  %v1508 = vpop.f32.mrb[0].mxu0
  %v1509 = vadd.f32 %v810, %v1508
  %1510 = vmatprep.mubr.f32.mxu0 0.0
  %1511 = vmatmul.mubr.f32.gmra.mrb[0].mxu0 %v31
  %v1512 = vpop.f32.mrb[0].mxu0
  %v1513 = vadd.f32 %v814, %v1512
  %v1514 = vpop.f32.mrb[0].mxu0
  %v1515 = vadd.f32 %v816, %v1514
  %1516 = vmatprep.mubr.f32.mxu0 0.0
  %1517 = vmatmul.mubr.f32.gmra.mrb[0].mxu0 %v32
  %v1518 = vpop.f32.mrb[0].mxu0
  %v1519 = vadd.f32 %v820, %v1518
  %v1520 = vpop.f32.mrb[0].mxu0
  %v1521 = vadd.f32 %v822, %v1520
  %1522 = vmatprep.mubr.f32.mxu0 0.0
  %1523 = vmatmul.mubr.f32.gmra.mrb[0].mxu0 %v33
  %v1524 = vpop.f32.mrb[0].mxu0
  %v1525 = vadd.f32 %v826, %v1524
  %v1526 = vpop.f32.mrb[0].mxu0
  %v1527 = vadd.f32 %v828, %v1526
  %1528 = vmatprep.mubr.f32.mxu0 0.0
  %1529 = vmatmul.mubr.f32.gmra.mrb[0].mxu0 %v34
  %v1530 = vpop.f32.mrb[0].mxu0
  %v1531 = vadd.f32 %v832, %v1530
  %v1532 = vpop.f32.mrb[0].mxu0
  %v1533 = vadd.f32 %v834, %v1532
  %1534 = vmatprep.mubr.f32.mxu0 0.0
  %1535 = vmatmul.mubr.f32.gmra.mrb[0].mxu0 %v35
  %v1536 = vpop.f32.mrb[0].mxu0
  %v1537 = vadd.f32 %v838, %v1536
  %v1538 = vpop.f32.mrb[0].mxu0
  %v1539 = vadd.f32 %v840, %v1538
  %1540 = vmatprep.mubr.f32.mxu0 0.0
  %1541 = vmatmul.mubr.f32.gmra.mrb[0].mxu0 %v36
  %v1542 = vpop.f32.mrb[0].mxu0
  %v1543 = vadd.f32 %v844, %v1542
  %v1544 = vpop.f32.mrb[0].mxu0
  %v1545 = vadd.f32 %v846, %v1544
  %1546 = vmatprep.mubr.f32.mxu0 0.0
  %1547 = vmatmul.mubr.f32.gmra.mrb[0].mxu0 %v37
  %v1548 = vpop.f32.mrb[0].mxu0
  %v1549 = vadd.f32 %v850, %v1548
  %v1550 = vpop.f32.mrb[0].mxu0
  %v1551 = vadd.f32 %v852, %v1550
  %1552 = vmatprep.mubr.f32.mxu0 0.0
  %1553 = vmatmul.mubr.f32.gmra.mrb[0].mxu0 %v38
  %v1554 = vpop.f32.mrb[0].mxu0
  %v1555 = vadd.f32 %v856, %v1554
  %v1556 = vpop.f32.mrb[0].mxu0
  %v1557 = vadd.f32 %v858, %v1556
  %1558 = vmatprep.mubr.f32.mxu0 0.0
  %1559 = vmatmul.mubr.f32.gmra.mrb[0].mxu0 %v39
  %v1560 = vpop.f32.mrb[0].mxu0
  %v1561 = vadd.f32 %v862, %v1560
  %v1562 = vpop.f32.mrb[0].mxu0
  %v1563 = vadd.f32 %v864, %v1562
  %1564 = vmatprep.mubr.f32.mxu0 0.0
  %1565 = vmatmul.mubr.f32.gmra.mrb[0].mxu0 %v40
  %v1566 = vpop.f32.mrb[0].mxu0
  %v1567 = vadd.f32 %v868, %v1566
  %v1568 = vpop.f32.mrb[0].mxu0
  %v1569 = vadd.f32 %v870, %v1568
  %1570 = vmatprep.mubr.f32.mxu0 0.0
  %1571 = vmatmul.mubr.f32.gmra.mrb[0].mxu0 %v41
  %v1572 = vpop.f32.mrb[0].mxu0
  %v1573 = vadd.f32 %v874, %v1572
  %v1574 = vpop.f32.mrb[0].mxu0
  %v1575 = vadd.f32 %v876, %v1574
  %1576 = vmatprep.mubr.f32.mxu0 0.0
  %1577 = vmatmul.mubr.f32.gmra.mrb[0].mxu0 %v42
  %v1578 = vpop.f32.mrb[0].mxu0
  %v1579 = vadd.f32 %v880, %v1578
  %v1580 = vpop.f32.mrb[0].mxu0
  %v1581 = vadd.f32 %v882, %v1580
  %1582 = vmatprep.mubr.f32.mxu0 0.0
  %1583 = vmatmul.mubr.f32.gmra.mrb[0].mxu0 %v43
  %v1584 = vpop.f32.mrb[0].mxu0
  %v1585 = vadd.f32 %v886, %v1584
  %v1586 = vpop.f32.mrb[0].mxu0
  %v1587 = vadd.f32 %v888, %v1586
  %1588 = vmatprep.mubr.f32.mxu0 0.0
  %1589 = vmatmul.mubr.f32.gmra.mrb[0].mxu0 %v44
  %v1590 = vpop.f32.mrb[0].mxu0
  %v1591 = vadd.f32 %v892, %v1590
  %v1592 = vpop.f32.mrb[0].mxu0
  %v1593 = vadd.f32 %v894, %v1592
  %1594 = vmatprep.mubr.f32.mxu0 0.0
  %1595 = vmatmul.mubr.f32.gmra.mrb[0].mxu0 %v45
  %v1596 = vpop.f32.mrb[0].mxu0
  %v1597 = vadd.f32 %v898, %v1596
  %v1598 = vpop.f32.mrb[0].mxu0
  %v1599 = vadd.f32 %v900, %v1598
  %1600 = vmatprep.mubr.f32.mxu0 0.0
  %1601 = vmatmul.mubr.f32.gmra.mrb[0].mxu0 %v46
  %v1602 = vpop.f32.mrb[0].mxu0
  %v1603 = vadd.f32 %v904, %v1602
  %v1604 = vpop.f32.mrb[0].mxu0
  %v1605 = vadd.f32 %v906, %v1604
  %1606 = vmatprep.mubr.f32.mxu0 0.0
  %1607 = vmatmul.mubr.f32.gmra.mrb[0].mxu0 %v47
  %v1608 = vpop.f32.mrb[0].mxu0
  %v1609 = vadd.f32 %v910, %v1608
  %v1610 = vpop.f32.mrb[0].mxu0
  %v1611 = vadd.f32 %v912, %v1610
  %1612 = vmatprep.mubr.f32.mxu0 0.0
  %1613 = vmatmul.mubr.f32.gmra.mrb[0].mxu0 %v48
  %v1614 = vpop.f32.mrb[0].mxu0
  %v1615 = vadd.f32 %v916, %v1614
  %v1616 = vpop.f32.mrb[0].mxu0
  %v1617 = vadd.f32 %v918, %v1616
  %1618 = vmatprep.mubr.f32.mxu0 0.0
  %1619 = vmatmul.mubr.f32.gmra.mrb[0].mxu0 %v49
  %v1620 = vpop.f32.mrb[0].mxu0
  %v1621 = vadd.f32 %v922, %v1620
  %v1622 = vpop.f32.mrb[0].mxu0
  %v1623 = vadd.f32 %v924, %v1622
  %1624 = vmatprep.mubr.f32.mxu0 0.0
  %1625 = vmatmul.mubr.f32.gmra.mrb[0].mxu0 %v50
  %v1626 = vpop.f32.mrb[0].mxu0
  %v1627 = vadd.f32 %v928, %v1626
  %v1628 = vpop.f32.mrb[0].mxu0
  %v1629 = vadd.f32 %v930, %v1628
  %1630 = vmatprep.mubr.f32.mxu0 0.0
  %1631 = vmatmul.mubr.f32.gmra.mrb[0].mxu0 %v51
  %v1632 = vpop.f32.mrb[0].mxu0
  %v1633 = vadd.f32 %v934, %v1632
  %v1634 = vpop.f32.mrb[0].mxu0
  %v1635 = vadd.f32 %v936, %v1634
  %1636 = vmatprep.mubr.f32.mxu0 0.0
  %1637 = vmatmul.mubr.f32.gmra.mrb[0].mxu0 %v52
  %v1638 = vpop.f32.mrb[0].mxu0
  %v1639 = vadd.f32 %v940, %v1638
  %v1640 = vpop.f32.mrb[0].mxu0
  %v1641 = vadd.f32 %v942, %v1640
  %1642 = vmatprep.mubr.f32.mxu0 0.0
  %1643 = vmatmul.mubr.f32.gmra.mrb[0].mxu0 %v53
  %v1644 = vpop.f32.mrb[0].mxu0
  %v1645 = vadd.f32 %v946, %v1644
  %v1646 = vpop.f32.mrb[0].mxu0
  %v1647 = vadd.f32 %v948, %v1646
  %1648 = vdwg.mxu0
  %s1649 = scalar_lea.vmem %s1, 1536
  %v1650 = vld [vmem:[%s1649] sm:$0xff]
  %v1651 = vld [vmem:[%s1649 + $0x8] sm:$0xff]
  %v1652 = vld [vmem:[%s1649 + $0x10] sm:$0xff]
  %v1653 = vld [vmem:[%s1649 + $0x18] sm:$0xff]
  %v1654 = vld [vmem:[%s1649 + $0x20] sm:$0xff]
  %v1655 = vld [vmem:[%s1649 + $0x28] sm:$0xff]
  %v1656 = vld [vmem:[%s1649 + $0x30] sm:$0xff]
  %v1657 = vld [vmem:[%s1649 + $0x38] sm:$0xff]
  %v1658 = vld [vmem:[%s1649 + $0x40] sm:$0xff]
  %v1659 = vld [vmem:[%s1649 + $0x48] sm:$0xff]
  %v1660 = vld [vmem:[%s1649 + $0x50] sm:$0xff]
  %v1661 = vld [vmem:[%s1649 + $0x58] sm:$0xff]
  %v1662 = vld [vmem:[%s1649 + $0x60] sm:$0xff]
  %v1663 = vld [vmem:[%s1649 + $0x68] sm:$0xff]
  %v1664 = vld [vmem:[%s1649 + $0x70] sm:$0xff]
  %v1665 = vld [vmem:[%s1649 + $0x78] sm:$0xff]
  %v1666 = vld [vmem:[%s1649 + $0x80] sm:$0xff]
  %v1667 = vld [vmem:[%s1649 + $0x88] sm:$0xff]
  %v1668 = vld [vmem:[%s1649 + $0x90] sm:$0xff]
  %v1669 = vld [vmem:[%s1649 + $0x98] sm:$0xff]
  %v1670 = vld [vmem:[%s1649 + $0xa0] sm:$0xff]
  %v1671 = vld [vmem:[%s1649 + $0xa8] sm:$0xff]
  %v1672 = vld [vmem:[%s1649 + $0xb0] sm:$0xff]
  %v1673 = vld [vmem:[%s1649 + $0xb8] sm:$0xff]
  %v1674 = vld [vmem:[%s1649 + $0xc0] sm:$0xff]
  %v1675 = vld [vmem:[%s1649 + $0xc8] sm:$0xff]
  %v1676 = vld [vmem:[%s1649 + $0xd0] sm:$0xff]
  %v1677 = vld [vmem:[%s1649 + $0xd8] sm:$0xff]
  %v1678 = vld [vmem:[%s1649 + $0xe0] sm:$0xff]
  %v1679 = vld [vmem:[%s1649 + $0xe8] sm:$0xff]
  %v1680 = vld [vmem:[%s1649 + $0xf0] sm:$0xff]
  %v1681 = vld [vmem:[%s1649 + $0xf8] sm:$0xff]
  %v1682 = vld [vmem:[%s1649 + $0x100] sm:$0xff]
  %v1683 = vld [vmem:[%s1649 + $0x108] sm:$0xff]
  %v1684 = vld [vmem:[%s1649 + $0x110] sm:$0xff]
  %v1685 = vld [vmem:[%s1649 + $0x118] sm:$0xff]
  %v1686 = vld [vmem:[%s1649 + $0x120] sm:$0xff]
  %v1687 = vld [vmem:[%s1649 + $0x128] sm:$0xff]
  %v1688 = vld [vmem:[%s1649 + $0x130] sm:$0xff]
  %v1689 = vld [vmem:[%s1649 + $0x138] sm:$0xff]
  %v1690 = vld [vmem:[%s1649 + $0x140] sm:$0xff]
  %v1691 = vld [vmem:[%s1649 + $0x148] sm:$0xff]
  %v1692 = vld [vmem:[%s1649 + $0x150] sm:$0xff]
  %v1693 = vld [vmem:[%s1649 + $0x158] sm:$0xff]
  %v1694 = vld [vmem:[%s1649 + $0x160] sm:$0xff]
  %v1695 = vld [vmem:[%s1649 + $0x168] sm:$0xff]
  %v1696 = vld [vmem:[%s1649 + $0x170] sm:$0xff]
  %v1697 = vld [vmem:[%s1649 + $0x178] sm:$0xff]
  %v1698 = vld [vmem:[%s1649 + $0x180] sm:$0xff]
  %v1699 = vld [vmem:[%s1649 + $0x188] sm:$0xff]
  %v1700 = vld [vmem:[%s1649 + $0x190] sm:$0xff]
  %v1701 = vld [vmem:[%s1649 + $0x198] sm:$0xff]
  %v1702 = vld [vmem:[%s1649 + $0x1a0] sm:$0xff]
  %v1703 = vld [vmem:[%s1649 + $0x1a8] sm:$0xff]
  %v1704 = vld [vmem:[%s1649 + $0x1b0] sm:$0xff]
  %v1705 = vld [vmem:[%s1649 + $0x1b8] sm:$0xff]
  %v1706 = vld [vmem:[%s1649 + $0x1c0] sm:$0xff]
  %v1707 = vld [vmem:[%s1649 + $0x1c8] sm:$0xff]
  %v1708 = vld [vmem:[%s1649 + $0x1d0] sm:$0xff]
  %v1709 = vld [vmem:[%s1649 + $0x1d8] sm:$0xff]
  %v1710 = vld [vmem:[%s1649 + $0x1e0] sm:$0xff]
  %v1711 = vld [vmem:[%s1649 + $0x1e8] sm:$0xff]
  %v1712 = vld [vmem:[%s1649 + $0x1f0] sm:$0xff]
  %v1713 = vld [vmem:[%s1649 + $0x1f8] sm:$0xff]
  %v1714 = vld [vmem:[%s1649 + $0x200] sm:$0xff]
  %v1715 = vld [vmem:[%s1649 + $0x208] sm:$0xff]
  %v1716 = vld [vmem:[%s1649 + $0x210] sm:$0xff]
  %v1717 = vld [vmem:[%s1649 + $0x218] sm:$0xff]
  %v1718 = vld [vmem:[%s1649 + $0x220] sm:$0xff]
  %v1719 = vld [vmem:[%s1649 + $0x228] sm:$0xff]
  %v1720 = vld [vmem:[%s1649 + $0x230] sm:$0xff]
  %v1721 = vld [vmem:[%s1649 + $0x238] sm:$0xff]
  %v1722 = vld [vmem:[%s1649 + $0x240] sm:$0xff]
  %v1723 = vld [vmem:[%s1649 + $0x248] sm:$0xff]
  %v1724 = vld [vmem:[%s1649 + $0x250] sm:$0xff]
  %v1725 = vld [vmem:[%s1649 + $0x258] sm:$0xff]
  %v1726 = vld [vmem:[%s1649 + $0x260] sm:$0xff]
  %v1727 = vld [vmem:[%s1649 + $0x268] sm:$0xff]
  %v1728 = vld [vmem:[%s1649 + $0x270] sm:$0xff]
  %v1729 = vld [vmem:[%s1649 + $0x278] sm:$0xff]
  %v1730 = vld [vmem:[%s1649 + $0x280] sm:$0xff]
  %v1731 = vld [vmem:[%s1649 + $0x288] sm:$0xff]
  %v1732 = vld [vmem:[%s1649 + $0x290] sm:$0xff]
  %v1733 = vld [vmem:[%s1649 + $0x298] sm:$0xff]
  %v1734 = vld [vmem:[%s1649 + $0x2a0] sm:$0xff]
  %v1735 = vld [vmem:[%s1649 + $0x2a8] sm:$0xff]
  %v1736 = vld [vmem:[%s1649 + $0x2b0] sm:$0xff]
  %v1737 = vld [vmem:[%s1649 + $0x2b8] sm:$0xff]
  %v1738 = vld [vmem:[%s1649 + $0x2c0] sm:$0xff]
  %v1739 = vld [vmem:[%s1649 + $0x2c8] sm:$0xff]
  %v1740 = vld [vmem:[%s1649 + $0x2d0] sm:$0xff]
  %v1741 = vld [vmem:[%s1649 + $0x2d8] sm:$0xff]
  %v1742 = vld [vmem:[%s1649 + $0x2e0] sm:$0xff]
  %v1743 = vld [vmem:[%s1649 + $0x2e8] sm:$0xff]
  %v1744 = vld [vmem:[%s1649 + $0x2f0] sm:$0xff]
  %v1745 = vld [vmem:[%s1649 + $0x2f8] sm:$0xff]
  %1746 = vmatprep.subr.mxu0 %v1651
  %1747 = vmatpush1.msra.mxu0 %v1650
  %1748 = vmatprep.subr.mxu0 %v1657
  %1749 = vmatpush1.msra.mxu0 %v1656
  %1750 = vmatprep.subr.mxu0 %v1663
  %1751 = vmatpush1.msra.mxu0 %v1662
  %1752 = vmatprep.subr.mxu0 %v1669
  %1753 = vmatpush1.msra.mxu0 %v1668
  %1754 = vmatprep.subr.mxu0 %v1675
  %1755 = vmatpush1.msra.mxu0 %v1674
  %1756 = vmatprep.subr.mxu0 %v1681
  %1757 = vmatpush1.msra.mxu0 %v1680
  %1758 = vmatprep.subr.mxu0 %v1687
  %1759 = vmatpush1.msra.mxu0 %v1686
  %1760 = vmatprep.subr.mxu0 %v1693
  %1761 = vmatpush1.msra.mxu0 %v1692
  %1762 = vmatprep.subr.mxu0 %v1699
  %1763 = vmatpush1.msra.mxu0 %v1698
  %1764 = vmatprep.subr.mxu0 %v1705
  %1765 = vmatpush1.msra.mxu0 %v1704
  %1766 = vmatprep.subr.mxu0 %v1711
  %1767 = vmatpush1.msra.mxu0 %v1710
  %1768 = vmatprep.subr.mxu0 %v1717
  %1769 = vmatpush1.msra.mxu0 %v1716
  %1770 = vmatprep.subr.mxu0 %v1723
  %1771 = vmatpush1.msra.mxu0 %v1722
  %1772 = vmatprep.subr.mxu0 %v1729
  %1773 = vmatpush1.msra.mxu0 %v1728
  %1774 = vmatprep.subr.mxu0 %v1735
  %1775 = vmatpush1.msra.mxu0 %v1734
  %1776 = vmatprep.subr.mxu0 %v1741
  %1777 = vmatpush1.msra.mxu0 %v1740
  %1778 = vmatprep.subr.mxu0 0.0
  %1779 = vmatpush1.msra.mxu0 0.0
  %1780 = vmatprep.subr.mxu0 0.0
  %1781 = vmatpush1.msra.mxu0 0.0
  %1782 = vmatprep.subr.mxu0 0.0
  %1783 = vmatpush1.msra.mxu0 0.0
  %1784 = vmatprep.subr.mxu0 0.0
  %1785 = vmatpush1.msra.mxu0 0.0
  %1786 = vmatprep.subr.mxu0 0.0
  %1787 = vmatpush1.msra.mxu0 0.0
  %1788 = vmatprep.subr.mxu0 0.0
  %1789 = vmatpush1.msra.mxu0 0.0
  %1790 = vmatprep.subr.mxu0 0.0
  %1791 = vmatpush1.msra.mxu0 0.0
  %1792 = vmatprep.subr.mxu0 0.0
  %1793 = vmatpush1.msra.mxu0 0.0
  %1794 = vmatprep.subr.mxu0 0.0
  %1795 = vmatpush1.msra.mxu0 0.0
  %1796 = vmatprep.subr.mxu0 0.0
  %1797 = vmatpush1.msra.mxu0 0.0
  %1798 = vmatprep.subr.mxu0 0.0
  %1799 = vmatpush1.msra.mxu0 0.0
  %1800 = vmatprep.subr.mxu0 0.0
  %1801 = vmatpush1.msra.mxu0 0.0
  %1802 = vmatprep.subr.mxu0 0.0
  %1803 = vmatpush1.msra.mxu0 0.0
  %1804 = vmatprep.subr.mxu0 0.0
  %1805 = vmatpush1.msra.mxu0 0.0
  %1806 = vmatprep.subr.mxu0 0.0
  %1807 = vmatpush1.msra.mxu0 0.0
  %1808 = vmatprep.subr.mxu0 0.0
  %1809 = vmatpush1.msra.mxu0 0.0
  %1810 = vmatprep.mubr.f32.mxu0 0.0
  %1811 = vmatmul.mubr.f32.gmra.mrb[0].mxu0 %v28
  %v1812 = vpop.f32.mrb[0].mxu0
  %v1813 = vadd.f32 0.0, %v1812
  %v1814 = vpop.f32.mrb[0].mxu0
  %v1815 = vadd.f32 0.0, %v1814
  %1816 = vmatprep.mubr.f32.mxu0 0.0
  %1817 = vmatmul.mubr.f32.gmra.mrb[0].mxu0 %v29
  %v1818 = vpop.f32.mrb[0].mxu0
  %v1819 = vadd.f32 0.0, %v1818
  %v1820 = vpop.f32.mrb[0].mxu0
  %v1821 = vadd.f32 0.0, %v1820
  %1822 = vmatprep.mubr.f32.mxu0 0.0
  %1823 = vmatmul.mubr.f32.gmra.mrb[0].mxu0 %v30
  %v1824 = vpop.f32.mrb[0].mxu0
  %v1825 = vadd.f32 0.0, %v1824
  %v1826 = vpop.f32.mrb[0].mxu0
  %v1827 = vadd.f32 0.0, %v1826
  %1828 = vmatprep.mubr.f32.mxu0 0.0
  %1829 = vmatmul.mubr.f32.gmra.mrb[0].mxu0 %v31
  %v1830 = vpop.f32.mrb[0].mxu0
  %v1831 = vadd.f32 0.0, %v1830
  %v1832 = vpop.f32.mrb[0].mxu0
  %v1833 = vadd.f32 0.0, %v1832
  %1834 = vmatprep.mubr.f32.mxu0 0.0
  %1835 = vmatmul.mubr.f32.gmra.mrb[0].mxu0 %v32
  %v1836 = vpop.f32.mrb[0].mxu0
  %v1837 = vadd.f32 0.0, %v1836
  %v1838 = vpop.f32.mrb[0].mxu0
  %v1839 = vadd.f32 0.0, %v1838
  %1840 = vmatprep.mubr.f32.mxu0 0.0
  %1841 = vmatmul.mubr.f32.gmra.mrb[0].mxu0 %v33
  %v1842 = vpop.f32.mrb[0].mxu0
  %v1843 = vadd.f32 0.0, %v1842
  %v1844 = vpop.f32.mrb[0].mxu0
  %v1845 = vadd.f32 0.0, %v1844
  %1846 = vmatprep.mubr.f32.mxu0 0.0
  %1847 = vmatmul.mubr.f32.gmra.mrb[0].mxu0 %v34
  %v1848 = vpop.f32.mrb[0].mxu0
  %v1849 = vadd.f32 0.0, %v1848
  %v1850 = vpop.f32.mrb[0].mxu0
  %v1851 = vadd.f32 0.0, %v1850
  %1852 = vmatprep.mubr.f32.mxu0 0.0
  %1853 = vmatmul.mubr.f32.gmra.mrb[0].mxu0 %v35
  %v1854 = vpop.f32.mrb[0].mxu0
  %v1855 = vadd.f32 0.0, %v1854
  %v1856 = vpop.f32.mrb[0].mxu0
  %v1857 = vadd.f32 0.0, %v1856
  %1858 = vmatprep.mubr.f32.mxu0 0.0
  %1859 = vmatmul.mubr.f32.gmra.mrb[0].mxu0 %v36
  %v1860 = vpop.f32.mrb[0].mxu0
  %v1861 = vadd.f32 0.0, %v1860
  %v1862 = vpop.f32.mrb[0].mxu0
  %v1863 = vadd.f32 0.0, %v1862
  %1864 = vmatprep.mubr.f32.mxu0 0.0
  %1865 = vmatmul.mubr.f32.gmra.mrb[0].mxu0 %v37
  %v1866 = vpop.f32.mrb[0].mxu0
  %v1867 = vadd.f32 0.0, %v1866
  %v1868 = vpop.f32.mrb[0].mxu0
  %v1869 = vadd.f32 0.0, %v1868
  %1870 = vmatprep.mubr.f32.mxu0 0.0
  %1871 = vmatmul.mubr.f32.gmra.mrb[0].mxu0 %v38
  %v1872 = vpop.f32.mrb[0].mxu0
  %v1873 = vadd.f32 0.0, %v1872
  %v1874 = vpop.f32.mrb[0].mxu0
  %v1875 = vadd.f32 0.0, %v1874
  %1876 = vmatprep.mubr.f32.mxu0 0.0
  %1877 = vmatmul.mubr.f32.gmra.mrb[0].mxu0 %v39
  %v1878 = vpop.f32.mrb[0].mxu0
  %v1879 = vadd.f32 0.0, %v1878
  %v1880 = vpop.f32.mrb[0].mxu0
  %v1881 = vadd.f32 0.0, %v1880
  %1882 = vmatprep.mubr.f32.mxu0 0.0
  %1883 = vmatmul.mubr.f32.gmra.mrb[0].mxu0 %v40
  %v1884 = vpop.f32.mrb[0].mxu0
  %v1885 = vadd.f32 0.0, %v1884
  %v1886 = vpop.f32.mrb[0].mxu0
  %v1887 = vadd.f32 0.0, %v1886
  %1888 = vmatprep.mubr.f32.mxu0 0.0
  %1889 = vmatmul.mubr.f32.gmra.mrb[0].mxu0 %v41
  %v1890 = vpop.f32.mrb[0].mxu0
  %v1891 = vadd.f32 0.0, %v1890
  %v1892 = vpop.f32.mrb[0].mxu0
  %v1893 = vadd.f32 0.0, %v1892
  %1894 = vmatprep.mubr.f32.mxu0 0.0
  %1895 = vmatmul.mubr.f32.gmra.mrb[0].mxu0 %v42
  %v1896 = vpop.f32.mrb[0].mxu0
  %v1897 = vadd.f32 0.0, %v1896
  %v1898 = vpop.f32.mrb[0].mxu0
  %v1899 = vadd.f32 0.0, %v1898
  %1900 = vmatprep.mubr.f32.mxu0 0.0
  %1901 = vmatmul.mubr.f32.gmra.mrb[0].mxu0 %v43
  %v1902 = vpop.f32.mrb[0].mxu0
  %v1903 = vadd.f32 0.0, %v1902
  %v1904 = vpop.f32.mrb[0].mxu0
  %v1905 = vadd.f32 0.0, %v1904
  %1906 = vmatprep.mubr.f32.mxu0 0.0
  %1907 = vmatmul.mubr.f32.gmra.mrb[0].mxu0 %v44
  %v1908 = vpop.f32.mrb[0].mxu0
  %v1909 = vadd.f32 0.0, %v1908
  %v1910 = vpop.f32.mrb[0].mxu0
  %v1911 = vadd.f32 0.0, %v1910
  %1912 = vmatprep.mubr.f32.mxu0 0.0
  %1913 = vmatmul.mubr.f32.gmra.mrb[0].mxu0 %v45
  %v1914 = vpop.f32.mrb[0].mxu0
  %v1915 = vadd.f32 0.0, %v1914
  %v1916 = vpop.f32.mrb[0].mxu0
  %v1917 = vadd.f32 0.0, %v1916
  %1918 = vmatprep.mubr.f32.mxu0 0.0
  %1919 = vmatmul.mubr.f32.gmra.mrb[0].mxu0 %v46
  %v1920 = vpop.f32.mrb[0].mxu0
  %v1921 = vadd.f32 0.0, %v1920
  %v1922 = vpop.f32.mrb[0].mxu0
  %v1923 = vadd.f32 0.0, %v1922
  %1924 = vmatprep.mubr.f32.mxu0 0.0
  %1925 = vmatmul.mubr.f32.gmra.mrb[0].mxu0 %v47
  %v1926 = vpop.f32.mrb[0].mxu0
  %v1927 = vadd.f32 0.0, %v1926
  %v1928 = vpop.f32.mrb[0].mxu0
  %v1929 = vadd.f32 0.0, %v1928
  %1930 = vmatprep.mubr.f32.mxu0 0.0
  %1931 = vmatmul.mubr.f32.gmra.mrb[0].mxu0 %v48
  %v1932 = vpop.f32.mrb[0].mxu0
  %v1933 = vadd.f32 0.0, %v1932
  %v1934 = vpop.f32.mrb[0].mxu0
  %v1935 = vadd.f32 0.0, %v1934
  %1936 = vmatprep.mubr.f32.mxu0 0.0
  %1937 = vmatmul.mubr.f32.gmra.mrb[0].mxu0 %v49
  %v1938 = vpop.f32.mrb[0].mxu0
  %v1939 = vadd.f32 0.0, %v1938
  %v1940 = vpop.f32.mrb[0].mxu0
  %v1941 = vadd.f32 0.0, %v1940
  %1942 = vmatprep.mubr.f32.mxu0 0.0
  %1943 = vmatmul.mubr.f32.gmra.mrb[0].mxu0 %v50
  %v1944 = vpop.f32.mrb[0].mxu0
  %v1945 = vadd.f32 0.0, %v1944
  %v1946 = vpop.f32.mrb[0].mxu0
  %v1947 = vadd.f32 0.0, %v1946
  %1948 = vmatprep.mubr.f32.mxu0 0.0
  %1949 = vmatmul.mubr.f32.gmra.mrb[0].mxu0 %v51
  %v1950 = vpop.f32.mrb[0].mxu0
  %v1951 = vadd.f32 0.0, %v1950
  %v1952 = vpop.f32.mrb[0].mxu0
  %v1953 = vadd.f32 0.0, %v1952
  %1954 = vmatprep.mubr.f32.mxu0 0.0
  %1955 = vmatmul.mubr.f32.gmra.mrb[0].mxu0 %v52
  %v1956 = vpop.f32.mrb[0].mxu0
  %v1957 = vadd.f32 0.0, %v1956
  %v1958 = vpop.f32.mrb[0].mxu0
  %v1959 = vadd.f32 0.0, %v1958
  %1960 = vmatprep.mubr.f32.mxu0 0.0
  %1961 = vmatmul.mubr.f32.gmra.mrb[0].mxu0 %v53
  %v1962 = vpop.f32.mrb[0].mxu0
  %v1963 = vadd.f32 0.0, %v1962
  %v1964 = vpop.f32.mrb[0].mxu0
  %v1965 = vadd.f32 0.0, %v1964
  %1966 = vmatprep.mubr.f32.mxu0 0.0
  %1967 = vmatmul.mubr.f32.gmra.mrb[0].mxu0 %v54
  %v1968 = vpop.f32.mrb[0].mxu0
  %v1969 = vadd.f32 0.0, %v1968
  %v1970 = vpop.f32.mrb[0].mxu0
  %v1971 = vadd.f32 0.0, %v1970
  %1972 = vmatprep.mubr.f32.mxu0 0.0
  %1973 = vmatmul.mubr.f32.gmra.mrb[0].mxu0 %v55
  %v1974 = vpop.f32.mrb[0].mxu0
  %v1975 = vadd.f32 0.0, %v1974
  %v1976 = vpop.f32.mrb[0].mxu0
  %v1977 = vadd.f32 0.0, %v1976
  %1978 = vdwg.mxu0
  %1979 = vmatprep.subr.mxu0 %v1653
  %1980 = vmatpush1.msra.mxu0 %v1652
  %1981 = vmatprep.subr.mxu0 %v1659
  %1982 = vmatpush1.msra.mxu0 %v1658
  %1983 = vmatprep.subr.mxu0 %v1665
  %1984 = vmatpush1.msra.mxu0 %v1664
  %1985 = vmatprep.subr.mxu0 %v1671
  %1986 = vmatpush1.msra.mxu0 %v1670
  %1987 = vmatprep.subr.mxu0 %v1677
  %1988 = vmatpush1.msra.mxu0 %v1676
  %1989 = vmatprep.subr.mxu0 %v1683
  %1990 = vmatpush1.msra.mxu0 %v1682
  %1991 = vmatprep.subr.mxu0 %v1689
  %1992 = vmatpush1.msra.mxu0 %v1688
  %1993 = vmatprep.subr.mxu0 %v1695
  %1994 = vmatpush1.msra.mxu0 %v1694
  %1995 = vmatprep.subr.mxu0 %v1701
  %1996 = vmatpush1.msra.mxu0 %v1700
  %1997 = vmatprep.subr.mxu0 %v1707
  %1998 = vmatpush1.msra.mxu0 %v1706
  %1999 = vmatprep.subr.mxu0 %v1713
  %2000 = vmatpush1.msra.mxu0 %v1712
  %2001 = vmatprep.subr.mxu0 %v1719
  %2002 = vmatpush1.msra.mxu0 %v1718
  %2003 = vmatprep.subr.mxu0 %v1725
  %2004 = vmatpush1.msra.mxu0 %v1724
  %2005 = vmatprep.subr.mxu0 %v1731
  %2006 = vmatpush1.msra.mxu0 %v1730
  %2007 = vmatprep.subr.mxu0 %v1737
  %2008 = vmatpush1.msra.mxu0 %v1736
  %2009 = vmatprep.subr.mxu0 %v1743
  %2010 = vmatpush1.msra.mxu0 %v1742
  %2011 = vmatprep.subr.mxu0 0.0
  %2012 = vmatpush1.msra.mxu0 0.0
  %2013 = vmatprep.subr.mxu0 0.0
  %2014 = vmatpush1.msra.mxu0 0.0
  %2015 = vmatprep.subr.mxu0 0.0
  %2016 = vmatpush1.msra.mxu0 0.0
  %2017 = vmatprep.subr.mxu0 0.0
  %2018 = vmatpush1.msra.mxu0 0.0
  %2019 = vmatprep.subr.mxu0 0.0
  %2020 = vmatpush1.msra.mxu0 0.0
  %2021 = vmatprep.subr.mxu0 0.0
  %2022 = vmatpush1.msra.mxu0 0.0
  %2023 = vmatprep.subr.mxu0 0.0
  %2024 = vmatpush1.msra.mxu0 0.0
  %2025 = vmatprep.subr.mxu0 0.0
  %2026 = vmatpush1.msra.mxu0 0.0
  %2027 = vmatprep.subr.mxu0 0.0
  %2028 = vmatpush1.msra.mxu0 0.0
  %2029 = vmatprep.subr.mxu0 0.0
  %2030 = vmatpush1.msra.mxu0 0.0
  %2031 = vmatprep.subr.mxu0 0.0
  %2032 = vmatpush1.msra.mxu0 0.0
  %2033 = vmatprep.subr.mxu0 0.0
  %2034 = vmatpush1.msra.mxu0 0.0
  %2035 = vmatprep.subr.mxu0 0.0
  %2036 = vmatpush1.msra.mxu0 0.0
  %2037 = vmatprep.subr.mxu0 0.0
  %2038 = vmatpush1.msra.mxu0 0.0
  %2039 = vmatprep.subr.mxu0 0.0
  %2040 = vmatpush1.msra.mxu0 0.0
  %2041 = vmatprep.subr.mxu0 0.0
  %2042 = vmatpush1.msra.mxu0 0.0
  %2043 = vmatprep.mubr.f32.mxu0 0.0
  %2044 = vmatmul.mubr.f32.gmra.mrb[0].mxu0 %v28
  %v2045 = vpop.f32.mrb[0].mxu0
  %v2046 = vadd.f32 0.0, %v2045
  %v2047 = vpop.f32.mrb[0].mxu0
  %v2048 = vadd.f32 0.0, %v2047
  %2049 = vmatprep.mubr.f32.mxu0 0.0
  %2050 = vmatmul.mubr.f32.gmra.mrb[0].mxu0 %v29
  %v2051 = vpop.f32.mrb[0].mxu0
  %v2052 = vadd.f32 0.0, %v2051
  %v2053 = vpop.f32.mrb[0].mxu0
  %v2054 = vadd.f32 0.0, %v2053
  %2055 = vmatprep.mubr.f32.mxu0 0.0
  %2056 = vmatmul.mubr.f32.gmra.mrb[0].mxu0 %v30
  %v2057 = vpop.f32.mrb[0].mxu0
  %v2058 = vadd.f32 0.0, %v2057
  %v2059 = vpop.f32.mrb[0].mxu0
  %v2060 = vadd.f32 0.0, %v2059
  %2061 = vmatprep.mubr.f32.mxu0 0.0
  %2062 = vmatmul.mubr.f32.gmra.mrb[0].mxu0 %v31
  %v2063 = vpop.f32.mrb[0].mxu0
  %v2064 = vadd.f32 0.0, %v2063
  %v2065 = vpop.f32.mrb[0].mxu0
  %v2066 = vadd.f32 0.0, %v2065
  %2067 = vmatprep.mubr.f32.mxu0 0.0
  %2068 = vmatmul.mubr.f32.gmra.mrb[0].mxu0 %v32
  %v2069 = vpop.f32.mrb[0].mxu0
  %v2070 = vadd.f32 0.0, %v2069
  %v2071 = vpop.f32.mrb[0].mxu0
  %v2072 = vadd.f32 0.0, %v2071
  %2073 = vmatprep.mubr.f32.mxu0 0.0
  %2074 = vmatmul.mubr.f32.gmra.mrb[0].mxu0 %v33
  %v2075 = vpop.f32.mrb[0].mxu0
  %v2076 = vadd.f32 0.0, %v2075
  %v2077 = vpop.f32.mrb[0].mxu0
  %v2078 = vadd.f32 0.0, %v2077
  %2079 = vmatprep.mubr.f32.mxu0 0.0
  %2080 = vmatmul.mubr.f32.gmra.mrb[0].mxu0 %v34
  %v2081 = vpop.f32.mrb[0].mxu0
  %v2082 = vadd.f32 0.0, %v2081
  %v2083 = vpop.f32.mrb[0].mxu0
  %v2084 = vadd.f32 0.0, %v2083
  %2085 = vmatprep.mubr.f32.mxu0 0.0
  %2086 = vmatmul.mubr.f32.gmra.mrb[0].mxu0 %v35
  %v2087 = vpop.f32.mrb[0].mxu0
  %v2088 = vadd.f32 0.0, %v2087
  %v2089 = vpop.f32.mrb[0].mxu0
  %v2090 = vadd.f32 0.0, %v2089
  %2091 = vmatprep.mubr.f32.mxu0 0.0
  %2092 = vmatmul.mubr.f32.gmra.mrb[0].mxu0 %v36
  %v2093 = vpop.f32.mrb[0].mxu0
  %v2094 = vadd.f32 0.0, %v2093
  %v2095 = vpop.f32.mrb[0].mxu0
  %v2096 = vadd.f32 0.0, %v2095
  %2097 = vmatprep.mubr.f32.mxu0 0.0
  %2098 = vmatmul.mubr.f32.gmra.mrb[0].mxu0 %v37
  %v2099 = vpop.f32.mrb[0].mxu0
  %v2100 = vadd.f32 0.0, %v2099
  %v2101 = vpop.f32.mrb[0].mxu0
  %v2102 = vadd.f32 0.0, %v2101
  %2103 = vmatprep.mubr.f32.mxu0 0.0
  %2104 = vmatmul.mubr.f32.gmra.mrb[0].mxu0 %v38
  %v2105 = vpop.f32.mrb[0].mxu0
  %v2106 = vadd.f32 0.0, %v2105
  %v2107 = vpop.f32.mrb[0].mxu0
  %v2108 = vadd.f32 0.0, %v2107
  %2109 = vmatprep.mubr.f32.mxu0 0.0
  %2110 = vmatmul.mubr.f32.gmra.mrb[0].mxu0 %v39
  %v2111 = vpop.f32.mrb[0].mxu0
  %v2112 = vadd.f32 0.0, %v2111
  %v2113 = vpop.f32.mrb[0].mxu0
  %v2114 = vadd.f32 0.0, %v2113
  %2115 = vmatprep.mubr.f32.mxu0 0.0
  %2116 = vmatmul.mubr.f32.gmra.mrb[0].mxu0 %v40
  %v2117 = vpop.f32.mrb[0].mxu0
  %v2118 = vadd.f32 0.0, %v2117
  %v2119 = vpop.f32.mrb[0].mxu0
  %v2120 = vadd.f32 0.0, %v2119
  %2121 = vmatprep.mubr.f32.mxu0 0.0
  %2122 = vmatmul.mubr.f32.gmra.mrb[0].mxu0 %v41
  %v2123 = vpop.f32.mrb[0].mxu0
  %v2124 = vadd.f32 0.0, %v2123
  %v2125 = vpop.f32.mrb[0].mxu0
  %v2126 = vadd.f32 0.0, %v2125
  %2127 = vmatprep.mubr.f32.mxu0 0.0
  %2128 = vmatmul.mubr.f32.gmra.mrb[0].mxu0 %v42
  %v2129 = vpop.f32.mrb[0].mxu0
  %v2130 = vadd.f32 0.0, %v2129
  %v2131 = vpop.f32.mrb[0].mxu0
  %v2132 = vadd.f32 0.0, %v2131
  %2133 = vmatprep.mubr.f32.mxu0 0.0
  %2134 = vmatmul.mubr.f32.gmra.mrb[0].mxu0 %v43
  %v2135 = vpop.f32.mrb[0].mxu0
  %v2136 = vadd.f32 0.0, %v2135
  %v2137 = vpop.f32.mrb[0].mxu0
  %v2138 = vadd.f32 0.0, %v2137
  %2139 = vmatprep.mubr.f32.mxu0 0.0
  %2140 = vmatmul.mubr.f32.gmra.mrb[0].mxu0 %v44
  %v2141 = vpop.f32.mrb[0].mxu0
  %v2142 = vadd.f32 0.0, %v2141
  %v2143 = vpop.f32.mrb[0].mxu0
  %v2144 = vadd.f32 0.0, %v2143
  %2145 = vmatprep.mubr.f32.mxu0 0.0
  %2146 = vmatmul.mubr.f32.gmra.mrb[0].mxu0 %v45
  %v2147 = vpop.f32.mrb[0].mxu0
  %v2148 = vadd.f32 0.0, %v2147
  %v2149 = vpop.f32.mrb[0].mxu0
  %v2150 = vadd.f32 0.0, %v2149
  %2151 = vmatprep.mubr.f32.mxu0 0.0
  %2152 = vmatmul.mubr.f32.gmra.mrb[0].mxu0 %v46
  %v2153 = vpop.f32.mrb[0].mxu0
  %v2154 = vadd.f32 0.0, %v2153
  %v2155 = vpop.f32.mrb[0].mxu0
  %v2156 = vadd.f32 0.0, %v2155
  %2157 = vmatprep.mubr.f32.mxu0 0.0
  %2158 = vmatmul.mubr.f32.gmra.mrb[0].mxu0 %v47
  %v2159 = vpop.f32.mrb[0].mxu0
  %v2160 = vadd.f32 0.0, %v2159
  %v2161 = vpop.f32.mrb[0].mxu0
  %v2162 = vadd.f32 0.0, %v2161
  %2163 = vmatprep.mubr.f32.mxu0 0.0
  %2164 = vmatmul.mubr.f32.gmra.mrb[0].mxu0 %v48
  %v2165 = vpop.f32.mrb[0].mxu0
  %v2166 = vadd.f32 0.0, %v2165
  %v2167 = vpop.f32.mrb[0].mxu0
  %v2168 = vadd.f32 0.0, %v2167
  %2169 = vmatprep.mubr.f32.mxu0 0.0
  %2170 = vmatmul.mubr.f32.gmra.mrb[0].mxu0 %v49
  %v2171 = vpop.f32.mrb[0].mxu0
  %v2172 = vadd.f32 0.0, %v2171
  %v2173 = vpop.f32.mrb[0].mxu0
  %v2174 = vadd.f32 0.0, %v2173
  %2175 = vmatprep.mubr.f32.mxu0 0.0
  %2176 = vmatmul.mubr.f32.gmra.mrb[0].mxu0 %v50
  %v2177 = vpop.f32.mrb[0].mxu0
  %v2178 = vadd.f32 0.0, %v2177
  %v2179 = vpop.f32.mrb[0].mxu0
  %v2180 = vadd.f32 0.0, %v2179
  %2181 = vmatprep.mubr.f32.mxu0 0.0
  %2182 = vmatmul.mubr.f32.gmra.mrb[0].mxu0 %v51
  %v2183 = vpop.f32.mrb[0].mxu0
  %v2184 = vadd.f32 0.0, %v2183
  %v2185 = vpop.f32.mrb[0].mxu0
  %v2186 = vadd.f32 0.0, %v2185
  %2187 = vmatprep.mubr.f32.mxu0 0.0
  %2188 = vmatmul.mubr.f32.gmra.mrb[0].mxu0 %v52
  %v2189 = vpop.f32.mrb[0].mxu0
  %v2190 = vadd.f32 0.0, %v2189
  %v2191 = vpop.f32.mrb[0].mxu0
  %v2192 = vadd.f32 0.0, %v2191
  %2193 = vmatprep.mubr.f32.mxu0 0.0
  %2194 = vmatmul.mubr.f32.gmra.mrb[0].mxu0 %v53
  %v2195 = vpop.f32.mrb[0].mxu0
  %v2196 = vadd.f32 0.0, %v2195
  %v2197 = vpop.f32.mrb[0].mxu0
  %v2198 = vadd.f32 0.0, %v2197
  %2199 = vmatprep.mubr.f32.mxu0 0.0
  %2200 = vmatmul.mubr.f32.gmra.mrb[0].mxu0 %v54
  %v2201 = vpop.f32.mrb[0].mxu0
  %v2202 = vadd.f32 0.0, %v2201
  %v2203 = vpop.f32.mrb[0].mxu0
  %v2204 = vadd.f32 0.0, %v2203
  %2205 = vmatprep.mubr.f32.mxu0 0.0
  %2206 = vmatmul.mubr.f32.gmra.mrb[0].mxu0 %v55
  %v2207 = vpop.f32.mrb[0].mxu0
  %v2208 = vadd.f32 0.0, %v2207
  %v2209 = vpop.f32.mrb[0].mxu0
  %v2210 = vadd.f32 0.0, %v2209
  %2211 = vdwg.mxu0
  %2212 = vmatprep.subr.mxu0 %v1655
  %2213 = vmatpush1.msra.mxu0 %v1654
  %2214 = vmatprep.subr.mxu0 %v1661
  %2215 = vmatpush1.msra.mxu0 %v1660
  %2216 = vmatprep.subr.mxu0 %v1667
  %2217 = vmatpush1.msra.mxu0 %v1666
  %2218 = vmatprep.subr.mxu0 %v1673
  %2219 = vmatpush1.msra.mxu0 %v1672
  %2220 = vmatprep.subr.mxu0 %v1679
  %2221 = vmatpush1.msra.mxu0 %v1678
  %2222 = vmatprep.subr.mxu0 %v1685
  %2223 = vmatpush1.msra.mxu0 %v1684
  %2224 = vmatprep.subr.mxu0 %v1691
  %2225 = vmatpush1.msra.mxu0 %v1690
  %2226 = vmatprep.subr.mxu0 %v1697
  %2227 = vmatpush1.msra.mxu0 %v1696
  %2228 = vmatprep.subr.mxu0 %v1703
  %2229 = vmatpush1.msra.mxu0 %v1702
  %2230 = vmatprep.subr.mxu0 %v1709
  %2231 = vmatpush1.msra.mxu0 %v1708
  %2232 = vmatprep.subr.mxu0 %v1715
  %2233 = vmatpush1.msra.mxu0 %v1714
  %2234 = vmatprep.subr.mxu0 %v1721
  %2235 = vmatpush1.msra.mxu0 %v1720
  %2236 = vmatprep.subr.mxu0 %v1727
  %2237 = vmatpush1.msra.mxu0 %v1726
  %2238 = vmatprep.subr.mxu0 %v1733
  %2239 = vmatpush1.msra.mxu0 %v1732
  %2240 = vmatprep.subr.mxu0 %v1739
  %2241 = vmatpush1.msra.mxu0 %v1738
  %2242 = vmatprep.subr.mxu0 %v1745
  %2243 = vmatpush1.msra.mxu0 %v1744
  %2244 = vmatprep.subr.mxu0 0.0
  %2245 = vmatpush1.msra.mxu0 0.0
  %2246 = vmatprep.subr.mxu0 0.0
  %2247 = vmatpush1.msra.mxu0 0.0
  %2248 = vmatprep.subr.mxu0 0.0
  %2249 = vmatpush1.msra.mxu0 0.0
  %2250 = vmatprep.subr.mxu0 0.0
  %2251 = vmatpush1.msra.mxu0 0.0
  %2252 = vmatprep.subr.mxu0 0.0
  %2253 = vmatpush1.msra.mxu0 0.0
  %2254 = vmatprep.subr.mxu0 0.0
  %2255 = vmatpush1.msra.mxu0 0.0
  %2256 = vmatprep.subr.mxu0 0.0
  %2257 = vmatpush1.msra.mxu0 0.0
  %2258 = vmatprep.subr.mxu0 0.0
  %2259 = vmatpush1.msra.mxu0 0.0
  %2260 = vmatprep.subr.mxu0 0.0
  %2261 = vmatpush1.msra.mxu0 0.0
  %2262 = vmatprep.subr.mxu0 0.0
  %2263 = vmatpush1.msra.mxu0 0.0
  %2264 = vmatprep.subr.mxu0 0.0
  %2265 = vmatpush1.msra.mxu0 0.0
  %2266 = vmatprep.subr.mxu0 0.0
  %2267 = vmatpush1.msra.mxu0 0.0
  %2268 = vmatprep.subr.mxu0 0.0
  %2269 = vmatpush1.msra.mxu0 0.0
  %2270 = vmatprep.subr.mxu0 0.0
  %2271 = vmatpush1.msra.mxu0 0.0
  %2272 = vmatprep.subr.mxu0 0.0
  %2273 = vmatpush1.msra.mxu0 0.0
  %2274 = vmatprep.subr.mxu0 0.0
  %2275 = vmatpush1.msra.mxu0 0.0
  %2276 = vmatprep.mubr.f32.mxu0 0.0
  %2277 = vmatmul.mubr.f32.gmra.mrb[0].mxu0 %v28
  %v2278 = vpop.f32.mrb[0].mxu0
  %v2279 = vadd.f32 0.0, %v2278
  %v2280 = vpop.f32.mrb[0].mxu0
  %v2281 = vadd.f32 0.0, %v2280
  %2282 = vmatprep.mubr.f32.mxu0 0.0
  %2283 = vmatmul.mubr.f32.gmra.mrb[0].mxu0 %v29
  %v2284 = vpop.f32.mrb[0].mxu0
  %v2285 = vadd.f32 0.0, %v2284
  %v2286 = vpop.f32.mrb[0].mxu0
  %v2287 = vadd.f32 0.0, %v2286
  %2288 = vmatprep.mubr.f32.mxu0 0.0
  %2289 = vmatmul.mubr.f32.gmra.mrb[0].mxu0 %v30
  %v2290 = vpop.f32.mrb[0].mxu0
  %v2291 = vadd.f32 0.0, %v2290
  %v2292 = vpop.f32.mrb[0].mxu0
  %v2293 = vadd.f32 0.0, %v2292
  %2294 = vmatprep.mubr.f32.mxu0 0.0
  %2295 = vmatmul.mubr.f32.gmra.mrb[0].mxu0 %v31
  %v2296 = vpop.f32.mrb[0].mxu0
  %v2297 = vadd.f32 0.0, %v2296
  %v2298 = vpop.f32.mrb[0].mxu0
  %v2299 = vadd.f32 0.0, %v2298
  %2300 = vmatprep.mubr.f32.mxu0 0.0
  %2301 = vmatmul.mubr.f32.gmra.mrb[0].mxu0 %v32
  %v2302 = vpop.f32.mrb[0].mxu0
  %v2303 = vadd.f32 0.0, %v2302
  %v2304 = vpop.f32.mrb[0].mxu0
  %v2305 = vadd.f32 0.0, %v2304
  %2306 = vmatprep.mubr.f32.mxu0 0.0
  %2307 = vmatmul.mubr.f32.gmra.mrb[0].mxu0 %v33
  %v2308 = vpop.f32.mrb[0].mxu0
  %v2309 = vadd.f32 0.0, %v2308
  %v2310 = vpop.f32.mrb[0].mxu0
  %v2311 = vadd.f32 0.0, %v2310
  %2312 = vmatprep.mubr.f32.mxu0 0.0
  %2313 = vmatmul.mubr.f32.gmra.mrb[0].mxu0 %v34
  %v2314 = vpop.f32.mrb[0].mxu0
  %v2315 = vadd.f32 0.0, %v2314
  %v2316 = vpop.f32.mrb[0].mxu0
  %v2317 = vadd.f32 0.0, %v2316
  %2318 = vmatprep.mubr.f32.mxu0 0.0
  %2319 = vmatmul.mubr.f32.gmra.mrb[0].mxu0 %v35
  %v2320 = vpop.f32.mrb[0].mxu0
  %v2321 = vadd.f32 0.0, %v2320
  %v2322 = vpop.f32.mrb[0].mxu0
  %v2323 = vadd.f32 0.0, %v2322
  %2324 = vmatprep.mubr.f32.mxu0 0.0
  %2325 = vmatmul.mubr.f32.gmra.mrb[0].mxu0 %v36
  %v2326 = vpop.f32.mrb[0].mxu0
  %v2327 = vadd.f32 0.0, %v2326
  %v2328 = vpop.f32.mrb[0].mxu0
  %v2329 = vadd.f32 0.0, %v2328
  %2330 = vmatprep.mubr.f32.mxu0 0.0
  %2331 = vmatmul.mubr.f32.gmra.mrb[0].mxu0 %v37
  %v2332 = vpop.f32.mrb[0].mxu0
  %v2333 = vadd.f32 0.0, %v2332
  %v2334 = vpop.f32.mrb[0].mxu0
  %v2335 = vadd.f32 0.0, %v2334
  %2336 = vmatprep.mubr.f32.mxu0 0.0
  %2337 = vmatmul.mubr.f32.gmra.mrb[0].mxu0 %v38
  %v2338 = vpop.f32.mrb[0].mxu0
  %v2339 = vadd.f32 0.0, %v2338
  %v2340 = vpop.f32.mrb[0].mxu0
  %v2341 = vadd.f32 0.0, %v2340
  %2342 = vmatprep.mubr.f32.mxu0 0.0
  %2343 = vmatmul.mubr.f32.gmra.mrb[0].mxu0 %v39
  %v2344 = vpop.f32.mrb[0].mxu0
  %v2345 = vadd.f32 0.0, %v2344
  %v2346 = vpop.f32.mrb[0].mxu0
  %v2347 = vadd.f32 0.0, %v2346
  %2348 = vmatprep.mubr.f32.mxu0 0.0
  %2349 = vmatmul.mubr.f32.gmra.mrb[0].mxu0 %v40
  %v2350 = vpop.f32.mrb[0].mxu0
  %v2351 = vadd.f32 0.0, %v2350
  %v2352 = vpop.f32.mrb[0].mxu0
  %v2353 = vadd.f32 0.0, %v2352
  %2354 = vmatprep.mubr.f32.mxu0 0.0
  %2355 = vmatmul.mubr.f32.gmra.mrb[0].mxu0 %v41
  %v2356 = vpop.f32.mrb[0].mxu0
  %v2357 = vadd.f32 0.0, %v2356
  %v2358 = vpop.f32.mrb[0].mxu0
  %v2359 = vadd.f32 0.0, %v2358
  %2360 = vmatprep.mubr.f32.mxu0 0.0
  %2361 = vmatmul.mubr.f32.gmra.mrb[0].mxu0 %v42
  %v2362 = vpop.f32.mrb[0].mxu0
  %v2363 = vadd.f32 0.0, %v2362
  %v2364 = vpop.f32.mrb[0].mxu0
  %v2365 = vadd.f32 0.0, %v2364
  %2366 = vmatprep.mubr.f32.mxu0 0.0
  %2367 = vmatmul.mubr.f32.gmra.mrb[0].mxu0 %v43
  %v2368 = vpop.f32.mrb[0].mxu0
  %v2369 = vadd.f32 0.0, %v2368
  %v2370 = vpop.f32.mrb[0].mxu0
  %v2371 = vadd.f32 0.0, %v2370
  %2372 = vmatprep.mubr.f32.mxu0 0.0
  %2373 = vmatmul.mubr.f32.gmra.mrb[0].mxu0 %v44
  %v2374 = vpop.f32.mrb[0].mxu0
  %v2375 = vadd.f32 0.0, %v2374
  %v2376 = vpop.f32.mrb[0].mxu0
  %v2377 = vadd.f32 0.0, %v2376
  %2378 = vmatprep.mubr.f32.mxu0 0.0
  %2379 = vmatmul.mubr.f32.gmra.mrb[0].mxu0 %v45
  %v2380 = vpop.f32.mrb[0].mxu0
  %v2381 = vadd.f32 0.0, %v2380
  %v2382 = vpop.f32.mrb[0].mxu0
  %v2383 = vadd.f32 0.0, %v2382
  %2384 = vmatprep.mubr.f32.mxu0 0.0
  %2385 = vmatmul.mubr.f32.gmra.mrb[0].mxu0 %v46
  %v2386 = vpop.f32.mrb[0].mxu0
  %v2387 = vadd.f32 0.0, %v2386
  %v2388 = vpop.f32.mrb[0].mxu0
  %v2389 = vadd.f32 0.0, %v2388
  %2390 = vmatprep.mubr.f32.mxu0 0.0
  %2391 = vmatmul.mubr.f32.gmra.mrb[0].mxu0 %v47
  %v2392 = vpop.f32.mrb[0].mxu0
  %v2393 = vadd.f32 0.0, %v2392
  %v2394 = vpop.f32.mrb[0].mxu0
  %v2395 = vadd.f32 0.0, %v2394
  %2396 = vmatprep.mubr.f32.mxu0 0.0
  %2397 = vmatmul.mubr.f32.gmra.mrb[0].mxu0 %v48
  %v2398 = vpop.f32.mrb[0].mxu0
  %v2399 = vadd.f32 0.0, %v2398
  %v2400 = vpop.f32.mrb[0].mxu0
  %v2401 = vadd.f32 0.0, %v2400
  %2402 = vmatprep.mubr.f32.mxu0 0.0
  %2403 = vmatmul.mubr.f32.gmra.mrb[0].mxu0 %v49
  %v2404 = vpop.f32.mrb[0].mxu0
  %v2405 = vadd.f32 0.0, %v2404
  %v2406 = vpop.f32.mrb[0].mxu0
  %v2407 = vadd.f32 0.0, %v2406
  %2408 = vmatprep.mubr.f32.mxu0 0.0
  %2409 = vmatmul.mubr.f32.gmra.mrb[0].mxu0 %v50
  %v2410 = vpop.f32.mrb[0].mxu0
  %v2411 = vadd.f32 0.0, %v2410
  %v2412 = vpop.f32.mrb[0].mxu0
  %v2413 = vadd.f32 0.0, %v2412
  %2414 = vmatprep.mubr.f32.mxu0 0.0
  %2415 = vmatmul.mubr.f32.gmra.mrb[0].mxu0 %v51
  %v2416 = vpop.f32.mrb[0].mxu0
  %v2417 = vadd.f32 0.0, %v2416
  %v2418 = vpop.f32.mrb[0].mxu0
  %v2419 = vadd.f32 0.0, %v2418
  %2420 = vmatprep.mubr.f32.mxu0 0.0
  %2421 = vmatmul.mubr.f32.gmra.mrb[0].mxu0 %v52
  %v2422 = vpop.f32.mrb[0].mxu0
  %v2423 = vadd.f32 0.0, %v2422
  %v2424 = vpop.f32.mrb[0].mxu0
  %v2425 = vadd.f32 0.0, %v2424
  %2426 = vmatprep.mubr.f32.mxu0 0.0
  %2427 = vmatmul.mubr.f32.gmra.mrb[0].mxu0 %v53
  %v2428 = vpop.f32.mrb[0].mxu0
  %v2429 = vadd.f32 0.0, %v2428
  %v2430 = vpop.f32.mrb[0].mxu0
  %v2431 = vadd.f32 0.0, %v2430
  %2432 = vmatprep.mubr.f32.mxu0 0.0
  %2433 = vmatmul.mubr.f32.gmra.mrb[0].mxu0 %v54
  %v2434 = vpop.f32.mrb[0].mxu0
  %v2435 = vadd.f32 0.0, %v2434
  %v2436 = vpop.f32.mrb[0].mxu0
  %v2437 = vadd.f32 0.0, %v2436
  %2438 = vmatprep.mubr.f32.mxu0 0.0
  %2439 = vmatmul.mubr.f32.gmra.mrb[0].mxu0 %v55
  %v2440 = vpop.f32.mrb[0].mxu0
  %v2441 = vadd.f32 0.0, %v2440
  %v2442 = vpop.f32.mrb[0].mxu0
  %v2443 = vadd.f32 0.0, %v2442
  %2444 = vdwg.mxu0
  %v2445 = vadd.f32 %v1017, %v1813
  %v2446 = vadd.f32 %v1019, %v1815
  %v2447 = vadd.f32 %v1250, %v2046
  %v2448 = vadd.f32 %v1252, %v2048
  %v2449 = vadd.f32 %v1483, %v2279
  %v2450 = vadd.f32 %v1485, %v2281
  %v2451 = vadd.f32 %v1023, %v1819
  %v2452 = vadd.f32 %v1025, %v1821
  %v2453 = vadd.f32 %v1256, %v2052
  %v2454 = vadd.f32 %v1258, %v2054
  %v2455 = vadd.f32 %v1489, %v2285
  %v2456 = vadd.f32 %v1491, %v2287
  %v2457 = vadd.f32 %v1029, %v1825
  %v2458 = vadd.f32 %v1031, %v1827
  %v2459 = vadd.f32 %v1262, %v2058
  %v2460 = vadd.f32 %v1264, %v2060
  %v2461 = vadd.f32 %v1495, %v2291
  %v2462 = vadd.f32 %v1497, %v2293
  %v2463 = vadd.f32 %v1035, %v1831
  %v2464 = vadd.f32 %v1037, %v1833
  %v2465 = vadd.f32 %v1268, %v2064
  %v2466 = vadd.f32 %v1270, %v2066
  %v2467 = vadd.f32 %v1501, %v2297
  %v2468 = vadd.f32 %v1503, %v2299
  %v2469 = vadd.f32 %v1041, %v1837
  %v2470 = vadd.f32 %v1043, %v1839
  %v2471 = vadd.f32 %v1274, %v2070
  %v2472 = vadd.f32 %v1276, %v2072
  %v2473 = vadd.f32 %v1507, %v2303
  %v2474 = vadd.f32 %v1509, %v2305
  %v2475 = vadd.f32 %v1047, %v1843
  %v2476 = vadd.f32 %v1049, %v1845
  %v2477 = vadd.f32 %v1280, %v2076
  %v2478 = vadd.f32 %v1282, %v2078
  %v2479 = vadd.f32 %v1513, %v2309
  %v2480 = vadd.f32 %v1515, %v2311
  %v2481 = vadd.f32 %v1053, %v1849
  %v2482 = vadd.f32 %v1055, %v1851
  %v2483 = vadd.f32 %v1286, %v2082
  %v2484 = vadd.f32 %v1288, %v2084
  %v2485 = vadd.f32 %v1519, %v2315
  %v2486 = vadd.f32 %v1521, %v2317
  %v2487 = vadd.f32 %v1059, %v1855
  %v2488 = vadd.f32 %v1061, %v1857
  %v2489 = vadd.f32 %v1292, %v2088
  %v2490 = vadd.f32 %v1294, %v2090
  %v2491 = vadd.f32 %v1525, %v2321
  %v2492 = vadd.f32 %v1527, %v2323
  %v2493 = vadd.f32 %v1065, %v1861
  %v2494 = vadd.f32 %v1067, %v1863
  %v2495 = vadd.f32 %v1298, %v2094
  %v2496 = vadd.f32 %v1300, %v2096
  %v2497 = vadd.f32 %v1531, %v2327
  %v2498 = vadd.f32 %v1533, %v2329
  %v2499 = vadd.f32 %v1071, %v1867
  %v2500 = vadd.f32 %v1073, %v1869
  %v2501 = vadd.f32 %v1304, %v2100
  %v2502 = vadd.f32 %v1306, %v2102
  %v2503 = vadd.f32 %v1537, %v2333
  %v2504 = vadd.f32 %v1539, %v2335
  %v2505 = vadd.f32 %v1077, %v1873
  %v2506 = vadd.f32 %v1079, %v1875
  %v2507 = vadd.f32 %v1310, %v2106
  %v2508 = vadd.f32 %v1312, %v2108
  %v2509 = vadd.f32 %v1543, %v2339
  %v2510 = vadd.f32 %v1545, %v2341
  %v2511 = vadd.f32 %v1083, %v1879
  %v2512 = vadd.f32 %v1085, %v1881
  %v2513 = vadd.f32 %v1316, %v2112
  %v2514 = vadd.f32 %v1318, %v2114
  %v2515 = vadd.f32 %v1549, %v2345
  %v2516 = vadd.f32 %v1551, %v2347
  %v2517 = vadd.f32 %v1089, %v1885
  %v2518 = vadd.f32 %v1091, %v1887
  %v2519 = vadd.f32 %v1322, %v2118
  %v2520 = vadd.f32 %v1324, %v2120
  %v2521 = vadd.f32 %v1555, %v2351
  %v2522 = vadd.f32 %v1557, %v2353
  %v2523 = vadd.f32 %v1095, %v1891
  %v2524 = vadd.f32 %v1097, %v1893
  %v2525 = vadd.f32 %v1328, %v2124
  %v2526 = vadd.f32 %v1330, %v2126
  %v2527 = vadd.f32 %v1561, %v2357
  %v2528 = vadd.f32 %v1563, %v2359
  %v2529 = vadd.f32 %v1101, %v1897
  %v2530 = vadd.f32 %v1103, %v1899
  %v2531 = vadd.f32 %v1334, %v2130
  %v2532 = vadd.f32 %v1336, %v2132
  %v2533 = vadd.f32 %v1567, %v2363
  %v2534 = vadd.f32 %v1569, %v2365
  %v2535 = vadd.f32 %v1107, %v1903
  %v2536 = vadd.f32 %v1109, %v1905
  %v2537 = vadd.f32 %v1340, %v2136
  %v2538 = vadd.f32 %v1342, %v2138
  %v2539 = vadd.f32 %v1573, %v2369
  %v2540 = vadd.f32 %v1575, %v2371
  %v2541 = vadd.f32 %v1113, %v1909
  %v2542 = vadd.f32 %v1115, %v1911
  %v2543 = vadd.f32 %v1346, %v2142
  %v2544 = vadd.f32 %v1348, %v2144
  %v2545 = vadd.f32 %v1579, %v2375
  %v2546 = vadd.f32 %v1581, %v2377
  %v2547 = vadd.f32 %v1119, %v1915
  %v2548 = vadd.f32 %v1121, %v1917
  %v2549 = vadd.f32 %v1352, %v2148
  %v2550 = vadd.f32 %v1354, %v2150
  %v2551 = vadd.f32 %v1585, %v2381
  %v2552 = vadd.f32 %v1587, %v2383
  %v2553 = vadd.f32 %v1125, %v1921
  %v2554 = vadd.f32 %v1127, %v1923
  %v2555 = vadd.f32 %v1358, %v2154
  %v2556 = vadd.f32 %v1360, %v2156
  %v2557 = vadd.f32 %v1591, %v2387
  %v2558 = vadd.f32 %v1593, %v2389
  %v2559 = vadd.f32 %v1131, %v1927
  %v2560 = vadd.f32 %v1133, %v1929
  %v2561 = vadd.f32 %v1364, %v2160
  %v2562 = vadd.f32 %v1366, %v2162
  %v2563 = vadd.f32 %v1597, %v2393
  %v2564 = vadd.f32 %v1599, %v2395
  %v2565 = vadd.f32 %v1137, %v1933
  %v2566 = vadd.f32 %v1139, %v1935
  %v2567 = vadd.f32 %v1370, %v2166
  %v2568 = vadd.f32 %v1372, %v2168
  %v2569 = vadd.f32 %v1603, %v2399
  %v2570 = vadd.f32 %v1605, %v2401
  %v2571 = vadd.f32 %v1143, %v1939
  %v2572 = vadd.f32 %v1145, %v1941
  %v2573 = vadd.f32 %v1376, %v2172
  %v2574 = vadd.f32 %v1378, %v2174
  %v2575 = vadd.f32 %v1609, %v2405
  %v2576 = vadd.f32 %v1611, %v2407
  %v2577 = vadd.f32 %v1149, %v1945
  %v2578 = vadd.f32 %v1151, %v1947
  %v2579 = vadd.f32 %v1382, %v2178
  %v2580 = vadd.f32 %v1384, %v2180
  %v2581 = vadd.f32 %v1615, %v2411
  %v2582 = vadd.f32 %v1617, %v2413
  %v2583 = vadd.f32 %v1155, %v1951
  %v2584 = vadd.f32 %v1157, %v1953
  %v2585 = vadd.f32 %v1388, %v2184
  %v2586 = vadd.f32 %v1390, %v2186
  %v2587 = vadd.f32 %v1621, %v2417
  %v2588 = vadd.f32 %v1623, %v2419
  %v2589 = vadd.f32 %v1161, %v1957
  %v2590 = vadd.f32 %v1163, %v1959
  %v2591 = vadd.f32 %v1394, %v2190
  %v2592 = vadd.f32 %v1396, %v2192
  %v2593 = vadd.f32 %v1627, %v2423
  %v2594 = vadd.f32 %v1629, %v2425
  %v2595 = vadd.f32 %v1167, %v1963
  %v2596 = vadd.f32 %v1169, %v1965
  %v2597 = vadd.f32 %v1400, %v2196
  %v2598 = vadd.f32 %v1402, %v2198
  %v2599 = vadd.f32 %v1633, %v2429
  %v2600 = vadd.f32 %v1635, %v2431
  %v2601 = vadd.f32 %v1173, %v1969
  %v2602 = vadd.f32 %v1175, %v1971
  %v2603 = vadd.f32 %v1406, %v2202
  %v2604 = vadd.f32 %v1408, %v2204
  %v2605 = vadd.f32 %v1639, %v2435
  %v2606 = vadd.f32 %v1641, %v2437
  %v2607 = vadd.f32 %v1179, %v1975
  %v2608 = vadd.f32 %v1181, %v1977
  %v2609 = vadd.f32 %v1412, %v2208
  %v2610 = vadd.f32 %v1414, %v2210
  %v2611 = vadd.f32 %v1645, %v2441
  %v2612 = vadd.f32 %v1647, %v2443
  %s2613 = scalar_lea.vmem %s1, 2304
  %v2614 = vld [vmem:[%s2613] sm:$0xff]
  %v2615 = vld [vmem:[%s2613 + $0x8] sm:$0xff]
  %v2616 = vld [vmem:[%s2613 + $0x10] sm:$0xff]
  %v2617 = vld [vmem:[%s2613 + $0x18] sm:$0xff]
  %v2618 = vld [vmem:[%s2613 + $0x20] sm:$0xff]
  %v2619 = vld [vmem:[%s2613 + $0x28] sm:$0xff]
  %v2620 = vld [vmem:[%s2613 + $0x30] sm:$0xff]
  %v2621 = vld [vmem:[%s2613 + $0x38] sm:$0xff]
  %v2622 = vld [vmem:[%s2613 + $0x40] sm:$0xff]
  %v2623 = vld [vmem:[%s2613 + $0x48] sm:$0xff]
  %v2624 = vld [vmem:[%s2613 + $0x50] sm:$0xff]
  %v2625 = vld [vmem:[%s2613 + $0x58] sm:$0xff]
  %v2626 = vld [vmem:[%s2613 + $0x60] sm:$0xff]
  %v2627 = vld [vmem:[%s2613 + $0x68] sm:$0xff]
  %v2628 = vld [vmem:[%s2613 + $0x70] sm:$0xff]
  %v2629 = vld [vmem:[%s2613 + $0x78] sm:$0xff]
  %v2630 = vld [vmem:[%s2613 + $0x80] sm:$0xff]
  %v2631 = vld [vmem:[%s2613 + $0x88] sm:$0xff]
  %v2632 = vld [vmem:[%s2613 + $0x90] sm:$0xff]
  %v2633 = vld [vmem:[%s2613 + $0x98] sm:$0xff]
  %v2634 = vld [vmem:[%s2613 + $0xa0] sm:$0xff]
  %v2635 = vld [vmem:[%s2613 + $0xa8] sm:$0xff]
  %v2636 = vld [vmem:[%s2613 + $0xb0] sm:$0xff]
  %v2637 = vld [vmem:[%s2613 + $0xb8] sm:$0xff]
  %v2638 = vld [vmem:[%s2613 + $0xc0] sm:$0xff]
  %v2639 = vld [vmem:[%s2613 + $0xc8] sm:$0xff]
  %v2640 = vld [vmem:[%s2613 + $0xd0] sm:$0xff]
  %v2641 = vld [vmem:[%s2613 + $0xd8] sm:$0xff]
  %v2642 = vld [vmem:[%s2613 + $0xe0] sm:$0xff]
  %v2643 = vld [vmem:[%s2613 + $0xe8] sm:$0xff]
  %v2644 = vld [vmem:[%s2613 + $0xf0] sm:$0xff]
  %v2645 = vld [vmem:[%s2613 + $0xf8] sm:$0xff]
  %v2646 = vld [vmem:[%s2613 + $0x100] sm:$0xff]
  %v2647 = vld [vmem:[%s2613 + $0x108] sm:$0xff]
  %v2648 = vld [vmem:[%s2613 + $0x110] sm:$0xff]
  %v2649 = vld [vmem:[%s2613 + $0x118] sm:$0xff]
  %v2650 = vld [vmem:[%s2613 + $0x120] sm:$0xff]
  %v2651 = vld [vmem:[%s2613 + $0x128] sm:$0xff]
  %v2652 = vld [vmem:[%s2613 + $0x130] sm:$0xff]
  %v2653 = vld [vmem:[%s2613 + $0x138] sm:$0xff]
  %v2654 = vld [vmem:[%s2613 + $0x140] sm:$0xff]
  %v2655 = vld [vmem:[%s2613 + $0x148] sm:$0xff]
  %v2656 = vld [vmem:[%s2613 + $0x150] sm:$0xff]
  %v2657 = vld [vmem:[%s2613 + $0x158] sm:$0xff]
  %v2658 = vld [vmem:[%s2613 + $0x160] sm:$0xff]
  %v2659 = vld [vmem:[%s2613 + $0x168] sm:$0xff]
  %v2660 = vld [vmem:[%s2613 + $0x170] sm:$0xff]
  %v2661 = vld [vmem:[%s2613 + $0x178] sm:$0xff]
  %v2662 = vld [vmem:[%s2613 + $0x180] sm:$0xff]
  %v2663 = vld [vmem:[%s2613 + $0x188] sm:$0xff]
  %v2664 = vld [vmem:[%s2613 + $0x190] sm:$0xff]
  %v2665 = vld [vmem:[%s2613 + $0x198] sm:$0xff]
  %v2666 = vld [vmem:[%s2613 + $0x1a0] sm:$0xff]
  %v2667 = vld [vmem:[%s2613 + $0x1a8] sm:$0xff]
  %v2668 = vld [vmem:[%s2613 + $0x1b0] sm:$0xff]
  %v2669 = vld [vmem:[%s2613 + $0x1b8] sm:$0xff]
  %v2670 = vld [vmem:[%s2613 + $0x1c0] sm:$0xff]
  %v2671 = vld [vmem:[%s2613 + $0x1c8] sm:$0xff]
  %v2672 = vld [vmem:[%s2613 + $0x1d0] sm:$0xff]
  %v2673 = vld [vmem:[%s2613 + $0x1d8] sm:$0xff]
  %v2674 = vld [vmem:[%s2613 + $0x1e0] sm:$0xff]
  %v2675 = vld [vmem:[%s2613 + $0x1e8] sm:$0xff]
  %v2676 = vld [vmem:[%s2613 + $0x1f0] sm:$0xff]
  %v2677 = vld [vmem:[%s2613 + $0x1f8] sm:$0xff]
  %v2678 = vld [vmem:[%s2613 + $0x200] sm:$0xff]
  %v2679 = vld [vmem:[%s2613 + $0x208] sm:$0xff]
  %v2680 = vld [vmem:[%s2613 + $0x210] sm:$0xff]
  %v2681 = vld [vmem:[%s2613 + $0x218] sm:$0xff]
  %v2682 = vld [vmem:[%s2613 + $0x220] sm:$0xff]
  %v2683 = vld [vmem:[%s2613 + $0x228] sm:$0xff]
  %v2684 = vld [vmem:[%s2613 + $0x230] sm:$0xff]
  %v2685 = vld [vmem:[%s2613 + $0x238] sm:$0xff]
  %v2686 = vld [vmem:[%s2613 + $0x240] sm:$0xff]
  %v2687 = vld [vmem:[%s2613 + $0x248] sm:$0xff]
  %v2688 = vld [vmem:[%s2613 + $0x250] sm:$0xff]
  %v2689 = vld [vmem:[%s2613 + $0x258] sm:$0xff]
  %v2690 = vld [vmem:[%s2613 + $0x260] sm:$0xff]
  %v2691 = vld [vmem:[%s2613 + $0x268] sm:$0xff]
  %v2692 = vld [vmem:[%s2613 + $0x270] sm:$0xff]
  %v2693 = vld [vmem:[%s2613 + $0x278] sm:$0xff]
  %v2694 = vld [vmem:[%s2613 + $0x280] sm:$0xff]
  %v2695 = vld [vmem:[%s2613 + $0x288] sm:$0xff]
  %v2696 = vld [vmem:[%s2613 + $0x290] sm:$0xff]
  %v2697 = vld [vmem:[%s2613 + $0x298] sm:$0xff]
  %v2698 = vld [vmem:[%s2613 + $0x2a0] sm:$0xff]
  %v2699 = vld [vmem:[%s2613 + $0x2a8] sm:$0xff]
  %v2700 = vld [vmem:[%s2613 + $0x2b0] sm:$0xff]
  %v2701 = vld [vmem:[%s2613 + $0x2b8] sm:$0xff]
  %v2702 = vld [vmem:[%s2613 + $0x2c0] sm:$0xff]
  %v2703 = vld [vmem:[%s2613 + $0x2c8] sm:$0xff]
  %v2704 = vld [vmem:[%s2613 + $0x2d0] sm:$0xff]
  %v2705 = vld [vmem:[%s2613 + $0x2d8] sm:$0xff]
  %v2706 = vld [vmem:[%s2613 + $0x2e0] sm:$0xff]
  %v2707 = vld [vmem:[%s2613 + $0x2e8] sm:$0xff]
  %v2708 = vld [vmem:[%s2613 + $0x2f0] sm:$0xff]
  %v2709 = vld [vmem:[%s2613 + $0x2f8] sm:$0xff]
  %2710 = vmatprep.subr.mxu0 %v2615
  %2711 = vmatpush1.msra.mxu0 %v2614
  %2712 = vmatprep.subr.mxu0 %v2621
  %2713 = vmatpush1.msra.mxu0 %v2620
  %2714 = vmatprep.subr.mxu0 %v2627
  %2715 = vmatpush1.msra.mxu0 %v2626
  %2716 = vmatprep.subr.mxu0 %v2633
  %2717 = vmatpush1.msra.mxu0 %v2632
  %2718 = vmatprep.subr.mxu0 %v2639
  %2719 = vmatpush1.msra.mxu0 %v2638
  %2720 = vmatprep.subr.mxu0 %v2645
  %2721 = vmatpush1.msra.mxu0 %v2644
  %2722 = vmatprep.subr.mxu0 %v2651
  %2723 = vmatpush1.msra.mxu0 %v2650
  %2724 = vmatprep.subr.mxu0 %v2657
  %2725 = vmatpush1.msra.mxu0 %v2656
  %2726 = vmatprep.subr.mxu0 %v2663
  %2727 = vmatpush1.msra.mxu0 %v2662
  %2728 = vmatprep.subr.mxu0 %v2669
  %2729 = vmatpush1.msra.mxu0 %v2668
  %2730 = vmatprep.subr.mxu0 %v2675
  %2731 = vmatpush1.msra.mxu0 %v2674
  %2732 = vmatprep.subr.mxu0 %v2681
  %2733 = vmatpush1.msra.mxu0 %v2680
  %2734 = vmatprep.subr.mxu0 %v2687
  %2735 = vmatpush1.msra.mxu0 %v2686
  %2736 = vmatprep.subr.mxu0 %v2693
  %2737 = vmatpush1.msra.mxu0 %v2692
  %2738 = vmatprep.subr.mxu0 %v2699
  %2739 = vmatpush1.msra.mxu0 %v2698
  %2740 = vmatprep.subr.mxu0 %v2705
  %2741 = vmatpush1.msra.mxu0 %v2704
  %2742 = vmatprep.subr.mxu0 0.0
  %2743 = vmatpush1.msra.mxu0 0.0
  %2744 = vmatprep.subr.mxu0 0.0
  %2745 = vmatpush1.msra.mxu0 0.0
  %2746 = vmatprep.subr.mxu0 0.0
  %2747 = vmatpush1.msra.mxu0 0.0
  %2748 = vmatprep.subr.mxu0 0.0
  %2749 = vmatpush1.msra.mxu0 0.0
  %2750 = vmatprep.subr.mxu0 0.0
  %2751 = vmatpush1.msra.mxu0 0.0
  %2752 = vmatprep.subr.mxu0 0.0
  %2753 = vmatpush1.msra.mxu0 0.0
  %2754 = vmatprep.subr.mxu0 0.0
  %2755 = vmatpush1.msra.mxu0 0.0
  %2756 = vmatprep.subr.mxu0 0.0
  %2757 = vmatpush1.msra.mxu0 0.0
  %2758 = vmatprep.subr.mxu0 0.0
  %2759 = vmatpush1.msra.mxu0 0.0
  %2760 = vmatprep.subr.mxu0 0.0
  %2761 = vmatpush1.msra.mxu0 0.0
  %2762 = vmatprep.subr.mxu0 0.0
  %2763 = vmatpush1.msra.mxu0 0.0
  %2764 = vmatprep.subr.mxu0 0.0
  %2765 = vmatpush1.msra.mxu0 0.0
  %2766 = vmatprep.subr.mxu0 0.0
  %2767 = vmatpush1.msra.mxu0 0.0
  %2768 = vmatprep.subr.mxu0 0.0
  %2769 = vmatpush1.msra.mxu0 0.0
  %2770 = vmatprep.subr.mxu0 0.0
  %2771 = vmatpush1.msra.mxu0 0.0
  %2772 = vmatprep.subr.mxu0 0.0
  %2773 = vmatpush1.msra.mxu0 0.0
  %2774 = vmatprep.mubr.f32.mxu0 0.0
  %2775 = vmatmul.mubr.f32.gmra.mrb[0].mxu0 %v29
  %v2776 = vpop.f32.mrb[0].mxu0
  %v2777 = vadd.f32 0.0, %v2776
  %v2778 = vpop.f32.mrb[0].mxu0
  %v2779 = vadd.f32 0.0, %v2778
  %2780 = vmatprep.mubr.f32.mxu0 0.0
  %2781 = vmatmul.mubr.f32.gmra.mrb[0].mxu0 %v30
  %v2782 = vpop.f32.mrb[0].mxu0
  %v2783 = vadd.f32 0.0, %v2782
  %v2784 = vpop.f32.mrb[0].mxu0
  %v2785 = vadd.f32 0.0, %v2784
  %2786 = vmatprep.mubr.f32.mxu0 0.0
  %2787 = vmatmul.mubr.f32.gmra.mrb[0].mxu0 %v31
  %v2788 = vpop.f32.mrb[0].mxu0
  %v2789 = vadd.f32 0.0, %v2788
  %v2790 = vpop.f32.mrb[0].mxu0
  %v2791 = vadd.f32 0.0, %v2790
  %2792 = vmatprep.mubr.f32.mxu0 0.0
  %2793 = vmatmul.mubr.f32.gmra.mrb[0].mxu0 %v32
  %v2794 = vpop.f32.mrb[0].mxu0
  %v2795 = vadd.f32 0.0, %v2794
  %v2796 = vpop.f32.mrb[0].mxu0
  %v2797 = vadd.f32 0.0, %v2796
  %2798 = vmatprep.mubr.f32.mxu0 0.0
  %2799 = vmatmul.mubr.f32.gmra.mrb[0].mxu0 %v33
  %v2800 = vpop.f32.mrb[0].mxu0
  %v2801 = vadd.f32 0.0, %v2800
  %v2802 = vpop.f32.mrb[0].mxu0
  %v2803 = vadd.f32 0.0, %v2802
  %2804 = vmatprep.mubr.f32.mxu0 0.0
  %2805 = vmatmul.mubr.f32.gmra.mrb[0].mxu0 %v34
  %v2806 = vpop.f32.mrb[0].mxu0
  %v2807 = vadd.f32 0.0, %v2806
  %v2808 = vpop.f32.mrb[0].mxu0
  %v2809 = vadd.f32 0.0, %v2808
  %2810 = vmatprep.mubr.f32.mxu0 0.0
  %2811 = vmatmul.mubr.f32.gmra.mrb[0].mxu0 %v35
  %v2812 = vpop.f32.mrb[0].mxu0
  %v2813 = vadd.f32 0.0, %v2812
  %v2814 = vpop.f32.mrb[0].mxu0
  %v2815 = vadd.f32 0.0, %v2814
  %2816 = vmatprep.mubr.f32.mxu0 0.0
  %2817 = vmatmul.mubr.f32.gmra.mrb[0].mxu0 %v36
  %v2818 = vpop.f32.mrb[0].mxu0
  %v2819 = vadd.f32 0.0, %v2818
  %v2820 = vpop.f32.mrb[0].mxu0
  %v2821 = vadd.f32 0.0, %v2820
  %2822 = vmatprep.mubr.f32.mxu0 0.0
  %2823 = vmatmul.mubr.f32.gmra.mrb[0].mxu0 %v37
  %v2824 = vpop.f32.mrb[0].mxu0
  %v2825 = vadd.f32 0.0, %v2824
  %v2826 = vpop.f32.mrb[0].mxu0
  %v2827 = vadd.f32 0.0, %v2826
  %2828 = vmatprep.mubr.f32.mxu0 0.0
  %2829 = vmatmul.mubr.f32.gmra.mrb[0].mxu0 %v38
  %v2830 = vpop.f32.mrb[0].mxu0
  %v2831 = vadd.f32 0.0, %v2830
  %v2832 = vpop.f32.mrb[0].mxu0
  %v2833 = vadd.f32 0.0, %v2832
  %2834 = vmatprep.mubr.f32.mxu0 0.0
  %2835 = vmatmul.mubr.f32.gmra.mrb[0].mxu0 %v39
  %v2836 = vpop.f32.mrb[0].mxu0
  %v2837 = vadd.f32 0.0, %v2836
  %v2838 = vpop.f32.mrb[0].mxu0
  %v2839 = vadd.f32 0.0, %v2838
  %2840 = vmatprep.mubr.f32.mxu0 0.0
  %2841 = vmatmul.mubr.f32.gmra.mrb[0].mxu0 %v40
  %v2842 = vpop.f32.mrb[0].mxu0
  %v2843 = vadd.f32 0.0, %v2842
  %v2844 = vpop.f32.mrb[0].mxu0
  %v2845 = vadd.f32 0.0, %v2844
  %2846 = vmatprep.mubr.f32.mxu0 0.0
  %2847 = vmatmul.mubr.f32.gmra.mrb[0].mxu0 %v41
  %v2848 = vpop.f32.mrb[0].mxu0
  %v2849 = vadd.f32 0.0, %v2848
  %v2850 = vpop.f32.mrb[0].mxu0
  %v2851 = vadd.f32 0.0, %v2850
  %2852 = vmatprep.mubr.f32.mxu0 0.0
  %2853 = vmatmul.mubr.f32.gmra.mrb[0].mxu0 %v42
  %v2854 = vpop.f32.mrb[0].mxu0
  %v2855 = vadd.f32 0.0, %v2854
  %v2856 = vpop.f32.mrb[0].mxu0
  %v2857 = vadd.f32 0.0, %v2856
  %2858 = vmatprep.mubr.f32.mxu0 0.0
  %2859 = vmatmul.mubr.f32.gmra.mrb[0].mxu0 %v43
  %v2860 = vpop.f32.mrb[0].mxu0
  %v2861 = vadd.f32 0.0, %v2860
  %v2862 = vpop.f32.mrb[0].mxu0
  %v2863 = vadd.f32 0.0, %v2862
  %2864 = vmatprep.mubr.f32.mxu0 0.0
  %2865 = vmatmul.mubr.f32.gmra.mrb[0].mxu0 %v44
  %v2866 = vpop.f32.mrb[0].mxu0
  %v2867 = vadd.f32 0.0, %v2866
  %v2868 = vpop.f32.mrb[0].mxu0
  %v2869 = vadd.f32 0.0, %v2868
  %2870 = vmatprep.mubr.f32.mxu0 0.0
  %2871 = vmatmul.mubr.f32.gmra.mrb[0].mxu0 %v45
  %v2872 = vpop.f32.mrb[0].mxu0
  %v2873 = vadd.f32 0.0, %v2872
  %v2874 = vpop.f32.mrb[0].mxu0
  %v2875 = vadd.f32 0.0, %v2874
  %2876 = vmatprep.mubr.f32.mxu0 0.0
  %2877 = vmatmul.mubr.f32.gmra.mrb[0].mxu0 %v46
  %v2878 = vpop.f32.mrb[0].mxu0
  %v2879 = vadd.f32 0.0, %v2878
  %v2880 = vpop.f32.mrb[0].mxu0
  %v2881 = vadd.f32 0.0, %v2880
  %2882 = vmatprep.mubr.f32.mxu0 0.0
  %2883 = vmatmul.mubr.f32.gmra.mrb[0].mxu0 %v47
  %v2884 = vpop.f32.mrb[0].mxu0
  %v2885 = vadd.f32 0.0, %v2884
  %v2886 = vpop.f32.mrb[0].mxu0
  %v2887 = vadd.f32 0.0, %v2886
  %2888 = vmatprep.mubr.f32.mxu0 0.0
  %2889 = vmatmul.mubr.f32.gmra.mrb[0].mxu0 %v48
  %v2890 = vpop.f32.mrb[0].mxu0
  %v2891 = vadd.f32 0.0, %v2890
  %v2892 = vpop.f32.mrb[0].mxu0
  %v2893 = vadd.f32 0.0, %v2892
  %2894 = vmatprep.mubr.f32.mxu0 0.0
  %2895 = vmatmul.mubr.f32.gmra.mrb[0].mxu0 %v49
  %v2896 = vpop.f32.mrb[0].mxu0
  %v2897 = vadd.f32 0.0, %v2896
  %v2898 = vpop.f32.mrb[0].mxu0
  %v2899 = vadd.f32 0.0, %v2898
  %2900 = vmatprep.mubr.f32.mxu0 0.0
  %2901 = vmatmul.mubr.f32.gmra.mrb[0].mxu0 %v50
  %v2902 = vpop.f32.mrb[0].mxu0
  %v2903 = vadd.f32 0.0, %v2902
  %v2904 = vpop.f32.mrb[0].mxu0
  %v2905 = vadd.f32 0.0, %v2904
  %2906 = vmatprep.mubr.f32.mxu0 0.0
  %2907 = vmatmul.mubr.f32.gmra.mrb[0].mxu0 %v51
  %v2908 = vpop.f32.mrb[0].mxu0
  %v2909 = vadd.f32 0.0, %v2908
  %v2910 = vpop.f32.mrb[0].mxu0
  %v2911 = vadd.f32 0.0, %v2910
  %2912 = vmatprep.mubr.f32.mxu0 0.0
  %2913 = vmatmul.mubr.f32.gmra.mrb[0].mxu0 %v52
  %v2914 = vpop.f32.mrb[0].mxu0
  %v2915 = vadd.f32 0.0, %v2914
  %v2916 = vpop.f32.mrb[0].mxu0
  %v2917 = vadd.f32 0.0, %v2916
  %2918 = vmatprep.mubr.f32.mxu0 0.0
  %2919 = vmatmul.mubr.f32.gmra.mrb[0].mxu0 %v53
  %v2920 = vpop.f32.mrb[0].mxu0
  %v2921 = vadd.f32 0.0, %v2920
  %v2922 = vpop.f32.mrb[0].mxu0
  %v2923 = vadd.f32 0.0, %v2922
  %2924 = vmatprep.mubr.f32.mxu0 0.0
  %2925 = vmatmul.mubr.f32.gmra.mrb[0].mxu0 %v54
  %v2926 = vpop.f32.mrb[0].mxu0
  %v2927 = vadd.f32 0.0, %v2926
  %v2928 = vpop.f32.mrb[0].mxu0
  %v2929 = vadd.f32 0.0, %v2928
  %2930 = vmatprep.mubr.f32.mxu0 0.0
  %2931 = vmatmul.mubr.f32.gmra.mrb[0].mxu0 %v55
  %v2932 = vpop.f32.mrb[0].mxu0
  %v2933 = vadd.f32 0.0, %v2932
  %v2934 = vpop.f32.mrb[0].mxu0
  %v2935 = vadd.f32 0.0, %v2934
  %2936 = vmatprep.mubr.f32.mxu0 0.0
  %2937 = vmatmul.mubr.f32.gmra.mrb[0].mxu0 %v56
  %v2938 = vpop.f32.mrb[0].mxu0
  %v2939 = vadd.f32 0.0, %v2938
  %v2940 = vpop.f32.mrb[0].mxu0
  %v2941 = vadd.f32 0.0, %v2940
  %2942 = vdwg.mxu0
  %2943 = vmatprep.subr.mxu0 %v2617
  %2944 = vmatpush1.msra.mxu0 %v2616
  %2945 = vmatprep.subr.mxu0 %v2623
  %2946 = vmatpush1.msra.mxu0 %v2622
  %2947 = vmatprep.subr.mxu0 %v2629
  %2948 = vmatpush1.msra.mxu0 %v2628
  %2949 = vmatprep.subr.mxu0 %v2635
  %2950 = vmatpush1.msra.mxu0 %v2634
  %2951 = vmatprep.subr.mxu0 %v2641
  %2952 = vmatpush1.msra.mxu0 %v2640
  %2953 = vmatprep.subr.mxu0 %v2647
  %2954 = vmatpush1.msra.mxu0 %v2646
  %2955 = vmatprep.subr.mxu0 %v2653
  %2956 = vmatpush1.msra.mxu0 %v2652
  %2957 = vmatprep.subr.mxu0 %v2659
  %2958 = vmatpush1.msra.mxu0 %v2658
  %2959 = vmatprep.subr.mxu0 %v2665
  %2960 = vmatpush1.msra.mxu0 %v2664
  %2961 = vmatprep.subr.mxu0 %v2671
  %2962 = vmatpush1.msra.mxu0 %v2670
  %2963 = vmatprep.subr.mxu0 %v2677
  %2964 = vmatpush1.msra.mxu0 %v2676
  %2965 = vmatprep.subr.mxu0 %v2683
  %2966 = vmatpush1.msra.mxu0 %v2682
  %2967 = vmatprep.subr.mxu0 %v2689
  %2968 = vmatpush1.msra.mxu0 %v2688
  %2969 = vmatprep.subr.mxu0 %v2695
  %2970 = vmatpush1.msra.mxu0 %v2694
  %2971 = vmatprep.subr.mxu0 %v2701
  %2972 = vmatpush1.msra.mxu0 %v2700
  %2973 = vmatprep.subr.mxu0 %v2707
  %2974 = vmatpush1.msra.mxu0 %v2706
  %2975 = vmatprep.subr.mxu0 0.0
  %2976 = vmatpush1.msra.mxu0 0.0
  %2977 = vmatprep.subr.mxu0 0.0
  %2978 = vmatpush1.msra.mxu0 0.0
  %2979 = vmatprep.subr.mxu0 0.0
  %2980 = vmatpush1.msra.mxu0 0.0
  %2981 = vmatprep.subr.mxu0 0.0
  %2982 = vmatpush1.msra.mxu0 0.0
  %2983 = vmatprep.subr.mxu0 0.0
  %2984 = vmatpush1.msra.mxu0 0.0
  %2985 = vmatprep.subr.mxu0 0.0
  %2986 = vmatpush1.msra.mxu0 0.0
  %2987 = vmatprep.subr.mxu0 0.0
  %2988 = vmatpush1.msra.mxu0 0.0
  %2989 = vmatprep.subr.mxu0 0.0
  %2990 = vmatpush1.msra.mxu0 0.0
  %2991 = vmatprep.subr.mxu0 0.0
  %2992 = vmatpush1.msra.mxu0 0.0
  %2993 = vmatprep.subr.mxu0 0.0
  %2994 = vmatpush1.msra.mxu0 0.0
  %2995 = vmatprep.subr.mxu0 0.0
  %2996 = vmatpush1.msra.mxu0 0.0
  %2997 = vmatprep.subr.mxu0 0.0
  %2998 = vmatpush1.msra.mxu0 0.0
  %2999 = vmatprep.subr.mxu0 0.0
  %3000 = vmatpush1.msra.mxu0 0.0
  %3001 = vmatprep.subr.mxu0 0.0
  %3002 = vmatpush1.msra.mxu0 0.0
  %3003 = vmatprep.subr.mxu0 0.0
  %3004 = vmatpush1.msra.mxu0 0.0
  %3005 = vmatprep.subr.mxu0 0.0
  %3006 = vmatpush1.msra.mxu0 0.0
  %3007 = vmatprep.mubr.f32.mxu0 0.0
  %3008 = vmatmul.mubr.f32.gmra.mrb[0].mxu0 %v29
  %v3009 = vpop.f32.mrb[0].mxu0
  %v3010 = vadd.f32 0.0, %v3009
  %v3011 = vpop.f32.mrb[0].mxu0
  %v3012 = vadd.f32 0.0, %v3011
  %3013 = vmatprep.mubr.f32.mxu0 0.0
  %3014 = vmatmul.mubr.f32.gmra.mrb[0].mxu0 %v30
  %v3015 = vpop.f32.mrb[0].mxu0
  %v3016 = vadd.f32 0.0, %v3015
  %v3017 = vpop.f32.mrb[0].mxu0
  %v3018 = vadd.f32 0.0, %v3017
  %3019 = vmatprep.mubr.f32.mxu0 0.0
  %3020 = vmatmul.mubr.f32.gmra.mrb[0].mxu0 %v31
  %v3021 = vpop.f32.mrb[0].mxu0
  %v3022 = vadd.f32 0.0, %v3021
  %v3023 = vpop.f32.mrb[0].mxu0
  %v3024 = vadd.f32 0.0, %v3023
  %3025 = vmatprep.mubr.f32.mxu0 0.0
  %3026 = vmatmul.mubr.f32.gmra.mrb[0].mxu0 %v32
  %v3027 = vpop.f32.mrb[0].mxu0
  %v3028 = vadd.f32 0.0, %v3027
  %v3029 = vpop.f32.mrb[0].mxu0
  %v3030 = vadd.f32 0.0, %v3029
  %3031 = vmatprep.mubr.f32.mxu0 0.0
  %3032 = vmatmul.mubr.f32.gmra.mrb[0].mxu0 %v33
  %v3033 = vpop.f32.mrb[0].mxu0
  %v3034 = vadd.f32 0.0, %v3033
  %v3035 = vpop.f32.mrb[0].mxu0
  %v3036 = vadd.f32 0.0, %v3035
  %3037 = vmatprep.mubr.f32.mxu0 0.0
  %3038 = vmatmul.mubr.f32.gmra.mrb[0].mxu0 %v34
  %v3039 = vpop.f32.mrb[0].mxu0
  %v3040 = vadd.f32 0.0, %v3039
  %v3041 = vpop.f32.mrb[0].mxu0
  %v3042 = vadd.f32 0.0, %v3041
  %3043 = vmatprep.mubr.f32.mxu0 0.0
  %3044 = vmatmul.mubr.f32.gmra.mrb[0].mxu0 %v35
  %v3045 = vpop.f32.mrb[0].mxu0
  %v3046 = vadd.f32 0.0, %v3045
  %v3047 = vpop.f32.mrb[0].mxu0
  %v3048 = vadd.f32 0.0, %v3047
  %3049 = vmatprep.mubr.f32.mxu0 0.0
  %3050 = vmatmul.mubr.f32.gmra.mrb[0].mxu0 %v36
  %v3051 = vpop.f32.mrb[0].mxu0
  %v3052 = vadd.f32 0.0, %v3051
  %v3053 = vpop.f32.mrb[0].mxu0
  %v3054 = vadd.f32 0.0, %v3053
  %3055 = vmatprep.mubr.f32.mxu0 0.0
  %3056 = vmatmul.mubr.f32.gmra.mrb[0].mxu0 %v37
  %v3057 = vpop.f32.mrb[0].mxu0
  %v3058 = vadd.f32 0.0, %v3057
  %v3059 = vpop.f32.mrb[0].mxu0
  %v3060 = vadd.f32 0.0, %v3059
  %3061 = vmatprep.mubr.f32.mxu0 0.0
  %3062 = vmatmul.mubr.f32.gmra.mrb[0].mxu0 %v38
  %v3063 = vpop.f32.mrb[0].mxu0
  %v3064 = vadd.f32 0.0, %v3063
  %v3065 = vpop.f32.mrb[0].mxu0
  %v3066 = vadd.f32 0.0, %v3065
  %3067 = vmatprep.mubr.f32.mxu0 0.0
  %3068 = vmatmul.mubr.f32.gmra.mrb[0].mxu0 %v39
  %v3069 = vpop.f32.mrb[0].mxu0
  %v3070 = vadd.f32 0.0, %v3069
  %v3071 = vpop.f32.mrb[0].mxu0
  %v3072 = vadd.f32 0.0, %v3071
  %3073 = vmatprep.mubr.f32.mxu0 0.0
  %3074 = vmatmul.mubr.f32.gmra.mrb[0].mxu0 %v40
  %v3075 = vpop.f32.mrb[0].mxu0
  %v3076 = vadd.f32 0.0, %v3075
  %v3077 = vpop.f32.mrb[0].mxu0
  %v3078 = vadd.f32 0.0, %v3077
  %3079 = vmatprep.mubr.f32.mxu0 0.0
  %3080 = vmatmul.mubr.f32.gmra.mrb[0].mxu0 %v41
  %v3081 = vpop.f32.mrb[0].mxu0
  %v3082 = vadd.f32 0.0, %v3081
  %v3083 = vpop.f32.mrb[0].mxu0
  %v3084 = vadd.f32 0.0, %v3083
  %3085 = vmatprep.mubr.f32.mxu0 0.0
  %3086 = vmatmul.mubr.f32.gmra.mrb[0].mxu0 %v42
  %v3087 = vpop.f32.mrb[0].mxu0
  %v3088 = vadd.f32 0.0, %v3087
  %v3089 = vpop.f32.mrb[0].mxu0
  %v3090 = vadd.f32 0.0, %v3089
  %3091 = vmatprep.mubr.f32.mxu0 0.0
  %3092 = vmatmul.mubr.f32.gmra.mrb[0].mxu0 %v43
  %v3093 = vpop.f32.mrb[0].mxu0
  %v3094 = vadd.f32 0.0, %v3093
  %v3095 = vpop.f32.mrb[0].mxu0
  %v3096 = vadd.f32 0.0, %v3095
  %3097 = vmatprep.mubr.f32.mxu0 0.0
  %3098 = vmatmul.mubr.f32.gmra.mrb[0].mxu0 %v44
  %v3099 = vpop.f32.mrb[0].mxu0
  %v3100 = vadd.f32 0.0, %v3099
  %v3101 = vpop.f32.mrb[0].mxu0
  %v3102 = vadd.f32 0.0, %v3101
  %3103 = vmatprep.mubr.f32.mxu0 0.0
  %3104 = vmatmul.mubr.f32.gmra.mrb[0].mxu0 %v45
  %v3105 = vpop.f32.mrb[0].mxu0
  %v3106 = vadd.f32 0.0, %v3105
  %v3107 = vpop.f32.mrb[0].mxu0
  %v3108 = vadd.f32 0.0, %v3107
  %3109 = vmatprep.mubr.f32.mxu0 0.0
  %3110 = vmatmul.mubr.f32.gmra.mrb[0].mxu0 %v46
  %v3111 = vpop.f32.mrb[0].mxu0
  %v3112 = vadd.f32 0.0, %v3111
  %v3113 = vpop.f32.mrb[0].mxu0
  %v3114 = vadd.f32 0.0, %v3113
  %3115 = vmatprep.mubr.f32.mxu0 0.0
  %3116 = vmatmul.mubr.f32.gmra.mrb[0].mxu0 %v47
  %v3117 = vpop.f32.mrb[0].mxu0
  %v3118 = vadd.f32 0.0, %v3117
  %v3119 = vpop.f32.mrb[0].mxu0
  %v3120 = vadd.f32 0.0, %v3119
  %3121 = vmatprep.mubr.f32.mxu0 0.0
  %3122 = vmatmul.mubr.f32.gmra.mrb[0].mxu0 %v48
  %v3123 = vpop.f32.mrb[0].mxu0
  %v3124 = vadd.f32 0.0, %v3123
  %v3125 = vpop.f32.mrb[0].mxu0
  %v3126 = vadd.f32 0.0, %v3125
  %3127 = vmatprep.mubr.f32.mxu0 0.0
  %3128 = vmatmul.mubr.f32.gmra.mrb[0].mxu0 %v49
  %v3129 = vpop.f32.mrb[0].mxu0
  %v3130 = vadd.f32 0.0, %v3129
  %v3131 = vpop.f32.mrb[0].mxu0
  %v3132 = vadd.f32 0.0, %v3131
  %3133 = vmatprep.mubr.f32.mxu0 0.0
  %3134 = vmatmul.mubr.f32.gmra.mrb[0].mxu0 %v50
  %v3135 = vpop.f32.mrb[0].mxu0
  %v3136 = vadd.f32 0.0, %v3135
  %v3137 = vpop.f32.mrb[0].mxu0
  %v3138 = vadd.f32 0.0, %v3137
  %3139 = vmatprep.mubr.f32.mxu0 0.0
  %3140 = vmatmul.mubr.f32.gmra.mrb[0].mxu0 %v51
  %v3141 = vpop.f32.mrb[0].mxu0
  %v3142 = vadd.f32 0.0, %v3141
  %v3143 = vpop.f32.mrb[0].mxu0
  %v3144 = vadd.f32 0.0, %v3143
  %3145 = vmatprep.mubr.f32.mxu0 0.0
  %3146 = vmatmul.mubr.f32.gmra.mrb[0].mxu0 %v52
  %v3147 = vpop.f32.mrb[0].mxu0
  %v3148 = vadd.f32 0.0, %v3147
  %v3149 = vpop.f32.mrb[0].mxu0
  %v3150 = vadd.f32 0.0, %v3149
  %3151 = vmatprep.mubr.f32.mxu0 0.0
  %3152 = vmatmul.mubr.f32.gmra.mrb[0].mxu0 %v53
  %v3153 = vpop.f32.mrb[0].mxu0
  %v3154 = vadd.f32 0.0, %v3153
  %v3155 = vpop.f32.mrb[0].mxu0
  %v3156 = vadd.f32 0.0, %v3155
  %3157 = vmatprep.mubr.f32.mxu0 0.0
  %3158 = vmatmul.mubr.f32.gmra.mrb[0].mxu0 %v54
  %v3159 = vpop.f32.mrb[0].mxu0
  %v3160 = vadd.f32 0.0, %v3159
  %v3161 = vpop.f32.mrb[0].mxu0
  %v3162 = vadd.f32 0.0, %v3161
  %3163 = vmatprep.mubr.f32.mxu0 0.0
  %3164 = vmatmul.mubr.f32.gmra.mrb[0].mxu0 %v55
  %v3165 = vpop.f32.mrb[0].mxu0
  %v3166 = vadd.f32 0.0, %v3165
  %v3167 = vpop.f32.mrb[0].mxu0
  %v3168 = vadd.f32 0.0, %v3167
  %3169 = vmatprep.mubr.f32.mxu0 0.0
  %3170 = vmatmul.mubr.f32.gmra.mrb[0].mxu0 %v56
  %v3171 = vpop.f32.mrb[0].mxu0
  %v3172 = vadd.f32 0.0, %v3171
  %v3173 = vpop.f32.mrb[0].mxu0
  %v3174 = vadd.f32 0.0, %v3173
  %3175 = vdwg.mxu0
  %3176 = vmatprep.subr.mxu0 %v2619
  %3177 = vmatpush1.msra.mxu0 %v2618
  %3178 = vmatprep.subr.mxu0 %v2625
  %3179 = vmatpush1.msra.mxu0 %v2624
  %3180 = vmatprep.subr.mxu0 %v2631
  %3181 = vmatpush1.msra.mxu0 %v2630
  %3182 = vmatprep.subr.mxu0 %v2637
  %3183 = vmatpush1.msra.mxu0 %v2636
  %3184 = vmatprep.subr.mxu0 %v2643
  %3185 = vmatpush1.msra.mxu0 %v2642
  %3186 = vmatprep.subr.mxu0 %v2649
  %3187 = vmatpush1.msra.mxu0 %v2648
  %3188 = vmatprep.subr.mxu0 %v2655
  %3189 = vmatpush1.msra.mxu0 %v2654
  %3190 = vmatprep.subr.mxu0 %v2661
  %3191 = vmatpush1.msra.mxu0 %v2660
  %3192 = vmatprep.subr.mxu0 %v2667
  %3193 = vmatpush1.msra.mxu0 %v2666
  %3194 = vmatprep.subr.mxu0 %v2673
  %3195 = vmatpush1.msra.mxu0 %v2672
  %3196 = vmatprep.subr.mxu0 %v2679
  %3197 = vmatpush1.msra.mxu0 %v2678
  %3198 = vmatprep.subr.mxu0 %v2685
  %3199 = vmatpush1.msra.mxu0 %v2684
  %3200 = vmatprep.subr.mxu0 %v2691
  %3201 = vmatpush1.msra.mxu0 %v2690
  %3202 = vmatprep.subr.mxu0 %v2697
  %3203 = vmatpush1.msra.mxu0 %v2696
  %3204 = vmatprep.subr.mxu0 %v2703
  %3205 = vmatpush1.msra.mxu0 %v2702
  %3206 = vmatprep.subr.mxu0 %v2709
  %3207 = vmatpush1.msra.mxu0 %v2708
  %3208 = vmatprep.subr.mxu0 0.0
  %3209 = vmatpush1.msra.mxu0 0.0
  %3210 = vmatprep.subr.mxu0 0.0
  %3211 = vmatpush1.msra.mxu0 0.0
  %3212 = vmatprep.subr.mxu0 0.0
  %3213 = vmatpush1.msra.mxu0 0.0
  %3214 = vmatprep.subr.mxu0 0.0
  %3215 = vmatpush1.msra.mxu0 0.0
  %3216 = vmatprep.subr.mxu0 0.0
  %3217 = vmatpush1.msra.mxu0 0.0
  %3218 = vmatprep.subr.mxu0 0.0
  %3219 = vmatpush1.msra.mxu0 0.0
  %3220 = vmatprep.subr.mxu0 0.0
  %3221 = vmatpush1.msra.mxu0 0.0
  %3222 = vmatprep.subr.mxu0 0.0
  %3223 = vmatpush1.msra.mxu0 0.0
  %3224 = vmatprep.subr.mxu0 0.0
  %3225 = vmatpush1.msra.mxu0 0.0
  %3226 = vmatprep.subr.mxu0 0.0
  %3227 = vmatpush1.msra.mxu0 0.0
  %3228 = vmatprep.subr.mxu0 0.0
  %3229 = vmatpush1.msra.mxu0 0.0
  %3230 = vmatprep.subr.mxu0 0.0
  %3231 = vmatpush1.msra.mxu0 0.0
  %3232 = vmatprep.subr.mxu0 0.0
  %3233 = vmatpush1.msra.mxu0 0.0
  %3234 = vmatprep.subr.mxu0 0.0
  %3235 = vmatpush1.msra.mxu0 0.0
  %3236 = vmatprep.subr.mxu0 0.0
  %3237 = vmatpush1.msra.mxu0 0.0
  %3238 = vmatprep.subr.mxu0 0.0
  %3239 = vmatpush1.msra.mxu0 0.0
  %3240 = vmatprep.mubr.f32.mxu0 0.0
  %3241 = vmatmul.mubr.f32.gmra.mrb[0].mxu0 %v29
  %v3242 = vpop.f32.mrb[0].mxu0
  %v3243 = vadd.f32 0.0, %v3242
  %v3244 = vpop.f32.mrb[0].mxu0
  %v3245 = vadd.f32 0.0, %v3244
  %3246 = vmatprep.mubr.f32.mxu0 0.0
  %3247 = vmatmul.mubr.f32.gmra.mrb[0].mxu0 %v30
  %v3248 = vpop.f32.mrb[0].mxu0
  %v3249 = vadd.f32 0.0, %v3248
  %v3250 = vpop.f32.mrb[0].mxu0
  %v3251 = vadd.f32 0.0, %v3250
  %3252 = vmatprep.mubr.f32.mxu0 0.0
  %3253 = vmatmul.mubr.f32.gmra.mrb[0].mxu0 %v31
  %v3254 = vpop.f32.mrb[0].mxu0
  %v3255 = vadd.f32 0.0, %v3254
  %v3256 = vpop.f32.mrb[0].mxu0
  %v3257 = vadd.f32 0.0, %v3256
  %3258 = vmatprep.mubr.f32.mxu0 0.0
  %3259 = vmatmul.mubr.f32.gmra.mrb[0].mxu0 %v32
  %v3260 = vpop.f32.mrb[0].mxu0
  %v3261 = vadd.f32 0.0, %v3260
  %v3262 = vpop.f32.mrb[0].mxu0
  %v3263 = vadd.f32 0.0, %v3262
  %3264 = vmatprep.mubr.f32.mxu0 0.0
  %3265 = vmatmul.mubr.f32.gmra.mrb[0].mxu0 %v33
  %v3266 = vpop.f32.mrb[0].mxu0
  %v3267 = vadd.f32 0.0, %v3266
  %v3268 = vpop.f32.mrb[0].mxu0
  %v3269 = vadd.f32 0.0, %v3268
  %3270 = vmatprep.mubr.f32.mxu0 0.0
  %3271 = vmatmul.mubr.f32.gmra.mrb[0].mxu0 %v34
  %v3272 = vpop.f32.mrb[0].mxu0
  %v3273 = vadd.f32 0.0, %v3272
  %v3274 = vpop.f32.mrb[0].mxu0
  %v3275 = vadd.f32 0.0, %v3274
  %3276 = vmatprep.mubr.f32.mxu0 0.0
  %3277 = vmatmul.mubr.f32.gmra.mrb[0].mxu0 %v35
  %v3278 = vpop.f32.mrb[0].mxu0
  %v3279 = vadd.f32 0.0, %v3278
  %v3280 = vpop.f32.mrb[0].mxu0
  %v3281 = vadd.f32 0.0, %v3280
  %3282 = vmatprep.mubr.f32.mxu0 0.0
  %3283 = vmatmul.mubr.f32.gmra.mrb[0].mxu0 %v36
  %v3284 = vpop.f32.mrb[0].mxu0
  %v3285 = vadd.f32 0.0, %v3284
  %v3286 = vpop.f32.mrb[0].mxu0
  %v3287 = vadd.f32 0.0, %v3286
  %3288 = vmatprep.mubr.f32.mxu0 0.0
  %3289 = vmatmul.mubr.f32.gmra.mrb[0].mxu0 %v37
  %v3290 = vpop.f32.mrb[0].mxu0
  %v3291 = vadd.f32 0.0, %v3290
  %v3292 = vpop.f32.mrb[0].mxu0
  %v3293 = vadd.f32 0.0, %v3292
  %3294 = vmatprep.mubr.f32.mxu0 0.0
  %3295 = vmatmul.mubr.f32.gmra.mrb[0].mxu0 %v38
  %v3296 = vpop.f32.mrb[0].mxu0
  %v3297 = vadd.f32 0.0, %v3296
  %v3298 = vpop.f32.mrb[0].mxu0
  %v3299 = vadd.f32 0.0, %v3298
  %3300 = vmatprep.mubr.f32.mxu0 0.0
  %3301 = vmatmul.mubr.f32.gmra.mrb[0].mxu0 %v39
  %v3302 = vpop.f32.mrb[0].mxu0
  %v3303 = vadd.f32 0.0, %v3302
  %v3304 = vpop.f32.mrb[0].mxu0
  %v3305 = vadd.f32 0.0, %v3304
  %3306 = vmatprep.mubr.f32.mxu0 0.0
  %3307 = vmatmul.mubr.f32.gmra.mrb[0].mxu0 %v40
  %v3308 = vpop.f32.mrb[0].mxu0
  %v3309 = vadd.f32 0.0, %v3308
  %v3310 = vpop.f32.mrb[0].mxu0
  %v3311 = vadd.f32 0.0, %v3310
  %3312 = vmatprep.mubr.f32.mxu0 0.0
  %3313 = vmatmul.mubr.f32.gmra.mrb[0].mxu0 %v41
  %v3314 = vpop.f32.mrb[0].mxu0
  %v3315 = vadd.f32 0.0, %v3314
  %v3316 = vpop.f32.mrb[0].mxu0
  %v3317 = vadd.f32 0.0, %v3316
  %3318 = vmatprep.mubr.f32.mxu0 0.0
  %3319 = vmatmul.mubr.f32.gmra.mrb[0].mxu0 %v42
  %v3320 = vpop.f32.mrb[0].mxu0
  %v3321 = vadd.f32 0.0, %v3320
  %v3322 = vpop.f32.mrb[0].mxu0
  %v3323 = vadd.f32 0.0, %v3322
  %3324 = vmatprep.mubr.f32.mxu0 0.0
  %3325 = vmatmul.mubr.f32.gmra.mrb[0].mxu0 %v43
  %v3326 = vpop.f32.mrb[0].mxu0
  %v3327 = vadd.f32 0.0, %v3326
  %v3328 = vpop.f32.mrb[0].mxu0
  %v3329 = vadd.f32 0.0, %v3328
  %3330 = vmatprep.mubr.f32.mxu0 0.0
  %3331 = vmatmul.mubr.f32.gmra.mrb[0].mxu0 %v44
  %v3332 = vpop.f32.mrb[0].mxu0
  %v3333 = vadd.f32 0.0, %v3332
  %v3334 = vpop.f32.mrb[0].mxu0
  %v3335 = vadd.f32 0.0, %v3334
  %3336 = vmatprep.mubr.f32.mxu0 0.0
  %3337 = vmatmul.mubr.f32.gmra.mrb[0].mxu0 %v45
  %v3338 = vpop.f32.mrb[0].mxu0
  %v3339 = vadd.f32 0.0, %v3338
  %v3340 = vpop.f32.mrb[0].mxu0
  %v3341 = vadd.f32 0.0, %v3340
  %3342 = vmatprep.mubr.f32.mxu0 0.0
  %3343 = vmatmul.mubr.f32.gmra.mrb[0].mxu0 %v46
  %v3344 = vpop.f32.mrb[0].mxu0
  %v3345 = vadd.f32 0.0, %v3344
  %v3346 = vpop.f32.mrb[0].mxu0
  %v3347 = vadd.f32 0.0, %v3346
  %3348 = vmatprep.mubr.f32.mxu0 0.0
  %3349 = vmatmul.mubr.f32.gmra.mrb[0].mxu0 %v47
  %v3350 = vpop.f32.mrb[0].mxu0
  %v3351 = vadd.f32 0.0, %v3350
  %v3352 = vpop.f32.mrb[0].mxu0
  %v3353 = vadd.f32 0.0, %v3352
  %3354 = vmatprep.mubr.f32.mxu0 0.0
  %3355 = vmatmul.mubr.f32.gmra.mrb[0].mxu0 %v48
  %v3356 = vpop.f32.mrb[0].mxu0
  %v3357 = vadd.f32 0.0, %v3356
  %v3358 = vpop.f32.mrb[0].mxu0
  %v3359 = vadd.f32 0.0, %v3358
  %3360 = vmatprep.mubr.f32.mxu0 0.0
  %3361 = vmatmul.mubr.f32.gmra.mrb[0].mxu0 %v49
  %v3362 = vpop.f32.mrb[0].mxu0
  %v3363 = vadd.f32 0.0, %v3362
  %v3364 = vpop.f32.mrb[0].mxu0
  %v3365 = vadd.f32 0.0, %v3364
  %3366 = vmatprep.mubr.f32.mxu0 0.0
  %3367 = vmatmul.mubr.f32.gmra.mrb[0].mxu0 %v50
  %v3368 = vpop.f32.mrb[0].mxu0
  %v3369 = vadd.f32 0.0, %v3368
  %v3370 = vpop.f32.mrb[0].mxu0
  %v3371 = vadd.f32 0.0, %v3370
  %3372 = vmatprep.mubr.f32.mxu0 0.0
  %3373 = vmatmul.mubr.f32.gmra.mrb[0].mxu0 %v51
  %v3374 = vpop.f32.mrb[0].mxu0
  %v3375 = vadd.f32 0.0, %v3374
  %v3376 = vpop.f32.mrb[0].mxu0
  %v3377 = vadd.f32 0.0, %v3376
  %3378 = vmatprep.mubr.f32.mxu0 0.0
  %3379 = vmatmul.mubr.f32.gmra.mrb[0].mxu0 %v52
  %v3380 = vpop.f32.mrb[0].mxu0
  %v3381 = vadd.f32 0.0, %v3380
  %v3382 = vpop.f32.mrb[0].mxu0
  %v3383 = vadd.f32 0.0, %v3382
  %3384 = vmatprep.mubr.f32.mxu0 0.0
  %3385 = vmatmul.mubr.f32.gmra.mrb[0].mxu0 %v53
  %v3386 = vpop.f32.mrb[0].mxu0
  %v3387 = vadd.f32 0.0, %v3386
  %v3388 = vpop.f32.mrb[0].mxu0
  %v3389 = vadd.f32 0.0, %v3388
  %3390 = vmatprep.mubr.f32.mxu0 0.0
  %3391 = vmatmul.mubr.f32.gmra.mrb[0].mxu0 %v54
  %v3392 = vpop.f32.mrb[0].mxu0
  %v3393 = vadd.f32 0.0, %v3392
  %v3394 = vpop.f32.mrb[0].mxu0
  %v3395 = vadd.f32 0.0, %v3394
  %3396 = vmatprep.mubr.f32.mxu0 0.0
  %3397 = vmatmul.mubr.f32.gmra.mrb[0].mxu0 %v55
  %v3398 = vpop.f32.mrb[0].mxu0
  %v3399 = vadd.f32 0.0, %v3398
  %v3400 = vpop.f32.mrb[0].mxu0
  %v3401 = vadd.f32 0.0, %v3400
  %3402 = vmatprep.mubr.f32.mxu0 0.0
  %3403 = vmatmul.mubr.f32.gmra.mrb[0].mxu0 %v56
  %v3404 = vpop.f32.mrb[0].mxu0
  %v3405 = vadd.f32 0.0, %v3404
  %v3406 = vpop.f32.mrb[0].mxu0
  %v3407 = vadd.f32 0.0, %v3406
  %3408 = vdwg.mxu0
  %v3409 = vadd.f32 %v2445, %v2777
  %v3410 = vadd.f32 %v2446, %v2779
  %v3411 = vadd.f32 %v2447, %v3010
  %v3412 = vadd.f32 %v2448, %v3012
  %v3413 = vadd.f32 %v2449, %v3243
  %v3414 = vadd.f32 %v2450, %v3245
  %v3415 = vadd.f32 %v2451, %v2783
  %v3416 = vadd.f32 %v2452, %v2785
  %v3417 = vadd.f32 %v2453, %v3016
  %v3418 = vadd.f32 %v2454, %v3018
  %v3419 = vadd.f32 %v2455, %v3249
  %v3420 = vadd.f32 %v2456, %v3251
  %v3421 = vadd.f32 %v2457, %v2789
  %v3422 = vadd.f32 %v2458, %v2791
  %v3423 = vadd.f32 %v2459, %v3022
  %v3424 = vadd.f32 %v2460, %v3024
  %v3425 = vadd.f32 %v2461, %v3255
  %v3426 = vadd.f32 %v2462, %v3257
  %v3427 = vadd.f32 %v2463, %v2795
  %v3428 = vadd.f32 %v2464, %v2797
  %v3429 = vadd.f32 %v2465, %v3028
  %v3430 = vadd.f32 %v2466, %v3030
  %v3431 = vadd.f32 %v2467, %v3261
  %v3432 = vadd.f32 %v2468, %v3263
  %v3433 = vadd.f32 %v2469, %v2801
  %v3434 = vadd.f32 %v2470, %v2803
  %v3435 = vadd.f32 %v2471, %v3034
  %v3436 = vadd.f32 %v2472, %v3036
  %v3437 = vadd.f32 %v2473, %v3267
  %v3438 = vadd.f32 %v2474, %v3269
  %v3439 = vadd.f32 %v2475, %v2807
  %v3440 = vadd.f32 %v2476, %v2809
  %v3441 = vadd.f32 %v2477, %v3040
  %v3442 = vadd.f32 %v2478, %v3042
  %v3443 = vadd.f32 %v2479, %v3273
  %v3444 = vadd.f32 %v2480, %v3275
  %v3445 = vadd.f32 %v2481, %v2813
  %v3446 = vadd.f32 %v2482, %v2815
  %v3447 = vadd.f32 %v2483, %v3046
  %v3448 = vadd.f32 %v2484, %v3048
  %v3449 = vadd.f32 %v2485, %v3279
  %v3450 = vadd.f32 %v2486, %v3281
  %v3451 = vadd.f32 %v2487, %v2819
  %v3452 = vadd.f32 %v2488, %v2821
  %v3453 = vadd.f32 %v2489, %v3052
  %v3454 = vadd.f32 %v2490, %v3054
  %v3455 = vadd.f32 %v2491, %v3285
  %v3456 = vadd.f32 %v2492, %v3287
  %v3457 = vadd.f32 %v2493, %v2825
  %v3458 = vadd.f32 %v2494, %v2827
  %v3459 = vadd.f32 %v2495, %v3058
  %v3460 = vadd.f32 %v2496, %v3060
  %v3461 = vadd.f32 %v2497, %v3291
  %v3462 = vadd.f32 %v2498, %v3293
  %v3463 = vadd.f32 %v2499, %v2831
  %v3464 = vadd.f32 %v2500, %v2833
  %v3465 = vadd.f32 %v2501, %v3064
  %v3466 = vadd.f32 %v2502, %v3066
  %v3467 = vadd.f32 %v2503, %v3297
  %v3468 = vadd.f32 %v2504, %v3299
  %v3469 = vadd.f32 %v2505, %v2837
  %v3470 = vadd.f32 %v2506, %v2839
  %v3471 = vadd.f32 %v2507, %v3070
  %v3472 = vadd.f32 %v2508, %v3072
  %v3473 = vadd.f32 %v2509, %v3303
  %v3474 = vadd.f32 %v2510, %v3305
  %v3475 = vadd.f32 %v2511, %v2843
  %v3476 = vadd.f32 %v2512, %v2845
  %v3477 = vadd.f32 %v2513, %v3076
  %v3478 = vadd.f32 %v2514, %v3078
  %v3479 = vadd.f32 %v2515, %v3309
  %v3480 = vadd.f32 %v2516, %v3311
  %v3481 = vadd.f32 %v2517, %v2849
  %v3482 = vadd.f32 %v2518, %v2851
  %v3483 = vadd.f32 %v2519, %v3082
  %v3484 = vadd.f32 %v2520, %v3084
  %v3485 = vadd.f32 %v2521, %v3315
  %v3486 = vadd.f32 %v2522, %v3317
  %v3487 = vadd.f32 %v2523, %v2855
  %v3488 = vadd.f32 %v2524, %v2857
  %v3489 = vadd.f32 %v2525, %v3088
  %v3490 = vadd.f32 %v2526, %v3090
  %v3491 = vadd.f32 %v2527, %v3321
  %v3492 = vadd.f32 %v2528, %v3323
  %v3493 = vadd.f32 %v2529, %v2861
  %v3494 = vadd.f32 %v2530, %v2863
  %v3495 = vadd.f32 %v2531, %v3094
  %v3496 = vadd.f32 %v2532, %v3096
  %v3497 = vadd.f32 %v2533, %v3327
  %v3498 = vadd.f32 %v2534, %v3329
  %v3499 = vadd.f32 %v2535, %v2867
  %v3500 = vadd.f32 %v2536, %v2869
  %v3501 = vadd.f32 %v2537, %v3100
  %v3502 = vadd.f32 %v2538, %v3102
  %v3503 = vadd.f32 %v2539, %v3333
  %v3504 = vadd.f32 %v2540, %v3335
  %v3505 = vadd.f32 %v2541, %v2873
  %v3506 = vadd.f32 %v2542, %v2875
  %v3507 = vadd.f32 %v2543, %v3106
  %v3508 = vadd.f32 %v2544, %v3108
  %v3509 = vadd.f32 %v2545, %v3339
  %v3510 = vadd.f32 %v2546, %v3341
  %v3511 = vadd.f32 %v2547, %v2879
  %v3512 = vadd.f32 %v2548, %v2881
  %v3513 = vadd.f32 %v2549, %v3112
  %v3514 = vadd.f32 %v2550, %v3114
  %v3515 = vadd.f32 %v2551, %v3345
  %v3516 = vadd.f32 %v2552, %v3347
  %v3517 = vadd.f32 %v2553, %v2885
  %v3518 = vadd.f32 %v2554, %v2887
  %v3519 = vadd.f32 %v2555, %v3118
  %v3520 = vadd.f32 %v2556, %v3120
  %v3521 = vadd.f32 %v2557, %v3351
  %v3522 = vadd.f32 %v2558, %v3353
  %v3523 = vadd.f32 %v2559, %v2891
  %v3524 = vadd.f32 %v2560, %v2893
  %v3525 = vadd.f32 %v2561, %v3124
  %v3526 = vadd.f32 %v2562, %v3126
  %v3527 = vadd.f32 %v2563, %v3357
  %v3528 = vadd.f32 %v2564, %v3359
  %v3529 = vadd.f32 %v2565, %v2897
  %v3530 = vadd.f32 %v2566, %v2899
  %v3531 = vadd.f32 %v2567, %v3130
  %v3532 = vadd.f32 %v2568, %v3132
  %v3533 = vadd.f32 %v2569, %v3363
  %v3534 = vadd.f32 %v2570, %v3365
  %v3535 = vadd.f32 %v2571, %v2903
  %v3536 = vadd.f32 %v2572, %v2905
  %v3537 = vadd.f32 %v2573, %v3136
  %v3538 = vadd.f32 %v2574, %v3138
  %v3539 = vadd.f32 %v2575, %v3369
  %v3540 = vadd.f32 %v2576, %v3371
  %v3541 = vadd.f32 %v2577, %v2909
  %v3542 = vadd.f32 %v2578, %v2911
  %v3543 = vadd.f32 %v2579, %v3142
  %v3544 = vadd.f32 %v2580, %v3144
  %v3545 = vadd.f32 %v2581, %v3375
  %v3546 = vadd.f32 %v2582, %v3377
  %v3547 = vadd.f32 %v2583, %v2915
  %v3548 = vadd.f32 %v2584, %v2917
  %v3549 = vadd.f32 %v2585, %v3148
  %v3550 = vadd.f32 %v2586, %v3150
  %v3551 = vadd.f32 %v2587, %v3381
  %v3552 = vadd.f32 %v2588, %v3383
  %v3553 = vadd.f32 %v2589, %v2921
  %v3554 = vadd.f32 %v2590, %v2923
  %v3555 = vadd.f32 %v2591, %v3154
  %v3556 = vadd.f32 %v2592, %v3156
  %v3557 = vadd.f32 %v2593, %v3387
  %v3558 = vadd.f32 %v2594, %v3389
  %v3559 = vadd.f32 %v2595, %v2927
  %v3560 = vadd.f32 %v2596, %v2929
  %v3561 = vadd.f32 %v2597, %v3160
  %v3562 = vadd.f32 %v2598, %v3162
  %v3563 = vadd.f32 %v2599, %v3393
  %v3564 = vadd.f32 %v2600, %v3395
  %v3565 = vadd.f32 %v2601, %v2933
  %v3566 = vadd.f32 %v2602, %v2935
  %v3567 = vadd.f32 %v2603, %v3166
  %v3568 = vadd.f32 %v2604, %v3168
  %v3569 = vadd.f32 %v2605, %v3399
  %v3570 = vadd.f32 %v2606, %v3401
  %v3571 = vadd.f32 %v2607, %v2939
  %v3572 = vadd.f32 %v2608, %v2941
  %v3573 = vadd.f32 %v2609, %v3172
  %v3574 = vadd.f32 %v2610, %v3174
  %v3575 = vadd.f32 %v2611, %v3405
  %v3576 = vadd.f32 %v2612, %v3407
  %s3577 = scalar_lea.vmem %s1, 3072
  %v3578 = vld [vmem:[%s3577] sm:$0xff]
  %v3579 = vld [vmem:[%s3577 + $0x8] sm:$0xff]
  %v3580 = vld [vmem:[%s3577 + $0x10] sm:$0xff]
  %v3581 = vld [vmem:[%s3577 + $0x18] sm:$0xff]
  %v3582 = vld [vmem:[%s3577 + $0x20] sm:$0xff]
  %v3583 = vld [vmem:[%s3577 + $0x28] sm:$0xff]
  %v3584 = vld [vmem:[%s3577 + $0x30] sm:$0xff]
  %v3585 = vld [vmem:[%s3577 + $0x38] sm:$0xff]
  %v3586 = vld [vmem:[%s3577 + $0x40] sm:$0xff]
  %v3587 = vld [vmem:[%s3577 + $0x48] sm:$0xff]
  %v3588 = vld [vmem:[%s3577 + $0x50] sm:$0xff]
  %v3589 = vld [vmem:[%s3577 + $0x58] sm:$0xff]
  %v3590 = vld [vmem:[%s3577 + $0x60] sm:$0xff]
  %v3591 = vld [vmem:[%s3577 + $0x68] sm:$0xff]
  %v3592 = vld [vmem:[%s3577 + $0x70] sm:$0xff]
  %v3593 = vld [vmem:[%s3577 + $0x78] sm:$0xff]
  %v3594 = vld [vmem:[%s3577 + $0x80] sm:$0xff]
  %v3595 = vld [vmem:[%s3577 + $0x88] sm:$0xff]
  %v3596 = vld [vmem:[%s3577 + $0x90] sm:$0xff]
  %v3597 = vld [vmem:[%s3577 + $0x98] sm:$0xff]
  %v3598 = vld [vmem:[%s3577 + $0xa0] sm:$0xff]
  %v3599 = vld [vmem:[%s3577 + $0xa8] sm:$0xff]
  %v3600 = vld [vmem:[%s3577 + $0xb0] sm:$0xff]
  %v3601 = vld [vmem:[%s3577 + $0xb8] sm:$0xff]
  %v3602 = vld [vmem:[%s3577 + $0xc0] sm:$0xff]
  %v3603 = vld [vmem:[%s3577 + $0xc8] sm:$0xff]
  %v3604 = vld [vmem:[%s3577 + $0xd0] sm:$0xff]
  %v3605 = vld [vmem:[%s3577 + $0xd8] sm:$0xff]
  %v3606 = vld [vmem:[%s3577 + $0xe0] sm:$0xff]
  %v3607 = vld [vmem:[%s3577 + $0xe8] sm:$0xff]
  %v3608 = vld [vmem:[%s3577 + $0xf0] sm:$0xff]
  %v3609 = vld [vmem:[%s3577 + $0xf8] sm:$0xff]
  %v3610 = vld [vmem:[%s3577 + $0x100] sm:$0xff]
  %v3611 = vld [vmem:[%s3577 + $0x108] sm:$0xff]
  %v3612 = vld [vmem:[%s3577 + $0x110] sm:$0xff]
  %v3613 = vld [vmem:[%s3577 + $0x118] sm:$0xff]
  %v3614 = vld [vmem:[%s3577 + $0x120] sm:$0xff]
  %v3615 = vld [vmem:[%s3577 + $0x128] sm:$0xff]
  %v3616 = vld [vmem:[%s3577 + $0x130] sm:$0xff]
  %v3617 = vld [vmem:[%s3577 + $0x138] sm:$0xff]
  %v3618 = vld [vmem:[%s3577 + $0x140] sm:$0xff]
  %v3619 = vld [vmem:[%s3577 + $0x148] sm:$0xff]
  %v3620 = vld [vmem:[%s3577 + $0x150] sm:$0xff]
  %v3621 = vld [vmem:[%s3577 + $0x158] sm:$0xff]
  %v3622 = vld [vmem:[%s3577 + $0x160] sm:$0xff]
  %v3623 = vld [vmem:[%s3577 + $0x168] sm:$0xff]
  %v3624 = vld [vmem:[%s3577 + $0x170] sm:$0xff]
  %v3625 = vld [vmem:[%s3577 + $0x178] sm:$0xff]
  %v3626 = vld [vmem:[%s3577 + $0x180] sm:$0xff]
  %v3627 = vld [vmem:[%s3577 + $0x188] sm:$0xff]
  %v3628 = vld [vmem:[%s3577 + $0x190] sm:$0xff]
  %v3629 = vld [vmem:[%s3577 + $0x198] sm:$0xff]
  %v3630 = vld [vmem:[%s3577 + $0x1a0] sm:$0xff]
  %v3631 = vld [vmem:[%s3577 + $0x1a8] sm:$0xff]
  %v3632 = vld [vmem:[%s3577 + $0x1b0] sm:$0xff]
  %v3633 = vld [vmem:[%s3577 + $0x1b8] sm:$0xff]
  %v3634 = vld [vmem:[%s3577 + $0x1c0] sm:$0xff]
  %v3635 = vld [vmem:[%s3577 + $0x1c8] sm:$0xff]
  %v3636 = vld [vmem:[%s3577 + $0x1d0] sm:$0xff]
  %v3637 = vld [vmem:[%s3577 + $0x1d8] sm:$0xff]
  %v3638 = vld [vmem:[%s3577 + $0x1e0] sm:$0xff]
  %v3639 = vld [vmem:[%s3577 + $0x1e8] sm:$0xff]
  %v3640 = vld [vmem:[%s3577 + $0x1f0] sm:$0xff]
  %v3641 = vld [vmem:[%s3577 + $0x1f8] sm:$0xff]
  %v3642 = vld [vmem:[%s3577 + $0x200] sm:$0xff]
  %v3643 = vld [vmem:[%s3577 + $0x208] sm:$0xff]
  %v3644 = vld [vmem:[%s3577 + $0x210] sm:$0xff]
  %v3645 = vld [vmem:[%s3577 + $0x218] sm:$0xff]
  %v3646 = vld [vmem:[%s3577 + $0x220] sm:$0xff]
  %v3647 = vld [vmem:[%s3577 + $0x228] sm:$0xff]
  %v3648 = vld [vmem:[%s3577 + $0x230] sm:$0xff]
  %v3649 = vld [vmem:[%s3577 + $0x238] sm:$0xff]
  %v3650 = vld [vmem:[%s3577 + $0x240] sm:$0xff]
  %v3651 = vld [vmem:[%s3577 + $0x248] sm:$0xff]
  %v3652 = vld [vmem:[%s3577 + $0x250] sm:$0xff]
  %v3653 = vld [vmem:[%s3577 + $0x258] sm:$0xff]
  %v3654 = vld [vmem:[%s3577 + $0x260] sm:$0xff]
  %v3655 = vld [vmem:[%s3577 + $0x268] sm:$0xff]
  %v3656 = vld [vmem:[%s3577 + $0x270] sm:$0xff]
  %v3657 = vld [vmem:[%s3577 + $0x278] sm:$0xff]
  %v3658 = vld [vmem:[%s3577 + $0x280] sm:$0xff]
  %v3659 = vld [vmem:[%s3577 + $0x288] sm:$0xff]
  %v3660 = vld [vmem:[%s3577 + $0x290] sm:$0xff]
  %v3661 = vld [vmem:[%s3577 + $0x298] sm:$0xff]
  %v3662 = vld [vmem:[%s3577 + $0x2a0] sm:$0xff]
  %v3663 = vld [vmem:[%s3577 + $0x2a8] sm:$0xff]
  %v3664 = vld [vmem:[%s3577 + $0x2b0] sm:$0xff]
  %v3665 = vld [vmem:[%s3577 + $0x2b8] sm:$0xff]
  %v3666 = vld [vmem:[%s3577 + $0x2c0] sm:$0xff]
  %v3667 = vld [vmem:[%s3577 + $0x2c8] sm:$0xff]
  %v3668 = vld [vmem:[%s3577 + $0x2d0] sm:$0xff]
  %v3669 = vld [vmem:[%s3577 + $0x2d8] sm:$0xff]
  %v3670 = vld [vmem:[%s3577 + $0x2e0] sm:$0xff]
  %v3671 = vld [vmem:[%s3577 + $0x2e8] sm:$0xff]
  %v3672 = vld [vmem:[%s3577 + $0x2f0] sm:$0xff]
  %v3673 = vld [vmem:[%s3577 + $0x2f8] sm:$0xff]
  %3674 = vmatprep.subr.mxu0 %v3579
  %3675 = vmatpush1.msra.mxu0 %v3578
  %3676 = vmatprep.subr.mxu0 %v3585
  %3677 = vmatpush1.msra.mxu0 %v3584
  %3678 = vmatprep.subr.mxu0 %v3591
  %3679 = vmatpush1.msra.mxu0 %v3590
  %3680 = vmatprep.subr.mxu0 %v3597
  %3681 = vmatpush1.msra.mxu0 %v3596
  %3682 = vmatprep.subr.mxu0 %v3603
  %3683 = vmatpush1.msra.mxu0 %v3602
  %3684 = vmatprep.subr.mxu0 %v3609
  %3685 = vmatpush1.msra.mxu0 %v3608
  %3686 = vmatprep.subr.mxu0 %v3615
  %3687 = vmatpush1.msra.mxu0 %v3614
  %3688 = vmatprep.subr.mxu0 %v3621
  %3689 = vmatpush1.msra.mxu0 %v3620
  %3690 = vmatprep.subr.mxu0 %v3627
  %3691 = vmatpush1.msra.mxu0 %v3626
  %3692 = vmatprep.subr.mxu0 %v3633
  %3693 = vmatpush1.msra.mxu0 %v3632
  %3694 = vmatprep.subr.mxu0 %v3639
  %3695 = vmatpush1.msra.mxu0 %v3638
  %3696 = vmatprep.subr.mxu0 %v3645
  %3697 = vmatpush1.msra.mxu0 %v3644
  %3698 = vmatprep.subr.mxu0 %v3651
  %3699 = vmatpush1.msra.mxu0 %v3650
  %3700 = vmatprep.subr.mxu0 %v3657
  %3701 = vmatpush1.msra.mxu0 %v3656
  %3702 = vmatprep.subr.mxu0 %v3663
  %3703 = vmatpush1.msra.mxu0 %v3662
  %3704 = vmatprep.subr.mxu0 %v3669
  %3705 = vmatpush1.msra.mxu0 %v3668
  %3706 = vmatprep.subr.mxu0 0.0
  %3707 = vmatpush1.msra.mxu0 0.0
  %3708 = vmatprep.subr.mxu0 0.0
  %3709 = vmatpush1.msra.mxu0 0.0
  %3710 = vmatprep.subr.mxu0 0.0
  %3711 = vmatpush1.msra.mxu0 0.0
  %3712 = vmatprep.subr.mxu0 0.0
  %3713 = vmatpush1.msra.mxu0 0.0
  %3714 = vmatprep.subr.mxu0 0.0
  %3715 = vmatpush1.msra.mxu0 0.0
  %3716 = vmatprep.subr.mxu0 0.0
  %3717 = vmatpush1.msra.mxu0 0.0
  %3718 = vmatprep.subr.mxu0 0.0
  %3719 = vmatpush1.msra.mxu0 0.0
  %3720 = vmatprep.subr.mxu0 0.0
  %3721 = vmatpush1.msra.mxu0 0.0
  %3722 = vmatprep.subr.mxu0 0.0
  %3723 = vmatpush1.msra.mxu0 0.0
  %3724 = vmatprep.subr.mxu0 0.0
  %3725 = vmatpush1.msra.mxu0 0.0
  %3726 = vmatprep.subr.mxu0 0.0
  %3727 = vmatpush1.msra.mxu0 0.0
  %3728 = vmatprep.subr.mxu0 0.0
  %3729 = vmatpush1.msra.mxu0 0.0
  %3730 = vmatprep.subr.mxu0 0.0
  %3731 = vmatpush1.msra.mxu0 0.0
  %3732 = vmatprep.subr.mxu0 0.0
  %3733 = vmatpush1.msra.mxu0 0.0
  %3734 = vmatprep.subr.mxu0 0.0
  %3735 = vmatpush1.msra.mxu0 0.0
  %3736 = vmatprep.subr.mxu0 0.0
  %3737 = vmatpush1.msra.mxu0 0.0
  %3738 = vmatprep.mubr.f32.mxu0 0.0
  %3739 = vmatmul.mubr.f32.gmra.mrb[0].mxu0 %v30
  %v3740 = vpop.f32.mrb[0].mxu0
  %v3741 = vadd.f32 0.0, %v3740
  %v3742 = vpop.f32.mrb[0].mxu0
  %v3743 = vadd.f32 0.0, %v3742
  %3744 = vmatprep.mubr.f32.mxu0 0.0
  %3745 = vmatmul.mubr.f32.gmra.mrb[0].mxu0 %v31
  %v3746 = vpop.f32.mrb[0].mxu0
  %v3747 = vadd.f32 0.0, %v3746
  %v3748 = vpop.f32.mrb[0].mxu0
  %v3749 = vadd.f32 0.0, %v3748
  %3750 = vmatprep.mubr.f32.mxu0 0.0
  %3751 = vmatmul.mubr.f32.gmra.mrb[0].mxu0 %v32
  %v3752 = vpop.f32.mrb[0].mxu0
  %v3753 = vadd.f32 0.0, %v3752
  %v3754 = vpop.f32.mrb[0].mxu0
  %v3755 = vadd.f32 0.0, %v3754
  %3756 = vmatprep.mubr.f32.mxu0 0.0
  %3757 = vmatmul.mubr.f32.gmra.mrb[0].mxu0 %v33
  %v3758 = vpop.f32.mrb[0].mxu0
  %v3759 = vadd.f32 0.0, %v3758
  %v3760 = vpop.f32.mrb[0].mxu0
  %v3761 = vadd.f32 0.0, %v3760
  %3762 = vmatprep.mubr.f32.mxu0 0.0
  %3763 = vmatmul.mubr.f32.gmra.mrb[0].mxu0 %v34
  %v3764 = vpop.f32.mrb[0].mxu0
  %v3765 = vadd.f32 0.0, %v3764
  %v3766 = vpop.f32.mrb[0].mxu0
  %v3767 = vadd.f32 0.0, %v3766
  %3768 = vmatprep.mubr.f32.mxu0 0.0
  %3769 = vmatmul.mubr.f32.gmra.mrb[0].mxu0 %v35
  %v3770 = vpop.f32.mrb[0].mxu0
  %v3771 = vadd.f32 0.0, %v3770
  %v3772 = vpop.f32.mrb[0].mxu0
  %v3773 = vadd.f32 0.0, %v3772
  %3774 = vmatprep.mubr.f32.mxu0 0.0
  %3775 = vmatmul.mubr.f32.gmra.mrb[0].mxu0 %v36
  %v3776 = vpop.f32.mrb[0].mxu0
  %v3777 = vadd.f32 0.0, %v3776
  %v3778 = vpop.f32.mrb[0].mxu0
  %v3779 = vadd.f32 0.0, %v3778
  %3780 = vmatprep.mubr.f32.mxu0 0.0
  %3781 = vmatmul.mubr.f32.gmra.mrb[0].mxu0 %v37
  %v3782 = vpop.f32.mrb[0].mxu0
  %v3783 = vadd.f32 0.0, %v3782
  %v3784 = vpop.f32.mrb[0].mxu0
  %v3785 = vadd.f32 0.0, %v3784
  %3786 = vmatprep.mubr.f32.mxu0 0.0
  %3787 = vmatmul.mubr.f32.gmra.mrb[0].mxu0 %v38
  %v3788 = vpop.f32.mrb[0].mxu0
  %v3789 = vadd.f32 0.0, %v3788
  %v3790 = vpop.f32.mrb[0].mxu0
  %v3791 = vadd.f32 0.0, %v3790
  %3792 = vmatprep.mubr.f32.mxu0 0.0
  %3793 = vmatmul.mubr.f32.gmra.mrb[0].mxu0 %v39
  %v3794 = vpop.f32.mrb[0].mxu0
  %v3795 = vadd.f32 0.0, %v3794
  %v3796 = vpop.f32.mrb[0].mxu0
  %v3797 = vadd.f32 0.0, %v3796
  %3798 = vmatprep.mubr.f32.mxu0 0.0
  %3799 = vmatmul.mubr.f32.gmra.mrb[0].mxu0 %v40
  %v3800 = vpop.f32.mrb[0].mxu0
  %v3801 = vadd.f32 0.0, %v3800
  %v3802 = vpop.f32.mrb[0].mxu0
  %v3803 = vadd.f32 0.0, %v3802
  %3804 = vmatprep.mubr.f32.mxu0 0.0
  %3805 = vmatmul.mubr.f32.gmra.mrb[0].mxu0 %v41
  %v3806 = vpop.f32.mrb[0].mxu0
  %v3807 = vadd.f32 0.0, %v3806
  %v3808 = vpop.f32.mrb[0].mxu0
  %v3809 = vadd.f32 0.0, %v3808
  %3810 = vmatprep.mubr.f32.mxu0 0.0
  %3811 = vmatmul.mubr.f32.gmra.mrb[0].mxu0 %v42
  %v3812 = vpop.f32.mrb[0].mxu0
  %v3813 = vadd.f32 0.0, %v3812
  %v3814 = vpop.f32.mrb[0].mxu0
  %v3815 = vadd.f32 0.0, %v3814
  %3816 = vmatprep.mubr.f32.mxu0 0.0
  %3817 = vmatmul.mubr.f32.gmra.mrb[0].mxu0 %v43
  %v3818 = vpop.f32.mrb[0].mxu0
  %v3819 = vadd.f32 0.0, %v3818
  %v3820 = vpop.f32.mrb[0].mxu0
  %v3821 = vadd.f32 0.0, %v3820
  %3822 = vmatprep.mubr.f32.mxu0 0.0
  %3823 = vmatmul.mubr.f32.gmra.mrb[0].mxu0 %v44
  %v3824 = vpop.f32.mrb[0].mxu0
  %v3825 = vadd.f32 0.0, %v3824
  %v3826 = vpop.f32.mrb[0].mxu0
  %v3827 = vadd.f32 0.0, %v3826
  %3828 = vmatprep.mubr.f32.mxu0 0.0
  %3829 = vmatmul.mubr.f32.gmra.mrb[0].mxu0 %v45
  %v3830 = vpop.f32.mrb[0].mxu0
  %v3831 = vadd.f32 0.0, %v3830
  %v3832 = vpop.f32.mrb[0].mxu0
  %v3833 = vadd.f32 0.0, %v3832
  %3834 = vmatprep.mubr.f32.mxu0 0.0
  %3835 = vmatmul.mubr.f32.gmra.mrb[0].mxu0 %v46
  %v3836 = vpop.f32.mrb[0].mxu0
  %v3837 = vadd.f32 0.0, %v3836
  %v3838 = vpop.f32.mrb[0].mxu0
  %v3839 = vadd.f32 0.0, %v3838
  %3840 = vmatprep.mubr.f32.mxu0 0.0
  %3841 = vmatmul.mubr.f32.gmra.mrb[0].mxu0 %v47
  %v3842 = vpop.f32.mrb[0].mxu0
  %v3843 = vadd.f32 0.0, %v3842
  %v3844 = vpop.f32.mrb[0].mxu0
  %v3845 = vadd.f32 0.0, %v3844
  %3846 = vmatprep.mubr.f32.mxu0 0.0
  %3847 = vmatmul.mubr.f32.gmra.mrb[0].mxu0 %v48
  %v3848 = vpop.f32.mrb[0].mxu0
  %v3849 = vadd.f32 0.0, %v3848
  %v3850 = vpop.f32.mrb[0].mxu0
  %v3851 = vadd.f32 0.0, %v3850
  %3852 = vmatprep.mubr.f32.mxu0 0.0
  %3853 = vmatmul.mubr.f32.gmra.mrb[0].mxu0 %v49
  %v3854 = vpop.f32.mrb[0].mxu0
  %v3855 = vadd.f32 0.0, %v3854
  %v3856 = vpop.f32.mrb[0].mxu0
  %v3857 = vadd.f32 0.0, %v3856
  %3858 = vmatprep.mubr.f32.mxu0 0.0
  %3859 = vmatmul.mubr.f32.gmra.mrb[0].mxu0 %v50
  %v3860 = vpop.f32.mrb[0].mxu0
  %v3861 = vadd.f32 0.0, %v3860
  %v3862 = vpop.f32.mrb[0].mxu0
  %v3863 = vadd.f32 0.0, %v3862
  %3864 = vmatprep.mubr.f32.mxu0 0.0
  %3865 = vmatmul.mubr.f32.gmra.mrb[0].mxu0 %v51
  %v3866 = vpop.f32.mrb[0].mxu0
  %v3867 = vadd.f32 0.0, %v3866
  %v3868 = vpop.f32.mrb[0].mxu0
  %v3869 = vadd.f32 0.0, %v3868
  %3870 = vmatprep.mubr.f32.mxu0 0.0
  %3871 = vmatmul.mubr.f32.gmra.mrb[0].mxu0 %v52
  %v3872 = vpop.f32.mrb[0].mxu0
  %v3873 = vadd.f32 0.0, %v3872
  %v3874 = vpop.f32.mrb[0].mxu0
  %v3875 = vadd.f32 0.0, %v3874
  %3876 = vmatprep.mubr.f32.mxu0 0.0
  %3877 = vmatmul.mubr.f32.gmra.mrb[0].mxu0 %v53
  %v3878 = vpop.f32.mrb[0].mxu0
  %v3879 = vadd.f32 0.0, %v3878
  %v3880 = vpop.f32.mrb[0].mxu0
  %v3881 = vadd.f32 0.0, %v3880
  %3882 = vmatprep.mubr.f32.mxu0 0.0
  %3883 = vmatmul.mubr.f32.gmra.mrb[0].mxu0 %v54
  %v3884 = vpop.f32.mrb[0].mxu0
  %v3885 = vadd.f32 0.0, %v3884
  %v3886 = vpop.f32.mrb[0].mxu0
  %v3887 = vadd.f32 0.0, %v3886
  %3888 = vmatprep.mubr.f32.mxu0 0.0
  %3889 = vmatmul.mubr.f32.gmra.mrb[0].mxu0 %v55
  %v3890 = vpop.f32.mrb[0].mxu0
  %v3891 = vadd.f32 0.0, %v3890
  %v3892 = vpop.f32.mrb[0].mxu0
  %v3893 = vadd.f32 0.0, %v3892
  %3894 = vmatprep.mubr.f32.mxu0 0.0
  %3895 = vmatmul.mubr.f32.gmra.mrb[0].mxu0 %v56
  %v3896 = vpop.f32.mrb[0].mxu0
  %v3897 = vadd.f32 0.0, %v3896
  %v3898 = vpop.f32.mrb[0].mxu0
  %v3899 = vadd.f32 0.0, %v3898
  %3900 = vmatprep.mubr.f32.mxu0 0.0
  %3901 = vmatmul.mubr.f32.gmra.mrb[0].mxu0 %v57
  %v3902 = vpop.f32.mrb[0].mxu0
  %v3903 = vadd.f32 0.0, %v3902
  %v3904 = vpop.f32.mrb[0].mxu0
  %v3905 = vadd.f32 0.0, %v3904
  %3906 = vdwg.mxu0
  %3907 = vmatprep.subr.mxu0 %v3581
  %3908 = vmatpush1.msra.mxu0 %v3580
  %3909 = vmatprep.subr.mxu0 %v3587
  %3910 = vmatpush1.msra.mxu0 %v3586
  %3911 = vmatprep.subr.mxu0 %v3593
  %3912 = vmatpush1.msra.mxu0 %v3592
  %3913 = vmatprep.subr.mxu0 %v3599
  %3914 = vmatpush1.msra.mxu0 %v3598
  %3915 = vmatprep.subr.mxu0 %v3605
  %3916 = vmatpush1.msra.mxu0 %v3604
  %3917 = vmatprep.subr.mxu0 %v3611
  %3918 = vmatpush1.msra.mxu0 %v3610
  %3919 = vmatprep.subr.mxu0 %v3617
  %3920 = vmatpush1.msra.mxu0 %v3616
  %3921 = vmatprep.subr.mxu0 %v3623
  %3922 = vmatpush1.msra.mxu0 %v3622
  %3923 = vmatprep.subr.mxu0 %v3629
  %3924 = vmatpush1.msra.mxu0 %v3628
  %3925 = vmatprep.subr.mxu0 %v3635
  %3926 = vmatpush1.msra.mxu0 %v3634
  %3927 = vmatprep.subr.mxu0 %v3641
  %3928 = vmatpush1.msra.mxu0 %v3640
  %3929 = vmatprep.subr.mxu0 %v3647
  %3930 = vmatpush1.msra.mxu0 %v3646
  %3931 = vmatprep.subr.mxu0 %v3653
  %3932 = vmatpush1.msra.mxu0 %v3652
  %3933 = vmatprep.subr.mxu0 %v3659
  %3934 = vmatpush1.msra.mxu0 %v3658
  %3935 = vmatprep.subr.mxu0 %v3665
  %3936 = vmatpush1.msra.mxu0 %v3664
  %3937 = vmatprep.subr.mxu0 %v3671
  %3938 = vmatpush1.msra.mxu0 %v3670
  %3939 = vmatprep.subr.mxu0 0.0
  %3940 = vmatpush1.msra.mxu0 0.0
  %3941 = vmatprep.subr.mxu0 0.0
  %3942 = vmatpush1.msra.mxu0 0.0
  %3943 = vmatprep.subr.mxu0 0.0
  %3944 = vmatpush1.msra.mxu0 0.0
  %3945 = vmatprep.subr.mxu0 0.0
  %3946 = vmatpush1.msra.mxu0 0.0
  %3947 = vmatprep.subr.mxu0 0.0
  %3948 = vmatpush1.msra.mxu0 0.0
  %3949 = vmatprep.subr.mxu0 0.0
  %3950 = vmatpush1.msra.mxu0 0.0
  %3951 = vmatprep.subr.mxu0 0.0
  %3952 = vmatpush1.msra.mxu0 0.0
  %3953 = vmatprep.subr.mxu0 0.0
  %3954 = vmatpush1.msra.mxu0 0.0
  %3955 = vmatprep.subr.mxu0 0.0
  %3956 = vmatpush1.msra.mxu0 0.0
  %3957 = vmatprep.subr.mxu0 0.0
  %3958 = vmatpush1.msra.mxu0 0.0
  %3959 = vmatprep.subr.mxu0 0.0
  %3960 = vmatpush1.msra.mxu0 0.0
  %3961 = vmatprep.subr.mxu0 0.0
  %3962 = vmatpush1.msra.mxu0 0.0
  %3963 = vmatprep.subr.mxu0 0.0
  %3964 = vmatpush1.msra.mxu0 0.0
  %3965 = vmatprep.subr.mxu0 0.0
  %3966 = vmatpush1.msra.mxu0 0.0
  %3967 = vmatprep.subr.mxu0 0.0
  %3968 = vmatpush1.msra.mxu0 0.0
  %3969 = vmatprep.subr.mxu0 0.0
  %3970 = vmatpush1.msra.mxu0 0.0
  %3971 = vmatprep.mubr.f32.mxu0 0.0
  %3972 = vmatmul.mubr.f32.gmra.mrb[0].mxu0 %v30
  %v3973 = vpop.f32.mrb[0].mxu0
  %v3974 = vadd.f32 0.0, %v3973
  %v3975 = vpop.f32.mrb[0].mxu0
  %v3976 = vadd.f32 0.0, %v3975
  %3977 = vmatprep.mubr.f32.mxu0 0.0
  %3978 = vmatmul.mubr.f32.gmra.mrb[0].mxu0 %v31
  %v3979 = vpop.f32.mrb[0].mxu0
  %v3980 = vadd.f32 0.0, %v3979
  %v3981 = vpop.f32.mrb[0].mxu0
  %v3982 = vadd.f32 0.0, %v3981
  %3983 = vmatprep.mubr.f32.mxu0 0.0
  %3984 = vmatmul.mubr.f32.gmra.mrb[0].mxu0 %v32
  %v3985 = vpop.f32.mrb[0].mxu0
  %v3986 = vadd.f32 0.0, %v3985
  %v3987 = vpop.f32.mrb[0].mxu0
  %v3988 = vadd.f32 0.0, %v3987
  %3989 = vmatprep.mubr.f32.mxu0 0.0
  %3990 = vmatmul.mubr.f32.gmra.mrb[0].mxu0 %v33
  %v3991 = vpop.f32.mrb[0].mxu0
  %v3992 = vadd.f32 0.0, %v3991
  %v3993 = vpop.f32.mrb[0].mxu0
  %v3994 = vadd.f32 0.0, %v3993
  %3995 = vmatprep.mubr.f32.mxu0 0.0
  %3996 = vmatmul.mubr.f32.gmra.mrb[0].mxu0 %v34
  %v3997 = vpop.f32.mrb[0].mxu0
  %v3998 = vadd.f32 0.0, %v3997
  %v3999 = vpop.f32.mrb[0].mxu0
  %v4000 = vadd.f32 0.0, %v3999
  %4001 = vmatprep.mubr.f32.mxu0 0.0
  %4002 = vmatmul.mubr.f32.gmra.mrb[0].mxu0 %v35
  %v4003 = vpop.f32.mrb[0].mxu0
  %v4004 = vadd.f32 0.0, %v4003
  %v4005 = vpop.f32.mrb[0].mxu0
  %v4006 = vadd.f32 0.0, %v4005
  %4007 = vmatprep.mubr.f32.mxu0 0.0
  %4008 = vmatmul.mubr.f32.gmra.mrb[0].mxu0 %v36
  %v4009 = vpop.f32.mrb[0].mxu0
  %v4010 = vadd.f32 0.0, %v4009
  %v4011 = vpop.f32.mrb[0].mxu0
  %v4012 = vadd.f32 0.0, %v4011
  %4013 = vmatprep.mubr.f32.mxu0 0.0
  %4014 = vmatmul.mubr.f32.gmra.mrb[0].mxu0 %v37
  %v4015 = vpop.f32.mrb[0].mxu0
  %v4016 = vadd.f32 0.0, %v4015
  %v4017 = vpop.f32.mrb[0].mxu0
  %v4018 = vadd.f32 0.0, %v4017
  %4019 = vmatprep.mubr.f32.mxu0 0.0
  %4020 = vmatmul.mubr.f32.gmra.mrb[0].mxu0 %v38
  %v4021 = vpop.f32.mrb[0].mxu0
  %v4022 = vadd.f32 0.0, %v4021
  %v4023 = vpop.f32.mrb[0].mxu0
  %v4024 = vadd.f32 0.0, %v4023
  %4025 = vmatprep.mubr.f32.mxu0 0.0
  %4026 = vmatmul.mubr.f32.gmra.mrb[0].mxu0 %v39
  %v4027 = vpop.f32.mrb[0].mxu0
  %v4028 = vadd.f32 0.0, %v4027
  %v4029 = vpop.f32.mrb[0].mxu0
  %v4030 = vadd.f32 0.0, %v4029
  %4031 = vmatprep.mubr.f32.mxu0 0.0
  %4032 = vmatmul.mubr.f32.gmra.mrb[0].mxu0 %v40
  %v4033 = vpop.f32.mrb[0].mxu0
  %v4034 = vadd.f32 0.0, %v4033
  %v4035 = vpop.f32.mrb[0].mxu0
  %v4036 = vadd.f32 0.0, %v4035
  %4037 = vmatprep.mubr.f32.mxu0 0.0
  %4038 = vmatmul.mubr.f32.gmra.mrb[0].mxu0 %v41
  %v4039 = vpop.f32.mrb[0].mxu0
  %v4040 = vadd.f32 0.0, %v4039
  %v4041 = vpop.f32.mrb[0].mxu0
  %v4042 = vadd.f32 0.0, %v4041
  %4043 = vmatprep.mubr.f32.mxu0 0.0
  %4044 = vmatmul.mubr.f32.gmra.mrb[0].mxu0 %v42
  %v4045 = vpop.f32.mrb[0].mxu0
  %v4046 = vadd.f32 0.0, %v4045
  %v4047 = vpop.f32.mrb[0].mxu0
  %v4048 = vadd.f32 0.0, %v4047
  %4049 = vmatprep.mubr.f32.mxu0 0.0
  %4050 = vmatmul.mubr.f32.gmra.mrb[0].mxu0 %v43
  %v4051 = vpop.f32.mrb[0].mxu0
  %v4052 = vadd.f32 0.0, %v4051
  %v4053 = vpop.f32.mrb[0].mxu0
  %v4054 = vadd.f32 0.0, %v4053
  %4055 = vmatprep.mubr.f32.mxu0 0.0
  %4056 = vmatmul.mubr.f32.gmra.mrb[0].mxu0 %v44
  %v4057 = vpop.f32.mrb[0].mxu0
  %v4058 = vadd.f32 0.0, %v4057
  %v4059 = vpop.f32.mrb[0].mxu0
  %v4060 = vadd.f32 0.0, %v4059
  %4061 = vmatprep.mubr.f32.mxu0 0.0
  %4062 = vmatmul.mubr.f32.gmra.mrb[0].mxu0 %v45
  %v4063 = vpop.f32.mrb[0].mxu0
  %v4064 = vadd.f32 0.0, %v4063
  %v4065 = vpop.f32.mrb[0].mxu0
  %v4066 = vadd.f32 0.0, %v4065
  %4067 = vmatprep.mubr.f32.mxu0 0.0
  %4068 = vmatmul.mubr.f32.gmra.mrb[0].mxu0 %v46
  %v4069 = vpop.f32.mrb[0].mxu0
  %v4070 = vadd.f32 0.0, %v4069
  %v4071 = vpop.f32.mrb[0].mxu0
  %v4072 = vadd.f32 0.0, %v4071
  %4073 = vmatprep.mubr.f32.mxu0 0.0
  %4074 = vmatmul.mubr.f32.gmra.mrb[0].mxu0 %v47
  %v4075 = vpop.f32.mrb[0].mxu0
  %v4076 = vadd.f32 0.0, %v4075
  %v4077 = vpop.f32.mrb[0].mxu0
  %v4078 = vadd.f32 0.0, %v4077
  %4079 = vmatprep.mubr.f32.mxu0 0.0
  %4080 = vmatmul.mubr.f32.gmra.mrb[0].mxu0 %v48
  %v4081 = vpop.f32.mrb[0].mxu0
  %v4082 = vadd.f32 0.0, %v4081
  %v4083 = vpop.f32.mrb[0].mxu0
  %v4084 = vadd.f32 0.0, %v4083
  %4085 = vmatprep.mubr.f32.mxu0 0.0
  %4086 = vmatmul.mubr.f32.gmra.mrb[0].mxu0 %v49
  %v4087 = vpop.f32.mrb[0].mxu0
  %v4088 = vadd.f32 0.0, %v4087
  %v4089 = vpop.f32.mrb[0].mxu0
  %v4090 = vadd.f32 0.0, %v4089
  %4091 = vmatprep.mubr.f32.mxu0 0.0
  %4092 = vmatmul.mubr.f32.gmra.mrb[0].mxu0 %v50
  %v4093 = vpop.f32.mrb[0].mxu0
  %v4094 = vadd.f32 0.0, %v4093
  %v4095 = vpop.f32.mrb[0].mxu0
  %v4096 = vadd.f32 0.0, %v4095
  %4097 = vmatprep.mubr.f32.mxu0 0.0
  %4098 = vmatmul.mubr.f32.gmra.mrb[0].mxu0 %v51
  %v4099 = vpop.f32.mrb[0].mxu0
  %v4100 = vadd.f32 0.0, %v4099
  %v4101 = vpop.f32.mrb[0].mxu0
  %v4102 = vadd.f32 0.0, %v4101
  %4103 = vmatprep.mubr.f32.mxu0 0.0
  %4104 = vmatmul.mubr.f32.gmra.mrb[0].mxu0 %v52
  %v4105 = vpop.f32.mrb[0].mxu0
  %v4106 = vadd.f32 0.0, %v4105
  %v4107 = vpop.f32.mrb[0].mxu0
  %v4108 = vadd.f32 0.0, %v4107
  %4109 = vmatprep.mubr.f32.mxu0 0.0
  %4110 = vmatmul.mubr.f32.gmra.mrb[0].mxu0 %v53
  %v4111 = vpop.f32.mrb[0].mxu0
  %v4112 = vadd.f32 0.0, %v4111
  %v4113 = vpop.f32.mrb[0].mxu0
  %v4114 = vadd.f32 0.0, %v4113
  %4115 = vmatprep.mubr.f32.mxu0 0.0
  %4116 = vmatmul.mubr.f32.gmra.mrb[0].mxu0 %v54
  %v4117 = vpop.f32.mrb[0].mxu0
  %v4118 = vadd.f32 0.0, %v4117
  %v4119 = vpop.f32.mrb[0].mxu0
  %v4120 = vadd.f32 0.0, %v4119
  %4121 = vmatprep.mubr.f32.mxu0 0.0
  %4122 = vmatmul.mubr.f32.gmra.mrb[0].mxu0 %v55
  %v4123 = vpop.f32.mrb[0].mxu0
  %v4124 = vadd.f32 0.0, %v4123
  %v4125 = vpop.f32.mrb[0].mxu0
  %v4126 = vadd.f32 0.0, %v4125
  %4127 = vmatprep.mubr.f32.mxu0 0.0
  %4128 = vmatmul.mubr.f32.gmra.mrb[0].mxu0 %v56
  %v4129 = vpop.f32.mrb[0].mxu0
  %v4130 = vadd.f32 0.0, %v4129
  %v4131 = vpop.f32.mrb[0].mxu0
  %v4132 = vadd.f32 0.0, %v4131
  %4133 = vmatprep.mubr.f32.mxu0 0.0
  %4134 = vmatmul.mubr.f32.gmra.mrb[0].mxu0 %v57
  %v4135 = vpop.f32.mrb[0].mxu0
  %v4136 = vadd.f32 0.0, %v4135
  %v4137 = vpop.f32.mrb[0].mxu0
  %v4138 = vadd.f32 0.0, %v4137
  %4139 = vdwg.mxu0
  %4140 = vmatprep.subr.mxu0 %v3583
  %4141 = vmatpush1.msra.mxu0 %v3582
  %4142 = vmatprep.subr.mxu0 %v3589
  %4143 = vmatpush1.msra.mxu0 %v3588
  %4144 = vmatprep.subr.mxu0 %v3595
  %4145 = vmatpush1.msra.mxu0 %v3594
  %4146 = vmatprep.subr.mxu0 %v3601
  %4147 = vmatpush1.msra.mxu0 %v3600
  %4148 = vmatprep.subr.mxu0 %v3607
  %4149 = vmatpush1.msra.mxu0 %v3606
  %4150 = vmatprep.subr.mxu0 %v3613
  %4151 = vmatpush1.msra.mxu0 %v3612
  %4152 = vmatprep.subr.mxu0 %v3619
  %4153 = vmatpush1.msra.mxu0 %v3618
  %4154 = vmatprep.subr.mxu0 %v3625
  %4155 = vmatpush1.msra.mxu0 %v3624
  %4156 = vmatprep.subr.mxu0 %v3631
  %4157 = vmatpush1.msra.mxu0 %v3630
  %4158 = vmatprep.subr.mxu0 %v3637
  %4159 = vmatpush1.msra.mxu0 %v3636
  %4160 = vmatprep.subr.mxu0 %v3643
  %4161 = vmatpush1.msra.mxu0 %v3642
  %4162 = vmatprep.subr.mxu0 %v3649
  %4163 = vmatpush1.msra.mxu0 %v3648
  %4164 = vmatprep.subr.mxu0 %v3655
  %4165 = vmatpush1.msra.mxu0 %v3654
  %4166 = vmatprep.subr.mxu0 %v3661
  %4167 = vmatpush1.msra.mxu0 %v3660
  %4168 = vmatprep.subr.mxu0 %v3667
  %4169 = vmatpush1.msra.mxu0 %v3666
  %4170 = vmatprep.subr.mxu0 %v3673
  %4171 = vmatpush1.msra.mxu0 %v3672
  %4172 = vmatprep.subr.mxu0 0.0
  %4173 = vmatpush1.msra.mxu0 0.0
  %4174 = vmatprep.subr.mxu0 0.0
  %4175 = vmatpush1.msra.mxu0 0.0
  %4176 = vmatprep.subr.mxu0 0.0
  %4177 = vmatpush1.msra.mxu0 0.0
  %4178 = vmatprep.subr.mxu0 0.0
  %4179 = vmatpush1.msra.mxu0 0.0
  %4180 = vmatprep.subr.mxu0 0.0
  %4181 = vmatpush1.msra.mxu0 0.0
  %4182 = vmatprep.subr.mxu0 0.0
  %4183 = vmatpush1.msra.mxu0 0.0
  %4184 = vmatprep.subr.mxu0 0.0
  %4185 = vmatpush1.msra.mxu0 0.0
  %4186 = vmatprep.subr.mxu0 0.0
  %4187 = vmatpush1.msra.mxu0 0.0
  %4188 = vmatprep.subr.mxu0 0.0
  %4189 = vmatpush1.msra.mxu0 0.0
  %4190 = vmatprep.subr.mxu0 0.0
  %4191 = vmatpush1.msra.mxu0 0.0
  %4192 = vmatprep.subr.mxu0 0.0
  %4193 = vmatpush1.msra.mxu0 0.0
  %4194 = vmatprep.subr.mxu0 0.0
  %4195 = vmatpush1.msra.mxu0 0.0
  %4196 = vmatprep.subr.mxu0 0.0
  %4197 = vmatpush1.msra.mxu0 0.0
  %4198 = vmatprep.subr.mxu0 0.0
  %4199 = vmatpush1.msra.mxu0 0.0
  %4200 = vmatprep.subr.mxu0 0.0
  %4201 = vmatpush1.msra.mxu0 0.0
  %4202 = vmatprep.subr.mxu0 0.0
  %4203 = vmatpush1.msra.mxu0 0.0
  %4204 = vmatprep.mubr.f32.mxu0 0.0
  %4205 = vmatmul.mubr.f32.gmra.mrb[0].mxu0 %v30
  %v4206 = vpop.f32.mrb[0].mxu0
  %v4207 = vadd.f32 0.0, %v4206
  %v4208 = vpop.f32.mrb[0].mxu0
  %v4209 = vadd.f32 0.0, %v4208
  %4210 = vmatprep.mubr.f32.mxu0 0.0
  %4211 = vmatmul.mubr.f32.gmra.mrb[0].mxu0 %v31
  %v4212 = vpop.f32.mrb[0].mxu0
  %v4213 = vadd.f32 0.0, %v4212
  %v4214 = vpop.f32.mrb[0].mxu0
  %v4215 = vadd.f32 0.0, %v4214
  %4216 = vmatprep.mubr.f32.mxu0 0.0
  %4217 = vmatmul.mubr.f32.gmra.mrb[0].mxu0 %v32
  %v4218 = vpop.f32.mrb[0].mxu0
  %v4219 = vadd.f32 0.0, %v4218
  %v4220 = vpop.f32.mrb[0].mxu0
  %v4221 = vadd.f32 0.0, %v4220
  %4222 = vmatprep.mubr.f32.mxu0 0.0
  %4223 = vmatmul.mubr.f32.gmra.mrb[0].mxu0 %v33
  %v4224 = vpop.f32.mrb[0].mxu0
  %v4225 = vadd.f32 0.0, %v4224
  %v4226 = vpop.f32.mrb[0].mxu0
  %v4227 = vadd.f32 0.0, %v4226
  %4228 = vmatprep.mubr.f32.mxu0 0.0
  %4229 = vmatmul.mubr.f32.gmra.mrb[0].mxu0 %v34
  %v4230 = vpop.f32.mrb[0].mxu0
  %v4231 = vadd.f32 0.0, %v4230
  %v4232 = vpop.f32.mrb[0].mxu0
  %v4233 = vadd.f32 0.0, %v4232
  %4234 = vmatprep.mubr.f32.mxu0 0.0
  %4235 = vmatmul.mubr.f32.gmra.mrb[0].mxu0 %v35
  %v4236 = vpop.f32.mrb[0].mxu0
  %v4237 = vadd.f32 0.0, %v4236
  %v4238 = vpop.f32.mrb[0].mxu0
  %v4239 = vadd.f32 0.0, %v4238
  %4240 = vmatprep.mubr.f32.mxu0 0.0
  %4241 = vmatmul.mubr.f32.gmra.mrb[0].mxu0 %v36
  %v4242 = vpop.f32.mrb[0].mxu0
  %v4243 = vadd.f32 0.0, %v4242
  %v4244 = vpop.f32.mrb[0].mxu0
  %v4245 = vadd.f32 0.0, %v4244
  %4246 = vmatprep.mubr.f32.mxu0 0.0
  %4247 = vmatmul.mubr.f32.gmra.mrb[0].mxu0 %v37
  %v4248 = vpop.f32.mrb[0].mxu0
  %v4249 = vadd.f32 0.0, %v4248
  %v4250 = vpop.f32.mrb[0].mxu0
  %v4251 = vadd.f32 0.0, %v4250
  %4252 = vmatprep.mubr.f32.mxu0 0.0
  %4253 = vmatmul.mubr.f32.gmra.mrb[0].mxu0 %v38
  %v4254 = vpop.f32.mrb[0].mxu0
  %v4255 = vadd.f32 0.0, %v4254
  %v4256 = vpop.f32.mrb[0].mxu0
  %v4257 = vadd.f32 0.0, %v4256
  %4258 = vmatprep.mubr.f32.mxu0 0.0
  %4259 = vmatmul.mubr.f32.gmra.mrb[0].mxu0 %v39
  %v4260 = vpop.f32.mrb[0].mxu0
  %v4261 = vadd.f32 0.0, %v4260
  %v4262 = vpop.f32.mrb[0].mxu0
  %v4263 = vadd.f32 0.0, %v4262
  %4264 = vmatprep.mubr.f32.mxu0 0.0
  %4265 = vmatmul.mubr.f32.gmra.mrb[0].mxu0 %v40
  %v4266 = vpop.f32.mrb[0].mxu0
  %v4267 = vadd.f32 0.0, %v4266
  %v4268 = vpop.f32.mrb[0].mxu0
  %v4269 = vadd.f32 0.0, %v4268
  %4270 = vmatprep.mubr.f32.mxu0 0.0
  %4271 = vmatmul.mubr.f32.gmra.mrb[0].mxu0 %v41
  %v4272 = vpop.f32.mrb[0].mxu0
  %v4273 = vadd.f32 0.0, %v4272
  %v4274 = vpop.f32.mrb[0].mxu0
  %v4275 = vadd.f32 0.0, %v4274
  %4276 = vmatprep.mubr.f32.mxu0 0.0
  %4277 = vmatmul.mubr.f32.gmra.mrb[0].mxu0 %v42
  %v4278 = vpop.f32.mrb[0].mxu0
  %v4279 = vadd.f32 0.0, %v4278
  %v4280 = vpop.f32.mrb[0].mxu0
  %v4281 = vadd.f32 0.0, %v4280
  %4282 = vmatprep.mubr.f32.mxu0 0.0
  %4283 = vmatmul.mubr.f32.gmra.mrb[0].mxu0 %v43
  %v4284 = vpop.f32.mrb[0].mxu0
  %v4285 = vadd.f32 0.0, %v4284
  %v4286 = vpop.f32.mrb[0].mxu0
  %v4287 = vadd.f32 0.0, %v4286
  %4288 = vmatprep.mubr.f32.mxu0 0.0
  %4289 = vmatmul.mubr.f32.gmra.mrb[0].mxu0 %v44
  %v4290 = vpop.f32.mrb[0].mxu0
  %v4291 = vadd.f32 0.0, %v4290
  %v4292 = vpop.f32.mrb[0].mxu0
  %v4293 = vadd.f32 0.0, %v4292
  %4294 = vmatprep.mubr.f32.mxu0 0.0
  %4295 = vmatmul.mubr.f32.gmra.mrb[0].mxu0 %v45
  %v4296 = vpop.f32.mrb[0].mxu0
  %v4297 = vadd.f32 0.0, %v4296
  %v4298 = vpop.f32.mrb[0].mxu0
  %v4299 = vadd.f32 0.0, %v4298
  %4300 = vmatprep.mubr.f32.mxu0 0.0
  %4301 = vmatmul.mubr.f32.gmra.mrb[0].mxu0 %v46
  %v4302 = vpop.f32.mrb[0].mxu0
  %v4303 = vadd.f32 0.0, %v4302
  %v4304 = vpop.f32.mrb[0].mxu0
  %v4305 = vadd.f32 0.0, %v4304
  %4306 = vmatprep.mubr.f32.mxu0 0.0
  %4307 = vmatmul.mubr.f32.gmra.mrb[0].mxu0 %v47
  %v4308 = vpop.f32.mrb[0].mxu0
  %v4309 = vadd.f32 0.0, %v4308
  %v4310 = vpop.f32.mrb[0].mxu0
  %v4311 = vadd.f32 0.0, %v4310
  %4312 = vmatprep.mubr.f32.mxu0 0.0
  %4313 = vmatmul.mubr.f32.gmra.mrb[0].mxu0 %v48
  %v4314 = vpop.f32.mrb[0].mxu0
  %v4315 = vadd.f32 0.0, %v4314
  %v4316 = vpop.f32.mrb[0].mxu0
  %v4317 = vadd.f32 0.0, %v4316
  %4318 = vmatprep.mubr.f32.mxu0 0.0
  %4319 = vmatmul.mubr.f32.gmra.mrb[0].mxu0 %v49
  %v4320 = vpop.f32.mrb[0].mxu0
  %v4321 = vadd.f32 0.0, %v4320
  %v4322 = vpop.f32.mrb[0].mxu0
  %v4323 = vadd.f32 0.0, %v4322
  %4324 = vmatprep.mubr.f32.mxu0 0.0
  %4325 = vmatmul.mubr.f32.gmra.mrb[0].mxu0 %v50
  %v4326 = vpop.f32.mrb[0].mxu0
  %v4327 = vadd.f32 0.0, %v4326
  %v4328 = vpop.f32.mrb[0].mxu0
  %v4329 = vadd.f32 0.0, %v4328
  %4330 = vmatprep.mubr.f32.mxu0 0.0
  %4331 = vmatmul.mubr.f32.gmra.mrb[0].mxu0 %v51
  %v4332 = vpop.f32.mrb[0].mxu0
  %v4333 = vadd.f32 0.0, %v4332
  %v4334 = vpop.f32.mrb[0].mxu0
  %v4335 = vadd.f32 0.0, %v4334
  %4336 = vmatprep.mubr.f32.mxu0 0.0
  %4337 = vmatmul.mubr.f32.gmra.mrb[0].mxu0 %v52
  %v4338 = vpop.f32.mrb[0].mxu0
  %v4339 = vadd.f32 0.0, %v4338
  %v4340 = vpop.f32.mrb[0].mxu0
  %v4341 = vadd.f32 0.0, %v4340
  %4342 = vmatprep.mubr.f32.mxu0 0.0
  %4343 = vmatmul.mubr.f32.gmra.mrb[0].mxu0 %v53
  %v4344 = vpop.f32.mrb[0].mxu0
  %v4345 = vadd.f32 0.0, %v4344
  %v4346 = vpop.f32.mrb[0].mxu0
  %v4347 = vadd.f32 0.0, %v4346
  %4348 = vmatprep.mubr.f32.mxu0 0.0
  %4349 = vmatmul.mubr.f32.gmra.mrb[0].mxu0 %v54
  %v4350 = vpop.f32.mrb[0].mxu0
  %v4351 = vadd.f32 0.0, %v4350
  %v4352 = vpop.f32.mrb[0].mxu0
  %v4353 = vadd.f32 0.0, %v4352
  %4354 = vmatprep.mubr.f32.mxu0 0.0
  %4355 = vmatmul.mubr.f32.gmra.mrb[0].mxu0 %v55
  %v4356 = vpop.f32.mrb[0].mxu0
  %v4357 = vadd.f32 0.0, %v4356
  %v4358 = vpop.f32.mrb[0].mxu0
  %v4359 = vadd.f32 0.0, %v4358
  %4360 = vmatprep.mubr.f32.mxu0 0.0
  %4361 = vmatmul.mubr.f32.gmra.mrb[0].mxu0 %v56
  %v4362 = vpop.f32.mrb[0].mxu0
  %v4363 = vadd.f32 0.0, %v4362
  %v4364 = vpop.f32.mrb[0].mxu0
  %v4365 = vadd.f32 0.0, %v4364
  %4366 = vmatprep.mubr.f32.mxu0 0.0
  %4367 = vmatmul.mubr.f32.gmra.mrb[0].mxu0 %v57
  %v4368 = vpop.f32.mrb[0].mxu0
  %v4369 = vadd.f32 0.0, %v4368
  %v4370 = vpop.f32.mrb[0].mxu0
  %v4371 = vadd.f32 0.0, %v4370
  %4372 = vdwg.mxu0
  %v4373 = vadd.f32 %v3409, %v3741
  %v4374 = vadd.f32 %v3410, %v3743
  %v4375 = vadd.f32 %v3411, %v3974
  %v4376 = vadd.f32 %v3412, %v3976
  %v4377 = vadd.f32 %v3413, %v4207
  %v4378 = vadd.f32 %v3414, %v4209
  %v4379 = vadd.f32 %v3415, %v3747
  %v4380 = vadd.f32 %v3416, %v3749
  %v4381 = vadd.f32 %v3417, %v3980
  %v4382 = vadd.f32 %v3418, %v3982
  %v4383 = vadd.f32 %v3419, %v4213
  %v4384 = vadd.f32 %v3420, %v4215
  %v4385 = vadd.f32 %v3421, %v3753
  %v4386 = vadd.f32 %v3422, %v3755
  %v4387 = vadd.f32 %v3423, %v3986
  %v4388 = vadd.f32 %v3424, %v3988
  %v4389 = vadd.f32 %v3425, %v4219
  %v4390 = vadd.f32 %v3426, %v4221
  %v4391 = vadd.f32 %v3427, %v3759
  %v4392 = vadd.f32 %v3428, %v3761
  %v4393 = vadd.f32 %v3429, %v3992
  %v4394 = vadd.f32 %v3430, %v3994
  %v4395 = vadd.f32 %v3431, %v4225
  %v4396 = vadd.f32 %v3432, %v4227
  %v4397 = vadd.f32 %v3433, %v3765
  %v4398 = vadd.f32 %v3434, %v3767
  %v4399 = vadd.f32 %v3435, %v3998
  %v4400 = vadd.f32 %v3436, %v4000
  %v4401 = vadd.f32 %v3437, %v4231
  %v4402 = vadd.f32 %v3438, %v4233
  %v4403 = vadd.f32 %v3439, %v3771
  %v4404 = vadd.f32 %v3440, %v3773
  %v4405 = vadd.f32 %v3441, %v4004
  %v4406 = vadd.f32 %v3442, %v4006
  %v4407 = vadd.f32 %v3443, %v4237
  %v4408 = vadd.f32 %v3444, %v4239
  %v4409 = vadd.f32 %v3445, %v3777
  %v4410 = vadd.f32 %v3446, %v3779
  %v4411 = vadd.f32 %v3447, %v4010
  %v4412 = vadd.f32 %v3448, %v4012
  %v4413 = vadd.f32 %v3449, %v4243
  %v4414 = vadd.f32 %v3450, %v4245
  %v4415 = vadd.f32 %v3451, %v3783
  %v4416 = vadd.f32 %v3452, %v3785
  %v4417 = vadd.f32 %v3453, %v4016
  %v4418 = vadd.f32 %v3454, %v4018
  %v4419 = vadd.f32 %v3455, %v4249
  %v4420 = vadd.f32 %v3456, %v4251
  %v4421 = vadd.f32 %v3457, %v3789
  %v4422 = vadd.f32 %v3458, %v3791
  %v4423 = vadd.f32 %v3459, %v4022
  %v4424 = vadd.f32 %v3460, %v4024
  %v4425 = vadd.f32 %v3461, %v4255
  %v4426 = vadd.f32 %v3462, %v4257
  %v4427 = vadd.f32 %v3463, %v3795
  %v4428 = vadd.f32 %v3464, %v3797
  %v4429 = vadd.f32 %v3465, %v4028
  %v4430 = vadd.f32 %v3466, %v4030
  %v4431 = vadd.f32 %v3467, %v4261
  %v4432 = vadd.f32 %v3468, %v4263
  %v4433 = vadd.f32 %v3469, %v3801
  %v4434 = vadd.f32 %v3470, %v3803
  %v4435 = vadd.f32 %v3471, %v4034
  %v4436 = vadd.f32 %v3472, %v4036
  %v4437 = vadd.f32 %v3473, %v4267
  %v4438 = vadd.f32 %v3474, %v4269
  %v4439 = vadd.f32 %v3475, %v3807
  %v4440 = vadd.f32 %v3476, %v3809
  %v4441 = vadd.f32 %v3477, %v4040
  %v4442 = vadd.f32 %v3478, %v4042
  %v4443 = vadd.f32 %v3479, %v4273
  %v4444 = vadd.f32 %v3480, %v4275
  %v4445 = vadd.f32 %v3481, %v3813
  %v4446 = vadd.f32 %v3482, %v3815
  %v4447 = vadd.f32 %v3483, %v4046
  %v4448 = vadd.f32 %v3484, %v4048
  %v4449 = vadd.f32 %v3485, %v4279
  %v4450 = vadd.f32 %v3486, %v4281
  %v4451 = vadd.f32 %v3487, %v3819
  %v4452 = vadd.f32 %v3488, %v3821
  %v4453 = vadd.f32 %v3489, %v4052
  %v4454 = vadd.f32 %v3490, %v4054
  %v4455 = vadd.f32 %v3491, %v4285
  %v4456 = vadd.f32 %v3492, %v4287
  %v4457 = vadd.f32 %v3493, %v3825
  %v4458 = vadd.f32 %v3494, %v3827
  %v4459 = vadd.f32 %v3495, %v4058
  %v4460 = vadd.f32 %v3496, %v4060
  %v4461 = vadd.f32 %v3497, %v4291
  %v4462 = vadd.f32 %v3498, %v4293
  %v4463 = vadd.f32 %v3499, %v3831
  %v4464 = vadd.f32 %v3500, %v3833
  %v4465 = vadd.f32 %v3501, %v4064
  %v4466 = vadd.f32 %v3502, %v4066
  %v4467 = vadd.f32 %v3503, %v4297
  %v4468 = vadd.f32 %v3504, %v4299
  %v4469 = vadd.f32 %v3505, %v3837
  %v4470 = vadd.f32 %v3506, %v3839
  %v4471 = vadd.f32 %v3507, %v4070
  %v4472 = vadd.f32 %v3508, %v4072
  %v4473 = vadd.f32 %v3509, %v4303
  %v4474 = vadd.f32 %v3510, %v4305
  %v4475 = vadd.f32 %v3511, %v3843
  %v4476 = vadd.f32 %v3512, %v3845
  %v4477 = vadd.f32 %v3513, %v4076
  %v4478 = vadd.f32 %v3514, %v4078
  %v4479 = vadd.f32 %v3515, %v4309
  %v4480 = vadd.f32 %v3516, %v4311
  %v4481 = vadd.f32 %v3517, %v3849
  %v4482 = vadd.f32 %v3518, %v3851
  %v4483 = vadd.f32 %v3519, %v4082
  %v4484 = vadd.f32 %v3520, %v4084
  %v4485 = vadd.f32 %v3521, %v4315
  %v4486 = vadd.f32 %v3522, %v4317
  %v4487 = vadd.f32 %v3523, %v3855
  %v4488 = vadd.f32 %v3524, %v3857
  %v4489 = vadd.f32 %v3525, %v4088
  %v4490 = vadd.f32 %v3526, %v4090
  %v4491 = vadd.f32 %v3527, %v4321
  %v4492 = vadd.f32 %v3528, %v4323
  %v4493 = vadd.f32 %v3529, %v3861
  %v4494 = vadd.f32 %v3530, %v3863
  %v4495 = vadd.f32 %v3531, %v4094
  %v4496 = vadd.f32 %v3532, %v4096
  %v4497 = vadd.f32 %v3533, %v4327
  %v4498 = vadd.f32 %v3534, %v4329
  %v4499 = vadd.f32 %v3535, %v3867
  %v4500 = vadd.f32 %v3536, %v3869
  %v4501 = vadd.f32 %v3537, %v4100
  %v4502 = vadd.f32 %v3538, %v4102
  %v4503 = vadd.f32 %v3539, %v4333
  %v4504 = vadd.f32 %v3540, %v4335
  %v4505 = vadd.f32 %v3541, %v3873
  %v4506 = vadd.f32 %v3542, %v3875
  %v4507 = vadd.f32 %v3543, %v4106
  %v4508 = vadd.f32 %v3544, %v4108
  %v4509 = vadd.f32 %v3545, %v4339
  %v4510 = vadd.f32 %v3546, %v4341
  %v4511 = vadd.f32 %v3547, %v3879
  %v4512 = vadd.f32 %v3548, %v3881
  %v4513 = vadd.f32 %v3549, %v4112
  %v4514 = vadd.f32 %v3550, %v4114
  %v4515 = vadd.f32 %v3551, %v4345
  %v4516 = vadd.f32 %v3552, %v4347
  %v4517 = vadd.f32 %v3553, %v3885
  %v4518 = vadd.f32 %v3554, %v3887
  %v4519 = vadd.f32 %v3555, %v4118
  %v4520 = vadd.f32 %v3556, %v4120
  %v4521 = vadd.f32 %v3557, %v4351
  %v4522 = vadd.f32 %v3558, %v4353
  %v4523 = vadd.f32 %v3559, %v3891
  %v4524 = vadd.f32 %v3560, %v3893
  %v4525 = vadd.f32 %v3561, %v4124
  %v4526 = vadd.f32 %v3562, %v4126
  %v4527 = vadd.f32 %v3563, %v4357
  %v4528 = vadd.f32 %v3564, %v4359
  %v4529 = vadd.f32 %v3565, %v3897
  %v4530 = vadd.f32 %v3566, %v3899
  %v4531 = vadd.f32 %v3567, %v4130
  %v4532 = vadd.f32 %v3568, %v4132
  %v4533 = vadd.f32 %v3569, %v4363
  %v4534 = vadd.f32 %v3570, %v4365
  %v4535 = vadd.f32 %v3571, %v3903
  %v4536 = vadd.f32 %v3572, %v3905
  %v4537 = vadd.f32 %v3573, %v4136
  %v4538 = vadd.f32 %v3574, %v4138
  %v4539 = vadd.f32 %v3575, %v4369
  %v4540 = vadd.f32 %v3576, %v4371
  %v4541 = vld [vmem:[%s2] sm:$0x3f]
  %v4543 = vlaneseq
  %v4544 = vshrl.u32 %v4543, 7
  %v4545 = vsub.s32 0, %v4544
  %v4546 = vrot.slane %v4541, %v4545
  %v4547 = vlaneseq
  %v4548 = vshrl.u32 %v4547, 7
  %v4549 = vsub.s32 1, %v4548
  %v4550 = vrot.slane %v4541, %v4549
  %v4551 = vlaneseq
  %v4552 = vshrl.u32 %v4551, 7
  %v4553 = vsub.s32 2, %v4552
  %v4554 = vrot.slane %v4541, %v4553
  %v4555 = vlaneseq
  %v4556 = vshrl.u32 %v4555, 7
  %v4557 = vsub.s32 3, %v4556
  %v4558 = vrot.slane %v4541, %v4557
  %v4559 = vlaneseq
  %v4560 = vshrl.u32 %v4559, 7
  %v4561 = vsub.s32 4, %v4560
  %v4562 = vrot.slane %v4541, %v4561
  %v4563 = vlaneseq
  %v4564 = vshrl.u32 %v4563, 7
  %v4565 = vsub.s32 5, %v4564
  %v4566 = vrot.slane %v4541, %v4565
  %v4573 = vadd.f32 %v4373, %v4546
  %v4574 = vadd.f32 %v4374, %v4550
  %v4575 = vadd.f32 %v4375, %v4554
  %v4576 = vadd.f32 %v4376, %v4558
  %v4577 = vadd.f32 %v4377, %v4562
  %v4578 = vadd.f32 %v4378, %v4566
  %v4579 = vadd.f32 %v4379, %v4546
  %v4580 = vadd.f32 %v4380, %v4550
  %v4581 = vadd.f32 %v4381, %v4554
  %v4582 = vadd.f32 %v4382, %v4558
  %v4583 = vadd.f32 %v4383, %v4562
  %v4584 = vadd.f32 %v4384, %v4566
  %v4585 = vadd.f32 %v4385, %v4546
  %v4586 = vadd.f32 %v4386, %v4550
  %v4587 = vadd.f32 %v4387, %v4554
  %v4588 = vadd.f32 %v4388, %v4558
  %v4589 = vadd.f32 %v4389, %v4562
  %v4590 = vadd.f32 %v4390, %v4566
  %v4591 = vadd.f32 %v4391, %v4546
  %v4592 = vadd.f32 %v4392, %v4550
  %v4593 = vadd.f32 %v4393, %v4554
  %v4594 = vadd.f32 %v4394, %v4558
  %v4595 = vadd.f32 %v4395, %v4562
  %v4596 = vadd.f32 %v4396, %v4566
  %v4597 = vadd.f32 %v4397, %v4546
  %v4598 = vadd.f32 %v4398, %v4550
  %v4599 = vadd.f32 %v4399, %v4554
  %v4600 = vadd.f32 %v4400, %v4558
  %v4601 = vadd.f32 %v4401, %v4562
  %v4602 = vadd.f32 %v4402, %v4566
  %v4603 = vadd.f32 %v4403, %v4546
  %v4604 = vadd.f32 %v4404, %v4550
  %v4605 = vadd.f32 %v4405, %v4554
  %v4606 = vadd.f32 %v4406, %v4558
  %v4607 = vadd.f32 %v4407, %v4562
  %v4608 = vadd.f32 %v4408, %v4566
  %v4609 = vadd.f32 %v4409, %v4546
  %v4610 = vadd.f32 %v4410, %v4550
  %v4611 = vadd.f32 %v4411, %v4554
  %v4612 = vadd.f32 %v4412, %v4558
  %v4613 = vadd.f32 %v4413, %v4562
  %v4614 = vadd.f32 %v4414, %v4566
  %v4615 = vadd.f32 %v4415, %v4546
  %v4616 = vadd.f32 %v4416, %v4550
  %v4617 = vadd.f32 %v4417, %v4554
  %v4618 = vadd.f32 %v4418, %v4558
  %v4619 = vadd.f32 %v4419, %v4562
  %v4620 = vadd.f32 %v4420, %v4566
  %v4621 = vadd.f32 %v4421, %v4546
  %v4622 = vadd.f32 %v4422, %v4550
  %v4623 = vadd.f32 %v4423, %v4554
  %v4624 = vadd.f32 %v4424, %v4558
  %v4625 = vadd.f32 %v4425, %v4562
  %v4626 = vadd.f32 %v4426, %v4566
  %v4627 = vadd.f32 %v4427, %v4546
  %v4628 = vadd.f32 %v4428, %v4550
  %v4629 = vadd.f32 %v4429, %v4554
  %v4630 = vadd.f32 %v4430, %v4558
  %v4631 = vadd.f32 %v4431, %v4562
  %v4632 = vadd.f32 %v4432, %v4566
  %v4633 = vadd.f32 %v4433, %v4546
  %v4634 = vadd.f32 %v4434, %v4550
  %v4635 = vadd.f32 %v4435, %v4554
  %v4636 = vadd.f32 %v4436, %v4558
  %v4637 = vadd.f32 %v4437, %v4562
  %v4638 = vadd.f32 %v4438, %v4566
  %v4639 = vadd.f32 %v4439, %v4546
  %v4640 = vadd.f32 %v4440, %v4550
  %v4641 = vadd.f32 %v4441, %v4554
  %v4642 = vadd.f32 %v4442, %v4558
  %v4643 = vadd.f32 %v4443, %v4562
  %v4644 = vadd.f32 %v4444, %v4566
  %v4645 = vadd.f32 %v4445, %v4546
  %v4646 = vadd.f32 %v4446, %v4550
  %v4647 = vadd.f32 %v4447, %v4554
  %v4648 = vadd.f32 %v4448, %v4558
  %v4649 = vadd.f32 %v4449, %v4562
  %v4650 = vadd.f32 %v4450, %v4566
  %v4651 = vadd.f32 %v4451, %v4546
  %v4652 = vadd.f32 %v4452, %v4550
  %v4653 = vadd.f32 %v4453, %v4554
  %v4654 = vadd.f32 %v4454, %v4558
  %v4655 = vadd.f32 %v4455, %v4562
  %v4656 = vadd.f32 %v4456, %v4566
  %v4657 = vadd.f32 %v4457, %v4546
  %v4658 = vadd.f32 %v4458, %v4550
  %v4659 = vadd.f32 %v4459, %v4554
  %v4660 = vadd.f32 %v4460, %v4558
  %v4661 = vadd.f32 %v4461, %v4562
  %v4662 = vadd.f32 %v4462, %v4566
  %v4663 = vadd.f32 %v4463, %v4546
  %v4664 = vadd.f32 %v4464, %v4550
  %v4665 = vadd.f32 %v4465, %v4554
  %v4666 = vadd.f32 %v4466, %v4558
  %v4667 = vadd.f32 %v4467, %v4562
  %v4668 = vadd.f32 %v4468, %v4566
  %v4669 = vadd.f32 %v4469, %v4546
  %v4670 = vadd.f32 %v4470, %v4550
  %v4671 = vadd.f32 %v4471, %v4554
  %v4672 = vadd.f32 %v4472, %v4558
  %v4673 = vadd.f32 %v4473, %v4562
  %v4674 = vadd.f32 %v4474, %v4566
  %v4675 = vadd.f32 %v4475, %v4546
  %v4676 = vadd.f32 %v4476, %v4550
  %v4677 = vadd.f32 %v4477, %v4554
  %v4678 = vadd.f32 %v4478, %v4558
  %v4679 = vadd.f32 %v4479, %v4562
  %v4680 = vadd.f32 %v4480, %v4566
  %v4681 = vadd.f32 %v4481, %v4546
  %v4682 = vadd.f32 %v4482, %v4550
  %v4683 = vadd.f32 %v4483, %v4554
  %v4684 = vadd.f32 %v4484, %v4558
  %v4685 = vadd.f32 %v4485, %v4562
  %v4686 = vadd.f32 %v4486, %v4566
  %v4687 = vadd.f32 %v4487, %v4546
  %v4688 = vadd.f32 %v4488, %v4550
  %v4689 = vadd.f32 %v4489, %v4554
  %v4690 = vadd.f32 %v4490, %v4558
  %v4691 = vadd.f32 %v4491, %v4562
  %v4692 = vadd.f32 %v4492, %v4566
  %v4693 = vadd.f32 %v4493, %v4546
  %v4694 = vadd.f32 %v4494, %v4550
  %v4695 = vadd.f32 %v4495, %v4554
  %v4696 = vadd.f32 %v4496, %v4558
  %v4697 = vadd.f32 %v4497, %v4562
  %v4698 = vadd.f32 %v4498, %v4566
  %v4699 = vadd.f32 %v4499, %v4546
  %v4700 = vadd.f32 %v4500, %v4550
  %v4701 = vadd.f32 %v4501, %v4554
  %v4702 = vadd.f32 %v4502, %v4558
  %v4703 = vadd.f32 %v4503, %v4562
  %v4704 = vadd.f32 %v4504, %v4566
  %v4705 = vadd.f32 %v4505, %v4546
  %v4706 = vadd.f32 %v4506, %v4550
  %v4707 = vadd.f32 %v4507, %v4554
  %v4708 = vadd.f32 %v4508, %v4558
  %v4709 = vadd.f32 %v4509, %v4562
  %v4710 = vadd.f32 %v4510, %v4566
  %v4711 = vadd.f32 %v4511, %v4546
  %v4712 = vadd.f32 %v4512, %v4550
  %v4713 = vadd.f32 %v4513, %v4554
  %v4714 = vadd.f32 %v4514, %v4558
  %v4715 = vadd.f32 %v4515, %v4562
  %v4716 = vadd.f32 %v4516, %v4566
  %v4717 = vadd.f32 %v4517, %v4546
  %v4718 = vadd.f32 %v4518, %v4550
  %v4719 = vadd.f32 %v4519, %v4554
  %v4720 = vadd.f32 %v4520, %v4558
  %v4721 = vadd.f32 %v4521, %v4562
  %v4722 = vadd.f32 %v4522, %v4566
  %v4723 = vadd.f32 %v4523, %v4546
  %v4724 = vadd.f32 %v4524, %v4550
  %v4725 = vadd.f32 %v4525, %v4554
  %v4726 = vadd.f32 %v4526, %v4558
  %v4727 = vadd.f32 %v4527, %v4562
  %v4728 = vadd.f32 %v4528, %v4566
  %v4729 = vadd.f32 %v4529, %v4546
  %v4730 = vadd.f32 %v4530, %v4550
  %v4731 = vadd.f32 %v4531, %v4554
  %v4732 = vadd.f32 %v4532, %v4558
  %v4733 = vadd.f32 %v4533, %v4562
  %v4734 = vadd.f32 %v4534, %v4566
  %v4735 = vadd.f32 %v4535, %v4546
  %v4736 = vadd.f32 %v4536, %v4550
  %v4737 = vadd.f32 %v4537, %v4554
  %v4738 = vadd.f32 %v4538, %v4558
  %v4739 = vadd.f32 %v4539, %v4562
  %v4740 = vadd.f32 %v4540, %v4566
  %v4741 = vmax.f32 %v4573, 0.0
  %v4742 = vmax.f32 %v4574, 0.0
  %v4743 = vmax.f32 %v4575, 0.0
  %v4744 = vmax.f32 %v4576, 0.0
  %v4745 = vmax.f32 %v4577, 0.0
  %v4746 = vmax.f32 %v4578, 0.0
  %v4747 = vmax.f32 %v4579, 0.0
  %v4748 = vmax.f32 %v4580, 0.0
  %v4749 = vmax.f32 %v4581, 0.0
  %v4750 = vmax.f32 %v4582, 0.0
  %v4751 = vmax.f32 %v4583, 0.0
  %v4752 = vmax.f32 %v4584, 0.0
  %v4753 = vmax.f32 %v4585, 0.0
  %v4754 = vmax.f32 %v4586, 0.0
  %v4755 = vmax.f32 %v4587, 0.0
  %v4756 = vmax.f32 %v4588, 0.0
  %v4757 = vmax.f32 %v4589, 0.0
  %v4758 = vmax.f32 %v4590, 0.0
  %v4759 = vmax.f32 %v4591, 0.0
  %v4760 = vmax.f32 %v4592, 0.0
  %v4761 = vmax.f32 %v4593, 0.0
  %v4762 = vmax.f32 %v4594, 0.0
  %v4763 = vmax.f32 %v4595, 0.0
  %v4764 = vmax.f32 %v4596, 0.0
  %v4765 = vmax.f32 %v4597, 0.0
  %v4766 = vmax.f32 %v4598, 0.0
  %v4767 = vmax.f32 %v4599, 0.0
  %v4768 = vmax.f32 %v4600, 0.0
  %v4769 = vmax.f32 %v4601, 0.0
  %v4770 = vmax.f32 %v4602, 0.0
  %v4771 = vmax.f32 %v4603, 0.0
  %v4772 = vmax.f32 %v4604, 0.0
  %v4773 = vmax.f32 %v4605, 0.0
  %v4774 = vmax.f32 %v4606, 0.0
  %v4775 = vmax.f32 %v4607, 0.0
  %v4776 = vmax.f32 %v4608, 0.0
  %v4777 = vmax.f32 %v4609, 0.0
  %v4778 = vmax.f32 %v4610, 0.0
  %v4779 = vmax.f32 %v4611, 0.0
  %v4780 = vmax.f32 %v4612, 0.0
  %v4781 = vmax.f32 %v4613, 0.0
  %v4782 = vmax.f32 %v4614, 0.0
  %v4783 = vmax.f32 %v4615, 0.0
  %v4784 = vmax.f32 %v4616, 0.0
  %v4785 = vmax.f32 %v4617, 0.0
  %v4786 = vmax.f32 %v4618, 0.0
  %v4787 = vmax.f32 %v4619, 0.0
  %v4788 = vmax.f32 %v4620, 0.0
  %v4789 = vmax.f32 %v4621, 0.0
  %v4790 = vmax.f32 %v4622, 0.0
  %v4791 = vmax.f32 %v4623, 0.0
  %v4792 = vmax.f32 %v4624, 0.0
  %v4793 = vmax.f32 %v4625, 0.0
  %v4794 = vmax.f32 %v4626, 0.0
  %v4795 = vmax.f32 %v4627, 0.0
  %v4796 = vmax.f32 %v4628, 0.0
  %v4797 = vmax.f32 %v4629, 0.0
  %v4798 = vmax.f32 %v4630, 0.0
  %v4799 = vmax.f32 %v4631, 0.0
  %v4800 = vmax.f32 %v4632, 0.0
  %v4801 = vmax.f32 %v4633, 0.0
  %v4802 = vmax.f32 %v4634, 0.0
  %v4803 = vmax.f32 %v4635, 0.0
  %v4804 = vmax.f32 %v4636, 0.0
  %v4805 = vmax.f32 %v4637, 0.0
  %v4806 = vmax.f32 %v4638, 0.0
  %v4807 = vmax.f32 %v4639, 0.0
  %v4808 = vmax.f32 %v4640, 0.0
  %v4809 = vmax.f32 %v4641, 0.0
  %v4810 = vmax.f32 %v4642, 0.0
  %v4811 = vmax.f32 %v4643, 0.0
  %v4812 = vmax.f32 %v4644, 0.0
  %v4813 = vmax.f32 %v4645, 0.0
  %v4814 = vmax.f32 %v4646, 0.0
  %v4815 = vmax.f32 %v4647, 0.0
  %v4816 = vmax.f32 %v4648, 0.0
  %v4817 = vmax.f32 %v4649, 0.0
  %v4818 = vmax.f32 %v4650, 0.0
  %v4819 = vmax.f32 %v4651, 0.0
  %v4820 = vmax.f32 %v4652, 0.0
  %v4821 = vmax.f32 %v4653, 0.0
  %v4822 = vmax.f32 %v4654, 0.0
  %v4823 = vmax.f32 %v4655, 0.0
  %v4824 = vmax.f32 %v4656, 0.0
  %v4825 = vmax.f32 %v4657, 0.0
  %v4826 = vmax.f32 %v4658, 0.0
  %v4827 = vmax.f32 %v4659, 0.0
  %v4828 = vmax.f32 %v4660, 0.0
  %v4829 = vmax.f32 %v4661, 0.0
  %v4830 = vmax.f32 %v4662, 0.0
  %v4831 = vmax.f32 %v4663, 0.0
  %v4832 = vmax.f32 %v4664, 0.0
  %v4833 = vmax.f32 %v4665, 0.0
  %v4834 = vmax.f32 %v4666, 0.0
  %v4835 = vmax.f32 %v4667, 0.0
  %v4836 = vmax.f32 %v4668, 0.0
  %v4837 = vmax.f32 %v4669, 0.0
  %v4838 = vmax.f32 %v4670, 0.0
  %v4839 = vmax.f32 %v4671, 0.0
  %v4840 = vmax.f32 %v4672, 0.0
  %v4841 = vmax.f32 %v4673, 0.0
  %v4842 = vmax.f32 %v4674, 0.0
  %v4843 = vmax.f32 %v4675, 0.0
  %v4844 = vmax.f32 %v4676, 0.0
  %v4845 = vmax.f32 %v4677, 0.0
  %v4846 = vmax.f32 %v4678, 0.0
  %v4847 = vmax.f32 %v4679, 0.0
  %v4848 = vmax.f32 %v4680, 0.0
  %v4849 = vmax.f32 %v4681, 0.0
  %v4850 = vmax.f32 %v4682, 0.0
  %v4851 = vmax.f32 %v4683, 0.0
  %v4852 = vmax.f32 %v4684, 0.0
  %v4853 = vmax.f32 %v4685, 0.0
  %v4854 = vmax.f32 %v4686, 0.0
  %v4855 = vmax.f32 %v4687, 0.0
  %v4856 = vmax.f32 %v4688, 0.0
  %v4857 = vmax.f32 %v4689, 0.0
  %v4858 = vmax.f32 %v4690, 0.0
  %v4859 = vmax.f32 %v4691, 0.0
  %v4860 = vmax.f32 %v4692, 0.0
  %v4861 = vmax.f32 %v4693, 0.0
  %v4862 = vmax.f32 %v4694, 0.0
  %v4863 = vmax.f32 %v4695, 0.0
  %v4864 = vmax.f32 %v4696, 0.0
  %v4865 = vmax.f32 %v4697, 0.0
  %v4866 = vmax.f32 %v4698, 0.0
  %v4867 = vmax.f32 %v4699, 0.0
  %v4868 = vmax.f32 %v4700, 0.0
  %v4869 = vmax.f32 %v4701, 0.0
  %v4870 = vmax.f32 %v4702, 0.0
  %v4871 = vmax.f32 %v4703, 0.0
  %v4872 = vmax.f32 %v4704, 0.0
  %v4873 = vmax.f32 %v4705, 0.0
  %v4874 = vmax.f32 %v4706, 0.0
  %v4875 = vmax.f32 %v4707, 0.0
  %v4876 = vmax.f32 %v4708, 0.0
  %v4877 = vmax.f32 %v4709, 0.0
  %v4878 = vmax.f32 %v4710, 0.0
  %v4879 = vmax.f32 %v4711, 0.0
  %v4880 = vmax.f32 %v4712, 0.0
  %v4881 = vmax.f32 %v4713, 0.0
  %v4882 = vmax.f32 %v4714, 0.0
  %v4883 = vmax.f32 %v4715, 0.0
  %v4884 = vmax.f32 %v4716, 0.0
  %v4885 = vmax.f32 %v4717, 0.0
  %v4886 = vmax.f32 %v4718, 0.0
  %v4887 = vmax.f32 %v4719, 0.0
  %v4888 = vmax.f32 %v4720, 0.0
  %v4889 = vmax.f32 %v4721, 0.0
  %v4890 = vmax.f32 %v4722, 0.0
  %v4891 = vmax.f32 %v4723, 0.0
  %v4892 = vmax.f32 %v4724, 0.0
  %v4893 = vmax.f32 %v4725, 0.0
  %v4894 = vmax.f32 %v4726, 0.0
  %v4895 = vmax.f32 %v4727, 0.0
  %v4896 = vmax.f32 %v4728, 0.0
  %v4897 = vmax.f32 %v4729, 0.0
  %v4898 = vmax.f32 %v4730, 0.0
  %v4899 = vmax.f32 %v4731, 0.0
  %v4900 = vmax.f32 %v4732, 0.0
  %v4901 = vmax.f32 %v4733, 0.0
  %v4902 = vmax.f32 %v4734, 0.0
  %v4903 = vmax.f32 %v4735, 0.0
  %v4904 = vmax.f32 %v4736, 0.0
  %v4905 = vmax.f32 %v4737, 0.0
  %v4906 = vmax.f32 %v4738, 0.0
  %v4907 = vmax.f32 %v4739, 0.0
  %v4908 = vmax.f32 %v4740, 0.0
  %v4909 = vmax.f32 %v4741, %v4747
  %v4910 = vmax.f32 %v4742, %v4748
  %v4911 = vmax.f32 %v4743, %v4749
  %v4912 = vmax.f32 %v4744, %v4750
  %v4913 = vmax.f32 %v4745, %v4751
  %v4914 = vmax.f32 %v4746, %v4752
  %v4915 = vmax.f32 %v4753, %v4759
  %v4916 = vmax.f32 %v4754, %v4760
  %v4917 = vmax.f32 %v4755, %v4761
  %v4918 = vmax.f32 %v4756, %v4762
  %v4919 = vmax.f32 %v4757, %v4763
  %v4920 = vmax.f32 %v4758, %v4764
  %v4921 = vmax.f32 %v4765, %v4771
  %v4922 = vmax.f32 %v4766, %v4772
  %v4923 = vmax.f32 %v4767, %v4773
  %v4924 = vmax.f32 %v4768, %v4774
  %v4925 = vmax.f32 %v4769, %v4775
  %v4926 = vmax.f32 %v4770, %v4776
  %v4927 = vmax.f32 %v4777, %v4783
  %v4928 = vmax.f32 %v4778, %v4784
  %v4929 = vmax.f32 %v4779, %v4785
  %v4930 = vmax.f32 %v4780, %v4786
  %v4931 = vmax.f32 %v4781, %v4787
  %v4932 = vmax.f32 %v4782, %v4788
  %v4933 = vmax.f32 %v4789, %v4795
  %v4934 = vmax.f32 %v4790, %v4796
  %v4935 = vmax.f32 %v4791, %v4797
  %v4936 = vmax.f32 %v4792, %v4798
  %v4937 = vmax.f32 %v4793, %v4799
  %v4938 = vmax.f32 %v4794, %v4800
  %v4939 = vmax.f32 %v4801, %v4807
  %v4940 = vmax.f32 %v4802, %v4808
  %v4941 = vmax.f32 %v4803, %v4809
  %v4942 = vmax.f32 %v4804, %v4810
  %v4943 = vmax.f32 %v4805, %v4811
  %v4944 = vmax.f32 %v4806, %v4812
  %v4945 = vmax.f32 %v4813, %v4819
  %v4946 = vmax.f32 %v4814, %v4820
  %v4947 = vmax.f32 %v4815, %v4821
  %v4948 = vmax.f32 %v4816, %v4822
  %v4949 = vmax.f32 %v4817, %v4823
  %v4950 = vmax.f32 %v4818, %v4824
  %v4951 = vmax.f32 %v4825, %v4831
  %v4952 = vmax.f32 %v4826, %v4832
  %v4953 = vmax.f32 %v4827, %v4833
  %v4954 = vmax.f32 %v4828, %v4834
  %v4955 = vmax.f32 %v4829, %v4835
  %v4956 = vmax.f32 %v4830, %v4836
  %v4957 = vmax.f32 %v4837, %v4843
  %v4958 = vmax.f32 %v4838, %v4844
  %v4959 = vmax.f32 %v4839, %v4845
  %v4960 = vmax.f32 %v4840, %v4846
  %v4961 = vmax.f32 %v4841, %v4847
  %v4962 = vmax.f32 %v4842, %v4848
  %v4963 = vmax.f32 %v4849, %v4855
  %v4964 = vmax.f32 %v4850, %v4856
  %v4965 = vmax.f32 %v4851, %v4857
  %v4966 = vmax.f32 %v4852, %v4858
  %v4967 = vmax.f32 %v4853, %v4859
  %v4968 = vmax.f32 %v4854, %v4860
  %v4969 = vmax.f32 %v4861, %v4867
  %v4970 = vmax.f32 %v4862, %v4868
  %v4971 = vmax.f32 %v4863, %v4869
  %v4972 = vmax.f32 %v4864, %v4870
  %v4973 = vmax.f32 %v4865, %v4871
  %v4974 = vmax.f32 %v4866, %v4872
  %v4975 = vmax.f32 %v4873, %v4879
  %v4976 = vmax.f32 %v4874, %v4880
  %v4977 = vmax.f32 %v4875, %v4881
  %v4978 = vmax.f32 %v4876, %v4882
  %v4979 = vmax.f32 %v4877, %v4883
  %v4980 = vmax.f32 %v4878, %v4884
  %v4981 = vmax.f32 %v4885, %v4891
  %v4982 = vmax.f32 %v4886, %v4892
  %v4983 = vmax.f32 %v4887, %v4893
  %v4984 = vmax.f32 %v4888, %v4894
  %v4985 = vmax.f32 %v4889, %v4895
  %v4986 = vmax.f32 %v4890, %v4896
  %v4987 = vmax.f32 %v4897, %v4903
  %v4988 = vmax.f32 %v4898, %v4904
  %v4989 = vmax.f32 %v4899, %v4905
  %v4990 = vmax.f32 %v4900, %v4906
  %v4991 = vmax.f32 %v4901, %v4907
  %v4992 = vmax.f32 %v4902, %v4908
  %v4993 = vmax.f32 %v4909, %v4912
  %v4994 = vmax.f32 %v4910, %v4913
  %v4995 = vmax.f32 %v4911, %v4914
  %v4996 = vmax.f32 %v4915, %v4918
  %v4997 = vmax.f32 %v4916, %v4919
  %v4998 = vmax.f32 %v4917, %v4920
  %v4999 = vmax.f32 %v4921, %v4924
  %v5000 = vmax.f32 %v4922, %v4925
  %v5001 = vmax.f32 %v4923, %v4926
  %v5002 = vmax.f32 %v4927, %v4930
  %v5003 = vmax.f32 %v4928, %v4931
  %v5004 = vmax.f32 %v4929, %v4932
  %v5005 = vmax.f32 %v4933, %v4936
  %v5006 = vmax.f32 %v4934, %v4937
  %v5007 = vmax.f32 %v4935, %v4938
  %v5008 = vmax.f32 %v4939, %v4942
  %v5009 = vmax.f32 %v4940, %v4943
  %v5010 = vmax.f32 %v4941, %v4944
  %v5011 = vmax.f32 %v4945, %v4948
  %v5012 = vmax.f32 %v4946, %v4949
  %v5013 = vmax.f32 %v4947, %v4950
  %v5014 = vmax.f32 %v4951, %v4954
  %v5015 = vmax.f32 %v4952, %v4955
  %v5016 = vmax.f32 %v4953, %v4956
  %v5017 = vmax.f32 %v4957, %v4960
  %v5018 = vmax.f32 %v4958, %v4961
  %v5019 = vmax.f32 %v4959, %v4962
  %v5020 = vmax.f32 %v4963, %v4966
  %v5021 = vmax.f32 %v4964, %v4967
  %v5022 = vmax.f32 %v4965, %v4968
  %v5023 = vmax.f32 %v4969, %v4972
  %v5024 = vmax.f32 %v4970, %v4973
  %v5025 = vmax.f32 %v4971, %v4974
  %v5026 = vmax.f32 %v4975, %v4978
  %v5027 = vmax.f32 %v4976, %v4979
  %v5028 = vmax.f32 %v4977, %v4980
  %v5029 = vmax.f32 %v4981, %v4984
  %v5030 = vmax.f32 %v4982, %v4985
  %v5031 = vmax.f32 %v4983, %v4986
  %v5032 = vmax.f32 %v4987, %v4990
  %v5033 = vmax.f32 %v4988, %v4991
  %v5034 = vmax.f32 %v4989, %v4992
  %v5035 = vld [vmem:[%s3] sm:$0xff]
  %v5036 = vld [vmem:[%s3 + $0x8] sm:$0xff]
  %v5037 = vld [vmem:[%s3 + $0x10] sm:$0xff]
  %v5038 = vld [vmem:[%s3 + $0x18] sm:$0xff]
  %v5039 = vld [vmem:[%s3 + $0x20] sm:$0xff]
  %v5040 = vld [vmem:[%s3 + $0x28] sm:$0xff]
  %v5041 = vld [vmem:[%s3 + $0x30] sm:$0xff]
  %v5042 = vld [vmem:[%s3 + $0x38] sm:$0xff]
  %v5043 = vld [vmem:[%s3 + $0x40] sm:$0xff]
  %v5044 = vld [vmem:[%s3 + $0x48] sm:$0xff]
  %v5045 = vld [vmem:[%s3 + $0x50] sm:$0xff]
  %v5046 = vld [vmem:[%s3 + $0x58] sm:$0xff]
  %v5047 = vld [vmem:[%s3 + $0x60] sm:$0xff]
  %v5048 = vld [vmem:[%s3 + $0x68] sm:$0xff]
  %v5049 = vld [vmem:[%s3 + $0x70] sm:$0xff]
  %v5050 = vld [vmem:[%s3 + $0x78] sm:$0xff]
  %v5051 = vld [vmem:[%s3 + $0x80] sm:$0xff]
  %v5052 = vld [vmem:[%s3 + $0x88] sm:$0xff]
  %v5053 = vld [vmem:[%s3 + $0x90] sm:$0xff]
  %v5054 = vld [vmem:[%s3 + $0x98] sm:$0xff]
  %v5055 = vld [vmem:[%s3 + $0xa0] sm:$0xff]
  %v5056 = vld [vmem:[%s3 + $0xa8] sm:$0xff]
  %v5057 = vld [vmem:[%s3 + $0xb0] sm:$0xff]
  %v5058 = vld [vmem:[%s3 + $0xb8] sm:$0xff]
  %v5059 = vld [vmem:[%s3 + $0xc0] sm:$0xff]
  %v5060 = vld [vmem:[%s3 + $0xc8] sm:$0xff]
  %v5061 = vld [vmem:[%s3 + $0xd0] sm:$0xff]
  %v5062 = vld [vmem:[%s3 + $0xd8] sm:$0xff]
  %v5063 = vld [vmem:[%s3 + $0xe0] sm:$0xff]
  %v5064 = vld [vmem:[%s3 + $0xe8] sm:$0xff]
  %v5065 = vld [vmem:[%s3 + $0xf0] sm:$0xff]
  %v5066 = vld [vmem:[%s3 + $0xf8] sm:$0xff]
  %v5067 = vld [vmem:[%s3 + $0x100] sm:$0xff]
  %v5068 = vld [vmem:[%s3 + $0x108] sm:$0xff]
  %v5069 = vld [vmem:[%s3 + $0x110] sm:$0xff]
  %v5070 = vld [vmem:[%s3 + $0x118] sm:$0xff]
  %v5071 = vld [vmem:[%s3 + $0x120] sm:$0xff]
  %v5072 = vld [vmem:[%s3 + $0x128] sm:$0xff]
  %v5073 = vld [vmem:[%s3 + $0x130] sm:$0xff]
  %v5074 = vld [vmem:[%s3 + $0x138] sm:$0xff]
  %v5075 = vld [vmem:[%s3 + $0x140] sm:$0xff]
  %v5076 = vld [vmem:[%s3 + $0x148] sm:$0xff]
  %v5077 = vld [vmem:[%s3 + $0x150] sm:$0xff]
  %v5078 = vld [vmem:[%s3 + $0x158] sm:$0xff]
  %v5079 = vld [vmem:[%s3 + $0x160] sm:$0xff]
  %v5080 = vld [vmem:[%s3 + $0x168] sm:$0xff]
  %v5081 = vld [vmem:[%s3 + $0x170] sm:$0xff]
  %v5082 = vld [vmem:[%s3 + $0x178] sm:$0xff]
  %s5083 = scalar_lea.vmem %s3, 384
  %v5084 = vld [vmem:[%s5083] sm:$0xff]
  %v5085 = vld [vmem:[%s5083 + $0x8] sm:$0xff]
  %v5086 = vld [vmem:[%s5083 + $0x10] sm:$0xff]
  %v5087 = vld [vmem:[%s5083 + $0x18] sm:$0xff]
  %v5088 = vld [vmem:[%s5083 + $0x20] sm:$0xff]
  %v5089 = vld [vmem:[%s5083 + $0x28] sm:$0xff]
  %v5090 = vld [vmem:[%s5083 + $0x30] sm:$0xff]
  %v5091 = vld [vmem:[%s5083 + $0x38] sm:$0xff]
  %v5092 = vld [vmem:[%s5083 + $0x40] sm:$0xff]
  %v5093 = vld [vmem:[%s5083 + $0x48] sm:$0xff]
  %v5094 = vld [vmem:[%s5083 + $0x50] sm:$0xff]
  %v5095 = vld [vmem:[%s5083 + $0x58] sm:$0xff]
  %v5096 = vld [vmem:[%s5083 + $0x60] sm:$0xff]
  %v5097 = vld [vmem:[%s5083 + $0x68] sm:$0xff]
  %v5098 = vld [vmem:[%s5083 + $0x70] sm:$0xff]
  %v5099 = vld [vmem:[%s5083 + $0x78] sm:$0xff]
  %v5100 = vld [vmem:[%s5083 + $0x80] sm:$0xff]
  %v5101 = vld [vmem:[%s5083 + $0x88] sm:$0xff]
  %v5102 = vld [vmem:[%s5083 + $0x90] sm:$0xff]
  %v5103 = vld [vmem:[%s5083 + $0x98] sm:$0xff]
  %v5104 = vld [vmem:[%s5083 + $0xa0] sm:$0xff]
  %v5105 = vld [vmem:[%s5083 + $0xa8] sm:$0xff]
  %v5106 = vld [vmem:[%s5083 + $0xb0] sm:$0xff]
  %v5107 = vld [vmem:[%s5083 + $0xb8] sm:$0xff]
  %v5108 = vld [vmem:[%s5083 + $0xc0] sm:$0xff]
  %v5109 = vld [vmem:[%s5083 + $0xc8] sm:$0xff]
  %v5110 = vld [vmem:[%s5083 + $0xd0] sm:$0xff]
  %v5111 = vld [vmem:[%s5083 + $0xd8] sm:$0xff]
  %v5112 = vld [vmem:[%s5083 + $0xe0] sm:$0xff]
  %v5113 = vld [vmem:[%s5083 + $0xe8] sm:$0xff]
  %v5114 = vld [vmem:[%s5083 + $0xf0] sm:$0xff]
  %v5115 = vld [vmem:[%s5083 + $0xf8] sm:$0xff]
  %v5116 = vld [vmem:[%s5083 + $0x100] sm:$0xff]
  %v5117 = vld [vmem:[%s5083 + $0x108] sm:$0xff]
  %v5118 = vld [vmem:[%s5083 + $0x110] sm:$0xff]
  %v5119 = vld [vmem:[%s5083 + $0x118] sm:$0xff]
  %v5120 = vld [vmem:[%s5083 + $0x120] sm:$0xff]
  %v5121 = vld [vmem:[%s5083 + $0x128] sm:$0xff]
  %v5122 = vld [vmem:[%s5083 + $0x130] sm:$0xff]
  %v5123 = vld [vmem:[%s5083 + $0x138] sm:$0xff]
  %v5124 = vld [vmem:[%s5083 + $0x140] sm:$0xff]
  %v5125 = vld [vmem:[%s5083 + $0x148] sm:$0xff]
  %v5126 = vld [vmem:[%s5083 + $0x150] sm:$0xff]
  %v5127 = vld [vmem:[%s5083 + $0x158] sm:$0xff]
  %v5128 = vld [vmem:[%s5083 + $0x160] sm:$0xff]
  %v5129 = vld [vmem:[%s5083 + $0x168] sm:$0xff]
  %v5130 = vld [vmem:[%s5083 + $0x170] sm:$0xff]
  %v5131 = vld [vmem:[%s5083 + $0x178] sm:$0xff]
  %5132 = vmatprep.subr.mxu0 0.0
  %5133 = vmatpush1.msra.mxu0 %v5084
  %5134 = vmatprep.subr.mxu0 0.0
  %5135 = vmatpush1.msra.mxu0 %v5085
  %5136 = vmatprep.subr.mxu0 0.0
  %5137 = vmatpush1.msra.mxu0 %v5086
  %5138 = vmatprep.subr.mxu0 0.0
  %5139 = vmatpush1.msra.mxu0 %v5087
  %5140 = vmatprep.subr.mxu0 0.0
  %5141 = vmatpush1.msra.mxu0 %v5088
  %5142 = vmatprep.subr.mxu0 0.0
  %5143 = vmatpush1.msra.mxu0 %v5089
  %5144 = vmatprep.subr.mxu0 0.0
  %5145 = vmatpush1.msra.mxu0 %v5090
  %5146 = vmatprep.subr.mxu0 0.0
  %5147 = vmatpush1.msra.mxu0 %v5091
  %5148 = vmatprep.subr.mxu0 0.0
  %5149 = vmatpush1.msra.mxu0 %v5092
  %5150 = vmatprep.subr.mxu0 0.0
  %5151 = vmatpush1.msra.mxu0 %v5093
  %5152 = vmatprep.subr.mxu0 0.0
  %5153 = vmatpush1.msra.mxu0 %v5094
  %5154 = vmatprep.subr.mxu0 0.0
  %5155 = vmatpush1.msra.mxu0 %v5095
  %5156 = vmatprep.subr.mxu0 0.0
  %5157 = vmatpush1.msra.mxu0 %v5096
  %5158 = vmatprep.subr.mxu0 0.0
  %5159 = vmatpush1.msra.mxu0 %v5097
  %5160 = vmatprep.subr.mxu0 0.0
  %5161 = vmatpush1.msra.mxu0 %v5098
  %5162 = vmatprep.subr.mxu0 0.0
  %5163 = vmatpush1.msra.mxu0 %v5099
  %5164 = vmatprep.subr.mxu0 0.0
  %5165 = vmatpush1.msra.mxu0 %v5100
  %5166 = vmatprep.subr.mxu0 0.0
  %5167 = vmatpush1.msra.mxu0 %v5101
  %5168 = vmatprep.subr.mxu0 0.0
  %5169 = vmatpush1.msra.mxu0 %v5102
  %5170 = vmatprep.subr.mxu0 0.0
  %5171 = vmatpush1.msra.mxu0 %v5103
  %5172 = vmatprep.subr.mxu0 0.0
  %5173 = vmatpush1.msra.mxu0 %v5104
  %5174 = vmatprep.subr.mxu0 0.0
  %5175 = vmatpush1.msra.mxu0 %v5105
  %5176 = vmatprep.subr.mxu0 0.0
  %5177 = vmatpush1.msra.mxu0 %v5106
  %5178 = vmatprep.subr.mxu0 0.0
  %5179 = vmatpush1.msra.mxu0 %v5107
  %5180 = vmatprep.subr.mxu0 0.0
  %5181 = vmatpush1.msra.mxu0 %v5108
  %5182 = vmatprep.subr.mxu0 0.0
  %5183 = vmatpush1.msra.mxu0 %v5109
  %5184 = vmatprep.subr.mxu0 0.0
  %5185 = vmatpush1.msra.mxu0 %v5110
  %5186 = vmatprep.subr.mxu0 0.0
  %5187 = vmatpush1.msra.mxu0 %v5111
  %5188 = vmatprep.subr.mxu0 0.0
  %5189 = vmatpush1.msra.mxu0 %v5112
  %5190 = vmatprep.subr.mxu0 0.0
  %5191 = vmatpush1.msra.mxu0 %v5113
  %5192 = vmatprep.subr.mxu0 0.0
  %5193 = vmatpush1.msra.mxu0 %v5114
  %5194 = vmatprep.subr.mxu0 0.0
  %5195 = vmatpush1.msra.mxu0 %v5115
  %5196 = vmatprep.mubr.f32.mxu0 %v4997
  %5197 = vmatmul.mubr.f32.gmra.mrb[0].mxu0 %v4996
  %v5198 = vpop.f32.mrb[0].mxu0
  %v5199 = vadd.f32 0.0, %v5198
  %v5200 = vpop.f32.mrb[0].mxu0
  %5201 = vdwg.mxu0
  %5202 = vmatprep.subr.mxu0 0.0
  %5203 = vmatpush1.msra.mxu0 %v5116
  %5204 = vmatprep.subr.mxu0 0.0
  %5205 = vmatpush1.msra.mxu0 %v5117
  %5206 = vmatprep.subr.mxu0 0.0
  %5207 = vmatpush1.msra.mxu0 %v5118
  %5208 = vmatprep.subr.mxu0 0.0
  %5209 = vmatpush1.msra.mxu0 %v5119
  %5210 = vmatprep.subr.mxu0 0.0
  %5211 = vmatpush1.msra.mxu0 %v5120
  %5212 = vmatprep.subr.mxu0 0.0
  %5213 = vmatpush1.msra.mxu0 %v5121
  %5214 = vmatprep.subr.mxu0 0.0
  %5215 = vmatpush1.msra.mxu0 %v5122
  %5216 = vmatprep.subr.mxu0 0.0
  %5217 = vmatpush1.msra.mxu0 %v5123
  %5218 = vmatprep.subr.mxu0 0.0
  %5219 = vmatpush1.msra.mxu0 %v5124
  %5220 = vmatprep.subr.mxu0 0.0
  %5221 = vmatpush1.msra.mxu0 %v5125
  %5222 = vmatprep.subr.mxu0 0.0
  %5223 = vmatpush1.msra.mxu0 %v5126
  %5224 = vmatprep.subr.mxu0 0.0
  %5225 = vmatpush1.msra.mxu0 %v5127
  %5226 = vmatprep.subr.mxu0 0.0
  %5227 = vmatpush1.msra.mxu0 %v5128
  %5228 = vmatprep.subr.mxu0 0.0
  %5229 = vmatpush1.msra.mxu0 %v5129
  %5230 = vmatprep.subr.mxu0 0.0
  %5231 = vmatpush1.msra.mxu0 %v5130
  %5232 = vmatprep.subr.mxu0 0.0
  %5233 = vmatpush1.msra.mxu0 %v5131
  %5234 = vmatprep.subr.mxu0 0.0
  %5235 = vmatpush1.msra.mxu0 0.0
  %5236 = vmatprep.subr.mxu0 0.0
  %5237 = vmatpush1.msra.mxu0 0.0
  %5238 = vmatprep.subr.mxu0 0.0
  %5239 = vmatpush1.msra.mxu0 0.0
  %5240 = vmatprep.subr.mxu0 0.0
  %5241 = vmatpush1.msra.mxu0 0.0
  %5242 = vmatprep.subr.mxu0 0.0
  %5243 = vmatpush1.msra.mxu0 0.0
  %5244 = vmatprep.subr.mxu0 0.0
  %5245 = vmatpush1.msra.mxu0 0.0
  %5246 = vmatprep.subr.mxu0 0.0
  %5247 = vmatpush1.msra.mxu0 0.0
  %5248 = vmatprep.subr.mxu0 0.0
  %5249 = vmatpush1.msra.mxu0 0.0
  %5250 = vmatprep.subr.mxu0 0.0
  %5251 = vmatpush1.msra.mxu0 0.0
  %5252 = vmatprep.subr.mxu0 0.0
  %5253 = vmatpush1.msra.mxu0 0.0
  %5254 = vmatprep.subr.mxu0 0.0
  %5255 = vmatpush1.msra.mxu0 0.0
  %5256 = vmatprep.subr.mxu0 0.0
  %5257 = vmatpush1.msra.mxu0 0.0
  %5258 = vmatprep.subr.mxu0 0.0
  %5259 = vmatpush1.msra.mxu0 0.0
  %5260 = vmatprep.subr.mxu0 0.0
  %5261 = vmatpush1.msra.mxu0 0.0
  %5262 = vmatprep.subr.mxu0 0.0
  %5263 = vmatpush1.msra.mxu0 0.0
  %5264 = vmatprep.subr.mxu0 0.0
  %5265 = vmatpush1.msra.mxu0 0.0
  %5266 = vmatprep.mubr.f32.mxu0 0.0
  %5267 = vmatmul.mubr.f32.gmra.mrb[0].mxu0 %v4998
  %v5268 = vpop.f32.mrb[0].mxu0
  %v5269 = vadd.f32 %v5199, %v5268
  %v5270 = vpop.f32.mrb[0].mxu0
  %5271 = vdwg.mxu0
  %5272 = vmatprep.subr.mxu0 0.0
  %5273 = vmatpush1.msra.mxu0 %v5035
  %5274 = vmatprep.subr.mxu0 0.0
  %5275 = vmatpush1.msra.mxu0 %v5036
  %5276 = vmatprep.subr.mxu0 0.0
  %5277 = vmatpush1.msra.mxu0 %v5037
  %5278 = vmatprep.subr.mxu0 0.0
  %5279 = vmatpush1.msra.mxu0 %v5038
  %5280 = vmatprep.subr.mxu0 0.0
  %5281 = vmatpush1.msra.mxu0 %v5039
  %5282 = vmatprep.subr.mxu0 0.0
  %5283 = vmatpush1.msra.mxu0 %v5040
  %5284 = vmatprep.subr.mxu0 0.0
  %5285 = vmatpush1.msra.mxu0 %v5041
  %5286 = vmatprep.subr.mxu0 0.0
  %5287 = vmatpush1.msra.mxu0 %v5042
  %5288 = vmatprep.subr.mxu0 0.0
  %5289 = vmatpush1.msra.mxu0 %v5043
  %5290 = vmatprep.subr.mxu0 0.0
  %5291 = vmatpush1.msra.mxu0 %v5044
  %5292 = vmatprep.subr.mxu0 0.0
  %5293 = vmatpush1.msra.mxu0 %v5045
  %5294 = vmatprep.subr.mxu0 0.0
  %5295 = vmatpush1.msra.mxu0 %v5046
  %5296 = vmatprep.subr.mxu0 0.0
  %5297 = vmatpush1.msra.mxu0 %v5047
  %5298 = vmatprep.subr.mxu0 0.0
  %5299 = vmatpush1.msra.mxu0 %v5048
  %5300 = vmatprep.subr.mxu0 0.0
  %5301 = vmatpush1.msra.mxu0 %v5049
  %5302 = vmatprep.subr.mxu0 0.0
  %5303 = vmatpush1.msra.mxu0 %v5050
  %5304 = vmatprep.subr.mxu0 0.0
  %5305 = vmatpush1.msra.mxu0 %v5051
  %5306 = vmatprep.subr.mxu0 0.0
  %5307 = vmatpush1.msra.mxu0 %v5052
  %5308 = vmatprep.subr.mxu0 0.0
  %5309 = vmatpush1.msra.mxu0 %v5053
  %5310 = vmatprep.subr.mxu0 0.0
  %5311 = vmatpush1.msra.mxu0 %v5054
  %5312 = vmatprep.subr.mxu0 0.0
  %5313 = vmatpush1.msra.mxu0 %v5055
  %5314 = vmatprep.subr.mxu0 0.0
  %5315 = vmatpush1.msra.mxu0 %v5056
  %5316 = vmatprep.subr.mxu0 0.0
  %5317 = vmatpush1.msra.mxu0 %v5057
  %5318 = vmatprep.subr.mxu0 0.0
  %5319 = vmatpush1.msra.mxu0 %v5058
  %5320 = vmatprep.subr.mxu0 0.0
  %5321 = vmatpush1.msra.mxu0 %v5059
  %5322 = vmatprep.subr.mxu0 0.0
  %5323 = vmatpush1.msra.mxu0 %v5060
  %5324 = vmatprep.subr.mxu0 0.0
  %5325 = vmatpush1.msra.mxu0 %v5061
  %5326 = vmatprep.subr.mxu0 0.0
  %5327 = vmatpush1.msra.mxu0 %v5062
  %5328 = vmatprep.subr.mxu0 0.0
  %5329 = vmatpush1.msra.mxu0 %v5063
  %5330 = vmatprep.subr.mxu0 0.0
  %5331 = vmatpush1.msra.mxu0 %v5064
  %5332 = vmatprep.subr.mxu0 0.0
  %5333 = vmatpush1.msra.mxu0 %v5065
  %5334 = vmatprep.subr.mxu0 0.0
  %5335 = vmatpush1.msra.mxu0 %v5066
  %5336 = vmatprep.mubr.f32.mxu0 %v4994
  %5337 = vmatmul.mubr.f32.gmra.mrb[0].mxu0 %v4993
  %v5338 = vpop.f32.mrb[0].mxu0
  %v5339 = vadd.f32 %v5269, %v5338
  %v5340 = vpop.f32.mrb[0].mxu0
  %5341 = vdwg.mxu0
  %5342 = vmatprep.subr.mxu0 0.0
  %5343 = vmatpush1.msra.mxu0 %v5067
  %5344 = vmatprep.subr.mxu0 0.0
  %5345 = vmatpush1.msra.mxu0 %v5068
  %5346 = vmatprep.subr.mxu0 0.0
  %5347 = vmatpush1.msra.mxu0 %v5069
  %5348 = vmatprep.subr.mxu0 0.0
  %5349 = vmatpush1.msra.mxu0 %v5070
  %5350 = vmatprep.subr.mxu0 0.0
  %5351 = vmatpush1.msra.mxu0 %v5071
  %5352 = vmatprep.subr.mxu0 0.0
  %5353 = vmatpush1.msra.mxu0 %v5072
  %5354 = vmatprep.subr.mxu0 0.0
  %5355 = vmatpush1.msra.mxu0 %v5073
  %5356 = vmatprep.subr.mxu0 0.0
  %5357 = vmatpush1.msra.mxu0 %v5074
  %5358 = vmatprep.subr.mxu0 0.0
  %5359 = vmatpush1.msra.mxu0 %v5075
  %5360 = vmatprep.subr.mxu0 0.0
  %5361 = vmatpush1.msra.mxu0 %v5076
  %5362 = vmatprep.subr.mxu0 0.0
  %5363 = vmatpush1.msra.mxu0 %v5077
  %5364 = vmatprep.subr.mxu0 0.0
  %5365 = vmatpush1.msra.mxu0 %v5078
  %5366 = vmatprep.subr.mxu0 0.0
  %5367 = vmatpush1.msra.mxu0 %v5079
  %5368 = vmatprep.subr.mxu0 0.0
  %5369 = vmatpush1.msra.mxu0 %v5080
  %5370 = vmatprep.subr.mxu0 0.0
  %5371 = vmatpush1.msra.mxu0 %v5081
  %5372 = vmatprep.subr.mxu0 0.0
  %5373 = vmatpush1.msra.mxu0 %v5082
  %5374 = vmatprep.subr.mxu0 0.0
  %5375 = vmatpush1.msra.mxu0 0.0
  %5376 = vmatprep.subr.mxu0 0.0
  %5377 = vmatpush1.msra.mxu0 0.0
  %5378 = vmatprep.subr.mxu0 0.0
  %5379 = vmatpush1.msra.mxu0 0.0
  %5380 = vmatprep.subr.mxu0 0.0
  %5381 = vmatpush1.msra.mxu0 0.0
  %5382 = vmatprep.subr.mxu0 0.0
  %5383 = vmatpush1.msra.mxu0 0.0
  %5384 = vmatprep.subr.mxu0 0.0
  %5385 = vmatpush1.msra.mxu0 0.0
  %5386 = vmatprep.subr.mxu0 0.0
  %5387 = vmatpush1.msra.mxu0 0.0
  %5388 = vmatprep.subr.mxu0 0.0
  %5389 = vmatpush1.msra.mxu0 0.0
  %5390 = vmatprep.subr.mxu0 0.0
  %5391 = vmatpush1.msra.mxu0 0.0
  %5392 = vmatprep.subr.mxu0 0.0
  %5393 = vmatpush1.msra.mxu0 0.0
  %5394 = vmatprep.subr.mxu0 0.0
  %5395 = vmatpush1.msra.mxu0 0.0
  %5396 = vmatprep.subr.mxu0 0.0
  %5397 = vmatpush1.msra.mxu0 0.0
  %5398 = vmatprep.subr.mxu0 0.0
  %5399 = vmatpush1.msra.mxu0 0.0
  %5400 = vmatprep.subr.mxu0 0.0
  %5401 = vmatpush1.msra.mxu0 0.0
  %5402 = vmatprep.subr.mxu0 0.0
  %5403 = vmatpush1.msra.mxu0 0.0
  %5404 = vmatprep.subr.mxu0 0.0
  %5405 = vmatpush1.msra.mxu0 0.0
  %5406 = vmatprep.mubr.f32.mxu0 0.0
  %5407 = vmatmul.mubr.f32.gmra.mrb[0].mxu0 %v4995
  %v5408 = vpop.f32.mrb[0].mxu0
  %v5409 = vadd.f32 %v5339, %v5408
  %v5410 = vpop.f32.mrb[0].mxu0
  %5411 = vdwg.mxu0
  %s5412 = scalar_lea.vmem %s3, 768
  %v5413 = vld [vmem:[%s5412] sm:$0xff]
  %v5414 = vld [vmem:[%s5412 + $0x8] sm:$0xff]
  %v5415 = vld [vmem:[%s5412 + $0x10] sm:$0xff]
  %v5416 = vld [vmem:[%s5412 + $0x18] sm:$0xff]
  %v5417 = vld [vmem:[%s5412 + $0x20] sm:$0xff]
  %v5418 = vld [vmem:[%s5412 + $0x28] sm:$0xff]
  %v5419 = vld [vmem:[%s5412 + $0x30] sm:$0xff]
  %v5420 = vld [vmem:[%s5412 + $0x38] sm:$0xff]
  %v5421 = vld [vmem:[%s5412 + $0x40] sm:$0xff]
  %v5422 = vld [vmem:[%s5412 + $0x48] sm:$0xff]
  %v5423 = vld [vmem:[%s5412 + $0x50] sm:$0xff]
  %v5424 = vld [vmem:[%s5412 + $0x58] sm:$0xff]
  %v5425 = vld [vmem:[%s5412 + $0x60] sm:$0xff]
  %v5426 = vld [vmem:[%s5412 + $0x68] sm:$0xff]
  %v5427 = vld [vmem:[%s5412 + $0x70] sm:$0xff]
  %v5428 = vld [vmem:[%s5412 + $0x78] sm:$0xff]
  %v5429 = vld [vmem:[%s5412 + $0x80] sm:$0xff]
  %v5430 = vld [vmem:[%s5412 + $0x88] sm:$0xff]
  %v5431 = vld [vmem:[%s5412 + $0x90] sm:$0xff]
  %v5432 = vld [vmem:[%s5412 + $0x98] sm:$0xff]
  %v5433 = vld [vmem:[%s5412 + $0xa0] sm:$0xff]
  %v5434 = vld [vmem:[%s5412 + $0xa8] sm:$0xff]
  %v5435 = vld [vmem:[%s5412 + $0xb0] sm:$0xff]
  %v5436 = vld [vmem:[%s5412 + $0xb8] sm:$0xff]
  %v5437 = vld [vmem:[%s5412 + $0xc0] sm:$0xff]
  %v5438 = vld [vmem:[%s5412 + $0xc8] sm:$0xff]
  %v5439 = vld [vmem:[%s5412 + $0xd0] sm:$0xff]
  %v5440 = vld [vmem:[%s5412 + $0xd8] sm:$0xff]
  %v5441 = vld [vmem:[%s5412 + $0xe0] sm:$0xff]
  %v5442 = vld [vmem:[%s5412 + $0xe8] sm:$0xff]
  %v5443 = vld [vmem:[%s5412 + $0xf0] sm:$0xff]
  %v5444 = vld [vmem:[%s5412 + $0xf8] sm:$0xff]
  %v5445 = vld [vmem:[%s5412 + $0x100] sm:$0xff]
  %v5446 = vld [vmem:[%s5412 + $0x108] sm:$0xff]
  %v5447 = vld [vmem:[%s5412 + $0x110] sm:$0xff]
  %v5448 = vld [vmem:[%s5412 + $0x118] sm:$0xff]
  %v5449 = vld [vmem:[%s5412 + $0x120] sm:$0xff]
  %v5450 = vld [vmem:[%s5412 + $0x128] sm:$0xff]
  %v5451 = vld [vmem:[%s5412 + $0x130] sm:$0xff]
  %v5452 = vld [vmem:[%s5412 + $0x138] sm:$0xff]
  %v5453 = vld [vmem:[%s5412 + $0x140] sm:$0xff]
  %v5454 = vld [vmem:[%s5412 + $0x148] sm:$0xff]
  %v5455 = vld [vmem:[%s5412 + $0x150] sm:$0xff]
  %v5456 = vld [vmem:[%s5412 + $0x158] sm:$0xff]
  %v5457 = vld [vmem:[%s5412 + $0x160] sm:$0xff]
  %v5458 = vld [vmem:[%s5412 + $0x168] sm:$0xff]
  %v5459 = vld [vmem:[%s5412 + $0x170] sm:$0xff]
  %v5460 = vld [vmem:[%s5412 + $0x178] sm:$0xff]
  %5461 = vmatprep.subr.mxu0 0.0
  %5462 = vmatpush1.msra.mxu0 %v5413
  %5463 = vmatprep.subr.mxu0 0.0
  %5464 = vmatpush1.msra.mxu0 %v5414
  %5465 = vmatprep.subr.mxu0 0.0
  %5466 = vmatpush1.msra.mxu0 %v5415
  %5467 = vmatprep.subr.mxu0 0.0
  %5468 = vmatpush1.msra.mxu0 %v5416
  %5469 = vmatprep.subr.mxu0 0.0
  %5470 = vmatpush1.msra.mxu0 %v5417
  %5471 = vmatprep.subr.mxu0 0.0
  %5472 = vmatpush1.msra.mxu0 %v5418
  %5473 = vmatprep.subr.mxu0 0.0
  %5474 = vmatpush1.msra.mxu0 %v5419
  %5475 = vmatprep.subr.mxu0 0.0
  %5476 = vmatpush1.msra.mxu0 %v5420
  %5477 = vmatprep.subr.mxu0 0.0
  %5478 = vmatpush1.msra.mxu0 %v5421
  %5479 = vmatprep.subr.mxu0 0.0
  %5480 = vmatpush1.msra.mxu0 %v5422
  %5481 = vmatprep.subr.mxu0 0.0
  %5482 = vmatpush1.msra.mxu0 %v5423
  %5483 = vmatprep.subr.mxu0 0.0
  %5484 = vmatpush1.msra.mxu0 %v5424
  %5485 = vmatprep.subr.mxu0 0.0
  %5486 = vmatpush1.msra.mxu0 %v5425
  %5487 = vmatprep.subr.mxu0 0.0
  %5488 = vmatpush1.msra.mxu0 %v5426
  %5489 = vmatprep.subr.mxu0 0.0
  %5490 = vmatpush1.msra.mxu0 %v5427
  %5491 = vmatprep.subr.mxu0 0.0
  %5492 = vmatpush1.msra.mxu0 %v5428
  %5493 = vmatprep.subr.mxu0 0.0
  %5494 = vmatpush1.msra.mxu0 %v5429
  %5495 = vmatprep.subr.mxu0 0.0
  %5496 = vmatpush1.msra.mxu0 %v5430
  %5497 = vmatprep.subr.mxu0 0.0
  %5498 = vmatpush1.msra.mxu0 %v5431
  %5499 = vmatprep.subr.mxu0 0.0
  %5500 = vmatpush1.msra.mxu0 %v5432
  %5501 = vmatprep.subr.mxu0 0.0
  %5502 = vmatpush1.msra.mxu0 %v5433
  %5503 = vmatprep.subr.mxu0 0.0
  %5504 = vmatpush1.msra.mxu0 %v5434
  %5505 = vmatprep.subr.mxu0 0.0
  %5506 = vmatpush1.msra.mxu0 %v5435
  %5507 = vmatprep.subr.mxu0 0.0
  %5508 = vmatpush1.msra.mxu0 %v5436
  %5509 = vmatprep.subr.mxu0 0.0
  %5510 = vmatpush1.msra.mxu0 %v5437
  %5511 = vmatprep.subr.mxu0 0.0
  %5512 = vmatpush1.msra.mxu0 %v5438
  %5513 = vmatprep.subr.mxu0 0.0
  %5514 = vmatpush1.msra.mxu0 %v5439
  %5515 = vmatprep.subr.mxu0 0.0
  %5516 = vmatpush1.msra.mxu0 %v5440
  %5517 = vmatprep.subr.mxu0 0.0
  %5518 = vmatpush1.msra.mxu0 %v5441
  %5519 = vmatprep.subr.mxu0 0.0
  %5520 = vmatpush1.msra.mxu0 %v5442
  %5521 = vmatprep.subr.mxu0 0.0
  %5522 = vmatpush1.msra.mxu0 %v5443
  %5523 = vmatprep.subr.mxu0 0.0
  %5524 = vmatpush1.msra.mxu0 %v5444
  %5525 = vmatprep.mubr.f32.mxu0 %v5000
  %5526 = vmatmul.mubr.f32.gmra.mrb[0].mxu0 %v4999
  %v5527 = vpop.f32.mrb[0].mxu0
  %v5528 = vadd.f32 0.0, %v5527
  %v5529 = vpop.f32.mrb[0].mxu0
  %5530 = vdwg.mxu0
  %5531 = vmatprep.subr.mxu0 0.0
  %5532 = vmatpush1.msra.mxu0 %v5445
  %5533 = vmatprep.subr.mxu0 0.0
  %5534 = vmatpush1.msra.mxu0 %v5446
  %5535 = vmatprep.subr.mxu0 0.0
  %5536 = vmatpush1.msra.mxu0 %v5447
  %5537 = vmatprep.subr.mxu0 0.0
  %5538 = vmatpush1.msra.mxu0 %v5448
  %5539 = vmatprep.subr.mxu0 0.0
  %5540 = vmatpush1.msra.mxu0 %v5449
  %5541 = vmatprep.subr.mxu0 0.0
  %5542 = vmatpush1.msra.mxu0 %v5450
  %5543 = vmatprep.subr.mxu0 0.0
  %5544 = vmatpush1.msra.mxu0 %v5451
  %5545 = vmatprep.subr.mxu0 0.0
  %5546 = vmatpush1.msra.mxu0 %v5452
  %5547 = vmatprep.subr.mxu0 0.0
  %5548 = vmatpush1.msra.mxu0 %v5453
  %5549 = vmatprep.subr.mxu0 0.0
  %5550 = vmatpush1.msra.mxu0 %v5454
  %5551 = vmatprep.subr.mxu0 0.0
  %5552 = vmatpush1.msra.mxu0 %v5455
  %5553 = vmatprep.subr.mxu0 0.0
  %5554 = vmatpush1.msra.mxu0 %v5456
  %5555 = vmatprep.subr.mxu0 0.0
  %5556 = vmatpush1.msra.mxu0 %v5457
  %5557 = vmatprep.subr.mxu0 0.0
  %5558 = vmatpush1.msra.mxu0 %v5458
  %5559 = vmatprep.subr.mxu0 0.0
  %5560 = vmatpush1.msra.mxu0 %v5459
  %5561 = vmatprep.subr.mxu0 0.0
  %5562 = vmatpush1.msra.mxu0 %v5460
  %5563 = vmatprep.subr.mxu0 0.0
  %5564 = vmatpush1.msra.mxu0 0.0
  %5565 = vmatprep.subr.mxu0 0.0
  %5566 = vmatpush1.msra.mxu0 0.0
  %5567 = vmatprep.subr.mxu0 0.0
  %5568 = vmatpush1.msra.mxu0 0.0
  %5569 = vmatprep.subr.mxu0 0.0
  %5570 = vmatpush1.msra.mxu0 0.0
  %5571 = vmatprep.subr.mxu0 0.0
  %5572 = vmatpush1.msra.mxu0 0.0
  %5573 = vmatprep.subr.mxu0 0.0
  %5574 = vmatpush1.msra.mxu0 0.0
  %5575 = vmatprep.subr.mxu0 0.0
  %5576 = vmatpush1.msra.mxu0 0.0
  %5577 = vmatprep.subr.mxu0 0.0
  %5578 = vmatpush1.msra.mxu0 0.0
  %5579 = vmatprep.subr.mxu0 0.0
  %5580 = vmatpush1.msra.mxu0 0.0
  %5581 = vmatprep.subr.mxu0 0.0
  %5582 = vmatpush1.msra.mxu0 0.0
  %5583 = vmatprep.subr.mxu0 0.0
  %5584 = vmatpush1.msra.mxu0 0.0
  %5585 = vmatprep.subr.mxu0 0.0
  %5586 = vmatpush1.msra.mxu0 0.0
  %5587 = vmatprep.subr.mxu0 0.0
  %5588 = vmatpush1.msra.mxu0 0.0
  %5589 = vmatprep.subr.mxu0 0.0
  %5590 = vmatpush1.msra.mxu0 0.0
  %5591 = vmatprep.subr.mxu0 0.0
  %5592 = vmatpush1.msra.mxu0 0.0
  %5593 = vmatprep.subr.mxu0 0.0
  %5594 = vmatpush1.msra.mxu0 0.0
  %5595 = vmatprep.mubr.f32.mxu0 0.0
  %5596 = vmatmul.mubr.f32.gmra.mrb[0].mxu0 %v5001
  %v5597 = vpop.f32.mrb[0].mxu0
  %v5598 = vadd.f32 %v5528, %v5597
  %v5599 = vpop.f32.mrb[0].mxu0
  %5600 = vdwg.mxu0
  %v5601 = vadd.f32 %v5409, %v5598
  %s5602 = scalar_lea.vmem %s3, 1152
  %v5603 = vld [vmem:[%s5602] sm:$0xff]
  %v5604 = vld [vmem:[%s5602 + $0x8] sm:$0xff]
  %v5605 = vld [vmem:[%s5602 + $0x10] sm:$0xff]
  %v5606 = vld [vmem:[%s5602 + $0x18] sm:$0xff]
  %v5607 = vld [vmem:[%s5602 + $0x20] sm:$0xff]
  %v5608 = vld [vmem:[%s5602 + $0x28] sm:$0xff]
  %v5609 = vld [vmem:[%s5602 + $0x30] sm:$0xff]
  %v5610 = vld [vmem:[%s5602 + $0x38] sm:$0xff]
  %v5611 = vld [vmem:[%s5602 + $0x40] sm:$0xff]
  %v5612 = vld [vmem:[%s5602 + $0x48] sm:$0xff]
  %v5613 = vld [vmem:[%s5602 + $0x50] sm:$0xff]
  %v5614 = vld [vmem:[%s5602 + $0x58] sm:$0xff]
  %v5615 = vld [vmem:[%s5602 + $0x60] sm:$0xff]
  %v5616 = vld [vmem:[%s5602 + $0x68] sm:$0xff]
  %v5617 = vld [vmem:[%s5602 + $0x70] sm:$0xff]
  %v5618 = vld [vmem:[%s5602 + $0x78] sm:$0xff]
  %v5619 = vld [vmem:[%s5602 + $0x80] sm:$0xff]
  %v5620 = vld [vmem:[%s5602 + $0x88] sm:$0xff]
  %v5621 = vld [vmem:[%s5602 + $0x90] sm:$0xff]
  %v5622 = vld [vmem:[%s5602 + $0x98] sm:$0xff]
  %v5623 = vld [vmem:[%s5602 + $0xa0] sm:$0xff]
  %v5624 = vld [vmem:[%s5602 + $0xa8] sm:$0xff]
  %v5625 = vld [vmem:[%s5602 + $0xb0] sm:$0xff]
  %v5626 = vld [vmem:[%s5602 + $0xb8] sm:$0xff]
  %v5627 = vld [vmem:[%s5602 + $0xc0] sm:$0xff]
  %v5628 = vld [vmem:[%s5602 + $0xc8] sm:$0xff]
  %v5629 = vld [vmem:[%s5602 + $0xd0] sm:$0xff]
  %v5630 = vld [vmem:[%s5602 + $0xd8] sm:$0xff]
  %v5631 = vld [vmem:[%s5602 + $0xe0] sm:$0xff]
  %v5632 = vld [vmem:[%s5602 + $0xe8] sm:$0xff]
  %v5633 = vld [vmem:[%s5602 + $0xf0] sm:$0xff]
  %v5634 = vld [vmem:[%s5602 + $0xf8] sm:$0xff]
  %v5635 = vld [vmem:[%s5602 + $0x100] sm:$0xff]
  %v5636 = vld [vmem:[%s5602 + $0x108] sm:$0xff]
  %v5637 = vld [vmem:[%s5602 + $0x110] sm:$0xff]
  %v5638 = vld [vmem:[%s5602 + $0x118] sm:$0xff]
  %v5639 = vld [vmem:[%s5602 + $0x120] sm:$0xff]
  %v5640 = vld [vmem:[%s5602 + $0x128] sm:$0xff]
  %v5641 = vld [vmem:[%s5602 + $0x130] sm:$0xff]
  %v5642 = vld [vmem:[%s5602 + $0x138] sm:$0xff]
  %v5643 = vld [vmem:[%s5602 + $0x140] sm:$0xff]
  %v5644 = vld [vmem:[%s5602 + $0x148] sm:$0xff]
  %v5645 = vld [vmem:[%s5602 + $0x150] sm:$0xff]
  %v5646 = vld [vmem:[%s5602 + $0x158] sm:$0xff]
  %v5647 = vld [vmem:[%s5602 + $0x160] sm:$0xff]
  %v5648 = vld [vmem:[%s5602 + $0x168] sm:$0xff]
  %v5649 = vld [vmem:[%s5602 + $0x170] sm:$0xff]
  %v5650 = vld [vmem:[%s5602 + $0x178] sm:$0xff]
  %5651 = vmatprep.subr.mxu0 0.0
  %5652 = vmatpush1.msra.mxu0 %v5603
  %5653 = vmatprep.subr.mxu0 0.0
  %5654 = vmatpush1.msra.mxu0 %v5604
  %5655 = vmatprep.subr.mxu0 0.0
  %5656 = vmatpush1.msra.mxu0 %v5605
  %5657 = vmatprep.subr.mxu0 0.0
  %5658 = vmatpush1.msra.mxu0 %v5606
  %5659 = vmatprep.subr.mxu0 0.0
  %5660 = vmatpush1.msra.mxu0 %v5607
  %5661 = vmatprep.subr.mxu0 0.0
  %5662 = vmatpush1.msra.mxu0 %v5608
  %5663 = vmatprep.subr.mxu0 0.0
  %5664 = vmatpush1.msra.mxu0 %v5609
  %5665 = vmatprep.subr.mxu0 0.0
  %5666 = vmatpush1.msra.mxu0 %v5610
  %5667 = vmatprep.subr.mxu0 0.0
  %5668 = vmatpush1.msra.mxu0 %v5611
  %5669 = vmatprep.subr.mxu0 0.0
  %5670 = vmatpush1.msra.mxu0 %v5612
  %5671 = vmatprep.subr.mxu0 0.0
  %5672 = vmatpush1.msra.mxu0 %v5613
  %5673 = vmatprep.subr.mxu0 0.0
  %5674 = vmatpush1.msra.mxu0 %v5614
  %5675 = vmatprep.subr.mxu0 0.0
  %5676 = vmatpush1.msra.mxu0 %v5615
  %5677 = vmatprep.subr.mxu0 0.0
  %5678 = vmatpush1.msra.mxu0 %v5616
  %5679 = vmatprep.subr.mxu0 0.0
  %5680 = vmatpush1.msra.mxu0 %v5617
  %5681 = vmatprep.subr.mxu0 0.0
  %5682 = vmatpush1.msra.mxu0 %v5618
  %5683 = vmatprep.subr.mxu0 0.0
  %5684 = vmatpush1.msra.mxu0 %v5619
  %5685 = vmatprep.subr.mxu0 0.0
  %5686 = vmatpush1.msra.mxu0 %v5620
  %5687 = vmatprep.subr.mxu0 0.0
  %5688 = vmatpush1.msra.mxu0 %v5621
  %5689 = vmatprep.subr.mxu0 0.0
  %5690 = vmatpush1.msra.mxu0 %v5622
  %5691 = vmatprep.subr.mxu0 0.0
  %5692 = vmatpush1.msra.mxu0 %v5623
  %5693 = vmatprep.subr.mxu0 0.0
  %5694 = vmatpush1.msra.mxu0 %v5624
  %5695 = vmatprep.subr.mxu0 0.0
  %5696 = vmatpush1.msra.mxu0 %v5625
  %5697 = vmatprep.subr.mxu0 0.0
  %5698 = vmatpush1.msra.mxu0 %v5626
  %5699 = vmatprep.subr.mxu0 0.0
  %5700 = vmatpush1.msra.mxu0 %v5627
  %5701 = vmatprep.subr.mxu0 0.0
  %5702 = vmatpush1.msra.mxu0 %v5628
  %5703 = vmatprep.subr.mxu0 0.0
  %5704 = vmatpush1.msra.mxu0 %v5629
  %5705 = vmatprep.subr.mxu0 0.0
  %5706 = vmatpush1.msra.mxu0 %v5630
  %5707 = vmatprep.subr.mxu0 0.0
  %5708 = vmatpush1.msra.mxu0 %v5631
  %5709 = vmatprep.subr.mxu0 0.0
  %5710 = vmatpush1.msra.mxu0 %v5632
  %5711 = vmatprep.subr.mxu0 0.0
  %5712 = vmatpush1.msra.mxu0 %v5633
  %5713 = vmatprep.subr.mxu0 0.0
  %5714 = vmatpush1.msra.mxu0 %v5634
  %5715 = vmatprep.mubr.f32.mxu0 %v5003
  %5716 = vmatmul.mubr.f32.gmra.mrb[0].mxu0 %v5002
  %v5717 = vpop.f32.mrb[0].mxu0
  %v5718 = vadd.f32 0.0, %v5717
  %v5719 = vpop.f32.mrb[0].mxu0
  %5720 = vdwg.mxu0
  %5721 = vmatprep.subr.mxu0 0.0
  %5722 = vmatpush1.msra.mxu0 %v5635
  %5723 = vmatprep.subr.mxu0 0.0
  %5724 = vmatpush1.msra.mxu0 %v5636
  %5725 = vmatprep.subr.mxu0 0.0
  %5726 = vmatpush1.msra.mxu0 %v5637
  %5727 = vmatprep.subr.mxu0 0.0
  %5728 = vmatpush1.msra.mxu0 %v5638
  %5729 = vmatprep.subr.mxu0 0.0
  %5730 = vmatpush1.msra.mxu0 %v5639
  %5731 = vmatprep.subr.mxu0 0.0
  %5732 = vmatpush1.msra.mxu0 %v5640
  %5733 = vmatprep.subr.mxu0 0.0
  %5734 = vmatpush1.msra.mxu0 %v5641
  %5735 = vmatprep.subr.mxu0 0.0
  %5736 = vmatpush1.msra.mxu0 %v5642
  %5737 = vmatprep.subr.mxu0 0.0
  %5738 = vmatpush1.msra.mxu0 %v5643
  %5739 = vmatprep.subr.mxu0 0.0
  %5740 = vmatpush1.msra.mxu0 %v5644
  %5741 = vmatprep.subr.mxu0 0.0
  %5742 = vmatpush1.msra.mxu0 %v5645
  %5743 = vmatprep.subr.mxu0 0.0
  %5744 = vmatpush1.msra.mxu0 %v5646
  %5745 = vmatprep.subr.mxu0 0.0
  %5746 = vmatpush1.msra.mxu0 %v5647
  %5747 = vmatprep.subr.mxu0 0.0
  %5748 = vmatpush1.msra.mxu0 %v5648
  %5749 = vmatprep.subr.mxu0 0.0
  %5750 = vmatpush1.msra.mxu0 %v5649
  %5751 = vmatprep.subr.mxu0 0.0
  %5752 = vmatpush1.msra.mxu0 %v5650
  %5753 = vmatprep.subr.mxu0 0.0
  %5754 = vmatpush1.msra.mxu0 0.0
  %5755 = vmatprep.subr.mxu0 0.0
  %5756 = vmatpush1.msra.mxu0 0.0
  %5757 = vmatprep.subr.mxu0 0.0
  %5758 = vmatpush1.msra.mxu0 0.0
  %5759 = vmatprep.subr.mxu0 0.0
  %5760 = vmatpush1.msra.mxu0 0.0
  %5761 = vmatprep.subr.mxu0 0.0
  %5762 = vmatpush1.msra.mxu0 0.0
  %5763 = vmatprep.subr.mxu0 0.0
  %5764 = vmatpush1.msra.mxu0 0.0
  %5765 = vmatprep.subr.mxu0 0.0
  %5766 = vmatpush1.msra.mxu0 0.0
  %5767 = vmatprep.subr.mxu0 0.0
  %5768 = vmatpush1.msra.mxu0 0.0
  %5769 = vmatprep.subr.mxu0 0.0
  %5770 = vmatpush1.msra.mxu0 0.0
  %5771 = vmatprep.subr.mxu0 0.0
  %5772 = vmatpush1.msra.mxu0 0.0
  %5773 = vmatprep.subr.mxu0 0.0
  %5774 = vmatpush1.msra.mxu0 0.0
  %5775 = vmatprep.subr.mxu0 0.0
  %5776 = vmatpush1.msra.mxu0 0.0
  %5777 = vmatprep.subr.mxu0 0.0
  %5778 = vmatpush1.msra.mxu0 0.0
  %5779 = vmatprep.subr.mxu0 0.0
  %5780 = vmatpush1.msra.mxu0 0.0
  %5781 = vmatprep.subr.mxu0 0.0
  %5782 = vmatpush1.msra.mxu0 0.0
  %5783 = vmatprep.subr.mxu0 0.0
  %5784 = vmatpush1.msra.mxu0 0.0
  %5785 = vmatprep.mubr.f32.mxu0 0.0
  %5786 = vmatmul.mubr.f32.gmra.mrb[0].mxu0 %v5004
  %v5787 = vpop.f32.mrb[0].mxu0
  %v5788 = vadd.f32 %v5718, %v5787
  %v5789 = vpop.f32.mrb[0].mxu0
  %5790 = vdwg.mxu0
  %v5791 = vadd.f32 %v5601, %v5788
  %s5792 = scalar_lea.vmem %s3, 1536
  %v5793 = vld [vmem:[%s5792] sm:$0xff]
  %v5794 = vld [vmem:[%s5792 + $0x8] sm:$0xff]
  %v5795 = vld [vmem:[%s5792 + $0x10] sm:$0xff]
  %v5796 = vld [vmem:[%s5792 + $0x18] sm:$0xff]
  %v5797 = vld [vmem:[%s5792 + $0x20] sm:$0xff]
  %v5798 = vld [vmem:[%s5792 + $0x28] sm:$0xff]
  %v5799 = vld [vmem:[%s5792 + $0x30] sm:$0xff]
  %v5800 = vld [vmem:[%s5792 + $0x38] sm:$0xff]
  %v5801 = vld [vmem:[%s5792 + $0x40] sm:$0xff]
  %v5802 = vld [vmem:[%s5792 + $0x48] sm:$0xff]
  %v5803 = vld [vmem:[%s5792 + $0x50] sm:$0xff]
  %v5804 = vld [vmem:[%s5792 + $0x58] sm:$0xff]
  %v5805 = vld [vmem:[%s5792 + $0x60] sm:$0xff]
  %v5806 = vld [vmem:[%s5792 + $0x68] sm:$0xff]
  %v5807 = vld [vmem:[%s5792 + $0x70] sm:$0xff]
  %v5808 = vld [vmem:[%s5792 + $0x78] sm:$0xff]
  %v5809 = vld [vmem:[%s5792 + $0x80] sm:$0xff]
  %v5810 = vld [vmem:[%s5792 + $0x88] sm:$0xff]
  %v5811 = vld [vmem:[%s5792 + $0x90] sm:$0xff]
  %v5812 = vld [vmem:[%s5792 + $0x98] sm:$0xff]
  %v5813 = vld [vmem:[%s5792 + $0xa0] sm:$0xff]
  %v5814 = vld [vmem:[%s5792 + $0xa8] sm:$0xff]
  %v5815 = vld [vmem:[%s5792 + $0xb0] sm:$0xff]
  %v5816 = vld [vmem:[%s5792 + $0xb8] sm:$0xff]
  %v5817 = vld [vmem:[%s5792 + $0xc0] sm:$0xff]
  %v5818 = vld [vmem:[%s5792 + $0xc8] sm:$0xff]
  %v5819 = vld [vmem:[%s5792 + $0xd0] sm:$0xff]
  %v5820 = vld [vmem:[%s5792 + $0xd8] sm:$0xff]
  %v5821 = vld [vmem:[%s5792 + $0xe0] sm:$0xff]
  %v5822 = vld [vmem:[%s5792 + $0xe8] sm:$0xff]
  %v5823 = vld [vmem:[%s5792 + $0xf0] sm:$0xff]
  %v5824 = vld [vmem:[%s5792 + $0xf8] sm:$0xff]
  %v5825 = vld [vmem:[%s5792 + $0x100] sm:$0xff]
  %v5826 = vld [vmem:[%s5792 + $0x108] sm:$0xff]
  %v5827 = vld [vmem:[%s5792 + $0x110] sm:$0xff]
  %v5828 = vld [vmem:[%s5792 + $0x118] sm:$0xff]
  %v5829 = vld [vmem:[%s5792 + $0x120] sm:$0xff]
  %v5830 = vld [vmem:[%s5792 + $0x128] sm:$0xff]
  %v5831 = vld [vmem:[%s5792 + $0x130] sm:$0xff]
  %v5832 = vld [vmem:[%s5792 + $0x138] sm:$0xff]
  %v5833 = vld [vmem:[%s5792 + $0x140] sm:$0xff]
  %v5834 = vld [vmem:[%s5792 + $0x148] sm:$0xff]
  %v5835 = vld [vmem:[%s5792 + $0x150] sm:$0xff]
  %v5836 = vld [vmem:[%s5792 + $0x158] sm:$0xff]
  %v5837 = vld [vmem:[%s5792 + $0x160] sm:$0xff]
  %v5838 = vld [vmem:[%s5792 + $0x168] sm:$0xff]
  %v5839 = vld [vmem:[%s5792 + $0x170] sm:$0xff]
  %v5840 = vld [vmem:[%s5792 + $0x178] sm:$0xff]
  %5841 = vmatprep.subr.mxu0 0.0
  %5842 = vmatpush1.msra.mxu0 %v5793
  %5843 = vmatprep.subr.mxu0 0.0
  %5844 = vmatpush1.msra.mxu0 %v5794
  %5845 = vmatprep.subr.mxu0 0.0
  %5846 = vmatpush1.msra.mxu0 %v5795
  %5847 = vmatprep.subr.mxu0 0.0
  %5848 = vmatpush1.msra.mxu0 %v5796
  %5849 = vmatprep.subr.mxu0 0.0
  %5850 = vmatpush1.msra.mxu0 %v5797
  %5851 = vmatprep.subr.mxu0 0.0
  %5852 = vmatpush1.msra.mxu0 %v5798
  %5853 = vmatprep.subr.mxu0 0.0
  %5854 = vmatpush1.msra.mxu0 %v5799
  %5855 = vmatprep.subr.mxu0 0.0
  %5856 = vmatpush1.msra.mxu0 %v5800
  %5857 = vmatprep.subr.mxu0 0.0
  %5858 = vmatpush1.msra.mxu0 %v5801
  %5859 = vmatprep.subr.mxu0 0.0
  %5860 = vmatpush1.msra.mxu0 %v5802
  %5861 = vmatprep.subr.mxu0 0.0
  %5862 = vmatpush1.msra.mxu0 %v5803
  %5863 = vmatprep.subr.mxu0 0.0
  %5864 = vmatpush1.msra.mxu0 %v5804
  %5865 = vmatprep.subr.mxu0 0.0
  %5866 = vmatpush1.msra.mxu0 %v5805
  %5867 = vmatprep.subr.mxu0 0.0
  %5868 = vmatpush1.msra.mxu0 %v5806
  %5869 = vmatprep.subr.mxu0 0.0
  %5870 = vmatpush1.msra.mxu0 %v5807
  %5871 = vmatprep.subr.mxu0 0.0
  %5872 = vmatpush1.msra.mxu0 %v5808
  %5873 = vmatprep.subr.mxu0 0.0
  %5874 = vmatpush1.msra.mxu0 %v5809
  %5875 = vmatprep.subr.mxu0 0.0
  %5876 = vmatpush1.msra.mxu0 %v5810
  %5877 = vmatprep.subr.mxu0 0.0
  %5878 = vmatpush1.msra.mxu0 %v5811
  %5879 = vmatprep.subr.mxu0 0.0
  %5880 = vmatpush1.msra.mxu0 %v5812
  %5881 = vmatprep.subr.mxu0 0.0
  %5882 = vmatpush1.msra.mxu0 %v5813
  %5883 = vmatprep.subr.mxu0 0.0
  %5884 = vmatpush1.msra.mxu0 %v5814
  %5885 = vmatprep.subr.mxu0 0.0
  %5886 = vmatpush1.msra.mxu0 %v5815
  %5887 = vmatprep.subr.mxu0 0.0
  %5888 = vmatpush1.msra.mxu0 %v5816
  %5889 = vmatprep.subr.mxu0 0.0
  %5890 = vmatpush1.msra.mxu0 %v5817
  %5891 = vmatprep.subr.mxu0 0.0
  %5892 = vmatpush1.msra.mxu0 %v5818
  %5893 = vmatprep.subr.mxu0 0.0
  %5894 = vmatpush1.msra.mxu0 %v5819
  %5895 = vmatprep.subr.mxu0 0.0
  %5896 = vmatpush1.msra.mxu0 %v5820
  %5897 = vmatprep.subr.mxu0 0.0
  %5898 = vmatpush1.msra.mxu0 %v5821
  %5899 = vmatprep.subr.mxu0 0.0
  %5900 = vmatpush1.msra.mxu0 %v5822
  %5901 = vmatprep.subr.mxu0 0.0
  %5902 = vmatpush1.msra.mxu0 %v5823
  %5903 = vmatprep.subr.mxu0 0.0
  %5904 = vmatpush1.msra.mxu0 %v5824
  %5905 = vmatprep.mubr.f32.mxu0 %v5006
  %5906 = vmatmul.mubr.f32.gmra.mrb[0].mxu0 %v5005
  %v5907 = vpop.f32.mrb[0].mxu0
  %v5908 = vadd.f32 0.0, %v5907
  %v5909 = vpop.f32.mrb[0].mxu0
  %5910 = vdwg.mxu0
  %5911 = vmatprep.subr.mxu0 0.0
  %5912 = vmatpush1.msra.mxu0 %v5825
  %5913 = vmatprep.subr.mxu0 0.0
  %5914 = vmatpush1.msra.mxu0 %v5826
  %5915 = vmatprep.subr.mxu0 0.0
  %5916 = vmatpush1.msra.mxu0 %v5827
  %5917 = vmatprep.subr.mxu0 0.0
  %5918 = vmatpush1.msra.mxu0 %v5828
  %5919 = vmatprep.subr.mxu0 0.0
  %5920 = vmatpush1.msra.mxu0 %v5829
  %5921 = vmatprep.subr.mxu0 0.0
  %5922 = vmatpush1.msra.mxu0 %v5830
  %5923 = vmatprep.subr.mxu0 0.0
  %5924 = vmatpush1.msra.mxu0 %v5831
  %5925 = vmatprep.subr.mxu0 0.0
  %5926 = vmatpush1.msra.mxu0 %v5832
  %5927 = vmatprep.subr.mxu0 0.0
  %5928 = vmatpush1.msra.mxu0 %v5833
  %5929 = vmatprep.subr.mxu0 0.0
  %5930 = vmatpush1.msra.mxu0 %v5834
  %5931 = vmatprep.subr.mxu0 0.0
  %5932 = vmatpush1.msra.mxu0 %v5835
  %5933 = vmatprep.subr.mxu0 0.0
  %5934 = vmatpush1.msra.mxu0 %v5836
  %5935 = vmatprep.subr.mxu0 0.0
  %5936 = vmatpush1.msra.mxu0 %v5837
  %5937 = vmatprep.subr.mxu0 0.0
  %5938 = vmatpush1.msra.mxu0 %v5838
  %5939 = vmatprep.subr.mxu0 0.0
  %5940 = vmatpush1.msra.mxu0 %v5839
  %5941 = vmatprep.subr.mxu0 0.0
  %5942 = vmatpush1.msra.mxu0 %v5840
  %5943 = vmatprep.subr.mxu0 0.0
  %5944 = vmatpush1.msra.mxu0 0.0
  %5945 = vmatprep.subr.mxu0 0.0
  %5946 = vmatpush1.msra.mxu0 0.0
  %5947 = vmatprep.subr.mxu0 0.0
  %5948 = vmatpush1.msra.mxu0 0.0
  %5949 = vmatprep.subr.mxu0 0.0
  %5950 = vmatpush1.msra.mxu0 0.0
  %5951 = vmatprep.subr.mxu0 0.0
  %5952 = vmatpush1.msra.mxu0 0.0
  %5953 = vmatprep.subr.mxu0 0.0
  %5954 = vmatpush1.msra.mxu0 0.0
  %5955 = vmatprep.subr.mxu0 0.0
  %5956 = vmatpush1.msra.mxu0 0.0
  %5957 = vmatprep.subr.mxu0 0.0
  %5958 = vmatpush1.msra.mxu0 0.0
  %5959 = vmatprep.subr.mxu0 0.0
  %5960 = vmatpush1.msra.mxu0 0.0
  %5961 = vmatprep.subr.mxu0 0.0
  %5962 = vmatpush1.msra.mxu0 0.0
  %5963 = vmatprep.subr.mxu0 0.0
  %5964 = vmatpush1.msra.mxu0 0.0
  %5965 = vmatprep.subr.mxu0 0.0
  %5966 = vmatpush1.msra.mxu0 0.0
  %5967 = vmatprep.subr.mxu0 0.0
  %5968 = vmatpush1.msra.mxu0 0.0
  %5969 = vmatprep.subr.mxu0 0.0
  %5970 = vmatpush1.msra.mxu0 0.0
  %5971 = vmatprep.subr.mxu0 0.0
  %5972 = vmatpush1.msra.mxu0 0.0
  %5973 = vmatprep.subr.mxu0 0.0
  %5974 = vmatpush1.msra.mxu0 0.0
  %5975 = vmatprep.mubr.f32.mxu0 0.0
  %5976 = vmatmul.mubr.f32.gmra.mrb[0].mxu0 %v5007
  %v5977 = vpop.f32.mrb[0].mxu0
  %v5978 = vadd.f32 %v5908, %v5977
  %v5979 = vpop.f32.mrb[0].mxu0
  %5980 = vdwg.mxu0
  %v5981 = vadd.f32 %v5791, %v5978
  %s5982 = scalar_lea.vmem %s3, 1920
  %v5983 = vld [vmem:[%s5982] sm:$0xff]
  %v5984 = vld [vmem:[%s5982 + $0x8] sm:$0xff]
  %v5985 = vld [vmem:[%s5982 + $0x10] sm:$0xff]
  %v5986 = vld [vmem:[%s5982 + $0x18] sm:$0xff]
  %v5987 = vld [vmem:[%s5982 + $0x20] sm:$0xff]
  %v5988 = vld [vmem:[%s5982 + $0x28] sm:$0xff]
  %v5989 = vld [vmem:[%s5982 + $0x30] sm:$0xff]
  %v5990 = vld [vmem:[%s5982 + $0x38] sm:$0xff]
  %v5991 = vld [vmem:[%s5982 + $0x40] sm:$0xff]
  %v5992 = vld [vmem:[%s5982 + $0x48] sm:$0xff]
  %v5993 = vld [vmem:[%s5982 + $0x50] sm:$0xff]
  %v5994 = vld [vmem:[%s5982 + $0x58] sm:$0xff]
  %v5995 = vld [vmem:[%s5982 + $0x60] sm:$0xff]
  %v5996 = vld [vmem:[%s5982 + $0x68] sm:$0xff]
  %v5997 = vld [vmem:[%s5982 + $0x70] sm:$0xff]
  %v5998 = vld [vmem:[%s5982 + $0x78] sm:$0xff]
  %v5999 = vld [vmem:[%s5982 + $0x80] sm:$0xff]
  %v6000 = vld [vmem:[%s5982 + $0x88] sm:$0xff]
  %v6001 = vld [vmem:[%s5982 + $0x90] sm:$0xff]
  %v6002 = vld [vmem:[%s5982 + $0x98] sm:$0xff]
  %v6003 = vld [vmem:[%s5982 + $0xa0] sm:$0xff]
  %v6004 = vld [vmem:[%s5982 + $0xa8] sm:$0xff]
  %v6005 = vld [vmem:[%s5982 + $0xb0] sm:$0xff]
  %v6006 = vld [vmem:[%s5982 + $0xb8] sm:$0xff]
  %v6007 = vld [vmem:[%s5982 + $0xc0] sm:$0xff]
  %v6008 = vld [vmem:[%s5982 + $0xc8] sm:$0xff]
  %v6009 = vld [vmem:[%s5982 + $0xd0] sm:$0xff]
  %v6010 = vld [vmem:[%s5982 + $0xd8] sm:$0xff]
  %v6011 = vld [vmem:[%s5982 + $0xe0] sm:$0xff]
  %v6012 = vld [vmem:[%s5982 + $0xe8] sm:$0xff]
  %v6013 = vld [vmem:[%s5982 + $0xf0] sm:$0xff]
  %v6014 = vld [vmem:[%s5982 + $0xf8] sm:$0xff]
  %v6015 = vld [vmem:[%s5982 + $0x100] sm:$0xff]
  %v6016 = vld [vmem:[%s5982 + $0x108] sm:$0xff]
  %v6017 = vld [vmem:[%s5982 + $0x110] sm:$0xff]
  %v6018 = vld [vmem:[%s5982 + $0x118] sm:$0xff]
  %v6019 = vld [vmem:[%s5982 + $0x120] sm:$0xff]
  %v6020 = vld [vmem:[%s5982 + $0x128] sm:$0xff]
  %v6021 = vld [vmem:[%s5982 + $0x130] sm:$0xff]
  %v6022 = vld [vmem:[%s5982 + $0x138] sm:$0xff]
  %v6023 = vld [vmem:[%s5982 + $0x140] sm:$0xff]
  %v6024 = vld [vmem:[%s5982 + $0x148] sm:$0xff]
  %v6025 = vld [vmem:[%s5982 + $0x150] sm:$0xff]
  %v6026 = vld [vmem:[%s5982 + $0x158] sm:$0xff]
  %v6027 = vld [vmem:[%s5982 + $0x160] sm:$0xff]
  %v6028 = vld [vmem:[%s5982 + $0x168] sm:$0xff]
  %v6029 = vld [vmem:[%s5982 + $0x170] sm:$0xff]
  %v6030 = vld [vmem:[%s5982 + $0x178] sm:$0xff]
  %6031 = vmatprep.subr.mxu0 0.0
  %6032 = vmatpush1.msra.mxu0 %v5983
  %6033 = vmatprep.subr.mxu0 0.0
  %6034 = vmatpush1.msra.mxu0 %v5984
  %6035 = vmatprep.subr.mxu0 0.0
  %6036 = vmatpush1.msra.mxu0 %v5985
  %6037 = vmatprep.subr.mxu0 0.0
  %6038 = vmatpush1.msra.mxu0 %v5986
  %6039 = vmatprep.subr.mxu0 0.0
  %6040 = vmatpush1.msra.mxu0 %v5987
  %6041 = vmatprep.subr.mxu0 0.0
  %6042 = vmatpush1.msra.mxu0 %v5988
  %6043 = vmatprep.subr.mxu0 0.0
  %6044 = vmatpush1.msra.mxu0 %v5989
  %6045 = vmatprep.subr.mxu0 0.0
  %6046 = vmatpush1.msra.mxu0 %v5990
  %6047 = vmatprep.subr.mxu0 0.0
  %6048 = vmatpush1.msra.mxu0 %v5991
  %6049 = vmatprep.subr.mxu0 0.0
  %6050 = vmatpush1.msra.mxu0 %v5992
  %6051 = vmatprep.subr.mxu0 0.0
  %6052 = vmatpush1.msra.mxu0 %v5993
  %6053 = vmatprep.subr.mxu0 0.0
  %6054 = vmatpush1.msra.mxu0 %v5994
  %6055 = vmatprep.subr.mxu0 0.0
  %6056 = vmatpush1.msra.mxu0 %v5995
  %6057 = vmatprep.subr.mxu0 0.0
  %6058 = vmatpush1.msra.mxu0 %v5996
  %6059 = vmatprep.subr.mxu0 0.0
  %6060 = vmatpush1.msra.mxu0 %v5997
  %6061 = vmatprep.subr.mxu0 0.0
  %6062 = vmatpush1.msra.mxu0 %v5998
  %6063 = vmatprep.subr.mxu0 0.0
  %6064 = vmatpush1.msra.mxu0 %v5999
  %6065 = vmatprep.subr.mxu0 0.0
  %6066 = vmatpush1.msra.mxu0 %v6000
  %6067 = vmatprep.subr.mxu0 0.0
  %6068 = vmatpush1.msra.mxu0 %v6001
  %6069 = vmatprep.subr.mxu0 0.0
  %6070 = vmatpush1.msra.mxu0 %v6002
  %6071 = vmatprep.subr.mxu0 0.0
  %6072 = vmatpush1.msra.mxu0 %v6003
  %6073 = vmatprep.subr.mxu0 0.0
  %6074 = vmatpush1.msra.mxu0 %v6004
  %6075 = vmatprep.subr.mxu0 0.0
  %6076 = vmatpush1.msra.mxu0 %v6005
  %6077 = vmatprep.subr.mxu0 0.0
  %6078 = vmatpush1.msra.mxu0 %v6006
  %6079 = vmatprep.subr.mxu0 0.0
  %6080 = vmatpush1.msra.mxu0 %v6007
  %6081 = vmatprep.subr.mxu0 0.0
  %6082 = vmatpush1.msra.mxu0 %v6008
  %6083 = vmatprep.subr.mxu0 0.0
  %6084 = vmatpush1.msra.mxu0 %v6009
  %6085 = vmatprep.subr.mxu0 0.0
  %6086 = vmatpush1.msra.mxu0 %v6010
  %6087 = vmatprep.subr.mxu0 0.0
  %6088 = vmatpush1.msra.mxu0 %v6011
  %6089 = vmatprep.subr.mxu0 0.0
  %6090 = vmatpush1.msra.mxu0 %v6012
  %6091 = vmatprep.subr.mxu0 0.0
  %6092 = vmatpush1.msra.mxu0 %v6013
  %6093 = vmatprep.subr.mxu0 0.0
  %6094 = vmatpush1.msra.mxu0 %v6014
  %6095 = vmatprep.mubr.f32.mxu0 %v5009
  %6096 = vmatmul.mubr.f32.gmra.mrb[0].mxu0 %v5008
  %v6097 = vpop.f32.mrb[0].mxu0
  %v6098 = vadd.f32 0.0, %v6097
  %v6099 = vpop.f32.mrb[0].mxu0
  %6100 = vdwg.mxu0
  %6101 = vmatprep.subr.mxu0 0.0
  %6102 = vmatpush1.msra.mxu0 %v6015
  %6103 = vmatprep.subr.mxu0 0.0
  %6104 = vmatpush1.msra.mxu0 %v6016
  %6105 = vmatprep.subr.mxu0 0.0
  %6106 = vmatpush1.msra.mxu0 %v6017
  %6107 = vmatprep.subr.mxu0 0.0
  %6108 = vmatpush1.msra.mxu0 %v6018
  %6109 = vmatprep.subr.mxu0 0.0
  %6110 = vmatpush1.msra.mxu0 %v6019
  %6111 = vmatprep.subr.mxu0 0.0
  %6112 = vmatpush1.msra.mxu0 %v6020
  %6113 = vmatprep.subr.mxu0 0.0
  %6114 = vmatpush1.msra.mxu0 %v6021
  %6115 = vmatprep.subr.mxu0 0.0
  %6116 = vmatpush1.msra.mxu0 %v6022
  %6117 = vmatprep.subr.mxu0 0.0
  %6118 = vmatpush1.msra.mxu0 %v6023
  %6119 = vmatprep.subr.mxu0 0.0
  %6120 = vmatpush1.msra.mxu0 %v6024
  %6121 = vmatprep.subr.mxu0 0.0
  %6122 = vmatpush1.msra.mxu0 %v6025
  %6123 = vmatprep.subr.mxu0 0.0
  %6124 = vmatpush1.msra.mxu0 %v6026
  %6125 = vmatprep.subr.mxu0 0.0
  %6126 = vmatpush1.msra.mxu0 %v6027
  %6127 = vmatprep.subr.mxu0 0.0
  %6128 = vmatpush1.msra.mxu0 %v6028
  %6129 = vmatprep.subr.mxu0 0.0
  %6130 = vmatpush1.msra.mxu0 %v6029
  %6131 = vmatprep.subr.mxu0 0.0
  %6132 = vmatpush1.msra.mxu0 %v6030
  %6133 = vmatprep.subr.mxu0 0.0
  %6134 = vmatpush1.msra.mxu0 0.0
  %6135 = vmatprep.subr.mxu0 0.0
  %6136 = vmatpush1.msra.mxu0 0.0
  %6137 = vmatprep.subr.mxu0 0.0
  %6138 = vmatpush1.msra.mxu0 0.0
  %6139 = vmatprep.subr.mxu0 0.0
  %6140 = vmatpush1.msra.mxu0 0.0
  %6141 = vmatprep.subr.mxu0 0.0
  %6142 = vmatpush1.msra.mxu0 0.0
  %6143 = vmatprep.subr.mxu0 0.0
  %6144 = vmatpush1.msra.mxu0 0.0
  %6145 = vmatprep.subr.mxu0 0.0
  %6146 = vmatpush1.msra.mxu0 0.0
  %6147 = vmatprep.subr.mxu0 0.0
  %6148 = vmatpush1.msra.mxu0 0.0
  %6149 = vmatprep.subr.mxu0 0.0
  %6150 = vmatpush1.msra.mxu0 0.0
  %6151 = vmatprep.subr.mxu0 0.0
  %6152 = vmatpush1.msra.mxu0 0.0
  %6153 = vmatprep.subr.mxu0 0.0
  %6154 = vmatpush1.msra.mxu0 0.0
  %6155 = vmatprep.subr.mxu0 0.0
  %6156 = vmatpush1.msra.mxu0 0.0
  %6157 = vmatprep.subr.mxu0 0.0
  %6158 = vmatpush1.msra.mxu0 0.0
  %6159 = vmatprep.subr.mxu0 0.0
  %6160 = vmatpush1.msra.mxu0 0.0
  %6161 = vmatprep.subr.mxu0 0.0
  %6162 = vmatpush1.msra.mxu0 0.0
  %6163 = vmatprep.subr.mxu0 0.0
  %6164 = vmatpush1.msra.mxu0 0.0
  %6165 = vmatprep.mubr.f32.mxu0 0.0
  %6166 = vmatmul.mubr.f32.gmra.mrb[0].mxu0 %v5010
  %v6167 = vpop.f32.mrb[0].mxu0
  %v6168 = vadd.f32 %v6098, %v6167
  %v6169 = vpop.f32.mrb[0].mxu0
  %6170 = vdwg.mxu0
  %v6171 = vadd.f32 %v5981, %v6168
  %s6172 = scalar_lea.vmem %s3, 2304
  %v6173 = vld [vmem:[%s6172] sm:$0xff]
  %v6174 = vld [vmem:[%s6172 + $0x8] sm:$0xff]
  %v6175 = vld [vmem:[%s6172 + $0x10] sm:$0xff]
  %v6176 = vld [vmem:[%s6172 + $0x18] sm:$0xff]
  %v6177 = vld [vmem:[%s6172 + $0x20] sm:$0xff]
  %v6178 = vld [vmem:[%s6172 + $0x28] sm:$0xff]
  %v6179 = vld [vmem:[%s6172 + $0x30] sm:$0xff]
  %v6180 = vld [vmem:[%s6172 + $0x38] sm:$0xff]
  %v6181 = vld [vmem:[%s6172 + $0x40] sm:$0xff]
  %v6182 = vld [vmem:[%s6172 + $0x48] sm:$0xff]
  %v6183 = vld [vmem:[%s6172 + $0x50] sm:$0xff]
  %v6184 = vld [vmem:[%s6172 + $0x58] sm:$0xff]
  %v6185 = vld [vmem:[%s6172 + $0x60] sm:$0xff]
  %v6186 = vld [vmem:[%s6172 + $0x68] sm:$0xff]
  %v6187 = vld [vmem:[%s6172 + $0x70] sm:$0xff]
  %v6188 = vld [vmem:[%s6172 + $0x78] sm:$0xff]
  %v6189 = vld [vmem:[%s6172 + $0x80] sm:$0xff]
  %v6190 = vld [vmem:[%s6172 + $0x88] sm:$0xff]
  %v6191 = vld [vmem:[%s6172 + $0x90] sm:$0xff]
  %v6192 = vld [vmem:[%s6172 + $0x98] sm:$0xff]
  %v6193 = vld [vmem:[%s6172 + $0xa0] sm:$0xff]
  %v6194 = vld [vmem:[%s6172 + $0xa8] sm:$0xff]
  %v6195 = vld [vmem:[%s6172 + $0xb0] sm:$0xff]
  %v6196 = vld [vmem:[%s6172 + $0xb8] sm:$0xff]
  %v6197 = vld [vmem:[%s6172 + $0xc0] sm:$0xff]
  %v6198 = vld [vmem:[%s6172 + $0xc8] sm:$0xff]
  %v6199 = vld [vmem:[%s6172 + $0xd0] sm:$0xff]
  %v6200 = vld [vmem:[%s6172 + $0xd8] sm:$0xff]
  %v6201 = vld [vmem:[%s6172 + $0xe0] sm:$0xff]
  %v6202 = vld [vmem:[%s6172 + $0xe8] sm:$0xff]
  %v6203 = vld [vmem:[%s6172 + $0xf0] sm:$0xff]
  %v6204 = vld [vmem:[%s6172 + $0xf8] sm:$0xff]
  %v6205 = vld [vmem:[%s6172 + $0x100] sm:$0xff]
  %v6206 = vld [vmem:[%s6172 + $0x108] sm:$0xff]
  %v6207 = vld [vmem:[%s6172 + $0x110] sm:$0xff]
  %v6208 = vld [vmem:[%s6172 + $0x118] sm:$0xff]
  %v6209 = vld [vmem:[%s6172 + $0x120] sm:$0xff]
  %v6210 = vld [vmem:[%s6172 + $0x128] sm:$0xff]
  %v6211 = vld [vmem:[%s6172 + $0x130] sm:$0xff]
  %v6212 = vld [vmem:[%s6172 + $0x138] sm:$0xff]
  %v6213 = vld [vmem:[%s6172 + $0x140] sm:$0xff]
  %v6214 = vld [vmem:[%s6172 + $0x148] sm:$0xff]
  %v6215 = vld [vmem:[%s6172 + $0x150] sm:$0xff]
  %v6216 = vld [vmem:[%s6172 + $0x158] sm:$0xff]
  %v6217 = vld [vmem:[%s6172 + $0x160] sm:$0xff]
  %v6218 = vld [vmem:[%s6172 + $0x168] sm:$0xff]
  %v6219 = vld [vmem:[%s6172 + $0x170] sm:$0xff]
  %v6220 = vld [vmem:[%s6172 + $0x178] sm:$0xff]
  %6221 = vmatprep.subr.mxu0 0.0
  %6222 = vmatpush1.msra.mxu0 %v6173
  %6223 = vmatprep.subr.mxu0 0.0
  %6224 = vmatpush1.msra.mxu0 %v6174
  %6225 = vmatprep.subr.mxu0 0.0
  %6226 = vmatpush1.msra.mxu0 %v6175
  %6227 = vmatprep.subr.mxu0 0.0
  %6228 = vmatpush1.msra.mxu0 %v6176
  %6229 = vmatprep.subr.mxu0 0.0
  %6230 = vmatpush1.msra.mxu0 %v6177
  %6231 = vmatprep.subr.mxu0 0.0
  %6232 = vmatpush1.msra.mxu0 %v6178
  %6233 = vmatprep.subr.mxu0 0.0
  %6234 = vmatpush1.msra.mxu0 %v6179
  %6235 = vmatprep.subr.mxu0 0.0
  %6236 = vmatpush1.msra.mxu0 %v6180
  %6237 = vmatprep.subr.mxu0 0.0
  %6238 = vmatpush1.msra.mxu0 %v6181
  %6239 = vmatprep.subr.mxu0 0.0
  %6240 = vmatpush1.msra.mxu0 %v6182
  %6241 = vmatprep.subr.mxu0 0.0
  %6242 = vmatpush1.msra.mxu0 %v6183
  %6243 = vmatprep.subr.mxu0 0.0
  %6244 = vmatpush1.msra.mxu0 %v6184
  %6245 = vmatprep.subr.mxu0 0.0
  %6246 = vmatpush1.msra.mxu0 %v6185
  %6247 = vmatprep.subr.mxu0 0.0
  %6248 = vmatpush1.msra.mxu0 %v6186
  %6249 = vmatprep.subr.mxu0 0.0
  %6250 = vmatpush1.msra.mxu0 %v6187
  %6251 = vmatprep.subr.mxu0 0.0
  %6252 = vmatpush1.msra.mxu0 %v6188
  %6253 = vmatprep.subr.mxu0 0.0
  %6254 = vmatpush1.msra.mxu0 %v6189
  %6255 = vmatprep.subr.mxu0 0.0
  %6256 = vmatpush1.msra.mxu0 %v6190
  %6257 = vmatprep.subr.mxu0 0.0
  %6258 = vmatpush1.msra.mxu0 %v6191
  %6259 = vmatprep.subr.mxu0 0.0
  %6260 = vmatpush1.msra.mxu0 %v6192
  %6261 = vmatprep.subr.mxu0 0.0
  %6262 = vmatpush1.msra.mxu0 %v6193
  %6263 = vmatprep.subr.mxu0 0.0
  %6264 = vmatpush1.msra.mxu0 %v6194
  %6265 = vmatprep.subr.mxu0 0.0
  %6266 = vmatpush1.msra.mxu0 %v6195
  %6267 = vmatprep.subr.mxu0 0.0
  %6268 = vmatpush1.msra.mxu0 %v6196
  %6269 = vmatprep.subr.mxu0 0.0
  %6270 = vmatpush1.msra.mxu0 %v6197
  %6271 = vmatprep.subr.mxu0 0.0
  %6272 = vmatpush1.msra.mxu0 %v6198
  %6273 = vmatprep.subr.mxu0 0.0
  %6274 = vmatpush1.msra.mxu0 %v6199
  %6275 = vmatprep.subr.mxu0 0.0
  %6276 = vmatpush1.msra.mxu0 %v6200
  %6277 = vmatprep.subr.mxu0 0.0
  %6278 = vmatpush1.msra.mxu0 %v6201
  %6279 = vmatprep.subr.mxu0 0.0
  %6280 = vmatpush1.msra.mxu0 %v6202
  %6281 = vmatprep.subr.mxu0 0.0
  %6282 = vmatpush1.msra.mxu0 %v6203
  %6283 = vmatprep.subr.mxu0 0.0
  %6284 = vmatpush1.msra.mxu0 %v6204
  %6285 = vmatprep.mubr.f32.mxu0 %v5012
  %6286 = vmatmul.mubr.f32.gmra.mrb[0].mxu0 %v5011
  %v6287 = vpop.f32.mrb[0].mxu0
  %v6288 = vadd.f32 0.0, %v6287
  %v6289 = vpop.f32.mrb[0].mxu0
  %6290 = vdwg.mxu0
  %6291 = vmatprep.subr.mxu0 0.0
  %6292 = vmatpush1.msra.mxu0 %v6205
  %6293 = vmatprep.subr.mxu0 0.0
  %6294 = vmatpush1.msra.mxu0 %v6206
  %6295 = vmatprep.subr.mxu0 0.0
  %6296 = vmatpush1.msra.mxu0 %v6207
  %6297 = vmatprep.subr.mxu0 0.0
  %6298 = vmatpush1.msra.mxu0 %v6208
  %6299 = vmatprep.subr.mxu0 0.0
  %6300 = vmatpush1.msra.mxu0 %v6209
  %6301 = vmatprep.subr.mxu0 0.0
  %6302 = vmatpush1.msra.mxu0 %v6210
  %6303 = vmatprep.subr.mxu0 0.0
  %6304 = vmatpush1.msra.mxu0 %v6211
  %6305 = vmatprep.subr.mxu0 0.0
  %6306 = vmatpush1.msra.mxu0 %v6212
  %6307 = vmatprep.subr.mxu0 0.0
  %6308 = vmatpush1.msra.mxu0 %v6213
  %6309 = vmatprep.subr.mxu0 0.0
  %6310 = vmatpush1.msra.mxu0 %v6214
  %6311 = vmatprep.subr.mxu0 0.0
  %6312 = vmatpush1.msra.mxu0 %v6215
  %6313 = vmatprep.subr.mxu0 0.0
  %6314 = vmatpush1.msra.mxu0 %v6216
  %6315 = vmatprep.subr.mxu0 0.0
  %6316 = vmatpush1.msra.mxu0 %v6217
  %6317 = vmatprep.subr.mxu0 0.0
  %6318 = vmatpush1.msra.mxu0 %v6218
  %6319 = vmatprep.subr.mxu0 0.0
  %6320 = vmatpush1.msra.mxu0 %v6219
  %6321 = vmatprep.subr.mxu0 0.0
  %6322 = vmatpush1.msra.mxu0 %v6220
  %6323 = vmatprep.subr.mxu0 0.0
  %6324 = vmatpush1.msra.mxu0 0.0
  %6325 = vmatprep.subr.mxu0 0.0
  %6326 = vmatpush1.msra.mxu0 0.0
  %6327 = vmatprep.subr.mxu0 0.0
  %6328 = vmatpush1.msra.mxu0 0.0
  %6329 = vmatprep.subr.mxu0 0.0
  %6330 = vmatpush1.msra.mxu0 0.0
  %6331 = vmatprep.subr.mxu0 0.0
  %6332 = vmatpush1.msra.mxu0 0.0
  %6333 = vmatprep.subr.mxu0 0.0
  %6334 = vmatpush1.msra.mxu0 0.0
  %6335 = vmatprep.subr.mxu0 0.0
  %6336 = vmatpush1.msra.mxu0 0.0
  %6337 = vmatprep.subr.mxu0 0.0
  %6338 = vmatpush1.msra.mxu0 0.0
  %6339 = vmatprep.subr.mxu0 0.0
  %6340 = vmatpush1.msra.mxu0 0.0
  %6341 = vmatprep.subr.mxu0 0.0
  %6342 = vmatpush1.msra.mxu0 0.0
  %6343 = vmatprep.subr.mxu0 0.0
  %6344 = vmatpush1.msra.mxu0 0.0
  %6345 = vmatprep.subr.mxu0 0.0
  %6346 = vmatpush1.msra.mxu0 0.0
  %6347 = vmatprep.subr.mxu0 0.0
  %6348 = vmatpush1.msra.mxu0 0.0
  %6349 = vmatprep.subr.mxu0 0.0
  %6350 = vmatpush1.msra.mxu0 0.0
  %6351 = vmatprep.subr.mxu0 0.0
  %6352 = vmatpush1.msra.mxu0 0.0
  %6353 = vmatprep.subr.mxu0 0.0
  %6354 = vmatpush1.msra.mxu0 0.0
  %6355 = vmatprep.mubr.f32.mxu0 0.0
  %6356 = vmatmul.mubr.f32.gmra.mrb[0].mxu0 %v5013
  %v6357 = vpop.f32.mrb[0].mxu0
  %v6358 = vadd.f32 %v6288, %v6357
  %v6359 = vpop.f32.mrb[0].mxu0
  %6360 = vdwg.mxu0
  %v6361 = vadd.f32 %v6171, %v6358
  %s6362 = scalar_lea.vmem %s3, 2688
  %v6363 = vld [vmem:[%s6362] sm:$0xff]
  %v6364 = vld [vmem:[%s6362 + $0x8] sm:$0xff]
  %v6365 = vld [vmem:[%s6362 + $0x10] sm:$0xff]
  %v6366 = vld [vmem:[%s6362 + $0x18] sm:$0xff]
  %v6367 = vld [vmem:[%s6362 + $0x20] sm:$0xff]
  %v6368 = vld [vmem:[%s6362 + $0x28] sm:$0xff]
  %v6369 = vld [vmem:[%s6362 + $0x30] sm:$0xff]
  %v6370 = vld [vmem:[%s6362 + $0x38] sm:$0xff]
  %v6371 = vld [vmem:[%s6362 + $0x40] sm:$0xff]
  %v6372 = vld [vmem:[%s6362 + $0x48] sm:$0xff]
  %v6373 = vld [vmem:[%s6362 + $0x50] sm:$0xff]
  %v6374 = vld [vmem:[%s6362 + $0x58] sm:$0xff]
  %v6375 = vld [vmem:[%s6362 + $0x60] sm:$0xff]
  %v6376 = vld [vmem:[%s6362 + $0x68] sm:$0xff]
  %v6377 = vld [vmem:[%s6362 + $0x70] sm:$0xff]
  %v6378 = vld [vmem:[%s6362 + $0x78] sm:$0xff]
  %v6379 = vld [vmem:[%s6362 + $0x80] sm:$0xff]
  %v6380 = vld [vmem:[%s6362 + $0x88] sm:$0xff]
  %v6381 = vld [vmem:[%s6362 + $0x90] sm:$0xff]
  %v6382 = vld [vmem:[%s6362 + $0x98] sm:$0xff]
  %v6383 = vld [vmem:[%s6362 + $0xa0] sm:$0xff]
  %v6384 = vld [vmem:[%s6362 + $0xa8] sm:$0xff]
  %v6385 = vld [vmem:[%s6362 + $0xb0] sm:$0xff]
  %v6386 = vld [vmem:[%s6362 + $0xb8] sm:$0xff]
  %v6387 = vld [vmem:[%s6362 + $0xc0] sm:$0xff]
  %v6388 = vld [vmem:[%s6362 + $0xc8] sm:$0xff]
  %v6389 = vld [vmem:[%s6362 + $0xd0] sm:$0xff]
  %v6390 = vld [vmem:[%s6362 + $0xd8] sm:$0xff]
  %v6391 = vld [vmem:[%s6362 + $0xe0] sm:$0xff]
  %v6392 = vld [vmem:[%s6362 + $0xe8] sm:$0xff]
  %v6393 = vld [vmem:[%s6362 + $0xf0] sm:$0xff]
  %v6394 = vld [vmem:[%s6362 + $0xf8] sm:$0xff]
  %v6395 = vld [vmem:[%s6362 + $0x100] sm:$0xff]
  %v6396 = vld [vmem:[%s6362 + $0x108] sm:$0xff]
  %v6397 = vld [vmem:[%s6362 + $0x110] sm:$0xff]
  %v6398 = vld [vmem:[%s6362 + $0x118] sm:$0xff]
  %v6399 = vld [vmem:[%s6362 + $0x120] sm:$0xff]
  %v6400 = vld [vmem:[%s6362 + $0x128] sm:$0xff]
  %v6401 = vld [vmem:[%s6362 + $0x130] sm:$0xff]
  %v6402 = vld [vmem:[%s6362 + $0x138] sm:$0xff]
  %v6403 = vld [vmem:[%s6362 + $0x140] sm:$0xff]
  %v6404 = vld [vmem:[%s6362 + $0x148] sm:$0xff]
  %v6405 = vld [vmem:[%s6362 + $0x150] sm:$0xff]
  %v6406 = vld [vmem:[%s6362 + $0x158] sm:$0xff]
  %v6407 = vld [vmem:[%s6362 + $0x160] sm:$0xff]
  %v6408 = vld [vmem:[%s6362 + $0x168] sm:$0xff]
  %v6409 = vld [vmem:[%s6362 + $0x170] sm:$0xff]
  %v6410 = vld [vmem:[%s6362 + $0x178] sm:$0xff]
  %6411 = vmatprep.subr.mxu0 0.0
  %6412 = vmatpush1.msra.mxu0 %v6363
  %6413 = vmatprep.subr.mxu0 0.0
  %6414 = vmatpush1.msra.mxu0 %v6364
  %6415 = vmatprep.subr.mxu0 0.0
  %6416 = vmatpush1.msra.mxu0 %v6365
  %6417 = vmatprep.subr.mxu0 0.0
  %6418 = vmatpush1.msra.mxu0 %v6366
  %6419 = vmatprep.subr.mxu0 0.0
  %6420 = vmatpush1.msra.mxu0 %v6367
  %6421 = vmatprep.subr.mxu0 0.0
  %6422 = vmatpush1.msra.mxu0 %v6368
  %6423 = vmatprep.subr.mxu0 0.0
  %6424 = vmatpush1.msra.mxu0 %v6369
  %6425 = vmatprep.subr.mxu0 0.0
  %6426 = vmatpush1.msra.mxu0 %v6370
  %6427 = vmatprep.subr.mxu0 0.0
  %6428 = vmatpush1.msra.mxu0 %v6371
  %6429 = vmatprep.subr.mxu0 0.0
  %6430 = vmatpush1.msra.mxu0 %v6372
  %6431 = vmatprep.subr.mxu0 0.0
  %6432 = vmatpush1.msra.mxu0 %v6373
  %6433 = vmatprep.subr.mxu0 0.0
  %6434 = vmatpush1.msra.mxu0 %v6374
  %6435 = vmatprep.subr.mxu0 0.0
  %6436 = vmatpush1.msra.mxu0 %v6375
  %6437 = vmatprep.subr.mxu0 0.0
  %6438 = vmatpush1.msra.mxu0 %v6376
  %6439 = vmatprep.subr.mxu0 0.0
  %6440 = vmatpush1.msra.mxu0 %v6377
  %6441 = vmatprep.subr.mxu0 0.0
  %6442 = vmatpush1.msra.mxu0 %v6378
  %6443 = vmatprep.subr.mxu0 0.0
  %6444 = vmatpush1.msra.mxu0 %v6379
  %6445 = vmatprep.subr.mxu0 0.0
  %6446 = vmatpush1.msra.mxu0 %v6380
  %6447 = vmatprep.subr.mxu0 0.0
  %6448 = vmatpush1.msra.mxu0 %v6381
  %6449 = vmatprep.subr.mxu0 0.0
  %6450 = vmatpush1.msra.mxu0 %v6382
  %6451 = vmatprep.subr.mxu0 0.0
  %6452 = vmatpush1.msra.mxu0 %v6383
  %6453 = vmatprep.subr.mxu0 0.0
  %6454 = vmatpush1.msra.mxu0 %v6384
  %6455 = vmatprep.subr.mxu0 0.0
  %6456 = vmatpush1.msra.mxu0 %v6385
  %6457 = vmatprep.subr.mxu0 0.0
  %6458 = vmatpush1.msra.mxu0 %v6386
  %6459 = vmatprep.subr.mxu0 0.0
  %6460 = vmatpush1.msra.mxu0 %v6387
  %6461 = vmatprep.subr.mxu0 0.0
  %6462 = vmatpush1.msra.mxu0 %v6388
  %6463 = vmatprep.subr.mxu0 0.0
  %6464 = vmatpush1.msra.mxu0 %v6389
  %6465 = vmatprep.subr.mxu0 0.0
  %6466 = vmatpush1.msra.mxu0 %v6390
  %6467 = vmatprep.subr.mxu0 0.0
  %6468 = vmatpush1.msra.mxu0 %v6391
  %6469 = vmatprep.subr.mxu0 0.0
  %6470 = vmatpush1.msra.mxu0 %v6392
  %6471 = vmatprep.subr.mxu0 0.0
  %6472 = vmatpush1.msra.mxu0 %v6393
  %6473 = vmatprep.subr.mxu0 0.0
  %6474 = vmatpush1.msra.mxu0 %v6394
  %6475 = vmatprep.mubr.f32.mxu0 %v5015
  %6476 = vmatmul.mubr.f32.gmra.mrb[0].mxu0 %v5014
  %v6477 = vpop.f32.mrb[0].mxu0
  %v6478 = vadd.f32 0.0, %v6477
  %v6479 = vpop.f32.mrb[0].mxu0
  %6480 = vdwg.mxu0
  %6481 = vmatprep.subr.mxu0 0.0
  %6482 = vmatpush1.msra.mxu0 %v6395
  %6483 = vmatprep.subr.mxu0 0.0
  %6484 = vmatpush1.msra.mxu0 %v6396
  %6485 = vmatprep.subr.mxu0 0.0
  %6486 = vmatpush1.msra.mxu0 %v6397
  %6487 = vmatprep.subr.mxu0 0.0
  %6488 = vmatpush1.msra.mxu0 %v6398
  %6489 = vmatprep.subr.mxu0 0.0
  %6490 = vmatpush1.msra.mxu0 %v6399
  %6491 = vmatprep.subr.mxu0 0.0
  %6492 = vmatpush1.msra.mxu0 %v6400
  %6493 = vmatprep.subr.mxu0 0.0
  %6494 = vmatpush1.msra.mxu0 %v6401
  %6495 = vmatprep.subr.mxu0 0.0
  %6496 = vmatpush1.msra.mxu0 %v6402
  %6497 = vmatprep.subr.mxu0 0.0
  %6498 = vmatpush1.msra.mxu0 %v6403
  %6499 = vmatprep.subr.mxu0 0.0
  %6500 = vmatpush1.msra.mxu0 %v6404
  %6501 = vmatprep.subr.mxu0 0.0
  %6502 = vmatpush1.msra.mxu0 %v6405
  %6503 = vmatprep.subr.mxu0 0.0
  %6504 = vmatpush1.msra.mxu0 %v6406
  %6505 = vmatprep.subr.mxu0 0.0
  %6506 = vmatpush1.msra.mxu0 %v6407
  %6507 = vmatprep.subr.mxu0 0.0
  %6508 = vmatpush1.msra.mxu0 %v6408
  %6509 = vmatprep.subr.mxu0 0.0
  %6510 = vmatpush1.msra.mxu0 %v6409
  %6511 = vmatprep.subr.mxu0 0.0
  %6512 = vmatpush1.msra.mxu0 %v6410
  %6513 = vmatprep.subr.mxu0 0.0
  %6514 = vmatpush1.msra.mxu0 0.0
  %6515 = vmatprep.subr.mxu0 0.0
  %6516 = vmatpush1.msra.mxu0 0.0
  %6517 = vmatprep.subr.mxu0 0.0
  %6518 = vmatpush1.msra.mxu0 0.0
  %6519 = vmatprep.subr.mxu0 0.0
  %6520 = vmatpush1.msra.mxu0 0.0
  %6521 = vmatprep.subr.mxu0 0.0
  %6522 = vmatpush1.msra.mxu0 0.0
  %6523 = vmatprep.subr.mxu0 0.0
  %6524 = vmatpush1.msra.mxu0 0.0
  %6525 = vmatprep.subr.mxu0 0.0
  %6526 = vmatpush1.msra.mxu0 0.0
  %6527 = vmatprep.subr.mxu0 0.0
  %6528 = vmatpush1.msra.mxu0 0.0
  %6529 = vmatprep.subr.mxu0 0.0
  %6530 = vmatpush1.msra.mxu0 0.0
  %6531 = vmatprep.subr.mxu0 0.0
  %6532 = vmatpush1.msra.mxu0 0.0
  %6533 = vmatprep.subr.mxu0 0.0
  %6534 = vmatpush1.msra.mxu0 0.0
  %6535 = vmatprep.subr.mxu0 0.0
  %6536 = vmatpush1.msra.mxu0 0.0
  %6537 = vmatprep.subr.mxu0 0.0
  %6538 = vmatpush1.msra.mxu0 0.0
  %6539 = vmatprep.subr.mxu0 0.0
  %6540 = vmatpush1.msra.mxu0 0.0
  %6541 = vmatprep.subr.mxu0 0.0
  %6542 = vmatpush1.msra.mxu0 0.0
  %6543 = vmatprep.subr.mxu0 0.0
  %6544 = vmatpush1.msra.mxu0 0.0
  %6545 = vmatprep.mubr.f32.mxu0 0.0
  %6546 = vmatmul.mubr.f32.gmra.mrb[0].mxu0 %v5016
  %v6547 = vpop.f32.mrb[0].mxu0
  %v6548 = vadd.f32 %v6478, %v6547
  %v6549 = vpop.f32.mrb[0].mxu0
  %6550 = vdwg.mxu0
  %v6551 = vadd.f32 %v6361, %v6548
  %s6552 = scalar_lea.vmem %s3, 3072
  %v6553 = vld [vmem:[%s6552] sm:$0xff]
  %v6554 = vld [vmem:[%s6552 + $0x8] sm:$0xff]
  %v6555 = vld [vmem:[%s6552 + $0x10] sm:$0xff]
  %v6556 = vld [vmem:[%s6552 + $0x18] sm:$0xff]
  %v6557 = vld [vmem:[%s6552 + $0x20] sm:$0xff]
  %v6558 = vld [vmem:[%s6552 + $0x28] sm:$0xff]
  %v6559 = vld [vmem:[%s6552 + $0x30] sm:$0xff]
  %v6560 = vld [vmem:[%s6552 + $0x38] sm:$0xff]
  %v6561 = vld [vmem:[%s6552 + $0x40] sm:$0xff]
  %v6562 = vld [vmem:[%s6552 + $0x48] sm:$0xff]
  %v6563 = vld [vmem:[%s6552 + $0x50] sm:$0xff]
  %v6564 = vld [vmem:[%s6552 + $0x58] sm:$0xff]
  %v6565 = vld [vmem:[%s6552 + $0x60] sm:$0xff]
  %v6566 = vld [vmem:[%s6552 + $0x68] sm:$0xff]
  %v6567 = vld [vmem:[%s6552 + $0x70] sm:$0xff]
  %v6568 = vld [vmem:[%s6552 + $0x78] sm:$0xff]
  %v6569 = vld [vmem:[%s6552 + $0x80] sm:$0xff]
  %v6570 = vld [vmem:[%s6552 + $0x88] sm:$0xff]
  %v6571 = vld [vmem:[%s6552 + $0x90] sm:$0xff]
  %v6572 = vld [vmem:[%s6552 + $0x98] sm:$0xff]
  %v6573 = vld [vmem:[%s6552 + $0xa0] sm:$0xff]
  %v6574 = vld [vmem:[%s6552 + $0xa8] sm:$0xff]
  %v6575 = vld [vmem:[%s6552 + $0xb0] sm:$0xff]
  %v6576 = vld [vmem:[%s6552 + $0xb8] sm:$0xff]
  %v6577 = vld [vmem:[%s6552 + $0xc0] sm:$0xff]
  %v6578 = vld [vmem:[%s6552 + $0xc8] sm:$0xff]
  %v6579 = vld [vmem:[%s6552 + $0xd0] sm:$0xff]
  %v6580 = vld [vmem:[%s6552 + $0xd8] sm:$0xff]
  %v6581 = vld [vmem:[%s6552 + $0xe0] sm:$0xff]
  %v6582 = vld [vmem:[%s6552 + $0xe8] sm:$0xff]
  %v6583 = vld [vmem:[%s6552 + $0xf0] sm:$0xff]
  %v6584 = vld [vmem:[%s6552 + $0xf8] sm:$0xff]
  %v6585 = vld [vmem:[%s6552 + $0x100] sm:$0xff]
  %v6586 = vld [vmem:[%s6552 + $0x108] sm:$0xff]
  %v6587 = vld [vmem:[%s6552 + $0x110] sm:$0xff]
  %v6588 = vld [vmem:[%s6552 + $0x118] sm:$0xff]
  %v6589 = vld [vmem:[%s6552 + $0x120] sm:$0xff]
  %v6590 = vld [vmem:[%s6552 + $0x128] sm:$0xff]
  %v6591 = vld [vmem:[%s6552 + $0x130] sm:$0xff]
  %v6592 = vld [vmem:[%s6552 + $0x138] sm:$0xff]
  %v6593 = vld [vmem:[%s6552 + $0x140] sm:$0xff]
  %v6594 = vld [vmem:[%s6552 + $0x148] sm:$0xff]
  %v6595 = vld [vmem:[%s6552 + $0x150] sm:$0xff]
  %v6596 = vld [vmem:[%s6552 + $0x158] sm:$0xff]
  %v6597 = vld [vmem:[%s6552 + $0x160] sm:$0xff]
  %v6598 = vld [vmem:[%s6552 + $0x168] sm:$0xff]
  %v6599 = vld [vmem:[%s6552 + $0x170] sm:$0xff]
  %v6600 = vld [vmem:[%s6552 + $0x178] sm:$0xff]
  %6601 = vmatprep.subr.mxu0 0.0
  %6602 = vmatpush1.msra.mxu0 %v6553
  %6603 = vmatprep.subr.mxu0 0.0
  %6604 = vmatpush1.msra.mxu0 %v6554
  %6605 = vmatprep.subr.mxu0 0.0
  %6606 = vmatpush1.msra.mxu0 %v6555
  %6607 = vmatprep.subr.mxu0 0.0
  %6608 = vmatpush1.msra.mxu0 %v6556
  %6609 = vmatprep.subr.mxu0 0.0
  %6610 = vmatpush1.msra.mxu0 %v6557
  %6611 = vmatprep.subr.mxu0 0.0
  %6612 = vmatpush1.msra.mxu0 %v6558
  %6613 = vmatprep.subr.mxu0 0.0
  %6614 = vmatpush1.msra.mxu0 %v6559
  %6615 = vmatprep.subr.mxu0 0.0
  %6616 = vmatpush1.msra.mxu0 %v6560
  %6617 = vmatprep.subr.mxu0 0.0
  %6618 = vmatpush1.msra.mxu0 %v6561
  %6619 = vmatprep.subr.mxu0 0.0
  %6620 = vmatpush1.msra.mxu0 %v6562
  %6621 = vmatprep.subr.mxu0 0.0
  %6622 = vmatpush1.msra.mxu0 %v6563
  %6623 = vmatprep.subr.mxu0 0.0
  %6624 = vmatpush1.msra.mxu0 %v6564
  %6625 = vmatprep.subr.mxu0 0.0
  %6626 = vmatpush1.msra.mxu0 %v6565
  %6627 = vmatprep.subr.mxu0 0.0
  %6628 = vmatpush1.msra.mxu0 %v6566
  %6629 = vmatprep.subr.mxu0 0.0
  %6630 = vmatpush1.msra.mxu0 %v6567
  %6631 = vmatprep.subr.mxu0 0.0
  %6632 = vmatpush1.msra.mxu0 %v6568
  %6633 = vmatprep.subr.mxu0 0.0
  %6634 = vmatpush1.msra.mxu0 %v6569
  %6635 = vmatprep.subr.mxu0 0.0
  %6636 = vmatpush1.msra.mxu0 %v6570
  %6637 = vmatprep.subr.mxu0 0.0
  %6638 = vmatpush1.msra.mxu0 %v6571
  %6639 = vmatprep.subr.mxu0 0.0
  %6640 = vmatpush1.msra.mxu0 %v6572
  %6641 = vmatprep.subr.mxu0 0.0
  %6642 = vmatpush1.msra.mxu0 %v6573
  %6643 = vmatprep.subr.mxu0 0.0
  %6644 = vmatpush1.msra.mxu0 %v6574
  %6645 = vmatprep.subr.mxu0 0.0
  %6646 = vmatpush1.msra.mxu0 %v6575
  %6647 = vmatprep.subr.mxu0 0.0
  %6648 = vmatpush1.msra.mxu0 %v6576
  %6649 = vmatprep.subr.mxu0 0.0
  %6650 = vmatpush1.msra.mxu0 %v6577
  %6651 = vmatprep.subr.mxu0 0.0
  %6652 = vmatpush1.msra.mxu0 %v6578
  %6653 = vmatprep.subr.mxu0 0.0
  %6654 = vmatpush1.msra.mxu0 %v6579
  %6655 = vmatprep.subr.mxu0 0.0
  %6656 = vmatpush1.msra.mxu0 %v6580
  %6657 = vmatprep.subr.mxu0 0.0
  %6658 = vmatpush1.msra.mxu0 %v6581
  %6659 = vmatprep.subr.mxu0 0.0
  %6660 = vmatpush1.msra.mxu0 %v6582
  %6661 = vmatprep.subr.mxu0 0.0
  %6662 = vmatpush1.msra.mxu0 %v6583
  %6663 = vmatprep.subr.mxu0 0.0
  %6664 = vmatpush1.msra.mxu0 %v6584
  %6665 = vmatprep.mubr.f32.mxu0 %v5018
  %6666 = vmatmul.mubr.f32.gmra.mrb[0].mxu0 %v5017
  %v6667 = vpop.f32.mrb[0].mxu0
  %v6668 = vadd.f32 0.0, %v6667
  %v6669 = vpop.f32.mrb[0].mxu0
  %6670 = vdwg.mxu0
  %6671 = vmatprep.subr.mxu0 0.0
  %6672 = vmatpush1.msra.mxu0 %v6585
  %6673 = vmatprep.subr.mxu0 0.0
  %6674 = vmatpush1.msra.mxu0 %v6586
  %6675 = vmatprep.subr.mxu0 0.0
  %6676 = vmatpush1.msra.mxu0 %v6587
  %6677 = vmatprep.subr.mxu0 0.0
  %6678 = vmatpush1.msra.mxu0 %v6588
  %6679 = vmatprep.subr.mxu0 0.0
  %6680 = vmatpush1.msra.mxu0 %v6589
  %6681 = vmatprep.subr.mxu0 0.0
  %6682 = vmatpush1.msra.mxu0 %v6590
  %6683 = vmatprep.subr.mxu0 0.0
  %6684 = vmatpush1.msra.mxu0 %v6591
  %6685 = vmatprep.subr.mxu0 0.0
  %6686 = vmatpush1.msra.mxu0 %v6592
  %6687 = vmatprep.subr.mxu0 0.0
  %6688 = vmatpush1.msra.mxu0 %v6593
  %6689 = vmatprep.subr.mxu0 0.0
  %6690 = vmatpush1.msra.mxu0 %v6594
  %6691 = vmatprep.subr.mxu0 0.0
  %6692 = vmatpush1.msra.mxu0 %v6595
  %6693 = vmatprep.subr.mxu0 0.0
  %6694 = vmatpush1.msra.mxu0 %v6596
  %6695 = vmatprep.subr.mxu0 0.0
  %6696 = vmatpush1.msra.mxu0 %v6597
  %6697 = vmatprep.subr.mxu0 0.0
  %6698 = vmatpush1.msra.mxu0 %v6598
  %6699 = vmatprep.subr.mxu0 0.0
  %6700 = vmatpush1.msra.mxu0 %v6599
  %6701 = vmatprep.subr.mxu0 0.0
  %6702 = vmatpush1.msra.mxu0 %v6600
  %6703 = vmatprep.subr.mxu0 0.0
  %6704 = vmatpush1.msra.mxu0 0.0
  %6705 = vmatprep.subr.mxu0 0.0
  %6706 = vmatpush1.msra.mxu0 0.0
  %6707 = vmatprep.subr.mxu0 0.0
  %6708 = vmatpush1.msra.mxu0 0.0
  %6709 = vmatprep.subr.mxu0 0.0
  %6710 = vmatpush1.msra.mxu0 0.0
  %6711 = vmatprep.subr.mxu0 0.0
  %6712 = vmatpush1.msra.mxu0 0.0
  %6713 = vmatprep.subr.mxu0 0.0
  %6714 = vmatpush1.msra.mxu0 0.0
  %6715 = vmatprep.subr.mxu0 0.0
  %6716 = vmatpush1.msra.mxu0 0.0
  %6717 = vmatprep.subr.mxu0 0.0
  %6718 = vmatpush1.msra.mxu0 0.0
  %6719 = vmatprep.subr.mxu0 0.0
  %6720 = vmatpush1.msra.mxu0 0.0
  %6721 = vmatprep.subr.mxu0 0.0
  %6722 = vmatpush1.msra.mxu0 0.0
  %6723 = vmatprep.subr.mxu0 0.0
  %6724 = vmatpush1.msra.mxu0 0.0
  %6725 = vmatprep.subr.mxu0 0.0
  %6726 = vmatpush1.msra.mxu0 0.0
  %6727 = vmatprep.subr.mxu0 0.0
  %6728 = vmatpush1.msra.mxu0 0.0
  %6729 = vmatprep.subr.mxu0 0.0
  %6730 = vmatpush1.msra.mxu0 0.0
  %6731 = vmatprep.subr.mxu0 0.0
  %6732 = vmatpush1.msra.mxu0 0.0
  %6733 = vmatprep.subr.mxu0 0.0
  %6734 = vmatpush1.msra.mxu0 0.0
  %6735 = vmatprep.mubr.f32.mxu0 0.0
  %6736 = vmatmul.mubr.f32.gmra.mrb[0].mxu0 %v5019
  %v6737 = vpop.f32.mrb[0].mxu0
  %v6738 = vadd.f32 %v6668, %v6737
  %v6739 = vpop.f32.mrb[0].mxu0
  %6740 = vdwg.mxu0
  %v6741 = vadd.f32 %v6551, %v6738
  %s6742 = scalar_lea.vmem %s3, 3456
  %v6743 = vld [vmem:[%s6742] sm:$0xff]
  %v6744 = vld [vmem:[%s6742 + $0x8] sm:$0xff]
  %v6745 = vld [vmem:[%s6742 + $0x10] sm:$0xff]
  %v6746 = vld [vmem:[%s6742 + $0x18] sm:$0xff]
  %v6747 = vld [vmem:[%s6742 + $0x20] sm:$0xff]
  %v6748 = vld [vmem:[%s6742 + $0x28] sm:$0xff]
  %v6749 = vld [vmem:[%s6742 + $0x30] sm:$0xff]
  %v6750 = vld [vmem:[%s6742 + $0x38] sm:$0xff]
  %v6751 = vld [vmem:[%s6742 + $0x40] sm:$0xff]
  %v6752 = vld [vmem:[%s6742 + $0x48] sm:$0xff]
  %v6753 = vld [vmem:[%s6742 + $0x50] sm:$0xff]
  %v6754 = vld [vmem:[%s6742 + $0x58] sm:$0xff]
  %v6755 = vld [vmem:[%s6742 + $0x60] sm:$0xff]
  %v6756 = vld [vmem:[%s6742 + $0x68] sm:$0xff]
  %v6757 = vld [vmem:[%s6742 + $0x70] sm:$0xff]
  %v6758 = vld [vmem:[%s6742 + $0x78] sm:$0xff]
  %v6759 = vld [vmem:[%s6742 + $0x80] sm:$0xff]
  %v6760 = vld [vmem:[%s6742 + $0x88] sm:$0xff]
  %v6761 = vld [vmem:[%s6742 + $0x90] sm:$0xff]
  %v6762 = vld [vmem:[%s6742 + $0x98] sm:$0xff]
  %v6763 = vld [vmem:[%s6742 + $0xa0] sm:$0xff]
  %v6764 = vld [vmem:[%s6742 + $0xa8] sm:$0xff]
  %v6765 = vld [vmem:[%s6742 + $0xb0] sm:$0xff]
  %v6766 = vld [vmem:[%s6742 + $0xb8] sm:$0xff]
  %v6767 = vld [vmem:[%s6742 + $0xc0] sm:$0xff]
  %v6768 = vld [vmem:[%s6742 + $0xc8] sm:$0xff]
  %v6769 = vld [vmem:[%s6742 + $0xd0] sm:$0xff]
  %v6770 = vld [vmem:[%s6742 + $0xd8] sm:$0xff]
  %v6771 = vld [vmem:[%s6742 + $0xe0] sm:$0xff]
  %v6772 = vld [vmem:[%s6742 + $0xe8] sm:$0xff]
  %v6773 = vld [vmem:[%s6742 + $0xf0] sm:$0xff]
  %v6774 = vld [vmem:[%s6742 + $0xf8] sm:$0xff]
  %v6775 = vld [vmem:[%s6742 + $0x100] sm:$0xff]
  %v6776 = vld [vmem:[%s6742 + $0x108] sm:$0xff]
  %v6777 = vld [vmem:[%s6742 + $0x110] sm:$0xff]
  %v6778 = vld [vmem:[%s6742 + $0x118] sm:$0xff]
  %v6779 = vld [vmem:[%s6742 + $0x120] sm:$0xff]
  %v6780 = vld [vmem:[%s6742 + $0x128] sm:$0xff]
  %v6781 = vld [vmem:[%s6742 + $0x130] sm:$0xff]
  %v6782 = vld [vmem:[%s6742 + $0x138] sm:$0xff]
  %v6783 = vld [vmem:[%s6742 + $0x140] sm:$0xff]
  %v6784 = vld [vmem:[%s6742 + $0x148] sm:$0xff]
  %v6785 = vld [vmem:[%s6742 + $0x150] sm:$0xff]
  %v6786 = vld [vmem:[%s6742 + $0x158] sm:$0xff]
  %v6787 = vld [vmem:[%s6742 + $0x160] sm:$0xff]
  %v6788 = vld [vmem:[%s6742 + $0x168] sm:$0xff]
  %v6789 = vld [vmem:[%s6742 + $0x170] sm:$0xff]
  %v6790 = vld [vmem:[%s6742 + $0x178] sm:$0xff]
  %6791 = vmatprep.subr.mxu0 0.0
  %6792 = vmatpush1.msra.mxu0 %v6743
  %6793 = vmatprep.subr.mxu0 0.0
  %6794 = vmatpush1.msra.mxu0 %v6744
  %6795 = vmatprep.subr.mxu0 0.0
  %6796 = vmatpush1.msra.mxu0 %v6745
  %6797 = vmatprep.subr.mxu0 0.0
  %6798 = vmatpush1.msra.mxu0 %v6746
  %6799 = vmatprep.subr.mxu0 0.0
  %6800 = vmatpush1.msra.mxu0 %v6747
  %6801 = vmatprep.subr.mxu0 0.0
  %6802 = vmatpush1.msra.mxu0 %v6748
  %6803 = vmatprep.subr.mxu0 0.0
  %6804 = vmatpush1.msra.mxu0 %v6749
  %6805 = vmatprep.subr.mxu0 0.0
  %6806 = vmatpush1.msra.mxu0 %v6750
  %6807 = vmatprep.subr.mxu0 0.0
  %6808 = vmatpush1.msra.mxu0 %v6751
  %6809 = vmatprep.subr.mxu0 0.0
  %6810 = vmatpush1.msra.mxu0 %v6752
  %6811 = vmatprep.subr.mxu0 0.0
  %6812 = vmatpush1.msra.mxu0 %v6753
  %6813 = vmatprep.subr.mxu0 0.0
  %6814 = vmatpush1.msra.mxu0 %v6754
  %6815 = vmatprep.subr.mxu0 0.0
  %6816 = vmatpush1.msra.mxu0 %v6755
  %6817 = vmatprep.subr.mxu0 0.0
  %6818 = vmatpush1.msra.mxu0 %v6756
  %6819 = vmatprep.subr.mxu0 0.0
  %6820 = vmatpush1.msra.mxu0 %v6757
  %6821 = vmatprep.subr.mxu0 0.0
  %6822 = vmatpush1.msra.mxu0 %v6758
  %6823 = vmatprep.subr.mxu0 0.0
  %6824 = vmatpush1.msra.mxu0 %v6759
  %6825 = vmatprep.subr.mxu0 0.0
  %6826 = vmatpush1.msra.mxu0 %v6760
  %6827 = vmatprep.subr.mxu0 0.0
  %6828 = vmatpush1.msra.mxu0 %v6761
  %6829 = vmatprep.subr.mxu0 0.0
  %6830 = vmatpush1.msra.mxu0 %v6762
  %6831 = vmatprep.subr.mxu0 0.0
  %6832 = vmatpush1.msra.mxu0 %v6763
  %6833 = vmatprep.subr.mxu0 0.0
  %6834 = vmatpush1.msra.mxu0 %v6764
  %6835 = vmatprep.subr.mxu0 0.0
  %6836 = vmatpush1.msra.mxu0 %v6765
  %6837 = vmatprep.subr.mxu0 0.0
  %6838 = vmatpush1.msra.mxu0 %v6766
  %6839 = vmatprep.subr.mxu0 0.0
  %6840 = vmatpush1.msra.mxu0 %v6767
  %6841 = vmatprep.subr.mxu0 0.0
  %6842 = vmatpush1.msra.mxu0 %v6768
  %6843 = vmatprep.subr.mxu0 0.0
  %6844 = vmatpush1.msra.mxu0 %v6769
  %6845 = vmatprep.subr.mxu0 0.0
  %6846 = vmatpush1.msra.mxu0 %v6770
  %6847 = vmatprep.subr.mxu0 0.0
  %6848 = vmatpush1.msra.mxu0 %v6771
  %6849 = vmatprep.subr.mxu0 0.0
  %6850 = vmatpush1.msra.mxu0 %v6772
  %6851 = vmatprep.subr.mxu0 0.0
  %6852 = vmatpush1.msra.mxu0 %v6773
  %6853 = vmatprep.subr.mxu0 0.0
  %6854 = vmatpush1.msra.mxu0 %v6774
  %6855 = vmatprep.mubr.f32.mxu0 %v5021
  %6856 = vmatmul.mubr.f32.gmra.mrb[0].mxu0 %v5020
  %v6857 = vpop.f32.mrb[0].mxu0
  %v6858 = vadd.f32 0.0, %v6857
  %v6859 = vpop.f32.mrb[0].mxu0
  %6860 = vdwg.mxu0
  %6861 = vmatprep.subr.mxu0 0.0
  %6862 = vmatpush1.msra.mxu0 %v6775
  %6863 = vmatprep.subr.mxu0 0.0
  %6864 = vmatpush1.msra.mxu0 %v6776
  %6865 = vmatprep.subr.mxu0 0.0
  %6866 = vmatpush1.msra.mxu0 %v6777
  %6867 = vmatprep.subr.mxu0 0.0
  %6868 = vmatpush1.msra.mxu0 %v6778
  %6869 = vmatprep.subr.mxu0 0.0
  %6870 = vmatpush1.msra.mxu0 %v6779
  %6871 = vmatprep.subr.mxu0 0.0
  %6872 = vmatpush1.msra.mxu0 %v6780
  %6873 = vmatprep.subr.mxu0 0.0
  %6874 = vmatpush1.msra.mxu0 %v6781
  %6875 = vmatprep.subr.mxu0 0.0
  %6876 = vmatpush1.msra.mxu0 %v6782
  %6877 = vmatprep.subr.mxu0 0.0
  %6878 = vmatpush1.msra.mxu0 %v6783
  %6879 = vmatprep.subr.mxu0 0.0
  %6880 = vmatpush1.msra.mxu0 %v6784
  %6881 = vmatprep.subr.mxu0 0.0
  %6882 = vmatpush1.msra.mxu0 %v6785
  %6883 = vmatprep.subr.mxu0 0.0
  %6884 = vmatpush1.msra.mxu0 %v6786
  %6885 = vmatprep.subr.mxu0 0.0
  %6886 = vmatpush1.msra.mxu0 %v6787
  %6887 = vmatprep.subr.mxu0 0.0
  %6888 = vmatpush1.msra.mxu0 %v6788
  %6889 = vmatprep.subr.mxu0 0.0
  %6890 = vmatpush1.msra.mxu0 %v6789
  %6891 = vmatprep.subr.mxu0 0.0
  %6892 = vmatpush1.msra.mxu0 %v6790
  %6893 = vmatprep.subr.mxu0 0.0
  %6894 = vmatpush1.msra.mxu0 0.0
  %6895 = vmatprep.subr.mxu0 0.0
  %6896 = vmatpush1.msra.mxu0 0.0
  %6897 = vmatprep.subr.mxu0 0.0
  %6898 = vmatpush1.msra.mxu0 0.0
  %6899 = vmatprep.subr.mxu0 0.0
  %6900 = vmatpush1.msra.mxu0 0.0
  %6901 = vmatprep.subr.mxu0 0.0
  %6902 = vmatpush1.msra.mxu0 0.0
  %6903 = vmatprep.subr.mxu0 0.0
  %6904 = vmatpush1.msra.mxu0 0.0
  %6905 = vmatprep.subr.mxu0 0.0
  %6906 = vmatpush1.msra.mxu0 0.0
  %6907 = vmatprep.subr.mxu0 0.0
  %6908 = vmatpush1.msra.mxu0 0.0
  %6909 = vmatprep.subr.mxu0 0.0
  %6910 = vmatpush1.msra.mxu0 0.0
  %6911 = vmatprep.subr.mxu0 0.0
  %6912 = vmatpush1.msra.mxu0 0.0
  %6913 = vmatprep.subr.mxu0 0.0
  %6914 = vmatpush1.msra.mxu0 0.0
  %6915 = vmatprep.subr.mxu0 0.0
  %6916 = vmatpush1.msra.mxu0 0.0
  %6917 = vmatprep.subr.mxu0 0.0
  %6918 = vmatpush1.msra.mxu0 0.0
  %6919 = vmatprep.subr.mxu0 0.0
  %6920 = vmatpush1.msra.mxu0 0.0
  %6921 = vmatprep.subr.mxu0 0.0
  %6922 = vmatpush1.msra.mxu0 0.0
  %6923 = vmatprep.subr.mxu0 0.0
  %6924 = vmatpush1.msra.mxu0 0.0
  %6925 = vmatprep.mubr.f32.mxu0 0.0
  %6926 = vmatmul.mubr.f32.gmra.mrb[0].mxu0 %v5022
  %v6927 = vpop.f32.mrb[0].mxu0
  %v6928 = vadd.f32 %v6858, %v6927
  %v6929 = vpop.f32.mrb[0].mxu0
  %6930 = vdwg.mxu0
  %v6931 = vadd.f32 %v6741, %v6928
  %s6932 = scalar_lea.vmem %s3, 3840
  %v6933 = vld [vmem:[%s6932] sm:$0xff]
  %v6934 = vld [vmem:[%s6932 + $0x8] sm:$0xff]
  %v6935 = vld [vmem:[%s6932 + $0x10] sm:$0xff]
  %v6936 = vld [vmem:[%s6932 + $0x18] sm:$0xff]
  %v6937 = vld [vmem:[%s6932 + $0x20] sm:$0xff]
  %v6938 = vld [vmem:[%s6932 + $0x28] sm:$0xff]
  %v6939 = vld [vmem:[%s6932 + $0x30] sm:$0xff]
  %v6940 = vld [vmem:[%s6932 + $0x38] sm:$0xff]
  %v6941 = vld [vmem:[%s6932 + $0x40] sm:$0xff]
  %v6942 = vld [vmem:[%s6932 + $0x48] sm:$0xff]
  %v6943 = vld [vmem:[%s6932 + $0x50] sm:$0xff]
  %v6944 = vld [vmem:[%s6932 + $0x58] sm:$0xff]
  %v6945 = vld [vmem:[%s6932 + $0x60] sm:$0xff]
  %v6946 = vld [vmem:[%s6932 + $0x68] sm:$0xff]
  %v6947 = vld [vmem:[%s6932 + $0x70] sm:$0xff]
  %v6948 = vld [vmem:[%s6932 + $0x78] sm:$0xff]
  %v6949 = vld [vmem:[%s6932 + $0x80] sm:$0xff]
  %v6950 = vld [vmem:[%s6932 + $0x88] sm:$0xff]
  %v6951 = vld [vmem:[%s6932 + $0x90] sm:$0xff]
  %v6952 = vld [vmem:[%s6932 + $0x98] sm:$0xff]
  %v6953 = vld [vmem:[%s6932 + $0xa0] sm:$0xff]
  %v6954 = vld [vmem:[%s6932 + $0xa8] sm:$0xff]
  %v6955 = vld [vmem:[%s6932 + $0xb0] sm:$0xff]
  %v6956 = vld [vmem:[%s6932 + $0xb8] sm:$0xff]
  %v6957 = vld [vmem:[%s6932 + $0xc0] sm:$0xff]
  %v6958 = vld [vmem:[%s6932 + $0xc8] sm:$0xff]
  %v6959 = vld [vmem:[%s6932 + $0xd0] sm:$0xff]
  %v6960 = vld [vmem:[%s6932 + $0xd8] sm:$0xff]
  %v6961 = vld [vmem:[%s6932 + $0xe0] sm:$0xff]
  %v6962 = vld [vmem:[%s6932 + $0xe8] sm:$0xff]
  %v6963 = vld [vmem:[%s6932 + $0xf0] sm:$0xff]
  %v6964 = vld [vmem:[%s6932 + $0xf8] sm:$0xff]
  %v6965 = vld [vmem:[%s6932 + $0x100] sm:$0xff]
  %v6966 = vld [vmem:[%s6932 + $0x108] sm:$0xff]
  %v6967 = vld [vmem:[%s6932 + $0x110] sm:$0xff]
  %v6968 = vld [vmem:[%s6932 + $0x118] sm:$0xff]
  %v6969 = vld [vmem:[%s6932 + $0x120] sm:$0xff]
  %v6970 = vld [vmem:[%s6932 + $0x128] sm:$0xff]
  %v6971 = vld [vmem:[%s6932 + $0x130] sm:$0xff]
  %v6972 = vld [vmem:[%s6932 + $0x138] sm:$0xff]
  %v6973 = vld [vmem:[%s6932 + $0x140] sm:$0xff]
  %v6974 = vld [vmem:[%s6932 + $0x148] sm:$0xff]
  %v6975 = vld [vmem:[%s6932 + $0x150] sm:$0xff]
  %v6976 = vld [vmem:[%s6932 + $0x158] sm:$0xff]
  %v6977 = vld [vmem:[%s6932 + $0x160] sm:$0xff]
  %v6978 = vld [vmem:[%s6932 + $0x168] sm:$0xff]
  %v6979 = vld [vmem:[%s6932 + $0x170] sm:$0xff]
  %v6980 = vld [vmem:[%s6932 + $0x178] sm:$0xff]
  %6981 = vmatprep.subr.mxu0 0.0
  %6982 = vmatpush1.msra.mxu0 %v6933
  %6983 = vmatprep.subr.mxu0 0.0
  %6984 = vmatpush1.msra.mxu0 %v6934
  %6985 = vmatprep.subr.mxu0 0.0
  %6986 = vmatpush1.msra.mxu0 %v6935
  %6987 = vmatprep.subr.mxu0 0.0
  %6988 = vmatpush1.msra.mxu0 %v6936
  %6989 = vmatprep.subr.mxu0 0.0
  %6990 = vmatpush1.msra.mxu0 %v6937
  %6991 = vmatprep.subr.mxu0 0.0
  %6992 = vmatpush1.msra.mxu0 %v6938
  %6993 = vmatprep.subr.mxu0 0.0
  %6994 = vmatpush1.msra.mxu0 %v6939
  %6995 = vmatprep.subr.mxu0 0.0
  %6996 = vmatpush1.msra.mxu0 %v6940
  %6997 = vmatprep.subr.mxu0 0.0
  %6998 = vmatpush1.msra.mxu0 %v6941
  %6999 = vmatprep.subr.mxu0 0.0
  %7000 = vmatpush1.msra.mxu0 %v6942
  %7001 = vmatprep.subr.mxu0 0.0
  %7002 = vmatpush1.msra.mxu0 %v6943
  %7003 = vmatprep.subr.mxu0 0.0
  %7004 = vmatpush1.msra.mxu0 %v6944
  %7005 = vmatprep.subr.mxu0 0.0
  %7006 = vmatpush1.msra.mxu0 %v6945
  %7007 = vmatprep.subr.mxu0 0.0
  %7008 = vmatpush1.msra.mxu0 %v6946
  %7009 = vmatprep.subr.mxu0 0.0
  %7010 = vmatpush1.msra.mxu0 %v6947
  %7011 = vmatprep.subr.mxu0 0.0
  %7012 = vmatpush1.msra.mxu0 %v6948
  %7013 = vmatprep.subr.mxu0 0.0
  %7014 = vmatpush1.msra.mxu0 %v6949
  %7015 = vmatprep.subr.mxu0 0.0
  %7016 = vmatpush1.msra.mxu0 %v6950
  %7017 = vmatprep.subr.mxu0 0.0
  %7018 = vmatpush1.msra.mxu0 %v6951
  %7019 = vmatprep.subr.mxu0 0.0
  %7020 = vmatpush1.msra.mxu0 %v6952
  %7021 = vmatprep.subr.mxu0 0.0
  %7022 = vmatpush1.msra.mxu0 %v6953
  %7023 = vmatprep.subr.mxu0 0.0
  %7024 = vmatpush1.msra.mxu0 %v6954
  %7025 = vmatprep.subr.mxu0 0.0
  %7026 = vmatpush1.msra.mxu0 %v6955
  %7027 = vmatprep.subr.mxu0 0.0
  %7028 = vmatpush1.msra.mxu0 %v6956
  %7029 = vmatprep.subr.mxu0 0.0
  %7030 = vmatpush1.msra.mxu0 %v6957
  %7031 = vmatprep.subr.mxu0 0.0
  %7032 = vmatpush1.msra.mxu0 %v6958
  %7033 = vmatprep.subr.mxu0 0.0
  %7034 = vmatpush1.msra.mxu0 %v6959
  %7035 = vmatprep.subr.mxu0 0.0
  %7036 = vmatpush1.msra.mxu0 %v6960
  %7037 = vmatprep.subr.mxu0 0.0
  %7038 = vmatpush1.msra.mxu0 %v6961
  %7039 = vmatprep.subr.mxu0 0.0
  %7040 = vmatpush1.msra.mxu0 %v6962
  %7041 = vmatprep.subr.mxu0 0.0
  %7042 = vmatpush1.msra.mxu0 %v6963
  %7043 = vmatprep.subr.mxu0 0.0
  %7044 = vmatpush1.msra.mxu0 %v6964
  %7045 = vmatprep.mubr.f32.mxu0 %v5024
  %7046 = vmatmul.mubr.f32.gmra.mrb[0].mxu0 %v5023
  %v7047 = vpop.f32.mrb[0].mxu0
  %v7048 = vadd.f32 0.0, %v7047
  %v7049 = vpop.f32.mrb[0].mxu0
  %7050 = vdwg.mxu0
  %7051 = vmatprep.subr.mxu0 0.0
  %7052 = vmatpush1.msra.mxu0 %v6965
  %7053 = vmatprep.subr.mxu0 0.0
  %7054 = vmatpush1.msra.mxu0 %v6966
  %7055 = vmatprep.subr.mxu0 0.0
  %7056 = vmatpush1.msra.mxu0 %v6967
  %7057 = vmatprep.subr.mxu0 0.0
  %7058 = vmatpush1.msra.mxu0 %v6968
  %7059 = vmatprep.subr.mxu0 0.0
  %7060 = vmatpush1.msra.mxu0 %v6969
  %7061 = vmatprep.subr.mxu0 0.0
  %7062 = vmatpush1.msra.mxu0 %v6970
  %7063 = vmatprep.subr.mxu0 0.0
  %7064 = vmatpush1.msra.mxu0 %v6971
  %7065 = vmatprep.subr.mxu0 0.0
  %7066 = vmatpush1.msra.mxu0 %v6972
  %7067 = vmatprep.subr.mxu0 0.0
  %7068 = vmatpush1.msra.mxu0 %v6973
  %7069 = vmatprep.subr.mxu0 0.0
  %7070 = vmatpush1.msra.mxu0 %v6974
  %7071 = vmatprep.subr.mxu0 0.0
  %7072 = vmatpush1.msra.mxu0 %v6975
  %7073 = vmatprep.subr.mxu0 0.0
  %7074 = vmatpush1.msra.mxu0 %v6976
  %7075 = vmatprep.subr.mxu0 0.0
  %7076 = vmatpush1.msra.mxu0 %v6977
  %7077 = vmatprep.subr.mxu0 0.0
  %7078 = vmatpush1.msra.mxu0 %v6978
  %7079 = vmatprep.subr.mxu0 0.0
  %7080 = vmatpush1.msra.mxu0 %v6979
  %7081 = vmatprep.subr.mxu0 0.0
  %7082 = vmatpush1.msra.mxu0 %v6980
  %7083 = vmatprep.subr.mxu0 0.0
  %7084 = vmatpush1.msra.mxu0 0.0
  %7085 = vmatprep.subr.mxu0 0.0
  %7086 = vmatpush1.msra.mxu0 0.0
  %7087 = vmatprep.subr.mxu0 0.0
  %7088 = vmatpush1.msra.mxu0 0.0
  %7089 = vmatprep.subr.mxu0 0.0
  %7090 = vmatpush1.msra.mxu0 0.0
  %7091 = vmatprep.subr.mxu0 0.0
  %7092 = vmatpush1.msra.mxu0 0.0
  %7093 = vmatprep.subr.mxu0 0.0
  %7094 = vmatpush1.msra.mxu0 0.0
  %7095 = vmatprep.subr.mxu0 0.0
  %7096 = vmatpush1.msra.mxu0 0.0
  %7097 = vmatprep.subr.mxu0 0.0
  %7098 = vmatpush1.msra.mxu0 0.0
  %7099 = vmatprep.subr.mxu0 0.0
  %7100 = vmatpush1.msra.mxu0 0.0
  %7101 = vmatprep.subr.mxu0 0.0
  %7102 = vmatpush1.msra.mxu0 0.0
  %7103 = vmatprep.subr.mxu0 0.0
  %7104 = vmatpush1.msra.mxu0 0.0
  %7105 = vmatprep.subr.mxu0 0.0
  %7106 = vmatpush1.msra.mxu0 0.0
  %7107 = vmatprep.subr.mxu0 0.0
  %7108 = vmatpush1.msra.mxu0 0.0
  %7109 = vmatprep.subr.mxu0 0.0
  %7110 = vmatpush1.msra.mxu0 0.0
  %7111 = vmatprep.subr.mxu0 0.0
  %7112 = vmatpush1.msra.mxu0 0.0
  %7113 = vmatprep.subr.mxu0 0.0
  %7114 = vmatpush1.msra.mxu0 0.0
  %7115 = vmatprep.mubr.f32.mxu0 0.0
  %7116 = vmatmul.mubr.f32.gmra.mrb[0].mxu0 %v5025
  %v7117 = vpop.f32.mrb[0].mxu0
  %v7118 = vadd.f32 %v7048, %v7117
  %v7119 = vpop.f32.mrb[0].mxu0
  %7120 = vdwg.mxu0
  %v7121 = vadd.f32 %v6931, %v7118
  %s7122 = scalar_lea.vmem %s3, 4224
  %v7123 = vld [vmem:[%s7122] sm:$0xff]
  %v7124 = vld [vmem:[%s7122 + $0x8] sm:$0xff]
  %v7125 = vld [vmem:[%s7122 + $0x10] sm:$0xff]
  %v7126 = vld [vmem:[%s7122 + $0x18] sm:$0xff]
  %v7127 = vld [vmem:[%s7122 + $0x20] sm:$0xff]
  %v7128 = vld [vmem:[%s7122 + $0x28] sm:$0xff]
  %v7129 = vld [vmem:[%s7122 + $0x30] sm:$0xff]
  %v7130 = vld [vmem:[%s7122 + $0x38] sm:$0xff]
  %v7131 = vld [vmem:[%s7122 + $0x40] sm:$0xff]
  %v7132 = vld [vmem:[%s7122 + $0x48] sm:$0xff]
  %v7133 = vld [vmem:[%s7122 + $0x50] sm:$0xff]
  %v7134 = vld [vmem:[%s7122 + $0x58] sm:$0xff]
  %v7135 = vld [vmem:[%s7122 + $0x60] sm:$0xff]
  %v7136 = vld [vmem:[%s7122 + $0x68] sm:$0xff]
  %v7137 = vld [vmem:[%s7122 + $0x70] sm:$0xff]
  %v7138 = vld [vmem:[%s7122 + $0x78] sm:$0xff]
  %v7139 = vld [vmem:[%s7122 + $0x80] sm:$0xff]
  %v7140 = vld [vmem:[%s7122 + $0x88] sm:$0xff]
  %v7141 = vld [vmem:[%s7122 + $0x90] sm:$0xff]
  %v7142 = vld [vmem:[%s7122 + $0x98] sm:$0xff]
  %v7143 = vld [vmem:[%s7122 + $0xa0] sm:$0xff]
  %v7144 = vld [vmem:[%s7122 + $0xa8] sm:$0xff]
  %v7145 = vld [vmem:[%s7122 + $0xb0] sm:$0xff]
  %v7146 = vld [vmem:[%s7122 + $0xb8] sm:$0xff]
  %v7147 = vld [vmem:[%s7122 + $0xc0] sm:$0xff]
  %v7148 = vld [vmem:[%s7122 + $0xc8] sm:$0xff]
  %v7149 = vld [vmem:[%s7122 + $0xd0] sm:$0xff]
  %v7150 = vld [vmem:[%s7122 + $0xd8] sm:$0xff]
  %v7151 = vld [vmem:[%s7122 + $0xe0] sm:$0xff]
  %v7152 = vld [vmem:[%s7122 + $0xe8] sm:$0xff]
  %v7153 = vld [vmem:[%s7122 + $0xf0] sm:$0xff]
  %v7154 = vld [vmem:[%s7122 + $0xf8] sm:$0xff]
  %v7155 = vld [vmem:[%s7122 + $0x100] sm:$0xff]
  %v7156 = vld [vmem:[%s7122 + $0x108] sm:$0xff]
  %v7157 = vld [vmem:[%s7122 + $0x110] sm:$0xff]
  %v7158 = vld [vmem:[%s7122 + $0x118] sm:$0xff]
  %v7159 = vld [vmem:[%s7122 + $0x120] sm:$0xff]
  %v7160 = vld [vmem:[%s7122 + $0x128] sm:$0xff]
  %v7161 = vld [vmem:[%s7122 + $0x130] sm:$0xff]
  %v7162 = vld [vmem:[%s7122 + $0x138] sm:$0xff]
  %v7163 = vld [vmem:[%s7122 + $0x140] sm:$0xff]
  %v7164 = vld [vmem:[%s7122 + $0x148] sm:$0xff]
  %v7165 = vld [vmem:[%s7122 + $0x150] sm:$0xff]
  %v7166 = vld [vmem:[%s7122 + $0x158] sm:$0xff]
  %v7167 = vld [vmem:[%s7122 + $0x160] sm:$0xff]
  %v7168 = vld [vmem:[%s7122 + $0x168] sm:$0xff]
  %v7169 = vld [vmem:[%s7122 + $0x170] sm:$0xff]
  %v7170 = vld [vmem:[%s7122 + $0x178] sm:$0xff]
  %7171 = vmatprep.subr.mxu0 0.0
  %7172 = vmatpush1.msra.mxu0 %v7123
  %7173 = vmatprep.subr.mxu0 0.0
  %7174 = vmatpush1.msra.mxu0 %v7124
  %7175 = vmatprep.subr.mxu0 0.0
  %7176 = vmatpush1.msra.mxu0 %v7125
  %7177 = vmatprep.subr.mxu0 0.0
  %7178 = vmatpush1.msra.mxu0 %v7126
  %7179 = vmatprep.subr.mxu0 0.0
  %7180 = vmatpush1.msra.mxu0 %v7127
  %7181 = vmatprep.subr.mxu0 0.0
  %7182 = vmatpush1.msra.mxu0 %v7128
  %7183 = vmatprep.subr.mxu0 0.0
  %7184 = vmatpush1.msra.mxu0 %v7129
  %7185 = vmatprep.subr.mxu0 0.0
  %7186 = vmatpush1.msra.mxu0 %v7130
  %7187 = vmatprep.subr.mxu0 0.0
  %7188 = vmatpush1.msra.mxu0 %v7131
  %7189 = vmatprep.subr.mxu0 0.0
  %7190 = vmatpush1.msra.mxu0 %v7132
  %7191 = vmatprep.subr.mxu0 0.0
  %7192 = vmatpush1.msra.mxu0 %v7133
  %7193 = vmatprep.subr.mxu0 0.0
  %7194 = vmatpush1.msra.mxu0 %v7134
  %7195 = vmatprep.subr.mxu0 0.0
  %7196 = vmatpush1.msra.mxu0 %v7135
  %7197 = vmatprep.subr.mxu0 0.0
  %7198 = vmatpush1.msra.mxu0 %v7136
  %7199 = vmatprep.subr.mxu0 0.0
  %7200 = vmatpush1.msra.mxu0 %v7137
  %7201 = vmatprep.subr.mxu0 0.0
  %7202 = vmatpush1.msra.mxu0 %v7138
  %7203 = vmatprep.subr.mxu0 0.0
  %7204 = vmatpush1.msra.mxu0 %v7139
  %7205 = vmatprep.subr.mxu0 0.0
  %7206 = vmatpush1.msra.mxu0 %v7140
  %7207 = vmatprep.subr.mxu0 0.0
  %7208 = vmatpush1.msra.mxu0 %v7141
  %7209 = vmatprep.subr.mxu0 0.0
  %7210 = vmatpush1.msra.mxu0 %v7142
  %7211 = vmatprep.subr.mxu0 0.0
  %7212 = vmatpush1.msra.mxu0 %v7143
  %7213 = vmatprep.subr.mxu0 0.0
  %7214 = vmatpush1.msra.mxu0 %v7144
  %7215 = vmatprep.subr.mxu0 0.0
  %7216 = vmatpush1.msra.mxu0 %v7145
  %7217 = vmatprep.subr.mxu0 0.0
  %7218 = vmatpush1.msra.mxu0 %v7146
  %7219 = vmatprep.subr.mxu0 0.0
  %7220 = vmatpush1.msra.mxu0 %v7147
  %7221 = vmatprep.subr.mxu0 0.0
  %7222 = vmatpush1.msra.mxu0 %v7148
  %7223 = vmatprep.subr.mxu0 0.0
  %7224 = vmatpush1.msra.mxu0 %v7149
  %7225 = vmatprep.subr.mxu0 0.0
  %7226 = vmatpush1.msra.mxu0 %v7150
  %7227 = vmatprep.subr.mxu0 0.0
  %7228 = vmatpush1.msra.mxu0 %v7151
  %7229 = vmatprep.subr.mxu0 0.0
  %7230 = vmatpush1.msra.mxu0 %v7152
  %7231 = vmatprep.subr.mxu0 0.0
  %7232 = vmatpush1.msra.mxu0 %v7153
  %7233 = vmatprep.subr.mxu0 0.0
  %7234 = vmatpush1.msra.mxu0 %v7154
  %7235 = vmatprep.mubr.f32.mxu0 %v5027
  %7236 = vmatmul.mubr.f32.gmra.mrb[0].mxu0 %v5026
  %v7237 = vpop.f32.mrb[0].mxu0
  %v7238 = vadd.f32 0.0, %v7237
  %v7239 = vpop.f32.mrb[0].mxu0
  %7240 = vdwg.mxu0
  %7241 = vmatprep.subr.mxu0 0.0
  %7242 = vmatpush1.msra.mxu0 %v7155
  %7243 = vmatprep.subr.mxu0 0.0
  %7244 = vmatpush1.msra.mxu0 %v7156
  %7245 = vmatprep.subr.mxu0 0.0
  %7246 = vmatpush1.msra.mxu0 %v7157
  %7247 = vmatprep.subr.mxu0 0.0
  %7248 = vmatpush1.msra.mxu0 %v7158
  %7249 = vmatprep.subr.mxu0 0.0
  %7250 = vmatpush1.msra.mxu0 %v7159
  %7251 = vmatprep.subr.mxu0 0.0
  %7252 = vmatpush1.msra.mxu0 %v7160
  %7253 = vmatprep.subr.mxu0 0.0
  %7254 = vmatpush1.msra.mxu0 %v7161
  %7255 = vmatprep.subr.mxu0 0.0
  %7256 = vmatpush1.msra.mxu0 %v7162
  %7257 = vmatprep.subr.mxu0 0.0
  %7258 = vmatpush1.msra.mxu0 %v7163
  %7259 = vmatprep.subr.mxu0 0.0
  %7260 = vmatpush1.msra.mxu0 %v7164
  %7261 = vmatprep.subr.mxu0 0.0
  %7262 = vmatpush1.msra.mxu0 %v7165
  %7263 = vmatprep.subr.mxu0 0.0
  %7264 = vmatpush1.msra.mxu0 %v7166
  %7265 = vmatprep.subr.mxu0 0.0
  %7266 = vmatpush1.msra.mxu0 %v7167
  %7267 = vmatprep.subr.mxu0 0.0
  %7268 = vmatpush1.msra.mxu0 %v7168
  %7269 = vmatprep.subr.mxu0 0.0
  %7270 = vmatpush1.msra.mxu0 %v7169
  %7271 = vmatprep.subr.mxu0 0.0
  %7272 = vmatpush1.msra.mxu0 %v7170
  %7273 = vmatprep.subr.mxu0 0.0
  %7274 = vmatpush1.msra.mxu0 0.0
  %7275 = vmatprep.subr.mxu0 0.0
  %7276 = vmatpush1.msra.mxu0 0.0
  %7277 = vmatprep.subr.mxu0 0.0
  %7278 = vmatpush1.msra.mxu0 0.0
  %7279 = vmatprep.subr.mxu0 0.0
  %7280 = vmatpush1.msra.mxu0 0.0
  %7281 = vmatprep.subr.mxu0 0.0
  %7282 = vmatpush1.msra.mxu0 0.0
  %7283 = vmatprep.subr.mxu0 0.0
  %7284 = vmatpush1.msra.mxu0 0.0
  %7285 = vmatprep.subr.mxu0 0.0
  %7286 = vmatpush1.msra.mxu0 0.0
  %7287 = vmatprep.subr.mxu0 0.0
  %7288 = vmatpush1.msra.mxu0 0.0
  %7289 = vmatprep.subr.mxu0 0.0
  %7290 = vmatpush1.msra.mxu0 0.0
  %7291 = vmatprep.subr.mxu0 0.0
  %7292 = vmatpush1.msra.mxu0 0.0
  %7293 = vmatprep.subr.mxu0 0.0
  %7294 = vmatpush1.msra.mxu0 0.0
  %7295 = vmatprep.subr.mxu0 0.0
  %7296 = vmatpush1.msra.mxu0 0.0
  %7297 = vmatprep.subr.mxu0 0.0
  %7298 = vmatpush1.msra.mxu0 0.0
  %7299 = vmatprep.subr.mxu0 0.0
  %7300 = vmatpush1.msra.mxu0 0.0
  %7301 = vmatprep.subr.mxu0 0.0
  %7302 = vmatpush1.msra.mxu0 0.0
  %7303 = vmatprep.subr.mxu0 0.0
  %7304 = vmatpush1.msra.mxu0 0.0
  %7305 = vmatprep.mubr.f32.mxu0 0.0
  %7306 = vmatmul.mubr.f32.gmra.mrb[0].mxu0 %v5028
  %v7307 = vpop.f32.mrb[0].mxu0
  %v7308 = vadd.f32 %v7238, %v7307
  %v7309 = vpop.f32.mrb[0].mxu0
  %7310 = vdwg.mxu0
  %v7311 = vadd.f32 %v7121, %v7308
  %s7312 = scalar_lea.vmem %s3, 4608
  %v7313 = vld [vmem:[%s7312] sm:$0xff]
  %v7314 = vld [vmem:[%s7312 + $0x8] sm:$0xff]
  %v7315 = vld [vmem:[%s7312 + $0x10] sm:$0xff]
  %v7316 = vld [vmem:[%s7312 + $0x18] sm:$0xff]
  %v7317 = vld [vmem:[%s7312 + $0x20] sm:$0xff]
  %v7318 = vld [vmem:[%s7312 + $0x28] sm:$0xff]
  %v7319 = vld [vmem:[%s7312 + $0x30] sm:$0xff]
  %v7320 = vld [vmem:[%s7312 + $0x38] sm:$0xff]
  %v7321 = vld [vmem:[%s7312 + $0x40] sm:$0xff]
  %v7322 = vld [vmem:[%s7312 + $0x48] sm:$0xff]
  %v7323 = vld [vmem:[%s7312 + $0x50] sm:$0xff]
  %v7324 = vld [vmem:[%s7312 + $0x58] sm:$0xff]
  %v7325 = vld [vmem:[%s7312 + $0x60] sm:$0xff]
  %v7326 = vld [vmem:[%s7312 + $0x68] sm:$0xff]
  %v7327 = vld [vmem:[%s7312 + $0x70] sm:$0xff]
  %v7328 = vld [vmem:[%s7312 + $0x78] sm:$0xff]
  %v7329 = vld [vmem:[%s7312 + $0x80] sm:$0xff]
  %v7330 = vld [vmem:[%s7312 + $0x88] sm:$0xff]
  %v7331 = vld [vmem:[%s7312 + $0x90] sm:$0xff]
  %v7332 = vld [vmem:[%s7312 + $0x98] sm:$0xff]
  %v7333 = vld [vmem:[%s7312 + $0xa0] sm:$0xff]
  %v7334 = vld [vmem:[%s7312 + $0xa8] sm:$0xff]
  %v7335 = vld [vmem:[%s7312 + $0xb0] sm:$0xff]
  %v7336 = vld [vmem:[%s7312 + $0xb8] sm:$0xff]
  %v7337 = vld [vmem:[%s7312 + $0xc0] sm:$0xff]
  %v7338 = vld [vmem:[%s7312 + $0xc8] sm:$0xff]
  %v7339 = vld [vmem:[%s7312 + $0xd0] sm:$0xff]
  %v7340 = vld [vmem:[%s7312 + $0xd8] sm:$0xff]
  %v7341 = vld [vmem:[%s7312 + $0xe0] sm:$0xff]
  %v7342 = vld [vmem:[%s7312 + $0xe8] sm:$0xff]
  %v7343 = vld [vmem:[%s7312 + $0xf0] sm:$0xff]
  %v7344 = vld [vmem:[%s7312 + $0xf8] sm:$0xff]
  %v7345 = vld [vmem:[%s7312 + $0x100] sm:$0xff]
  %v7346 = vld [vmem:[%s7312 + $0x108] sm:$0xff]
  %v7347 = vld [vmem:[%s7312 + $0x110] sm:$0xff]
  %v7348 = vld [vmem:[%s7312 + $0x118] sm:$0xff]
  %v7349 = vld [vmem:[%s7312 + $0x120] sm:$0xff]
  %v7350 = vld [vmem:[%s7312 + $0x128] sm:$0xff]
  %v7351 = vld [vmem:[%s7312 + $0x130] sm:$0xff]
  %v7352 = vld [vmem:[%s7312 + $0x138] sm:$0xff]
  %v7353 = vld [vmem:[%s7312 + $0x140] sm:$0xff]
  %v7354 = vld [vmem:[%s7312 + $0x148] sm:$0xff]
  %v7355 = vld [vmem:[%s7312 + $0x150] sm:$0xff]
  %v7356 = vld [vmem:[%s7312 + $0x158] sm:$0xff]
  %v7357 = vld [vmem:[%s7312 + $0x160] sm:$0xff]
  %v7358 = vld [vmem:[%s7312 + $0x168] sm:$0xff]
  %v7359 = vld [vmem:[%s7312 + $0x170] sm:$0xff]
  %v7360 = vld [vmem:[%s7312 + $0x178] sm:$0xff]
  %7361 = vmatprep.subr.mxu0 0.0
  %7362 = vmatpush1.msra.mxu0 %v7313
  %7363 = vmatprep.subr.mxu0 0.0
  %7364 = vmatpush1.msra.mxu0 %v7314
  %7365 = vmatprep.subr.mxu0 0.0
  %7366 = vmatpush1.msra.mxu0 %v7315
  %7367 = vmatprep.subr.mxu0 0.0
  %7368 = vmatpush1.msra.mxu0 %v7316
  %7369 = vmatprep.subr.mxu0 0.0
  %7370 = vmatpush1.msra.mxu0 %v7317
  %7371 = vmatprep.subr.mxu0 0.0
  %7372 = vmatpush1.msra.mxu0 %v7318
  %7373 = vmatprep.subr.mxu0 0.0
  %7374 = vmatpush1.msra.mxu0 %v7319
  %7375 = vmatprep.subr.mxu0 0.0
  %7376 = vmatpush1.msra.mxu0 %v7320
  %7377 = vmatprep.subr.mxu0 0.0
  %7378 = vmatpush1.msra.mxu0 %v7321
  %7379 = vmatprep.subr.mxu0 0.0
  %7380 = vmatpush1.msra.mxu0 %v7322
  %7381 = vmatprep.subr.mxu0 0.0
  %7382 = vmatpush1.msra.mxu0 %v7323
  %7383 = vmatprep.subr.mxu0 0.0
  %7384 = vmatpush1.msra.mxu0 %v7324
  %7385 = vmatprep.subr.mxu0 0.0
  %7386 = vmatpush1.msra.mxu0 %v7325
  %7387 = vmatprep.subr.mxu0 0.0
  %7388 = vmatpush1.msra.mxu0 %v7326
  %7389 = vmatprep.subr.mxu0 0.0
  %7390 = vmatpush1.msra.mxu0 %v7327
  %7391 = vmatprep.subr.mxu0 0.0
  %7392 = vmatpush1.msra.mxu0 %v7328
  %7393 = vmatprep.subr.mxu0 0.0
  %7394 = vmatpush1.msra.mxu0 %v7329
  %7395 = vmatprep.subr.mxu0 0.0
  %7396 = vmatpush1.msra.mxu0 %v7330
  %7397 = vmatprep.subr.mxu0 0.0
  %7398 = vmatpush1.msra.mxu0 %v7331
  %7399 = vmatprep.subr.mxu0 0.0
  %7400 = vmatpush1.msra.mxu0 %v7332
  %7401 = vmatprep.subr.mxu0 0.0
  %7402 = vmatpush1.msra.mxu0 %v7333
  %7403 = vmatprep.subr.mxu0 0.0
  %7404 = vmatpush1.msra.mxu0 %v7334
  %7405 = vmatprep.subr.mxu0 0.0
  %7406 = vmatpush1.msra.mxu0 %v7335
  %7407 = vmatprep.subr.mxu0 0.0
  %7408 = vmatpush1.msra.mxu0 %v7336
  %7409 = vmatprep.subr.mxu0 0.0
  %7410 = vmatpush1.msra.mxu0 %v7337
  %7411 = vmatprep.subr.mxu0 0.0
  %7412 = vmatpush1.msra.mxu0 %v7338
  %7413 = vmatprep.subr.mxu0 0.0
  %7414 = vmatpush1.msra.mxu0 %v7339
  %7415 = vmatprep.subr.mxu0 0.0
  %7416 = vmatpush1.msra.mxu0 %v7340
  %7417 = vmatprep.subr.mxu0 0.0
  %7418 = vmatpush1.msra.mxu0 %v7341
  %7419 = vmatprep.subr.mxu0 0.0
  %7420 = vmatpush1.msra.mxu0 %v7342
  %7421 = vmatprep.subr.mxu0 0.0
  %7422 = vmatpush1.msra.mxu0 %v7343
  %7423 = vmatprep.subr.mxu0 0.0
  %7424 = vmatpush1.msra.mxu0 %v7344
  %7425 = vmatprep.mubr.f32.mxu0 %v5030
  %7426 = vmatmul.mubr.f32.gmra.mrb[0].mxu0 %v5029
  %v7427 = vpop.f32.mrb[0].mxu0
  %v7428 = vadd.f32 0.0, %v7427
  %v7429 = vpop.f32.mrb[0].mxu0
  %7430 = vdwg.mxu0
  %7431 = vmatprep.subr.mxu0 0.0
  %7432 = vmatpush1.msra.mxu0 %v7345
  %7433 = vmatprep.subr.mxu0 0.0
  %7434 = vmatpush1.msra.mxu0 %v7346
  %7435 = vmatprep.subr.mxu0 0.0
  %7436 = vmatpush1.msra.mxu0 %v7347
  %7437 = vmatprep.subr.mxu0 0.0
  %7438 = vmatpush1.msra.mxu0 %v7348
  %7439 = vmatprep.subr.mxu0 0.0
  %7440 = vmatpush1.msra.mxu0 %v7349
  %7441 = vmatprep.subr.mxu0 0.0
  %7442 = vmatpush1.msra.mxu0 %v7350
  %7443 = vmatprep.subr.mxu0 0.0
  %7444 = vmatpush1.msra.mxu0 %v7351
  %7445 = vmatprep.subr.mxu0 0.0
  %7446 = vmatpush1.msra.mxu0 %v7352
  %7447 = vmatprep.subr.mxu0 0.0
  %7448 = vmatpush1.msra.mxu0 %v7353
  %7449 = vmatprep.subr.mxu0 0.0
  %7450 = vmatpush1.msra.mxu0 %v7354
  %7451 = vmatprep.subr.mxu0 0.0
  %7452 = vmatpush1.msra.mxu0 %v7355
  %7453 = vmatprep.subr.mxu0 0.0
  %7454 = vmatpush1.msra.mxu0 %v7356
  %7455 = vmatprep.subr.mxu0 0.0
  %7456 = vmatpush1.msra.mxu0 %v7357
  %7457 = vmatprep.subr.mxu0 0.0
  %7458 = vmatpush1.msra.mxu0 %v7358
  %7459 = vmatprep.subr.mxu0 0.0
  %7460 = vmatpush1.msra.mxu0 %v7359
  %7461 = vmatprep.subr.mxu0 0.0
  %7462 = vmatpush1.msra.mxu0 %v7360
  %7463 = vmatprep.subr.mxu0 0.0
  %7464 = vmatpush1.msra.mxu0 0.0
  %7465 = vmatprep.subr.mxu0 0.0
  %7466 = vmatpush1.msra.mxu0 0.0
  %7467 = vmatprep.subr.mxu0 0.0
  %7468 = vmatpush1.msra.mxu0 0.0
  %7469 = vmatprep.subr.mxu0 0.0
  %7470 = vmatpush1.msra.mxu0 0.0
  %7471 = vmatprep.subr.mxu0 0.0
  %7472 = vmatpush1.msra.mxu0 0.0
  %7473 = vmatprep.subr.mxu0 0.0
  %7474 = vmatpush1.msra.mxu0 0.0
  %7475 = vmatprep.subr.mxu0 0.0
  %7476 = vmatpush1.msra.mxu0 0.0
  %7477 = vmatprep.subr.mxu0 0.0
  %7478 = vmatpush1.msra.mxu0 0.0
  %7479 = vmatprep.subr.mxu0 0.0
  %7480 = vmatpush1.msra.mxu0 0.0
  %7481 = vmatprep.subr.mxu0 0.0
  %7482 = vmatpush1.msra.mxu0 0.0
  %7483 = vmatprep.subr.mxu0 0.0
  %7484 = vmatpush1.msra.mxu0 0.0
  %7485 = vmatprep.subr.mxu0 0.0
  %7486 = vmatpush1.msra.mxu0 0.0
  %7487 = vmatprep.subr.mxu0 0.0
  %7488 = vmatpush1.msra.mxu0 0.0
  %7489 = vmatprep.subr.mxu0 0.0
  %7490 = vmatpush1.msra.mxu0 0.0
  %7491 = vmatprep.subr.mxu0 0.0
  %7492 = vmatpush1.msra.mxu0 0.0
  %7493 = vmatprep.subr.mxu0 0.0
  %7494 = vmatpush1.msra.mxu0 0.0
  %7495 = vmatprep.mubr.f32.mxu0 0.0
  %7496 = vmatmul.mubr.f32.gmra.mrb[0].mxu0 %v5031
  %v7497 = vpop.f32.mrb[0].mxu0
  %v7498 = vadd.f32 %v7428, %v7497
  %v7499 = vpop.f32.mrb[0].mxu0
  %7500 = vdwg.mxu0
  %v7501 = vadd.f32 %v7311, %v7498
  %s7502 = scalar_lea.vmem %s3, 4992
  %v7503 = vld [vmem:[%s7502] sm:$0xff]
  %v7504 = vld [vmem:[%s7502 + $0x8] sm:$0xff]
  %v7505 = vld [vmem:[%s7502 + $0x10] sm:$0xff]
  %v7506 = vld [vmem:[%s7502 + $0x18] sm:$0xff]
  %v7507 = vld [vmem:[%s7502 + $0x20] sm:$0xff]
  %v7508 = vld [vmem:[%s7502 + $0x28] sm:$0xff]
  %v7509 = vld [vmem:[%s7502 + $0x30] sm:$0xff]
  %v7510 = vld [vmem:[%s7502 + $0x38] sm:$0xff]
  %v7511 = vld [vmem:[%s7502 + $0x40] sm:$0xff]
  %v7512 = vld [vmem:[%s7502 + $0x48] sm:$0xff]
  %v7513 = vld [vmem:[%s7502 + $0x50] sm:$0xff]
  %v7514 = vld [vmem:[%s7502 + $0x58] sm:$0xff]
  %v7515 = vld [vmem:[%s7502 + $0x60] sm:$0xff]
  %v7516 = vld [vmem:[%s7502 + $0x68] sm:$0xff]
  %v7517 = vld [vmem:[%s7502 + $0x70] sm:$0xff]
  %v7518 = vld [vmem:[%s7502 + $0x78] sm:$0xff]
  %v7519 = vld [vmem:[%s7502 + $0x80] sm:$0xff]
  %v7520 = vld [vmem:[%s7502 + $0x88] sm:$0xff]
  %v7521 = vld [vmem:[%s7502 + $0x90] sm:$0xff]
  %v7522 = vld [vmem:[%s7502 + $0x98] sm:$0xff]
  %v7523 = vld [vmem:[%s7502 + $0xa0] sm:$0xff]
  %v7524 = vld [vmem:[%s7502 + $0xa8] sm:$0xff]
  %v7525 = vld [vmem:[%s7502 + $0xb0] sm:$0xff]
  %v7526 = vld [vmem:[%s7502 + $0xb8] sm:$0xff]
  %v7527 = vld [vmem:[%s7502 + $0xc0] sm:$0xff]
  %v7528 = vld [vmem:[%s7502 + $0xc8] sm:$0xff]
  %v7529 = vld [vmem:[%s7502 + $0xd0] sm:$0xff]
  %v7530 = vld [vmem:[%s7502 + $0xd8] sm:$0xff]
  %v7531 = vld [vmem:[%s7502 + $0xe0] sm:$0xff]
  %v7532 = vld [vmem:[%s7502 + $0xe8] sm:$0xff]
  %v7533 = vld [vmem:[%s7502 + $0xf0] sm:$0xff]
  %v7534 = vld [vmem:[%s7502 + $0xf8] sm:$0xff]
  %v7535 = vld [vmem:[%s7502 + $0x100] sm:$0xff]
  %v7536 = vld [vmem:[%s7502 + $0x108] sm:$0xff]
  %v7537 = vld [vmem:[%s7502 + $0x110] sm:$0xff]
  %v7538 = vld [vmem:[%s7502 + $0x118] sm:$0xff]
  %v7539 = vld [vmem:[%s7502 + $0x120] sm:$0xff]
  %v7540 = vld [vmem:[%s7502 + $0x128] sm:$0xff]
  %v7541 = vld [vmem:[%s7502 + $0x130] sm:$0xff]
  %v7542 = vld [vmem:[%s7502 + $0x138] sm:$0xff]
  %v7543 = vld [vmem:[%s7502 + $0x140] sm:$0xff]
  %v7544 = vld [vmem:[%s7502 + $0x148] sm:$0xff]
  %v7545 = vld [vmem:[%s7502 + $0x150] sm:$0xff]
  %v7546 = vld [vmem:[%s7502 + $0x158] sm:$0xff]
  %v7547 = vld [vmem:[%s7502 + $0x160] sm:$0xff]
  %v7548 = vld [vmem:[%s7502 + $0x168] sm:$0xff]
  %v7549 = vld [vmem:[%s7502 + $0x170] sm:$0xff]
  %v7550 = vld [vmem:[%s7502 + $0x178] sm:$0xff]
  %7551 = vmatprep.subr.mxu0 0.0
  %7552 = vmatpush1.msra.mxu0 %v7503
  %7553 = vmatprep.subr.mxu0 0.0
  %7554 = vmatpush1.msra.mxu0 %v7504
  %7555 = vmatprep.subr.mxu0 0.0
  %7556 = vmatpush1.msra.mxu0 %v7505
  %7557 = vmatprep.subr.mxu0 0.0
  %7558 = vmatpush1.msra.mxu0 %v7506
  %7559 = vmatprep.subr.mxu0 0.0
  %7560 = vmatpush1.msra.mxu0 %v7507
  %7561 = vmatprep.subr.mxu0 0.0
  %7562 = vmatpush1.msra.mxu0 %v7508
  %7563 = vmatprep.subr.mxu0 0.0
  %7564 = vmatpush1.msra.mxu0 %v7509
  %7565 = vmatprep.subr.mxu0 0.0
  %7566 = vmatpush1.msra.mxu0 %v7510
  %7567 = vmatprep.subr.mxu0 0.0
  %7568 = vmatpush1.msra.mxu0 %v7511
  %7569 = vmatprep.subr.mxu0 0.0
  %7570 = vmatpush1.msra.mxu0 %v7512
  %7571 = vmatprep.subr.mxu0 0.0
  %7572 = vmatpush1.msra.mxu0 %v7513
  %7573 = vmatprep.subr.mxu0 0.0
  %7574 = vmatpush1.msra.mxu0 %v7514
  %7575 = vmatprep.subr.mxu0 0.0
  %7576 = vmatpush1.msra.mxu0 %v7515
  %7577 = vmatprep.subr.mxu0 0.0
  %7578 = vmatpush1.msra.mxu0 %v7516
  %7579 = vmatprep.subr.mxu0 0.0
  %7580 = vmatpush1.msra.mxu0 %v7517
  %7581 = vmatprep.subr.mxu0 0.0
  %7582 = vmatpush1.msra.mxu0 %v7518
  %7583 = vmatprep.subr.mxu0 0.0
  %7584 = vmatpush1.msra.mxu0 %v7519
  %7585 = vmatprep.subr.mxu0 0.0
  %7586 = vmatpush1.msra.mxu0 %v7520
  %7587 = vmatprep.subr.mxu0 0.0
  %7588 = vmatpush1.msra.mxu0 %v7521
  %7589 = vmatprep.subr.mxu0 0.0
  %7590 = vmatpush1.msra.mxu0 %v7522
  %7591 = vmatprep.subr.mxu0 0.0
  %7592 = vmatpush1.msra.mxu0 %v7523
  %7593 = vmatprep.subr.mxu0 0.0
  %7594 = vmatpush1.msra.mxu0 %v7524
  %7595 = vmatprep.subr.mxu0 0.0
  %7596 = vmatpush1.msra.mxu0 %v7525
  %7597 = vmatprep.subr.mxu0 0.0
  %7598 = vmatpush1.msra.mxu0 %v7526
  %7599 = vmatprep.subr.mxu0 0.0
  %7600 = vmatpush1.msra.mxu0 %v7527
  %7601 = vmatprep.subr.mxu0 0.0
  %7602 = vmatpush1.msra.mxu0 %v7528
  %7603 = vmatprep.subr.mxu0 0.0
  %7604 = vmatpush1.msra.mxu0 %v7529
  %7605 = vmatprep.subr.mxu0 0.0
  %7606 = vmatpush1.msra.mxu0 %v7530
  %7607 = vmatprep.subr.mxu0 0.0
  %7608 = vmatpush1.msra.mxu0 %v7531
  %7609 = vmatprep.subr.mxu0 0.0
  %7610 = vmatpush1.msra.mxu0 %v7532
  %7611 = vmatprep.subr.mxu0 0.0
  %7612 = vmatpush1.msra.mxu0 %v7533
  %7613 = vmatprep.subr.mxu0 0.0
  %7614 = vmatpush1.msra.mxu0 %v7534
  %7615 = vmatprep.mubr.f32.mxu0 %v5033
  %7616 = vmatmul.mubr.f32.gmra.mrb[0].mxu0 %v5032
  %v7617 = vpop.f32.mrb[0].mxu0
  %v7618 = vadd.f32 0.0, %v7617
  %v7619 = vpop.f32.mrb[0].mxu0
  %7620 = vdwg.mxu0
  %7621 = vmatprep.subr.mxu0 0.0
  %7622 = vmatpush1.msra.mxu0 %v7535
  %7623 = vmatprep.subr.mxu0 0.0
  %7624 = vmatpush1.msra.mxu0 %v7536
  %7625 = vmatprep.subr.mxu0 0.0
  %7626 = vmatpush1.msra.mxu0 %v7537
  %7627 = vmatprep.subr.mxu0 0.0
  %7628 = vmatpush1.msra.mxu0 %v7538
  %7629 = vmatprep.subr.mxu0 0.0
  %7630 = vmatpush1.msra.mxu0 %v7539
  %7631 = vmatprep.subr.mxu0 0.0
  %7632 = vmatpush1.msra.mxu0 %v7540
  %7633 = vmatprep.subr.mxu0 0.0
  %7634 = vmatpush1.msra.mxu0 %v7541
  %7635 = vmatprep.subr.mxu0 0.0
  %7636 = vmatpush1.msra.mxu0 %v7542
  %7637 = vmatprep.subr.mxu0 0.0
  %7638 = vmatpush1.msra.mxu0 %v7543
  %7639 = vmatprep.subr.mxu0 0.0
  %7640 = vmatpush1.msra.mxu0 %v7544
  %7641 = vmatprep.subr.mxu0 0.0
  %7642 = vmatpush1.msra.mxu0 %v7545
  %7643 = vmatprep.subr.mxu0 0.0
  %7644 = vmatpush1.msra.mxu0 %v7546
  %7645 = vmatprep.subr.mxu0 0.0
  %7646 = vmatpush1.msra.mxu0 %v7547
  %7647 = vmatprep.subr.mxu0 0.0
  %7648 = vmatpush1.msra.mxu0 %v7548
  %7649 = vmatprep.subr.mxu0 0.0
  %7650 = vmatpush1.msra.mxu0 %v7549
  %7651 = vmatprep.subr.mxu0 0.0
  %7652 = vmatpush1.msra.mxu0 %v7550
  %7653 = vmatprep.subr.mxu0 0.0
  %7654 = vmatpush1.msra.mxu0 0.0
  %7655 = vmatprep.subr.mxu0 0.0
  %7656 = vmatpush1.msra.mxu0 0.0
  %7657 = vmatprep.subr.mxu0 0.0
  %7658 = vmatpush1.msra.mxu0 0.0
  %7659 = vmatprep.subr.mxu0 0.0
  %7660 = vmatpush1.msra.mxu0 0.0
  %7661 = vmatprep.subr.mxu0 0.0
  %7662 = vmatpush1.msra.mxu0 0.0
  %7663 = vmatprep.subr.mxu0 0.0
  %7664 = vmatpush1.msra.mxu0 0.0
  %7665 = vmatprep.subr.mxu0 0.0
  %7666 = vmatpush1.msra.mxu0 0.0
  %7667 = vmatprep.subr.mxu0 0.0
  %7668 = vmatpush1.msra.mxu0 0.0
  %7669 = vmatprep.subr.mxu0 0.0
  %7670 = vmatpush1.msra.mxu0 0.0
  %7671 = vmatprep.subr.mxu0 0.0
  %7672 = vmatpush1.msra.mxu0 0.0
  %7673 = vmatprep.subr.mxu0 0.0
  %7674 = vmatpush1.msra.mxu0 0.0
  %7675 = vmatprep.subr.mxu0 0.0
  %7676 = vmatpush1.msra.mxu0 0.0
  %7677 = vmatprep.subr.mxu0 0.0
  %7678 = vmatpush1.msra.mxu0 0.0
  %7679 = vmatprep.subr.mxu0 0.0
  %7680 = vmatpush1.msra.mxu0 0.0
  %7681 = vmatprep.subr.mxu0 0.0
  %7682 = vmatpush1.msra.mxu0 0.0
  %7683 = vmatprep.subr.mxu0 0.0
  %7684 = vmatpush1.msra.mxu0 0.0
  %7685 = vmatprep.mubr.f32.mxu0 0.0
  %7686 = vmatmul.mubr.f32.gmra.mrb[0].mxu0 %v5034
  %v7687 = vpop.f32.mrb[0].mxu0
  %v7688 = vadd.f32 %v7618, %v7687
  %v7689 = vpop.f32.mrb[0].mxu0
  %7690 = vdwg.mxu0
  %v7691 = vadd.f32 %v7501, %v7688
  %v7692 = vld [vmem:[%s4] sm:$0x1]
  %v7694 = vlaneseq
  %v7695 = vshrl.u32 %v7694, 7
  %v7696 = vsub.s32 0, %v7695
  %v7697 = vrot.slane %v7692, %v7696
  %v7699 = vadd.f32 %v7691, %v7697
  %v7700 = vmax.f32 %v7699, 0.0
  %v7701 = vld [vmem:[%s5] sm:$0xff]
  %v7702 = vld [vmem:[%s5 + $0x8] sm:$0xff]
  %v7703 = vld [vmem:[%s5 + $0x10] sm:$0xff]
  %v7704 = vld [vmem:[%s5 + $0x18] sm:$0xff]
  %v7705 = vld [vmem:[%s5 + $0x20] sm:$0xff]
  %v7706 = vld [vmem:[%s5 + $0x28] sm:$0xff]
  %v7707 = vld [vmem:[%s5 + $0x30] sm:$0xff]
  %v7708 = vld [vmem:[%s5 + $0x38] sm:$0xff]
  %v7709 = vld [vmem:[%s5 + $0x40] sm:$0xff]
  %v7710 = vld [vmem:[%s5 + $0x48] sm:$0xff]
  %v7711 = vld [vmem:[%s5 + $0x50] sm:$0xff]
  %v7712 = vld [vmem:[%s5 + $0x58] sm:$0xff]
  %v7713 = vld [vmem:[%s5 + $0x60] sm:$0xff]
  %v7714 = vld [vmem:[%s5 + $0x68] sm:$0xff]
  %v7715 = vld [vmem:[%s5 + $0x70] sm:$0xff]
  %v7716 = vld [vmem:[%s5 + $0x78] sm:$0xff]
  %v7717 = vld [vmem:[%s6] sm:$0x1]
  %v7719 = vlaneseq
  %v7720 = vshrl.u32 %v7719, 7
  %v7721 = vsub.s32 0, %v7720
  %v7722 = vrot.slane %v7717, %v7721
  %7724 = vmatprep.subr.mxu0 0.0
  %7725 = vmatpush1.msra.mxu0 %v7701
  %7726 = vmatprep.subr.mxu0 0.0
  %7727 = vmatpush1.msra.mxu0 %v7702
  %7728 = vmatprep.subr.mxu0 0.0
  %7729 = vmatpush1.msra.mxu0 %v7703
  %7730 = vmatprep.subr.mxu0 0.0
  %7731 = vmatpush1.msra.mxu0 %v7704
  %7732 = vmatprep.subr.mxu0 0.0
  %7733 = vmatpush1.msra.mxu0 %v7705
  %7734 = vmatprep.subr.mxu0 0.0
  %7735 = vmatpush1.msra.mxu0 %v7706
  %7736 = vmatprep.subr.mxu0 0.0
  %7737 = vmatpush1.msra.mxu0 %v7707
  %7738 = vmatprep.subr.mxu0 0.0
  %7739 = vmatpush1.msra.mxu0 %v7708
  %7740 = vmatprep.subr.mxu0 0.0
  %7741 = vmatpush1.msra.mxu0 %v7709
  %7742 = vmatprep.subr.mxu0 0.0
  %7743 = vmatpush1.msra.mxu0 %v7710
  %7744 = vmatprep.subr.mxu0 0.0
  %7745 = vmatpush1.msra.mxu0 %v7711
  %7746 = vmatprep.subr.mxu0 0.0
  %7747 = vmatpush1.msra.mxu0 %v7712
  %7748 = vmatprep.subr.mxu0 0.0
  %7749 = vmatpush1.msra.mxu0 %v7713
  %7750 = vmatprep.subr.mxu0 0.0
  %7751 = vmatpush1.msra.mxu0 %v7714
  %7752 = vmatprep.subr.mxu0 0.0
  %7753 = vmatpush1.msra.mxu0 %v7715
  %7754 = vmatprep.subr.mxu0 0.0
  %7755 = vmatpush1.msra.mxu0 %v7716
  %7756 = vmatprep.subr.mxu0 0.0
  %7757 = vmatpush1.msra.mxu0 0.0
  %7758 = vmatprep.subr.mxu0 0.0
  %7759 = vmatpush1.msra.mxu0 0.0
  %7760 = vmatprep.subr.mxu0 0.0
  %7761 = vmatpush1.msra.mxu0 0.0
  %7762 = vmatprep.subr.mxu0 0.0
  %7763 = vmatpush1.msra.mxu0 0.0
  %7764 = vmatprep.subr.mxu0 0.0
  %7765 = vmatpush1.msra.mxu0 0.0
  %7766 = vmatprep.subr.mxu0 0.0
  %7767 = vmatpush1.msra.mxu0 0.0
  %7768 = vmatprep.subr.mxu0 0.0
  %7769 = vmatpush1.msra.mxu0 0.0
  %7770 = vmatprep.subr.mxu0 0.0
  %7771 = vmatpush1.msra.mxu0 0.0
  %7772 = vmatprep.subr.mxu0 0.0
  %7773 = vmatpush1.msra.mxu0 0.0
  %7774 = vmatprep.subr.mxu0 0.0
  %7775 = vmatpush1.msra.mxu0 0.0
  %7776 = vmatprep.subr.mxu0 0.0
  %7777 = vmatpush1.msra.mxu0 0.0
  %7778 = vmatprep.subr.mxu0 0.0
  %7779 = vmatpush1.msra.mxu0 0.0
  %7780 = vmatprep.subr.mxu0 0.0
  %7781 = vmatpush1.msra.mxu0 0.0
  %7782 = vmatprep.subr.mxu0 0.0
  %7783 = vmatpush1.msra.mxu0 0.0
  %7784 = vmatprep.subr.mxu0 0.0
  %7785 = vmatpush1.msra.mxu0 0.0
  %7786 = vmatprep.subr.mxu0 0.0
  %7787 = vmatpush1.msra.mxu0 0.0
  %7788 = vmatprep.mubr.f32.mxu0 0.0
  %7789 = vmatmul.mubr.f32.gmra.mrb[0].mxu0 %v7700
  %v7790 = vpop.f32.mrb[0].mxu0
  %v7791 = vadd.f32 %v7722, %v7790
  %v7792 = vpop.f32.mrb[0].mxu0
  %7793 = vdwg.mxu0
  %7794 = vst [vmem:[%s7] sm:$0xff] %v7791
  // Predicated region
  $region30: #{model_forward.1} parent=0 // pred_check
    _
  $region31: #{model_forward.1} parent=0 // pred_check_branch
    %7796 = sbr.rel (0) target = $region33
  $region32: #{model_forward.1} parent=0 // pred_region
    _
  $region33: #{model_forward.1} parent=0 // pred_fallthru
    _
  // Predicated region
  $region34: #{model_forward.1} parent=0 // pred_check
    _
  $region35: #{model_forward.1} parent=0 // pred_check_branch
    %7798 = sbr.rel (0) target = $region37
  $region36: #{model_forward.1} parent=0 // pred_region
    _
  $region37: #{model_forward.1} parent=0 // pred_fallthru
    _

</llo_original>
